<compile_context>
chip_gen: v7x
topology: tpu7x:2x2x1
jax: 0.10.0
libtpu: 0.0.40
codegen_flags: <defaults>
</compile_context>

<pallas_src>
import functools

import jax
import jax.numpy as jnp
from jax.experimental import pallas as pl
from jax.experimental.pallas import tpu as pltpu


NEG = -1e9          # finite "max_neg_value": fully-masked rows become uniform, stay finite
LN_EPS = 1e-5


# ------------------------------ small helpers --------------------------------

def _ln(x, g, b):
    """LayerNorm in f32."""
    mu = jnp.mean(x, axis=-1, keepdims=True)
    xc = x - mu
    var = jnp.mean(xc * xc, axis=-1, keepdims=True)
    return xc * jax.lax.rsqrt(var + LN_EPS) * g + b


def _row_tile(m):
    for t in (512, 256, 128):
        if m >= t and m % t == 0:
            return t
    return m


def _pick_batch_block(batch, seq):
    """Batches per grid step: aim for >=256 matmul rows per step (fills the MXU M dim on
    1-TC v5e/v6e) while keeping >=2 grid steps when possible (v7x has 2 TensorCores)."""
    divisors = [d for d in range(1, batch + 1) if batch % d == 0]
    target = max(1, 256 // max(seq, 1))
    cands = [d for d in divisors if d <= target]
    if not cands:
        return 1
    keep_two = [d for d in cands if batch // d >= 2]
    return max(keep_two) if keep_two else max(cands)


def _compiler_params(operands=()):
    """Parallel grid semantics + explicit scoped-VMEM limit.

    v5e's default scoped VMEM is only 16 MiB; we request roughly 2x the operand bytes
    (double buffering) plus headroom, clamped to [32 MiB, 48 MiB] so the request always
    fits under v7x's 64 MiB physical VMEM per TensorCore.
    """
    op_bytes = sum(int(a.size) * a.dtype.itemsize for a in operands)
    limit = max(32 << 20, min(2 * op_bytes + (8 << 20), 48 << 20))
    return pltpu.CompilerParams(dimension_semantics=("parallel",),
                                vmem_limit_bytes=int(limit))


# ------------------------ in-kernel multi-head attention ----------------------

def _attend_block(xq, xkv, biases, wq, wk, wv, wo, bo, *,
                  bb, tq, tk, heads, head_dim, scale):
    """Multi-head attention over a block of `bb` batches.

    xq: (bb*tq, D) bf16, xkv: (bb*tk, D) bf16, biases: list of bb additive masks
    ((tq,tk) or (1,tk) f32).  QKV and the single output projection run on the full
    flattened row dim; only the masked score matmuls loop over b.
    """
    # scale folded into q once (instead of scaling every (tq,tk) score tile per head)
    q = (jnp.dot(xq, wq, preferred_element_type=jnp.float32) * scale).astype(jnp.bfloat16)
    k = jnp.dot(xkv, wk, preferred_element_type=jnp.float32).astype(jnp.bfloat16)
    v = jnp.dot(xkv, wv, preferred_element_type=jnp.float32).astype(jnp.bfloat16)

    blocks = []
    for b in range(bb):                               # static unroll, bb is small
        qb = q[b * tq:(b + 1) * tq]
        kb = k[b * tk:(b + 1) * tk]
        vb = v[b * tk:(b + 1) * tk]
        heads_out = []
        for h in range(heads):                        # static unroll, heads is small
            lo = h * head_dim
            qh = qb[:, lo:lo + head_dim]
            kh = kb[:, lo:lo + head_dim]
            vh = vb[:, lo:lo + head_dim]
            s = jax.lax.dot_general(qh, kh, (((1,), (1,)), ((), ())),
                                    preferred_element_type=jnp.float32) + biases[b]
            m = jnp.max(s, axis=-1, keepdims=True)
            p = jnp.exp(s - m)
            p = p * pl.reciprocal(jnp.sum(p, axis=-1, keepdims=True), approx=True)
            heads_out.append(jnp.dot(p.astype(jnp.bfloat16), vh,
                                     preferred_element_type=jnp.float32))
        # per-head outputs land in their lane slices of one (tq, D) buffer
        blocks.append(jnp.concatenate(heads_out, axis=-1))
    attn = blocks[0] if bb == 1 else jnp.concatenate(blocks, axis=0)   # (bb*tq, D)

    # ONE full-width output projection (previously `heads` tiny-K matmuls + accumulate)
    return jnp.dot(attn.astype(jnp.bfloat16), wo,
                   preferred_element_type=jnp.float32) + bo


# -------------------------- fused decoder-layer kernel ------------------------

def _decoder_layer_kernel(h_ref, ctx_ref, tmask_ref, smask_ref,
                          slng, slnb, swq, swk, swv, swo, sbo,
                          clng, clnb, cwq, cwk, cwv, cwo, cbo,
                          flng, flnb, fw1, fb1, fw2, fb2,
                          o_ref, *, heads, head_dim, scale):
    bb, T, D = h_ref.shape
    S = ctx_ref.shape[1]

    # bf16 residual stream in HBM, f32 inside the kernel
    h = h_ref[...].astype(jnp.float32).reshape(bb * T, D)
    ctx = ctx_ref[...].reshape(bb * S, D)                      # bf16

    # --- additive attention biases built in-kernel from the small key masks ---
    rows = jax.lax.broadcasted_iota(jnp.int32, (T, T), 0)
    cols = jax.lax.broadcasted_iota(jnp.int32, (T, T), 1)
    causal = cols <= rows
    self_bias, cross_bias = [], []
    for b in range(bb):
        self_bias.append(jnp.where(causal & (tmask_ref[b] > 0), 0.0, NEG))   # (T, T)
        cross_bias.append(jnp.where(smask_ref[b] > 0, 0.0, NEG))             # (1, S)

    # --- causal self-attention (pre-norm) + residual ---
    xn = _ln(h, slng[...], slnb[...]).astype(jnp.bfloat16)
    h = h + _attend_block(xn, xn, self_bias,
                          swq[...], swk[...], swv[...], swo[...], sbo[...],
                          bb=bb, tq=T, tk=T, heads=heads, head_dim=head_dim, scale=scale)

    # --- cross-attention over encoder context + residual ---
    xn = _ln(h, clng[...], clnb[...]).astype(jnp.bfloat16)
    h = h + _attend_block(xn, ctx, cross_bias,
                          cwq[...], cwk[...], cwv[...], cwo[...], cbo[...],
                          bb=bb, tq=T, tk=S, heads=heads, head_dim=head_dim, scale=scale)

    # --- feed-forward (GELU) + residual, full (bb*T, D) rows ---
    xn = _ln(h, flng[...], flnb[...]).astype(jnp.bfloat16)
    mid = jax.nn.gelu(jnp.dot(xn, fw1[...], preferred_element_type=jnp.float32) + fb1[...])
    h = h + jnp.dot(mid.astype(jnp.bfloat16), fw2[...],
                    preferred_element_type=jnp.float32) + fb2[...]

    o_ref[...] = h.reshape(bb, T, D).astype(o_ref.dtype)


def decoder_layer(h, ctx, tmask, smask, lp, *, bb, heads, head_dim, scale):
    B, T, D = h.shape
    S = ctx.shape[1]
    H = lp['ff']['w1'].shape[1]

    # TODO(synk): on v7x at production dim, add pipeline_mode=pl.Buffered(1) to these
    #             constant-index weight specs to single-buffer the resident weight set.
    def wspec(shape):
        return pl.BlockSpec(shape, lambda i: (0, 0))

    def attn_specs():
        return [wspec((1, D)), wspec((1, D)), wspec((D, D)), wspec((D, D)),
                wspec((D, D)), wspec((D, D)), wspec((1, D))]

    in_specs = ([pl.BlockSpec((bb, T, D), lambda i: (i, 0, 0)),
                 pl.BlockSpec((bb, S, D), lambda i: (i, 0, 0)),
                 pl.BlockSpec((bb, 1, T), lambda i: (i, 0, 0)),
                 pl.BlockSpec((bb, 1, S), lambda i: (i, 0, 0))]
                + attn_specs() + attn_specs()
                + [wspec((1, D)), wspec((1, D)), wspec((D, H)),
                   wspec((1, H)), wspec((H, D)), wspec((1, D))])

    sp, cp, fp = lp['self'], lp['cross'], lp['ff']
    args = (h, ctx, tmask, smask,
            sp['ln_g'], sp['ln_b'], sp['wq'], sp['wk'], sp['wv'], sp['wo'], sp['bo'],
            cp['ln_g'], cp['ln_b'], cp['wq'], cp['wk'], cp['wv'], cp['wo'], cp['bo'],
            fp['ln_g'], fp['ln_b'], fp['w1'], fp['b1'], fp['w2'], fp['b2'])

    kern = functools.partial(_decoder_layer_kernel, heads=heads,
                             head_dim=head_dim, scale=scale)
    return pl.pallas_call(
        kern,
        out_shape=jax.ShapeDtypeStruct((B, T, D), jnp.bfloat16),
        grid=(B // bb,),
        in_specs=in_specs,
        out_specs=pl.BlockSpec((bb, T, D), lambda i: (i, 0, 0)),
        compiler_params=_compiler_params(args),
    )(*args)


# ------------------------------ embedding kernel ------------------------------

def _embed_kernel(tok_ref, tab_ref, o_ref, *, offsets):
    """SumEmbedding as ONE one-hot matmul against a concatenated table."""
    tok = tok_ref[...]                                   # (tm, F) int32
    M = tok.shape[0]
    Vt = tab_ref.shape[0]
    col = jax.lax.broadcasted_iota(jnp.int32, (M, Vt), 1)
    hit = None
    for f, off in enumerate(offsets):                    # static, F is tiny
        sel = col == (tok[:, f:f + 1] + off)
        hit = sel if hit is None else (hit | sel)
    onehot = hit.astype(jnp.bfloat16)
    o_ref[...] = jnp.dot(onehot, tab_ref[...],
                         preferred_element_type=jnp.float32).astype(o_ref.dtype)


def sum_embedding(tokens2d, table, offsets):
    M, F = tokens2d.shape
    D = table.shape[1]
    tm = _row_tile(M)
    kern = functools.partial(_embed_kernel, offsets=tuple(offsets))
    return pl.pallas_call(
        kern,
        out_shape=jax.ShapeDtypeStruct((M, D), jnp.bfloat16),
        grid=(M // tm,),
        in_specs=[pl.BlockSpec((tm, F), lambda i: (i, 0)),
                  pl.BlockSpec(table.shape, lambda i: (0, 0))],
        out_specs=pl.BlockSpec((tm, D), lambda i: (i, 0)),
        compiler_params=_compiler_params((tokens2d, table)),
    )(tokens2d, table)


# ------------------- fused final LN + projection + split softmax --------------

def _proj_softmax_kernel(h_ref, g_ref, b_ref, w_ref, pb_ref, o_ref, *, v1, v_total):
    h = h_ref[...].astype(jnp.float32)                   # (tm, D)
    hn = _ln(h, g_ref[...], b_ref[...]).astype(jnp.bfloat16)
    logit = jnp.dot(hn, w_ref[...], preferred_element_type=jnp.float32) + pb_ref[...]

    # split softmax over [:v1] and [v1:v_total]; lanes >= v_total are padding (lane-dense store)
    lane = jax.lax.broadcasted_iota(jnp.int32, logit.shape, 1)
    in1 = lane < v1
    in2 = (lane >= v1) & (lane < v_total)
    neg = jnp.finfo(jnp.float32).min
    m1 = jnp.max(jnp.where(in1, logit, neg), axis=-1, keepdims=True)
    m2 = jnp.max(jnp.where(in2, logit, neg), axis=-1, keepdims=True)
    e1 = jnp.where(in1, jnp.exp(logit - m1), 0.0)
    e2 = jnp.where(in2, jnp.exp(logit - m2), 0.0)
    s1 = jnp.sum(e1, axis=-1, keepdims=True)             # (tm, 1)
    s2 = jnp.sum(e2, axis=-1, keepdims=True)             # (tm, 1)
    # exact divide on the (tm,1) sums: probabilities are user-visible (no approx error)
    o_ref[...] = e1 * (1.0 / s1) + e2 * (1.0 / s2)


def proj_softmax(h2d, g, b, w, pb, v1, v_total):
    M, D = h2d.shape
    Vp = w.shape[1]                                      # padded to a multiple of 128 lanes
    tm = _row_tile(M)
    kern = functools.partial(_proj_softmax_kernel, v1=v1, v_total=v_total)
    return pl.pallas_call(
        kern,
        out_shape=jax.ShapeDtypeStruct((M, Vp), jnp.float32),
        grid=(M // tm,),
        in_specs=[pl.BlockSpec((tm, D), lambda i: (i, 0)),
                  pl.BlockSpec((1, D), lambda i: (0, 0)),
                  pl.BlockSpec((1, D), lambda i: (0, 0)),
                  pl.BlockSpec((D, Vp), lambda i: (0, 0)),
                  pl.BlockSpec((1, Vp), lambda i: (0, 0))],
        out_specs=pl.BlockSpec((tm, Vp), lambda i: (i, 0)),
        compiler_params=_compiler_params((h2d, g, b, w, pb)),
    )(h2d, g, b, w, pb)


# ------------------------------ parameters ----------------------------------

def init_params(key, vocab_sizes, dim, depth, heads, ff_mult=4):
    del heads
    keys = iter(jax.random.split(key, 256))

    def nrm(shape, s=0.02, dtype=jnp.bfloat16):
        # matmul weights stored in bf16 (f32 accumulation inside kernels)
        return (jax.random.normal(next(keys), shape, jnp.float32) * s).astype(dtype)

    v_out = vocab_sizes[1] + vocab_sizes[2]
    v_pad = ((v_out + 127) // 128) * 128                 # lane-dense projection output
    proj_w = jnp.zeros((dim, v_pad), jnp.bfloat16).at[:, :v_out].set(nrm((dim, v_out)))

    params = {
        # single concatenated embedding table -> one one-hot matmul in the kernel
        'emb': nrm((sum(vocab_sizes), dim)),
        'layers': [],
        'final_ln_g': jnp.ones((1, dim), jnp.float32),
        'final_ln_b': jnp.zeros((1, dim), jnp.float32),
        'proj_w': proj_w,
        'proj_b': jnp.zeros((1, v_pad), jnp.float32),
    }
    for _ in range(depth):
        layer = {}
        for name in ('self', 'cross'):
            layer[name] = {
                'ln_g': jnp.ones((1, dim), jnp.float32),
                'ln_b': jnp.zeros((1, dim), jnp.float32),
                'wq': nrm((dim, dim)), 'wk': nrm((dim, dim)), 'wv': nrm((dim, dim)),
                'wo': nrm((dim, dim)), 'bo': jnp.zeros((1, dim), jnp.float32),
            }
        layer['ff'] = {
            'ln_g': jnp.ones((1, dim), jnp.float32),
            'ln_b': jnp.zeros((1, dim), jnp.float32),
            'w1': nrm((dim, dim * ff_mult)),
            'b1': jnp.zeros((1, dim * ff_mult), jnp.float32),
            'w2': nrm((dim * ff_mult, dim)),
            'b2': jnp.zeros((1, dim), jnp.float32),
        }
        params['layers'].append(layer)
    return params


# ------------------------------- forward -------------------------------------

def make_forward(dim, heads, vocab_sizes):
    head_dim = dim // heads
    scale = head_dim ** -0.5
    v1 = vocab_sizes[1]
    v_out = vocab_sizes[1] + vocab_sizes[2]
    offsets = tuple(int(sum(vocab_sizes[:f])) for f in range(len(vocab_sizes)))

    def forward(params, x_tokens, enc_out, src_mask):
        B, T, F = x_tokens.shape
        S = enc_out.shape[1]
        bb = _pick_batch_block(B, T)

        # mask = (x != 0)[..., -1]
        tmask = (x_tokens[..., -1] != 0).astype(jnp.int32).reshape(B, 1, T)
        smask = src_mask.astype(jnp.int32).reshape(B, 1, S)

        # SumEmbedding (single concatenated-table one-hot matmul); residual stream in bf16
        h = sum_embedding(x_tokens.reshape(B * T, F), params['emb'],
                          offsets).reshape(B, T, dim)
        ctx = enc_out.astype(jnp.bfloat16)               # cast once; halves per-layer ctx stream

        # decoder layers: one fused pallas_call per layer, gridded over batch blocks
        for lp in params['layers']:
            h = decoder_layer(h, ctx, tmask, smask, lp, bb=bb,
                              heads=heads, head_dim=head_dim, scale=scale)

        # final LayerNorm + projection + split softmax (fused, lane-dense padded output)
        probs = proj_softmax(h.reshape(B * T, dim),
                             params['final_ln_g'], params['final_ln_b'],
                             params['proj_w'], params['proj_b'], v1, v_out)
        return probs[:, :v_out].reshape(B, T, v_out)

    return forward


# --------------------------------- main --------------------------------------

if __name__ == "__main__":
    B, T, S = 2, 8, 8
    dim, depth, heads, ff_mult = 32, 2, 4, 4
    vocab_sizes = [9, 12, 8]          # vocab_size_dict.values(); proj -> V1+V2 = 20

    key = jax.random.PRNGKey(0)
    kp, kx0, kx1, kx2, ke = jax.random.split(key, 5)

    params = init_params(kp, vocab_sizes, dim, depth, heads, ff_mult)

    x_tokens = jnp.stack([
        jax.random.randint(kx0, (B, T), 0, vocab_sizes[0]),
        jax.random.randint(kx1, (B, T), 0, vocab_sizes[1]),
        jax.random.randint(kx2, (B, T), 0, vocab_sizes[2]),
    ], axis=-1).astype(jnp.int32)                                # (B, T, 3)

    enc_out = jax.random.normal(ke, (B, S, dim), jnp.float32)    # (B, S, dim)
    src_mask = jnp.arange(S)[None, :] < jnp.array([S, S - 2])[:, None]   # (B, S) bool

    fwd = jax.jit(make_forward(dim, heads, vocab_sizes))
    out = fwd(params, x_tokens, enc_out, src_mask)
    jax.block_until_ready(out)

    assert out.shape == (B, T, vocab_sizes[1] + vocab_sizes[2])
    assert bool(jnp.all(jnp.isfinite(out)))
    # each split softmax uses an exact divide -> sums to 1 within f32 rounding
    s1 = jnp.sum(out[..., :vocab_sizes[1]], axis=-1)
    s2 = jnp.sum(out[..., vocab_sizes[1]:], axis=-1)
    assert bool(jnp.allclose(s1, 1.0, atol=1e-3)) and bool(jnp.allclose(s2, 1.0, atol=1e-3))
    print("KERNEL_OK")
</pallas_src>

<mosaic_0001>
module attributes {stable_mosaic.version = 11 : i64} {
  func.func @_embed_kernel(%arg0: i32, %arg1: memref<16x3xi32, #tpu.memory_space<vmem>>, %arg2: memref<29x32xbf16, #tpu.memory_space<vmem>>, %arg3: memref<16x32xbf16, #tpu.memory_space<vmem>>) attributes {dimension_semantics = [#tpu.dimension_semantics<parallel>], iteration_bounds = array<i64: 1>, scalar_prefetch = 0 : i64, scratch_operands = 0 : i64, tpu.core_type = #tpu.core_type<tc>, window_params = [{transform_indices = @transform_0, window_bounds = array<i64: 16, 3>}, {pipeline_mode = #tpu.pipeline_mode<synchronous>, transform_indices = @transform_1, window_bounds = array<i64: 29, 32>}, {transform_indices = @transform_2, window_bounds = array<i64: 16, 32>}]} {
    %c0 = arith.constant 0 : index
    %c0_0 = arith.constant 0 : index
    %0 = vector.load %arg1[%c0, %c0_0] : memref<16x3xi32, #tpu.memory_space<vmem>>, vector<16x3xi32>
    %1 = tpu.iota {dimensions = array<i32: 1>} : vector<16x29xi32>
    %2 = vector.extract_strided_slice %0 {offsets = [0, 0], sizes = [16, 1], strides = [1, 1]} : vector<16x3xi32> to vector<16x1xi32>
    %c0_i32 = arith.constant 0 : i32
    %3 = vector.broadcast %c0_i32 : i32 to vector<16x1xi32>
    %4 = arith.addi %2, %3 : vector<16x1xi32>
    %5 = vector.broadcast %4 : vector<16x1xi32> to vector<16x29xi32>
    %6 = arith.cmpi eq, %1, %5 : vector<16x29xi32>
    %7 = vector.extract_strided_slice %0 {offsets = [0, 1], sizes = [16, 1], strides = [1, 1]} : vector<16x3xi32> to vector<16x1xi32>
    %c9_i32 = arith.constant 9 : i32
    %8 = vector.broadcast %c9_i32 : i32 to vector<16x1xi32>
    %9 = arith.addi %7, %8 : vector<16x1xi32>
    %10 = vector.broadcast %9 : vector<16x1xi32> to vector<16x29xi32>
    %11 = arith.cmpi eq, %1, %10 : vector<16x29xi32>
    %12 = arith.ori %6, %11 : vector<16x29xi1>
    %13 = vector.extract_strided_slice %0 {offsets = [0, 2], sizes = [16, 1], strides = [1, 1]} : vector<16x3xi32> to vector<16x1xi32>
    %c21_i32 = arith.constant 21 : i32
    %14 = vector.broadcast %c21_i32 : i32 to vector<16x1xi32>
    %15 = arith.addi %13, %14 : vector<16x1xi32>
    %16 = vector.broadcast %15 : vector<16x1xi32> to vector<16x29xi32>
    %17 = arith.cmpi eq, %1, %16 : vector<16x29xi32>
    %18 = arith.ori %12, %17 : vector<16x29xi1>
    %19 = arith.extui %18 : vector<16x29xi1> to vector<16x29xi32>
    %20 = arith.sitofp %19 : vector<16x29xi32> to vector<16x29xf32>
    %21 = arith.truncf %20 : vector<16x29xf32> to vector<16x29xbf16>
    %c0_1 = arith.constant 0 : index
    %c0_2 = arith.constant 0 : index
    %22 = vector.load %arg2[%c0_1, %c0_2] : memref<29x32xbf16, #tpu.memory_space<vmem>>, vector<29x32xbf16>
    %cst = arith.constant dense<0.000000e+00> : vector<16x32xf32>
    %23 = tpu.matmul %21, %22, %cst {dimension_numbers = #tpu.dot_dimension_numbers<[1], [0], [0], [1], [0, 0, 1, 1], [], []>} : vector<16x29xbf16>, vector<29x32xbf16>, vector<16x32xf32> -> vector<16x32xf32>
    %24 = arith.truncf %23 : vector<16x32xf32> to vector<16x32xbf16>
    %c0_3 = arith.constant 0 : index
    %c0_4 = arith.constant 0 : index
    %25 = vector.load %arg3[%c0_3, %c0_4] : memref<16x32xbf16, #tpu.memory_space<vmem>>, vector<16x32xbf16>
    tpu.vector_store %arg3[%c0_3, %c0_4], %24 {strides = array<i32>} : memref<16x32xbf16, #tpu.memory_space<vmem>>, vector<16x32xbf16>,
    return
  }
  func.func @transform_0(%arg0: i32) -> (i32, i32) {
    %c0_i32 = arith.constant 0 : i32
    %c0_i32_0 = arith.constant 0 : i32
    return %arg0, %c0_i32 : i32, i32
  }
  func.func @transform_1(%arg0: i32) -> (i32, i32) {
    %c0_i32 = arith.constant 0 : i32
    %c0_i32_0 = arith.constant 0 : i32
    %c0_i32_1 = arith.constant 0 : i32
    return %c0_i32, %c0_i32_0 : i32, i32
  }
  func.func @transform_2(%arg0: i32) -> (i32, i32) {
    %c0_i32 = arith.constant 0 : i32
    %c0_i32_0 = arith.constant 0 : i32
    return %arg0, %c0_i32 : i32, i32
  }
}

module attributes {stable_mosaic.version = 11 : i64} {
  func.func @_proj_softmax_kernel(%arg0: i32, %arg1: memref<16x32xbf16, #tpu.memory_space<vmem>>, %arg2: memref<1x32xf32, #tpu.memory_space<vmem>>, %arg3: memref<1x32xf32, #tpu.memory_space<vmem>>, %arg4: memref<32x128xbf16, #tpu.memory_space<vmem>>, %arg5: memref<1x128xf32, #tpu.memory_space<vmem>>, %arg6: memref<16x128xf32, #tpu.memory_space<vmem>>) attributes {dimension_semantics = [#tpu.dimension_semantics<parallel>], iteration_bounds = array<i64: 1>, scalar_prefetch = 0 : i64, scratch_operands = 0 : i64, tpu.core_type = #tpu.core_type<tc>, window_params = [{transform_indices = @transform_0, window_bounds = array<i64: 16, 32>}, {pipeline_mode = #tpu.pipeline_mode<synchronous>, transform_indices = @transform_1, window_bounds = array<i64: 1, 32>}, {pipeline_mode = #tpu.pipeline_mode<synchronous>, transform_indices = @transform_2, window_bounds = array<i64: 1, 32>}, {pipeline_mode = #tpu.pipeline_mode<synchronous>, transform_indices = @transform_3, window_bounds = array<i64: 32, 128>}, {pipeline_mode = #tpu.pipeline_mode<synchronous>, transform_indices = @transform_4, window_bounds = array<i64: 1, 128>}, {transform_indices = @transform_5, window_bounds = array<i64: 16, 128>}]} {
    %c0 = arith.constant 0 : index
    %c0_0 = arith.constant 0 : index
    %0 = vector.load %arg1[%c0, %c0_0] : memref<16x32xbf16, #tpu.memory_space<vmem>>, vector<16x32xbf16>
    %1 = arith.extf %0 : vector<16x32xbf16> to vector<16x32xf32>
    %c0_1 = arith.constant 0 : index
    %c0_2 = arith.constant 0 : index
    %2 = vector.load %arg2[%c0_1, %c0_2] : memref<1x32xf32, #tpu.memory_space<vmem>>, vector<1x32xf32>
    %c0_3 = arith.constant 0 : index
    %c0_4 = arith.constant 0 : index
    %3 = vector.load %arg3[%c0_3, %c0_4] : memref<1x32xf32, #tpu.memory_space<vmem>>, vector<1x32xf32>
    %cst = arith.constant dense<0.000000e+00> : vector<16xf32>
    %4 = vector.multi_reduction <add>, %1, %cst [1] : vector<16x32xf32> to vector<16xf32>
    %5 = vector.shape_cast %4 : vector<16xf32> to vector<16x1xf32>
    %cst_5 = arith.constant 3.200000e+01 : f32
    %6 = vector.broadcast %cst_5 : f32 to vector<16x1xf32>
    %7 = arith.divf %5, %6 : vector<16x1xf32>
    %8 = vector.broadcast %7 : vector<16x1xf32> to vector<16x32xf32>
    %9 = arith.subf %1, %8 : vector<16x32xf32>
    %10 = arith.mulf %9, %9 : vector<16x32xf32>
    %cst_6 = arith.constant dense<0.000000e+00> : vector<16xf32>
    %11 = vector.multi_reduction <add>, %10, %cst_6 [1] : vector<16x32xf32> to vector<16xf32>
    %12 = vector.shape_cast %11 : vector<16xf32> to vector<16x1xf32>
    %cst_7 = arith.constant 3.200000e+01 : f32
    %13 = vector.broadcast %cst_7 : f32 to vector<16x1xf32>
    %14 = arith.divf %12, %13 : vector<16x1xf32>
    %cst_8 = arith.constant 9.99999974E-6 : f32
    %15 = vector.broadcast %cst_8 : f32 to vector<16x1xf32>
    %16 = arith.addf %14, %15 : vector<16x1xf32>
    %17 = math.rsqrt %16 : vector<16x1xf32>
    %18 = vector.broadcast %17 : vector<16x1xf32> to vector<16x32xf32>
    %19 = arith.mulf %9, %18 : vector<16x32xf32>
    %20 = vector.broadcast %2 : vector<1x32xf32> to vector<16x32xf32>
    %21 = arith.mulf %19, %20 : vector<16x32xf32>
    %22 = vector.broadcast %3 : vector<1x32xf32> to vector<16x32xf32>
    %23 = arith.addf %21, %22 : vector<16x32xf32>
    %24 = arith.truncf %23 : vector<16x32xf32> to vector<16x32xbf16>
    %c0_9 = arith.constant 0 : index
    %c0_10 = arith.constant 0 : index
    %25 = vector.load %arg4[%c0_9, %c0_10] : memref<32x128xbf16, #tpu.memory_space<vmem>>, vector<32x128xbf16>
    %cst_11 = arith.constant dense<0.000000e+00> : vector<16x128xf32>
    %26 = tpu.matmul %24, %25, %cst_11 {dimension_numbers = #tpu.dot_dimension_numbers<[1], [0], [0], [1], [0, 0, 1, 1], [], []>} : vector<16x32xbf16>, vector<32x128xbf16>, vector<16x128xf32> -> vector<16x128xf32>
    %c0_12 = arith.constant 0 : index
    %c0_13 = arith.constant 0 : index
    %27 = vector.load %arg5[%c0_12, %c0_13] : memref<1x128xf32, #tpu.memory_space<vmem>>, vector<1x128xf32>
    %28 = vector.broadcast %27 : vector<1x128xf32> to vector<16x128xf32>
    %29 = arith.addf %26, %28 : vector<16x128xf32>
    %30 = tpu.iota {dimensions = array<i32: 1>} : vector<16x128xi32>
    %c12_i32 = arith.constant 12 : i32
    %31 = vector.broadcast %c12_i32 : i32 to vector<16x128xi32>
    %32 = arith.cmpi slt, %30, %31 : vector<16x128xi32>
    %c12_i32_14 = arith.constant 12 : i32
    %33 = vector.broadcast %c12_i32_14 : i32 to vector<16x128xi32>
    %34 = arith.cmpi sge, %30, %33 : vector<16x128xi32>
    %c20_i32 = arith.constant 20 : i32
    %35 = vector.broadcast %c20_i32 : i32 to vector<16x128xi32>
    %36 = arith.cmpi slt, %30, %35 : vector<16x128xi32>
    %37 = arith.andi %34, %36 : vector<16x128xi1>
    %cst_15 = arith.constant -3.40282347E+38 : f32
    %38 = vector.broadcast %cst_15 : f32 to vector<16x128xf32>
    %39 = arith.select %32, %29, %38 : vector<16x128xi1>, vector<16x128xf32>
    %cst_16 = arith.constant dense<0xFF800000> : vector<16xf32>
    %40 = vector.multi_reduction <maximumf>, %39, %cst_16 [1] : vector<16x128xf32> to vector<16xf32>
    %41 = vector.shape_cast %40 : vector<16xf32> to vector<16x1xf32>
    %cst_17 = arith.constant -3.40282347E+38 : f32
    %42 = vector.broadcast %cst_17 : f32 to vector<16x128xf32>
    %43 = arith.select %37, %29, %42 : vector<16x128xi1>, vector<16x128xf32>
    %cst_18 = arith.constant dense<0xFF800000> : vector<16xf32>
    %44 = vector.multi_reduction <maximumf>, %43, %cst_18 [1] : vector<16x128xf32> to vector<16xf32>
    %45 = vector.shape_cast %44 : vector<16xf32> to vector<16x1xf32>
    %46 = vector.broadcast %41 : vector<16x1xf32> to vector<16x128xf32>
    %47 = arith.subf %29, %46 : vector<16x128xf32>
    %48 = math.exp %47 : vector<16x128xf32>
    %cst_19 = arith.constant 0.000000e+00 : f32
    %49 = vector.broadcast %cst_19 : f32 to vector<16x128xf32>
    %50 = arith.select %32, %48, %49 : vector<16x128xi1>, vector<16x128xf32>
    %51 = vector.broadcast %45 : vector<16x1xf32> to vector<16x128xf32>
    %52 = arith.subf %29, %51 : vector<16x128xf32>
    %53 = math.exp %52 : vector<16x128xf32>
    %cst_20 = arith.constant 0.000000e+00 : f32
    %54 = vector.broadcast %cst_20 : f32 to vector<16x128xf32>
    %55 = arith.select %37, %53, %54 : vector<16x128xi1>, vector<16x128xf32>
    %cst_21 = arith.constant dense<0.000000e+00> : vector<16xf32>
    %56 = vector.multi_reduction <add>, %50, %cst_21 [1] : vector<16x128xf32> to vector<16xf32>
    %57 = vector.shape_cast %56 : vector<16xf32> to vector<16x1xf32>
    %cst_22 = arith.constant dense<0.000000e+00> : vector<16xf32>
    %58 = vector.multi_reduction <add>, %55, %cst_22 [1] : vector<16x128xf32> to vector<16xf32>
    %59 = vector.shape_cast %58 : vector<16xf32> to vector<16x1xf32>
    %cst_23 = arith.constant 1.000000e+00 : f32
    %60 = vector.broadcast %cst_23 : f32 to vector<16x1xf32>
    %61 = arith.divf %60, %57 : vector<16x1xf32>
    %62 = vector.broadcast %61 : vector<16x1xf32> to vector<16x128xf32>
    %63 = arith.mulf %50, %62 : vector<16x128xf32>
    %cst_24 = arith.constant 1.000000e+00 : f32
    %64 = vector.broadcast %cst_24 : f32 to vector<16x1xf32>
    %65 = arith.divf %64, %59 : vector<16x1xf32>
    %66 = vector.broadcast %65 : vector<16x1xf32> to vector<16x128xf32>
    %67 = arith.mulf %55, %66 : vector<16x128xf32>
    %68 = arith.addf %63, %67 : vector<16x128xf32>
    %c0_25 = arith.constant 0 : index
    %c0_26 = arith.constant 0 : index
    %69 = vector.load %arg6[%c0_25, %c0_26] : memref<16x128xf32, #tpu.memory_space<vmem>>, vector<16x128xf32>
    tpu.vector_store %arg6[%c0_25, %c0_26], %68 {strides = array<i32>} : memref<16x128xf32, #tpu.memory_space<vmem>>, vector<16x128xf32>,
    return
  }
  func.func @transform_0(%arg0: i32) -> (i32, i32) {
    %c0_i32 = arith.constant 0 : i32
    %c0_i32_0 = arith.constant 0 : i32
    return %arg0, %c0_i32 : i32, i32
  }
  func.func @transform_1(%arg0: i32) -> (i32, i32) {
    %c0_i32 = arith.constant 0 : i32
    %c0_i32_0 = arith.constant 0 : i32
    %c0_i32_1 = arith.constant 0 : i32
    return %c0_i32, %c0_i32_0 : i32, i32
  }
  func.func @transform_2(%arg0: i32) -> (i32, i32) {
    %c0_i32 = arith.constant 0 : i32
    %c0_i32_0 = arith.constant 0 : i32
    %c0_i32_1 = arith.constant 0 : i32
    return %c0_i32, %c0_i32_0 : i32, i32
  }
  func.func @transform_3(%arg0: i32) -> (i32, i32) {
    %c0_i32 = arith.constant 0 : i32
    %c0_i32_0 = arith.constant 0 : i32
    %c0_i32_1 = arith.constant 0 : i32
    return %c0_i32, %c0_i32_0 : i32, i32
  }
  func.func @transform_4(%arg0: i32) -> (i32, i32) {
    %c0_i32 = arith.constant 0 : i32
    %c0_i32_0 = arith.constant 0 : i32
    %c0_i32_1 = arith.constant 0 : i32
    return %c0_i32, %c0_i32_0 : i32, i32
  }
  func.func @transform_5(%arg0: i32) -> (i32, i32) {
    %c0_i32 = arith.constant 0 : i32
    %c0_i32_0 = arith.constant 0 : i32
    return %arg0, %c0_i32 : i32, i32
  }
}

module attributes {stable_mosaic.version = 11 : i64} {
  func.func @_decoder_layer_kernel(%arg0: i32, %arg1: memref<1x8x32xbf16, #tpu.memory_space<vmem>>, %arg2: memref<1x8x32xbf16, #tpu.memory_space<vmem>>, %arg3: memref<1x1x8xi32, #tpu.memory_space<vmem>>, %arg4: memref<1x1x8xi32, #tpu.memory_space<vmem>>, %arg5: memref<1x32xf32, #tpu.memory_space<vmem>>, %arg6: memref<1x32xf32, #tpu.memory_space<vmem>>, %arg7: memref<32x32xbf16, #tpu.memory_space<vmem>>, %arg8: memref<32x32xbf16, #tpu.memory_space<vmem>>, %arg9: memref<32x32xbf16, #tpu.memory_space<vmem>>, %arg10: memref<32x32xbf16, #tpu.memory_space<vmem>>, %arg11: memref<1x32xf32, #tpu.memory_space<vmem>>, %arg12: memref<1x32xf32, #tpu.memory_space<vmem>>, %arg13: memref<1x32xf32, #tpu.memory_space<vmem>>, %arg14: memref<32x32xbf16, #tpu.memory_space<vmem>>, %arg15: memref<32x32xbf16, #tpu.memory_space<vmem>>, %arg16: memref<32x32xbf16, #tpu.memory_space<vmem>>, %arg17: memref<32x32xbf16, #tpu.memory_space<vmem>>, %arg18: memref<1x32xf32, #tpu.memory_space<vmem>>, %arg19: memref<1x32xf32, #tpu.memory_space<vmem>>, %arg20: memref<1x32xf32, #tpu.memory_space<vmem>>, %arg21: memref<32x128xbf16, #tpu.memory_space<vmem>>, %arg22: memref<1x128xf32, #tpu.memory_space<vmem>>, %arg23: memref<128x32xbf16, #tpu.memory_space<vmem>>, %arg24: memref<1x32xf32, #tpu.memory_space<vmem>>, %arg25: memref<1x8x32xbf16, #tpu.memory_space<vmem>>) attributes {dimension_semantics = [#tpu.dimension_semantics<parallel>], iteration_bounds = array<i64: 2>, scalar_prefetch = 0 : i64, scratch_operands = 0 : i64, tpu.core_type = #tpu.core_type<tc>, window_params = [{transform_indices = @transform_0, window_bounds = array<i64: 1, 8, 32>}, {transform_indices = @transform_1, window_bounds = array<i64: 1, 8, 32>}, {transform_indices = @transform_2, window_bounds = array<i64: 1, 1, 8>}, {transform_indices = @transform_3, window_bounds = array<i64: 1, 1, 8>}, {pipeline_mode = #tpu.pipeline_mode<synchronous>, transform_indices = @transform_4, window_bounds = array<i64: 1, 32>}, {pipeline_mode = #tpu.pipeline_mode<synchronous>, transform_indices = @transform_5, window_bounds = array<i64: 1, 32>}, {pipeline_mode = #tpu.pipeline_mode<synchronous>, transform_indices = @transform_6, window_bounds = array<i64: 32, 32>}, {pipeline_mode = #tpu.pipeline_mode<synchronous>, transform_indices = @transform_7, window_bounds = array<i64: 32, 32>}, {pipeline_mode = #tpu.pipeline_mode<synchronous>, transform_indices = @transform_8, window_bounds = array<i64: 32, 32>}, {pipeline_mode = #tpu.pipeline_mode<synchronous>, transform_indices = @transform_9, window_bounds = array<i64: 32, 32>}, {pipeline_mode = #tpu.pipeline_mode<synchronous>, transform_indices = @transform_10, window_bounds = array<i64: 1, 32>}, {pipeline_mode = #tpu.pipeline_mode<synchronous>, transform_indices = @transform_11, window_bounds = array<i64: 1, 32>}, {pipeline_mode = #tpu.pipeline_mode<synchronous>, transform_indices = @transform_12, window_bounds = array<i64: 1, 32>}, {pipeline_mode = #tpu.pipeline_mode<synchronous>, transform_indices = @transform_13, window_bounds = array<i64: 32, 32>}, {pipeline_mode = #tpu.pipeline_mode<synchronous>, transform_indices = @transform_14, window_bounds = array<i64: 32, 32>}, {pipeline_mode = #tpu.pipeline_mode<synchronous>, transform_indices = @transform_15, window_bounds = array<i64: 32, 32>}, {pipeline_mode = #tpu.pipeline_mode<synchronous>, transform_indices = @transform_16, window_bounds = array<i64: 32, 32>}, {pipeline_mode = #tpu.pipeline_mode<synchronous>, transform_indices = @transform_17, window_bounds = array<i64: 1, 32>}, {pipeline_mode = #tpu.pipeline_mode<synchronous>, transform_indices = @transform_18, window_bounds = array<i64: 1, 32>}, {pipeline_mode = #tpu.pipeline_mode<synchronous>, transform_indices = @transform_19, window_bounds = array<i64: 1, 32>}, {pipeline_mode = #tpu.pipeline_mode<synchronous>, transform_indices = @transform_20, window_bounds = array<i64: 32, 128>}, {pipeline_mode = #tpu.pipeline_mode<synchronous>, transform_indices = @transform_21, window_bounds = array<i64: 1, 128>}, {pipeline_mode = #tpu.pipeline_mode<synchronous>, transform_indices = @transform_22, window_bounds = array<i64: 128, 32>}, {pipeline_mode = #tpu.pipeline_mode<synchronous>, transform_indices = @transform_23, window_bounds = array<i64: 1, 32>}, {transform_indices = @transform_24, window_bounds = array<i64: 1, 8, 32>}]} {
    %c0 = arith.constant 0 : index
    %c0_0 = arith.constant 0 : index
    %c0_1 = arith.constant 0 : index
    %0 = vector.load %arg1[%c0, %c0_0, %c0_1] : memref<1x8x32xbf16, #tpu.memory_space<vmem>>, vector<1x8x32xbf16>
    %1 = arith.extf %0 : vector<1x8x32xbf16> to vector<1x8x32xf32>
    %2 = vector.shape_cast %1 : vector<1x8x32xf32> to vector<8x32xf32>
    %c0_2 = arith.constant 0 : index
    %c0_3 = arith.constant 0 : index
    %c0_4 = arith.constant 0 : index
    %3 = vector.load %arg2[%c0_2, %c0_3, %c0_4] : memref<1x8x32xbf16, #tpu.memory_space<vmem>>, vector<1x8x32xbf16>
    %4 = vector.shape_cast %3 : vector<1x8x32xbf16> to vector<8x32xbf16>
    %5 = tpu.iota {dimensions = array<i32: 0>} : vector<8x8xi32>
    %6 = tpu.iota {dimensions = array<i32: 1>} : vector<8x8xi32>
    %7 = arith.cmpi sle, %6, %5 : vector<8x8xi32>
    %c0_5 = arith.constant 0 : index
    %c0_6 = arith.constant 0 : index
    %c0_7 = arith.constant 0 : index
    %8 = vector.load %arg3[%c0_5, %c0_6, %c0_7] : memref<1x1x8xi32, #tpu.memory_space<vmem>>, vector<1x1x8xi32>
    %9 = vector.shape_cast %8 : vector<1x1x8xi32> to vector<1x8xi32>
    %c0_i32 = arith.constant 0 : i32
    %10 = vector.broadcast %c0_i32 : i32 to vector<1x8xi32>
    %11 = arith.cmpi sgt, %9, %10 : vector<1x8xi32>
    %12 = vector.broadcast %11 : vector<1x8xi1> to vector<8x8xi1>
    %13 = arith.andi %7, %12 : vector<8x8xi1>
    %cst = arith.constant 0.000000e+00 : f32
    %cst_8 = arith.constant -1.000000e+09 : f32
    %14 = vector.broadcast %cst : f32 to vector<8x8xf32>
    %15 = vector.broadcast %cst_8 : f32 to vector<8x8xf32>
    %16 = arith.select %13, %14, %15 : vector<8x8xi1>, vector<8x8xf32>
    %c0_9 = arith.constant 0 : index
    %c0_10 = arith.constant 0 : index
    %c0_11 = arith.constant 0 : index
    %17 = vector.load %arg4[%c0_9, %c0_10, %c0_11] : memref<1x1x8xi32, #tpu.memory_space<vmem>>, vector<1x1x8xi32>
    %18 = vector.shape_cast %17 : vector<1x1x8xi32> to vector<1x8xi32>
    %c0_i32_12 = arith.constant 0 : i32
    %19 = vector.broadcast %c0_i32_12 : i32 to vector<1x8xi32>
    %20 = arith.cmpi sgt, %18, %19 : vector<1x8xi32>
    %cst_13 = arith.constant 0.000000e+00 : f32
    %cst_14 = arith.constant -1.000000e+09 : f32
    %21 = vector.broadcast %cst_13 : f32 to vector<1x8xf32>
    %22 = vector.broadcast %cst_14 : f32 to vector<1x8xf32>
    %23 = arith.select %20, %21, %22 : vector<1x8xi1>, vector<1x8xf32>
    %c0_15 = arith.constant 0 : index
    %c0_16 = arith.constant 0 : index
    %24 = vector.load %arg5[%c0_15, %c0_16] : memref<1x32xf32, #tpu.memory_space<vmem>>, vector<1x32xf32>
    %c0_17 = arith.constant 0 : index
    %c0_18 = arith.constant 0 : index
    %25 = vector.load %arg6[%c0_17, %c0_18] : memref<1x32xf32, #tpu.memory_space<vmem>>, vector<1x32xf32>
    %cst_19 = arith.constant dense<0.000000e+00> : vector<8xf32>
    %26 = vector.multi_reduction <add>, %2, %cst_19 [1] : vector<8x32xf32> to vector<8xf32>
    %27 = vector.shape_cast %26 : vector<8xf32> to vector<8x1xf32>
    %cst_20 = arith.constant 3.200000e+01 : f32
    %28 = vector.broadcast %cst_20 : f32 to vector<8x1xf32>
    %29 = arith.divf %27, %28 : vector<8x1xf32>
    %30 = vector.broadcast %29 : vector<8x1xf32> to vector<8x32xf32>
    %31 = arith.subf %2, %30 : vector<8x32xf32>
    %32 = arith.mulf %31, %31 : vector<8x32xf32>
    %cst_21 = arith.constant dense<0.000000e+00> : vector<8xf32>
    %33 = vector.multi_reduction <add>, %32, %cst_21 [1] : vector<8x32xf32> to vector<8xf32>
    %34 = vector.shape_cast %33 : vector<8xf32> to vector<8x1xf32>
    %cst_22 = arith.constant 3.200000e+01 : f32
    %35 = vector.broadcast %cst_22 : f32 to vector<8x1xf32>
    %36 = arith.divf %34, %35 : vector<8x1xf32>
    %cst_23 = arith.constant 9.99999974E-6 : f32
    %37 = vector.broadcast %cst_23 : f32 to vector<8x1xf32>
    %38 = arith.addf %36, %37 : vector<8x1xf32>
    %39 = math.rsqrt %38 : vector<8x1xf32>
    %40 = vector.broadcast %39 : vector<8x1xf32> to vector<8x32xf32>
    %41 = arith.mulf %31, %40 : vector<8x32xf32>
    %42 = vector.broadcast %24 : vector<1x32xf32> to vector<8x32xf32>
    %43 = arith.mulf %41, %42 : vector<8x32xf32>
    %44 = vector.broadcast %25 : vector<1x32xf32> to vector<8x32xf32>
    %45 = arith.addf %43, %44 : vector<8x32xf32>
    %46 = arith.truncf %45 : vector<8x32xf32> to vector<8x32xbf16>
    %c0_24 = arith.constant 0 : index
    %c0_25 = arith.constant 0 : index
    %47 = vector.load %arg7[%c0_24, %c0_25] : memref<32x32xbf16, #tpu.memory_space<vmem>>, vector<32x32xbf16>
    %c0_26 = arith.constant 0 : index
    %c0_27 = arith.constant 0 : index
    %48 = vector.load %arg8[%c0_26, %c0_27] : memref<32x32xbf16, #tpu.memory_space<vmem>>, vector<32x32xbf16>
    %c0_28 = arith.constant 0 : index
    %c0_29 = arith.constant 0 : index
    %49 = vector.load %arg9[%c0_28, %c0_29] : memref<32x32xbf16, #tpu.memory_space<vmem>>, vector<32x32xbf16>
    %c0_30 = arith.constant 0 : index
    %c0_31 = arith.constant 0 : index
    %50 = vector.load %arg10[%c0_30, %c0_31] : memref<32x32xbf16, #tpu.memory_space<vmem>>, vector<32x32xbf16>
    %c0_32 = arith.constant 0 : index
    %c0_33 = arith.constant 0 : index
    %51 = vector.load %arg11[%c0_32, %c0_33] : memref<1x32xf32, #tpu.memory_space<vmem>>, vector<1x32xf32>
    %cst_34 = arith.constant dense<0.000000e+00> : vector<8x32xf32>
    %52 = tpu.matmul %46, %47, %cst_34 {dimension_numbers = #tpu.dot_dimension_numbers<[1], [0], [0], [1], [0, 0, 1, 1], [], []>} : vector<8x32xbf16>, vector<32x32xbf16>, vector<8x32xf32> -> vector<8x32xf32>
    %cst_35 = arith.constant 0.353553385 : f32
    %53 = vector.broadcast %cst_35 : f32 to vector<8x32xf32>
    %54 = arith.mulf %52, %53 : vector<8x32xf32>
    %55 = arith.truncf %54 : vector<8x32xf32> to vector<8x32xbf16>
    %cst_36 = arith.constant dense<0.000000e+00> : vector<8x32xf32>
    %56 = tpu.matmul %46, %48, %cst_36 {dimension_numbers = #tpu.dot_dimension_numbers<[1], [0], [0], [1], [0, 0, 1, 1], [], []>} : vector<8x32xbf16>, vector<32x32xbf16>, vector<8x32xf32> -> vector<8x32xf32>
    %57 = arith.truncf %56 : vector<8x32xf32> to vector<8x32xbf16>
    %cst_37 = arith.constant dense<0.000000e+00> : vector<8x32xf32>
    %58 = tpu.matmul %46, %49, %cst_37 {dimension_numbers = #tpu.dot_dimension_numbers<[1], [0], [0], [1], [0, 0, 1, 1], [], []>} : vector<8x32xbf16>, vector<32x32xbf16>, vector<8x32xf32> -> vector<8x32xf32>
    %59 = arith.truncf %58 : vector<8x32xf32> to vector<8x32xbf16>
    %60 = vector.extract_strided_slice %55 {offsets = [0, 0], sizes = [8, 8], strides = [1, 1]} : vector<8x32xbf16> to vector<8x8xbf16>
    %61 = vector.extract_strided_slice %57 {offsets = [0, 0], sizes = [8, 8], strides = [1, 1]} : vector<8x32xbf16> to vector<8x8xbf16>
    %62 = vector.extract_strided_slice %59 {offsets = [0, 0], sizes = [8, 8], strides = [1, 1]} : vector<8x32xbf16> to vector<8x8xbf16>
    %cst_38 = arith.constant dense<0.000000e+00> : vector<8x8xf32>
    %63 = tpu.matmul %60, %61, %cst_38 {dimension_numbers = #tpu.dot_dimension_numbers<[1], [1], [0], [0], [0, 0, 1, 0], [], []>} : vector<8x8xbf16>, vector<8x8xbf16>, vector<8x8xf32> -> vector<8x8xf32>
    %64 = arith.addf %63, %16 : vector<8x8xf32>
    %cst_39 = arith.constant dense<0xFF800000> : vector<8xf32>
    %65 = vector.multi_reduction <maximumf>, %64, %cst_39 [1] : vector<8x8xf32> to vector<8xf32>
    %66 = vector.shape_cast %65 : vector<8xf32> to vector<8x1xf32>
    %67 = vector.broadcast %66 : vector<8x1xf32> to vector<8x8xf32>
    %68 = arith.subf %64, %67 : vector<8x8xf32>
    %69 = math.exp %68 : vector<8x8xf32>
    %cst_40 = arith.constant dense<0.000000e+00> : vector<8xf32>
    %70 = vector.multi_reduction <add>, %69, %cst_40 [1] : vector<8x8xf32> to vector<8xf32>
    %71 = vector.shape_cast %70 : vector<8xf32> to vector<8x1xf32>
    %72 = tpu.reciprocal %71 {approx = true} : vector<8x1xf32> -> vector<8x1xf32>
    %73 = vector.broadcast %72 : vector<8x1xf32> to vector<8x8xf32>
    %74 = arith.mulf %69, %73 : vector<8x8xf32>
    %75 = arith.truncf %74 : vector<8x8xf32> to vector<8x8xbf16>
    %cst_41 = arith.constant dense<0.000000e+00> : vector<8x8xf32>
    %76 = tpu.matmul %75, %62, %cst_41 {dimension_numbers = #tpu.dot_dimension_numbers<[1], [0], [0], [1], [0, 0, 1, 1], [], []>} : vector<8x8xbf16>, vector<8x8xbf16>, vector<8x8xf32> -> vector<8x8xf32>
    %77 = vector.extract_strided_slice %55 {offsets = [0, 8], sizes = [8, 8], strides = [1, 1]} : vector<8x32xbf16> to vector<8x8xbf16>
    %78 = vector.extract_strided_slice %57 {offsets = [0, 8], sizes = [8, 8], strides = [1, 1]} : vector<8x32xbf16> to vector<8x8xbf16>
    %79 = vector.extract_strided_slice %59 {offsets = [0, 8], sizes = [8, 8], strides = [1, 1]} : vector<8x32xbf16> to vector<8x8xbf16>
    %cst_42 = arith.constant dense<0.000000e+00> : vector<8x8xf32>
    %80 = tpu.matmul %77, %78, %cst_42 {dimension_numbers = #tpu.dot_dimension_numbers<[1], [1], [0], [0], [0, 0, 1, 0], [], []>} : vector<8x8xbf16>, vector<8x8xbf16>, vector<8x8xf32> -> vector<8x8xf32>
    %81 = arith.addf %80, %16 : vector<8x8xf32>
    %cst_43 = arith.constant dense<0xFF800000> : vector<8xf32>
    %82 = vector.multi_reduction <maximumf>, %81, %cst_43 [1] : vector<8x8xf32> to vector<8xf32>
    %83 = vector.shape_cast %82 : vector<8xf32> to vector<8x1xf32>
    %84 = vector.broadcast %83 : vector<8x1xf32> to vector<8x8xf32>
    %85 = arith.subf %81, %84 : vector<8x8xf32>
    %86 = math.exp %85 : vector<8x8xf32>
    %cst_44 = arith.constant dense<0.000000e+00> : vector<8xf32>
    %87 = vector.multi_reduction <add>, %86, %cst_44 [1] : vector<8x8xf32> to vector<8xf32>
    %88 = vector.shape_cast %87 : vector<8xf32> to vector<8x1xf32>
    %89 = tpu.reciprocal %88 {approx = true} : vector<8x1xf32> -> vector<8x1xf32>
    %90 = vector.broadcast %89 : vector<8x1xf32> to vector<8x8xf32>
    %91 = arith.mulf %86, %90 : vector<8x8xf32>
    %92 = arith.truncf %91 : vector<8x8xf32> to vector<8x8xbf16>
    %cst_45 = arith.constant dense<0.000000e+00> : vector<8x8xf32>
    %93 = tpu.matmul %92, %79, %cst_45 {dimension_numbers = #tpu.dot_dimension_numbers<[1], [0], [0], [1], [0, 0, 1, 1], [], []>} : vector<8x8xbf16>, vector<8x8xbf16>, vector<8x8xf32> -> vector<8x8xf32>
    %94 = vector.extract_strided_slice %55 {offsets = [0, 16], sizes = [8, 8], strides = [1, 1]} : vector<8x32xbf16> to vector<8x8xbf16>
    %95 = vector.extract_strided_slice %57 {offsets = [0, 16], sizes = [8, 8], strides = [1, 1]} : vector<8x32xbf16> to vector<8x8xbf16>
    %96 = vector.extract_strided_slice %59 {offsets = [0, 16], sizes = [8, 8], strides = [1, 1]} : vector<8x32xbf16> to vector<8x8xbf16>
    %cst_46 = arith.constant dense<0.000000e+00> : vector<8x8xf32>
    %97 = tpu.matmul %94, %95, %cst_46 {dimension_numbers = #tpu.dot_dimension_numbers<[1], [1], [0], [0], [0, 0, 1, 0], [], []>} : vector<8x8xbf16>, vector<8x8xbf16>, vector<8x8xf32> -> vector<8x8xf32>
    %98 = arith.addf %97, %16 : vector<8x8xf32>
    %cst_47 = arith.constant dense<0xFF800000> : vector<8xf32>
    %99 = vector.multi_reduction <maximumf>, %98, %cst_47 [1] : vector<8x8xf32> to vector<8xf32>
    %100 = vector.shape_cast %99 : vector<8xf32> to vector<8x1xf32>
    %101 = vector.broadcast %100 : vector<8x1xf32> to vector<8x8xf32>
    %102 = arith.subf %98, %101 : vector<8x8xf32>
    %103 = math.exp %102 : vector<8x8xf32>
    %cst_48 = arith.constant dense<0.000000e+00> : vector<8xf32>
    %104 = vector.multi_reduction <add>, %103, %cst_48 [1] : vector<8x8xf32> to vector<8xf32>
    %105 = vector.shape_cast %104 : vector<8xf32> to vector<8x1xf32>
    %106 = tpu.reciprocal %105 {approx = true} : vector<8x1xf32> -> vector<8x1xf32>
    %107 = vector.broadcast %106 : vector<8x1xf32> to vector<8x8xf32>
    %108 = arith.mulf %103, %107 : vector<8x8xf32>
    %109 = arith.truncf %108 : vector<8x8xf32> to vector<8x8xbf16>
    %cst_49 = arith.constant dense<0.000000e+00> : vector<8x8xf32>
    %110 = tpu.matmul %109, %96, %cst_49 {dimension_numbers = #tpu.dot_dimension_numbers<[1], [0], [0], [1], [0, 0, 1, 1], [], []>} : vector<8x8xbf16>, vector<8x8xbf16>, vector<8x8xf32> -> vector<8x8xf32>
    %111 = vector.extract_strided_slice %55 {offsets = [0, 24], sizes = [8, 8], strides = [1, 1]} : vector<8x32xbf16> to vector<8x8xbf16>
    %112 = vector.extract_strided_slice %57 {offsets = [0, 24], sizes = [8, 8], strides = [1, 1]} : vector<8x32xbf16> to vector<8x8xbf16>
    %113 = vector.extract_strided_slice %59 {offsets = [0, 24], sizes = [8, 8], strides = [1, 1]} : vector<8x32xbf16> to vector<8x8xbf16>
    %cst_50 = arith.constant dense<0.000000e+00> : vector<8x8xf32>
    %114 = tpu.matmul %111, %112, %cst_50 {dimension_numbers = #tpu.dot_dimension_numbers<[1], [1], [0], [0], [0, 0, 1, 0], [], []>} : vector<8x8xbf16>, vector<8x8xbf16>, vector<8x8xf32> -> vector<8x8xf32>
    %115 = arith.addf %114, %16 : vector<8x8xf32>
    %cst_51 = arith.constant dense<0xFF800000> : vector<8xf32>
    %116 = vector.multi_reduction <maximumf>, %115, %cst_51 [1] : vector<8x8xf32> to vector<8xf32>
    %117 = vector.shape_cast %116 : vector<8xf32> to vector<8x1xf32>
    %118 = vector.broadcast %117 : vector<8x1xf32> to vector<8x8xf32>
    %119 = arith.subf %115, %118 : vector<8x8xf32>
    %120 = math.exp %119 : vector<8x8xf32>
    %cst_52 = arith.constant dense<0.000000e+00> : vector<8xf32>
    %121 = vector.multi_reduction <add>, %120, %cst_52 [1] : vector<8x8xf32> to vector<8xf32>
    %122 = vector.shape_cast %121 : vector<8xf32> to vector<8x1xf32>
    %123 = tpu.reciprocal %122 {approx = true} : vector<8x1xf32> -> vector<8x1xf32>
    %124 = vector.broadcast %123 : vector<8x1xf32> to vector<8x8xf32>
    %125 = arith.mulf %120, %124 : vector<8x8xf32>
    %126 = arith.truncf %125 : vector<8x8xf32> to vector<8x8xbf16>
    %cst_53 = arith.constant dense<0.000000e+00> : vector<8x8xf32>
    %127 = tpu.matmul %126, %113, %cst_53 {dimension_numbers = #tpu.dot_dimension_numbers<[1], [0], [0], [1], [0, 0, 1, 1], [], []>} : vector<8x8xbf16>, vector<8x8xbf16>, vector<8x8xf32> -> vector<8x8xf32>
    %128 = tpu.concatenate %76, %93, %110, %127 in 1 : vector<8x8xf32>, vector<8x8xf32>, vector<8x8xf32>, vector<8x8xf32> -> vector<8x32xf32>
    %129 = arith.truncf %128 : vector<8x32xf32> to vector<8x32xbf16>
    %cst_54 = arith.constant dense<0.000000e+00> : vector<8x32xf32>
    %130 = tpu.matmul %129, %50, %cst_54 {dimension_numbers = #tpu.dot_dimension_numbers<[1], [0], [0], [1], [0, 0, 1, 1], [], []>} : vector<8x32xbf16>, vector<32x32xbf16>, vector<8x32xf32> -> vector<8x32xf32>
    %131 = vector.broadcast %51 : vector<1x32xf32> to vector<8x32xf32>
    %132 = arith.addf %130, %131 : vector<8x32xf32>
    %133 = arith.addf %2, %132 : vector<8x32xf32>
    %c0_55 = arith.constant 0 : index
    %c0_56 = arith.constant 0 : index
    %134 = vector.load %arg12[%c0_55, %c0_56] : memref<1x32xf32, #tpu.memory_space<vmem>>, vector<1x32xf32>
    %c0_57 = arith.constant 0 : index
    %c0_58 = arith.constant 0 : index
    %135 = vector.load %arg13[%c0_57, %c0_58] : memref<1x32xf32, #tpu.memory_space<vmem>>, vector<1x32xf32>
    %cst_59 = arith.constant dense<0.000000e+00> : vector<8xf32>
    %136 = vector.multi_reduction <add>, %133, %cst_59 [1] : vector<8x32xf32> to vector<8xf32>
    %137 = vector.shape_cast %136 : vector<8xf32> to vector<8x1xf32>
    %cst_60 = arith.constant 3.200000e+01 : f32
    %138 = vector.broadcast %cst_60 : f32 to vector<8x1xf32>
    %139 = arith.divf %137, %138 : vector<8x1xf32>
    %140 = vector.broadcast %139 : vector<8x1xf32> to vector<8x32xf32>
    %141 = arith.subf %133, %140 : vector<8x32xf32>
    %142 = arith.mulf %141, %141 : vector<8x32xf32>
    %cst_61 = arith.constant dense<0.000000e+00> : vector<8xf32>
    %143 = vector.multi_reduction <add>, %142, %cst_61 [1] : vector<8x32xf32> to vector<8xf32>
    %144 = vector.shape_cast %143 : vector<8xf32> to vector<8x1xf32>
    %cst_62 = arith.constant 3.200000e+01 : f32
    %145 = vector.broadcast %cst_62 : f32 to vector<8x1xf32>
    %146 = arith.divf %144, %145 : vector<8x1xf32>
    %cst_63 = arith.constant 9.99999974E-6 : f32
    %147 = vector.broadcast %cst_63 : f32 to vector<8x1xf32>
    %148 = arith.addf %146, %147 : vector<8x1xf32>
    %149 = math.rsqrt %148 : vector<8x1xf32>
    %150 = vector.broadcast %149 : vector<8x1xf32> to vector<8x32xf32>
    %151 = arith.mulf %141, %150 : vector<8x32xf32>
    %152 = vector.broadcast %134 : vector<1x32xf32> to vector<8x32xf32>
    %153 = arith.mulf %151, %152 : vector<8x32xf32>
    %154 = vector.broadcast %135 : vector<1x32xf32> to vector<8x32xf32>
    %155 = arith.addf %153, %154 : vector<8x32xf32>
    %156 = arith.truncf %155 : vector<8x32xf32> to vector<8x32xbf16>
    %c0_64 = arith.constant 0 : index
    %c0_65 = arith.constant 0 : index
    %157 = vector.load %arg14[%c0_64, %c0_65] : memref<32x32xbf16, #tpu.memory_space<vmem>>, vector<32x32xbf16>
    %c0_66 = arith.constant 0 : index
    %c0_67 = arith.constant 0 : index
    %158 = vector.load %arg15[%c0_66, %c0_67] : memref<32x32xbf16, #tpu.memory_space<vmem>>, vector<32x32xbf16>
    %c0_68 = arith.constant 0 : index
    %c0_69 = arith.constant 0 : index
    %159 = vector.load %arg16[%c0_68, %c0_69] : memref<32x32xbf16, #tpu.memory_space<vmem>>, vector<32x32xbf16>
    %c0_70 = arith.constant 0 : index
    %c0_71 = arith.constant 0 : index
    %160 = vector.load %arg17[%c0_70, %c0_71] : memref<32x32xbf16, #tpu.memory_space<vmem>>, vector<32x32xbf16>
    %c0_72 = arith.constant 0 : index
    %c0_73 = arith.constant 0 : index
    %161 = vector.load %arg18[%c0_72, %c0_73] : memref<1x32xf32, #tpu.memory_space<vmem>>, vector<1x32xf32>
    %cst_74 = arith.constant dense<0.000000e+00> : vector<8x32xf32>
    %162 = tpu.matmul %156, %157, %cst_74 {dimension_numbers = #tpu.dot_dimension_numbers<[1], [0], [0], [1], [0, 0, 1, 1], [], []>} : vector<8x32xbf16>, vector<32x32xbf16>, vector<8x32xf32> -> vector<8x32xf32>
    %cst_75 = arith.constant 0.353553385 : f32
    %163 = vector.broadcast %cst_75 : f32 to vector<8x32xf32>
    %164 = arith.mulf %162, %163 : vector<8x32xf32>
    %165 = arith.truncf %164 : vector<8x32xf32> to vector<8x32xbf16>
    %cst_76 = arith.constant dense<0.000000e+00> : vector<8x32xf32>
    %166 = tpu.matmul %4, %158, %cst_76 {dimension_numbers = #tpu.dot_dimension_numbers<[1], [0], [0], [1], [0, 0, 1, 1], [], []>} : vector<8x32xbf16>, vector<32x32xbf16>, vector<8x32xf32> -> vector<8x32xf32>
    %167 = arith.truncf %166 : vector<8x32xf32> to vector<8x32xbf16>
    %cst_77 = arith.constant dense<0.000000e+00> : vector<8x32xf32>
    %168 = tpu.matmul %4, %159, %cst_77 {dimension_numbers = #tpu.dot_dimension_numbers<[1], [0], [0], [1], [0, 0, 1, 1], [], []>} : vector<8x32xbf16>, vector<32x32xbf16>, vector<8x32xf32> -> vector<8x32xf32>
    %169 = arith.truncf %168 : vector<8x32xf32> to vector<8x32xbf16>
    %170 = vector.extract_strided_slice %165 {offsets = [0, 0], sizes = [8, 8], strides = [1, 1]} : vector<8x32xbf16> to vector<8x8xbf16>
    %171 = vector.extract_strided_slice %167 {offsets = [0, 0], sizes = [8, 8], strides = [1, 1]} : vector<8x32xbf16> to vector<8x8xbf16>
    %172 = vector.extract_strided_slice %169 {offsets = [0, 0], sizes = [8, 8], strides = [1, 1]} : vector<8x32xbf16> to vector<8x8xbf16>
    %cst_78 = arith.constant dense<0.000000e+00> : vector<8x8xf32>
    %173 = tpu.matmul %170, %171, %cst_78 {dimension_numbers = #tpu.dot_dimension_numbers<[1], [1], [0], [0], [0, 0, 1, 0], [], []>} : vector<8x8xbf16>, vector<8x8xbf16>, vector<8x8xf32> -> vector<8x8xf32>
    %174 = vector.broadcast %23 : vector<1x8xf32> to vector<8x8xf32>
    %175 = arith.addf %173, %174 : vector<8x8xf32>
    %cst_79 = arith.constant dense<0xFF800000> : vector<8xf32>
    %176 = vector.multi_reduction <maximumf>, %175, %cst_79 [1] : vector<8x8xf32> to vector<8xf32>
    %177 = vector.shape_cast %176 : vector<8xf32> to vector<8x1xf32>
    %178 = vector.broadcast %177 : vector<8x1xf32> to vector<8x8xf32>
    %179 = arith.subf %175, %178 : vector<8x8xf32>
    %180 = math.exp %179 : vector<8x8xf32>
    %cst_80 = arith.constant dense<0.000000e+00> : vector<8xf32>
    %181 = vector.multi_reduction <add>, %180, %cst_80 [1] : vector<8x8xf32> to vector<8xf32>
    %182 = vector.shape_cast %181 : vector<8xf32> to vector<8x1xf32>
    %183 = tpu.reciprocal %182 {approx = true} : vector<8x1xf32> -> vector<8x1xf32>
    %184 = vector.broadcast %183 : vector<8x1xf32> to vector<8x8xf32>
    %185 = arith.mulf %180, %184 : vector<8x8xf32>
    %186 = arith.truncf %185 : vector<8x8xf32> to vector<8x8xbf16>
    %cst_81 = arith.constant dense<0.000000e+00> : vector<8x8xf32>
    %187 = tpu.matmul %186, %172, %cst_81 {dimension_numbers = #tpu.dot_dimension_numbers<[1], [0], [0], [1], [0, 0, 1, 1], [], []>} : vector<8x8xbf16>, vector<8x8xbf16>, vector<8x8xf32> -> vector<8x8xf32>
    %188 = vector.extract_strided_slice %165 {offsets = [0, 8], sizes = [8, 8], strides = [1, 1]} : vector<8x32xbf16> to vector<8x8xbf16>
    %189 = vector.extract_strided_slice %167 {offsets = [0, 8], sizes = [8, 8], strides = [1, 1]} : vector<8x32xbf16> to vector<8x8xbf16>
    %190 = vector.extract_strided_slice %169 {offsets = [0, 8], sizes = [8, 8], strides = [1, 1]} : vector<8x32xbf16> to vector<8x8xbf16>
    %cst_82 = arith.constant dense<0.000000e+00> : vector<8x8xf32>
    %191 = tpu.matmul %188, %189, %cst_82 {dimension_numbers = #tpu.dot_dimension_numbers<[1], [1], [0], [0], [0, 0, 1, 0], [], []>} : vector<8x8xbf16>, vector<8x8xbf16>, vector<8x8xf32> -> vector<8x8xf32>
    %192 = vector.broadcast %23 : vector<1x8xf32> to vector<8x8xf32>
    %193 = arith.addf %191, %192 : vector<8x8xf32>
    %cst_83 = arith.constant dense<0xFF800000> : vector<8xf32>
    %194 = vector.multi_reduction <maximumf>, %193, %cst_83 [1] : vector<8x8xf32> to vector<8xf32>
    %195 = vector.shape_cast %194 : vector<8xf32> to vector<8x1xf32>
    %196 = vector.broadcast %195 : vector<8x1xf32> to vector<8x8xf32>
    %197 = arith.subf %193, %196 : vector<8x8xf32>
    %198 = math.exp %197 : vector<8x8xf32>
    %cst_84 = arith.constant dense<0.000000e+00> : vector<8xf32>
    %199 = vector.multi_reduction <add>, %198, %cst_84 [1] : vector<8x8xf32> to vector<8xf32>
    %200 = vector.shape_cast %199 : vector<8xf32> to vector<8x1xf32>
    %201 = tpu.reciprocal %200 {approx = true} : vector<8x1xf32> -> vector<8x1xf32>
    %202 = vector.broadcast %201 : vector<8x1xf32> to vector<8x8xf32>
    %203 = arith.mulf %198, %202 : vector<8x8xf32>
    %204 = arith.truncf %203 : vector<8x8xf32> to vector<8x8xbf16>
    %cst_85 = arith.constant dense<0.000000e+00> : vector<8x8xf32>
    %205 = tpu.matmul %204, %190, %cst_85 {dimension_numbers = #tpu.dot_dimension_numbers<[1], [0], [0], [1], [0, 0, 1, 1], [], []>} : vector<8x8xbf16>, vector<8x8xbf16>, vector<8x8xf32> -> vector<8x8xf32>
    %206 = vector.extract_strided_slice %165 {offsets = [0, 16], sizes = [8, 8], strides = [1, 1]} : vector<8x32xbf16> to vector<8x8xbf16>
    %207 = vector.extract_strided_slice %167 {offsets = [0, 16], sizes = [8, 8], strides = [1, 1]} : vector<8x32xbf16> to vector<8x8xbf16>
    %208 = vector.extract_strided_slice %169 {offsets = [0, 16], sizes = [8, 8], strides = [1, 1]} : vector<8x32xbf16> to vector<8x8xbf16>
    %cst_86 = arith.constant dense<0.000000e+00> : vector<8x8xf32>
    %209 = tpu.matmul %206, %207, %cst_86 {dimension_numbers = #tpu.dot_dimension_numbers<[1], [1], [0], [0], [0, 0, 1, 0], [], []>} : vector<8x8xbf16>, vector<8x8xbf16>, vector<8x8xf32> -> vector<8x8xf32>
    %210 = vector.broadcast %23 : vector<1x8xf32> to vector<8x8xf32>
    %211 = arith.addf %209, %210 : vector<8x8xf32>
    %cst_87 = arith.constant dense<0xFF800000> : vector<8xf32>
    %212 = vector.multi_reduction <maximumf>, %211, %cst_87 [1] : vector<8x8xf32> to vector<8xf32>
    %213 = vector.shape_cast %212 : vector<8xf32> to vector<8x1xf32>
    %214 = vector.broadcast %213 : vector<8x1xf32> to vector<8x8xf32>
    %215 = arith.subf %211, %214 : vector<8x8xf32>
    %216 = math.exp %215 : vector<8x8xf32>
    %cst_88 = arith.constant dense<0.000000e+00> : vector<8xf32>
    %217 = vector.multi_reduction <add>, %216, %cst_88 [1] : vector<8x8xf32> to vector<8xf32>
    %218 = vector.shape_cast %217 : vector<8xf32> to vector<8x1xf32>
    %219 = tpu.reciprocal %218 {approx = true} : vector<8x1xf32> -> vector<8x1xf32>
    %220 = vector.broadcast %219 : vector<8x1xf32> to vector<8x8xf32>
    %221 = arith.mulf %216, %220 : vector<8x8xf32>
    %222 = arith.truncf %221 : vector<8x8xf32> to vector<8x8xbf16>
    %cst_89 = arith.constant dense<0.000000e+00> : vector<8x8xf32>
    %223 = tpu.matmul %222, %208, %cst_89 {dimension_numbers = #tpu.dot_dimension_numbers<[1], [0], [0], [1], [0, 0, 1, 1], [], []>} : vector<8x8xbf16>, vector<8x8xbf16>, vector<8x8xf32> -> vector<8x8xf32>
    %224 = vector.extract_strided_slice %165 {offsets = [0, 24], sizes = [8, 8], strides = [1, 1]} : vector<8x32xbf16> to vector<8x8xbf16>
    %225 = vector.extract_strided_slice %167 {offsets = [0, 24], sizes = [8, 8], strides = [1, 1]} : vector<8x32xbf16> to vector<8x8xbf16>
    %226 = vector.extract_strided_slice %169 {offsets = [0, 24], sizes = [8, 8], strides = [1, 1]} : vector<8x32xbf16> to vector<8x8xbf16>
    %cst_90 = arith.constant dense<0.000000e+00> : vector<8x8xf32>
    %227 = tpu.matmul %224, %225, %cst_90 {dimension_numbers = #tpu.dot_dimension_numbers<[1], [1], [0], [0], [0, 0, 1, 0], [], []>} : vector<8x8xbf16>, vector<8x8xbf16>, vector<8x8xf32> -> vector<8x8xf32>
    %228 = vector.broadcast %23 : vector<1x8xf32> to vector<8x8xf32>
    %229 = arith.addf %227, %228 : vector<8x8xf32>
    %cst_91 = arith.constant dense<0xFF800000> : vector<8xf32>
    %230 = vector.multi_reduction <maximumf>, %229, %cst_91 [1] : vector<8x8xf32> to vector<8xf32>
    %231 = vector.shape_cast %230 : vector<8xf32> to vector<8x1xf32>
    %232 = vector.broadcast %231 : vector<8x1xf32> to vector<8x8xf32>
    %233 = arith.subf %229, %232 : vector<8x8xf32>
    %234 = math.exp %233 : vector<8x8xf32>
    %cst_92 = arith.constant dense<0.000000e+00> : vector<8xf32>
    %235 = vector.multi_reduction <add>, %234, %cst_92 [1] : vector<8x8xf32> to vector<8xf32>
    %236 = vector.shape_cast %235 : vector<8xf32> to vector<8x1xf32>
    %237 = tpu.reciprocal %236 {approx = true} : vector<8x1xf32> -> vector<8x1xf32>
    %238 = vector.broadcast %237 : vector<8x1xf32> to vector<8x8xf32>
    %239 = arith.mulf %234, %238 : vector<8x8xf32>
    %240 = arith.truncf %239 : vector<8x8xf32> to vector<8x8xbf16>
    %cst_93 = arith.constant dense<0.000000e+00> : vector<8x8xf32>
    %241 = tpu.matmul %240, %226, %cst_93 {dimension_numbers = #tpu.dot_dimension_numbers<[1], [0], [0], [1], [0, 0, 1, 1], [], []>} : vector<8x8xbf16>, vector<8x8xbf16>, vector<8x8xf32> -> vector<8x8xf32>
    %242 = tpu.concatenate %187, %205, %223, %241 in 1 : vector<8x8xf32>, vector<8x8xf32>, vector<8x8xf32>, vector<8x8xf32> -> vector<8x32xf32>
    %243 = arith.truncf %242 : vector<8x32xf32> to vector<8x32xbf16>
    %cst_94 = arith.constant dense<0.000000e+00> : vector<8x32xf32>
    %244 = tpu.matmul %243, %160, %cst_94 {dimension_numbers = #tpu.dot_dimension_numbers<[1], [0], [0], [1], [0, 0, 1, 1], [], []>} : vector<8x32xbf16>, vector<32x32xbf16>, vector<8x32xf32> -> vector<8x32xf32>
    %245 = vector.broadcast %161 : vector<1x32xf32> to vector<8x32xf32>
    %246 = arith.addf %244, %245 : vector<8x32xf32>
    %247 = arith.addf %133, %246 : vector<8x32xf32>
    %c0_95 = arith.constant 0 : index
    %c0_96 = arith.constant 0 : index
    %248 = vector.load %arg19[%c0_95, %c0_96] : memref<1x32xf32, #tpu.memory_space<vmem>>, vector<1x32xf32>
    %c0_97 = arith.constant 0 : index
    %c0_98 = arith.constant 0 : index
    %249 = vector.load %arg20[%c0_97, %c0_98] : memref<1x32xf32, #tpu.memory_space<vmem>>, vector<1x32xf32>
    %cst_99 = arith.constant dense<0.000000e+00> : vector<8xf32>
    %250 = vector.multi_reduction <add>, %247, %cst_99 [1] : vector<8x32xf32> to vector<8xf32>
    %251 = vector.shape_cast %250 : vector<8xf32> to vector<8x1xf32>
    %cst_100 = arith.constant 3.200000e+01 : f32
    %252 = vector.broadcast %cst_100 : f32 to vector<8x1xf32>
    %253 = arith.divf %251, %252 : vector<8x1xf32>
    %254 = vector.broadcast %253 : vector<8x1xf32> to vector<8x32xf32>
    %255 = arith.subf %247, %254 : vector<8x32xf32>
    %256 = arith.mulf %255, %255 : vector<8x32xf32>
    %cst_101 = arith.constant dense<0.000000e+00> : vector<8xf32>
    %257 = vector.multi_reduction <add>, %256, %cst_101 [1] : vector<8x32xf32> to vector<8xf32>
    %258 = vector.shape_cast %257 : vector<8xf32> to vector<8x1xf32>
    %cst_102 = arith.constant 3.200000e+01 : f32
    %259 = vector.broadcast %cst_102 : f32 to vector<8x1xf32>
    %260 = arith.divf %258, %259 : vector<8x1xf32>
    %cst_103 = arith.constant 9.99999974E-6 : f32
    %261 = vector.broadcast %cst_103 : f32 to vector<8x1xf32>
    %262 = arith.addf %260, %261 : vector<8x1xf32>
    %263 = math.rsqrt %262 : vector<8x1xf32>
    %264 = vector.broadcast %263 : vector<8x1xf32> to vector<8x32xf32>
    %265 = arith.mulf %255, %264 : vector<8x32xf32>
    %266 = vector.broadcast %248 : vector<1x32xf32> to vector<8x32xf32>
    %267 = arith.mulf %265, %266 : vector<8x32xf32>
    %268 = vector.broadcast %249 : vector<1x32xf32> to vector<8x32xf32>
    %269 = arith.addf %267, %268 : vector<8x32xf32>
    %270 = arith.truncf %269 : vector<8x32xf32> to vector<8x32xbf16>
    %c0_104 = arith.constant 0 : index
    %c0_105 = arith.constant 0 : index
    %271 = vector.load %arg21[%c0_104, %c0_105] : memref<32x128xbf16, #tpu.memory_space<vmem>>, vector<32x128xbf16>
    %cst_106 = arith.constant dense<0.000000e+00> : vector<8x128xf32>
    %272 = tpu.matmul %270, %271, %cst_106 {dimension_numbers = #tpu.dot_dimension_numbers<[1], [0], [0], [1], [0, 0, 1, 1], [], []>} : vector<8x32xbf16>, vector<32x128xbf16>, vector<8x128xf32> -> vector<8x128xf32>
    %c0_107 = arith.constant 0 : index
    %c0_108 = arith.constant 0 : index
    %273 = vector.load %arg22[%c0_107, %c0_108] : memref<1x128xf32, #tpu.memory_space<vmem>>, vector<1x128xf32>
    %274 = vector.broadcast %273 : vector<1x128xf32> to vector<8x128xf32>
    %275 = arith.addf %272, %274 : vector<8x128xf32>
    %276 = arith.mulf %275, %275 : vector<8x128xf32>
    %277 = arith.mulf %275, %276 : vector<8x128xf32>
    %cst_109 = arith.constant 4.471500e-02 : f32
    %278 = vector.broadcast %cst_109 : f32 to vector<8x128xf32>
    %279 = arith.mulf %278, %277 : vector<8x128xf32>
    %280 = arith.addf %275, %279 : vector<8x128xf32>
    %cst_110 = arith.constant 0.797884583 : f32
    %281 = vector.broadcast %cst_110 : f32 to vector<8x128xf32>
    %282 = arith.mulf %281, %280 : vector<8x128xf32>
    %283 = math.tanh %282 : vector<8x128xf32>
    %cst_111 = arith.constant 1.000000e+00 : f32
    %284 = vector.broadcast %cst_111 : f32 to vector<8x128xf32>
    %285 = arith.addf %284, %283 : vector<8x128xf32>
    %cst_112 = arith.constant 5.000000e-01 : f32
    %286 = vector.broadcast %cst_112 : f32 to vector<8x128xf32>
    %287 = arith.mulf %286, %285 : vector<8x128xf32>
    %288 = arith.mulf %275, %287 : vector<8x128xf32>
    %289 = arith.truncf %288 : vector<8x128xf32> to vector<8x128xbf16>
    %c0_113 = arith.constant 0 : index
    %c0_114 = arith.constant 0 : index
    %290 = vector.load %arg23[%c0_113, %c0_114] : memref<128x32xbf16, #tpu.memory_space<vmem>>, vector<128x32xbf16>
    %cst_115 = arith.constant dense<0.000000e+00> : vector<8x32xf32>
    %291 = tpu.matmul %289, %290, %cst_115 {dimension_numbers = #tpu.dot_dimension_numbers<[1], [0], [0], [1], [0, 0, 1, 1], [], []>} : vector<8x128xbf16>, vector<128x32xbf16>, vector<8x32xf32> -> vector<8x32xf32>
    %292 = arith.addf %247, %291 : vector<8x32xf32>
    %c0_116 = arith.constant 0 : index
    %c0_117 = arith.constant 0 : index
    %293 = vector.load %arg24[%c0_116, %c0_117] : memref<1x32xf32, #tpu.memory_space<vmem>>, vector<1x32xf32>
    %294 = vector.broadcast %293 : vector<1x32xf32> to vector<8x32xf32>
    %295 = arith.addf %292, %294 : vector<8x32xf32>
    %296 = vector.shape_cast %295 : vector<8x32xf32> to vector<1x8x32xf32>
    %297 = arith.truncf %296 : vector<1x8x32xf32> to vector<1x8x32xbf16>
    %c0_118 = arith.constant 0 : index
    %c0_119 = arith.constant 0 : index
    %c0_120 = arith.constant 0 : index
    %298 = vector.load %arg25[%c0_118, %c0_119, %c0_120] : memref<1x8x32xbf16, #tpu.memory_space<vmem>>, vector<1x8x32xbf16>
    tpu.vector_store %arg25[%c0_118, %c0_119, %c0_120], %297 {strides = array<i32>} : memref<1x8x32xbf16, #tpu.memory_space<vmem>>, vector<1x8x32xbf16>,
    return
  }
  func.func @transform_0(%arg0: i32) -> (i32, i32, i32) {
    %c0_i32 = arith.constant 0 : i32
    %c0_i32_0 = arith.constant 0 : i32
    %c0_i32_1 = arith.constant 0 : i32
    return %arg0, %c0_i32, %c0_i32_0 : i32, i32, i32
  }
  func.func @transform_1(%arg0: i32) -> (i32, i32, i32) {
    %c0_i32 = arith.constant 0 : i32
    %c0_i32_0 = arith.constant 0 : i32
    %c0_i32_1 = arith.constant 0 : i32
    return %arg0, %c0_i32, %c0_i32_0 : i32, i32, i32
  }
  func.func @transform_2(%arg0: i32) -> (i32, i32, i32) {
    %c0_i32 = arith.constant 0 : i32
    %c0_i32_0 = arith.constant 0 : i32
    %c0_i32_1 = arith.constant 0 : i32
    return %arg0, %c0_i32, %c0_i32_0 : i32, i32, i32
  }
  func.func @transform_3(%arg0: i32) -> (i32, i32, i32) {
    %c0_i32 = arith.constant 0 : i32
    %c0_i32_0 = arith.constant 0 : i32
    %c0_i32_1 = arith.constant 0 : i32
    return %arg0, %c0_i32, %c0_i32_0 : i32, i32, i32
  }
  func.func @transform_4(%arg0: i32) -> (i32, i32) {
    %c0_i32 = arith.constant 0 : i32
    %c0_i32_0 = arith.constant 0 : i32
    %c0_i32_1 = arith.constant 0 : i32
    return %c0_i32, %c0_i32_0 : i32, i32
  }
  func.func @transform_5(%arg0: i32) -> (i32, i32) {
    %c0_i32 = arith.constant 0 : i32
    %c0_i32_0 = arith.constant 0 : i32
    %c0_i32_1 = arith.constant 0 : i32
    return %c0_i32, %c0_i32_0 : i32, i32
  }
  func.func @transform_6(%arg0: i32) -> (i32, i32) {
    %c0_i32 = arith.constant 0 : i32
    %c0_i32_0 = arith.constant 0 : i32
    %c0_i32_1 = arith.constant 0 : i32
    return %c0_i32, %c0_i32_0 : i32, i32
  }
  func.func @transform_7(%arg0: i32) -> (i32, i32) {
    %c0_i32 = arith.constant 0 : i32
    %c0_i32_0 = arith.constant 0 : i32
    %c0_i32_1 = arith.constant 0 : i32
    return %c0_i32, %c0_i32_0 : i32, i32
  }
  func.func @transform_8(%arg0: i32) -> (i32, i32) {
    %c0_i32 = arith.constant 0 : i32
    %c0_i32_0 = arith.constant 0 : i32
    %c0_i32_1 = arith.constant 0 : i32
    return %c0_i32, %c0_i32_0 : i32, i32
  }
  func.func @transform_9(%arg0: i32) -> (i32, i32) {
    %c0_i32 = arith.constant 0 : i32
    %c0_i32_0 = arith.constant 0 : i32
    %c0_i32_1 = arith.constant 0 : i32
    return %c0_i32, %c0_i32_0 : i32, i32
  }
  func.func @transform_10(%arg0: i32) -> (i32, i32) {
    %c0_i32 = arith.constant 0 : i32
    %c0_i32_0 = arith.constant 0 : i32
    %c0_i32_1 = arith.constant 0 : i32
    return %c0_i32, %c0_i32_0 : i32, i32
  }
  func.func @transform_11(%arg0: i32) -> (i32, i32) {
    %c0_i32 = arith.constant 0 : i32
    %c0_i32_0 = arith.constant 0 : i32
    %c0_i32_1 = arith.constant 0 : i32
    return %c0_i32, %c0_i32_0 : i32, i32
  }
  func.func @transform_12(%arg0: i32) -> (i32, i32) {
    %c0_i32 = arith.constant 0 : i32
    %c0_i32_0 = arith.constant 0 : i32
    %c0_i32_1 = arith.constant 0 : i32
    return %c0_i32, %c0_i32_0 : i32, i32
  }
  func.func @transform_13(%arg0: i32) -> (i32, i32) {
    %c0_i32 = arith.constant 0 : i32
    %c0_i32_0 = arith.constant 0 : i32
    %c0_i32_1 = arith.constant 0 : i32
    return %c0_i32, %c0_i32_0 : i32, i32
  }
  func.func @transform_14(%arg0: i32) -> (i32, i32) {
    %c0_i32 = arith.constant 0 : i32
    %c0_i32_0 = arith.constant 0 : i32
    %c0_i32_1 = arith.constant 0 : i32
    return %c0_i32, %c0_i32_0 : i32, i32
  }
  func.func @transform_15(%arg0: i32) -> (i32, i32) {
    %c0_i32 = arith.constant 0 : i32
    %c0_i32_0 = arith.constant 0 : i32
    %c0_i32_1 = arith.constant 0 : i32
    return %c0_i32, %c0_i32_0 : i32, i32
  }
  func.func @transform_16(%arg0: i32) -> (i32, i32) {
    %c0_i32 = arith.constant 0 : i32
    %c0_i32_0 = arith.constant 0 : i32
    %c0_i32_1 = arith.constant 0 : i32
    return %c0_i32, %c0_i32_0 : i32, i32
  }
  func.func @transform_17(%arg0: i32) -> (i32, i32) {
    %c0_i32 = arith.constant 0 : i32
    %c0_i32_0 = arith.constant 0 : i32
    %c0_i32_1 = arith.constant 0 : i32
    return %c0_i32, %c0_i32_0 : i32, i32
  }
  func.func @transform_18(%arg0: i32) -> (i32, i32) {
    %c0_i32 = arith.constant 0 : i32
    %c0_i32_0 = arith.constant 0 : i32
    %c0_i32_1 = arith.constant 0 : i32
    return %c0_i32, %c0_i32_0 : i32, i32
  }
  func.func @transform_19(%arg0: i32) -> (i32, i32) {
    %c0_i32 = arith.constant 0 : i32
    %c0_i32_0 = arith.constant 0 : i32
    %c0_i32_1 = arith.constant 0 : i32
    return %c0_i32, %c0_i32_0 : i32, i32
  }
  func.func @transform_20(%arg0: i32) -> (i32, i32) {
    %c0_i32 = arith.constant 0 : i32
    %c0_i32_0 = arith.constant 0 : i32
    %c0_i32_1 = arith.constant 0 : i32
    return %c0_i32, %c0_i32_0 : i32, i32
  }
  func.func @transform_21(%arg0: i32) -> (i32, i32) {
    %c0_i32 = arith.constant 0 : i32
    %c0_i32_0 = arith.constant 0 : i32
    %c0_i32_1 = arith.constant 0 : i32
    return %c0_i32, %c0_i32_0 : i32, i32
  }
  func.func @transform_22(%arg0: i32) -> (i32, i32) {
    %c0_i32 = arith.constant 0 : i32
    %c0_i32_0 = arith.constant 0 : i32
    %c0_i32_1 = arith.constant 0 : i32
    return %c0_i32, %c0_i32_0 : i32, i32
  }
  func.func @transform_23(%arg0: i32) -> (i32, i32) {
    %c0_i32 = arith.constant 0 : i32
    %c0_i32_0 = arith.constant 0 : i32
    %c0_i32_1 = arith.constant 0 : i32
    return %c0_i32, %c0_i32_0 : i32, i32
  }
  func.func @transform_24(%arg0: i32) -> (i32, i32, i32) {
    %c0_i32 = arith.constant 0 : i32
    %c0_i32_0 = arith.constant 0 : i32
    %c0_i32_1 = arith.constant 0 : i32
    return %arg0, %c0_i32, %c0_i32_0 : i32, i32, i32
  }
}

module attributes {stable_mosaic.version = 11 : i64} {
  func.func @_decoder_layer_kernel(%arg0: i32, %arg1: memref<1x8x32xbf16, #tpu.memory_space<vmem>>, %arg2: memref<1x8x32xbf16, #tpu.memory_space<vmem>>, %arg3: memref<1x1x8xi32, #tpu.memory_space<vmem>>, %arg4: memref<1x1x8xi32, #tpu.memory_space<vmem>>, %arg5: memref<1x32xf32, #tpu.memory_space<vmem>>, %arg6: memref<1x32xf32, #tpu.memory_space<vmem>>, %arg7: memref<32x32xbf16, #tpu.memory_space<vmem>>, %arg8: memref<32x32xbf16, #tpu.memory_space<vmem>>, %arg9: memref<32x32xbf16, #tpu.memory_space<vmem>>, %arg10: memref<32x32xbf16, #tpu.memory_space<vmem>>, %arg11: memref<1x32xf32, #tpu.memory_space<vmem>>, %arg12: memref<1x32xf32, #tpu.memory_space<vmem>>, %arg13: memref<1x32xf32, #tpu.memory_space<vmem>>, %arg14: memref<32x32xbf16, #tpu.memory_space<vmem>>, %arg15: memref<32x32xbf16, #tpu.memory_space<vmem>>, %arg16: memref<32x32xbf16, #tpu.memory_space<vmem>>, %arg17: memref<32x32xbf16, #tpu.memory_space<vmem>>, %arg18: memref<1x32xf32, #tpu.memory_space<vmem>>, %arg19: memref<1x32xf32, #tpu.memory_space<vmem>>, %arg20: memref<1x32xf32, #tpu.memory_space<vmem>>, %arg21: memref<32x128xbf16, #tpu.memory_space<vmem>>, %arg22: memref<1x128xf32, #tpu.memory_space<vmem>>, %arg23: memref<128x32xbf16, #tpu.memory_space<vmem>>, %arg24: memref<1x32xf32, #tpu.memory_space<vmem>>, %arg25: memref<1x8x32xbf16, #tpu.memory_space<vmem>>) attributes {dimension_semantics = [#tpu.dimension_semantics<parallel>], iteration_bounds = array<i64: 2>, scalar_prefetch = 0 : i64, scratch_operands = 0 : i64, tpu.core_type = #tpu.core_type<tc>, window_params = [{transform_indices = @transform_0, window_bounds = array<i64: 1, 8, 32>}, {transform_indices = @transform_1, window_bounds = array<i64: 1, 8, 32>}, {transform_indices = @transform_2, window_bounds = array<i64: 1, 1, 8>}, {transform_indices = @transform_3, window_bounds = array<i64: 1, 1, 8>}, {pipeline_mode = #tpu.pipeline_mode<synchronous>, transform_indices = @transform_4, window_bounds = array<i64: 1, 32>}, {pipeline_mode = #tpu.pipeline_mode<synchronous>, transform_indices = @transform_5, window_bounds = array<i64: 1, 32>}, {pipeline_mode = #tpu.pipeline_mode<synchronous>, transform_indices = @transform_6, window_bounds = array<i64: 32, 32>}, {pipeline_mode = #tpu.pipeline_mode<synchronous>, transform_indices = @transform_7, window_bounds = array<i64: 32, 32>}, {pipeline_mode = #tpu.pipeline_mode<synchronous>, transform_indices = @transform_8, window_bounds = array<i64: 32, 32>}, {pipeline_mode = #tpu.pipeline_mode<synchronous>, transform_indices = @transform_9, window_bounds = array<i64: 32, 32>}, {pipeline_mode = #tpu.pipeline_mode<synchronous>, transform_indices = @transform_10, window_bounds = array<i64: 1, 32>}, {pipeline_mode = #tpu.pipeline_mode<synchronous>, transform_indices = @transform_11, window_bounds = array<i64: 1, 32>}, {pipeline_mode = #tpu.pipeline_mode<synchronous>, transform_indices = @transform_12, window_bounds = array<i64: 1, 32>}, {pipeline_mode = #tpu.pipeline_mode<synchronous>, transform_indices = @transform_13, window_bounds = array<i64: 32, 32>}, {pipeline_mode = #tpu.pipeline_mode<synchronous>, transform_indices = @transform_14, window_bounds = array<i64: 32, 32>}, {pipeline_mode = #tpu.pipeline_mode<synchronous>, transform_indices = @transform_15, window_bounds = array<i64: 32, 32>}, {pipeline_mode = #tpu.pipeline_mode<synchronous>, transform_indices = @transform_16, window_bounds = array<i64: 32, 32>}, {pipeline_mode = #tpu.pipeline_mode<synchronous>, transform_indices = @transform_17, window_bounds = array<i64: 1, 32>}, {pipeline_mode = #tpu.pipeline_mode<synchronous>, transform_indices = @transform_18, window_bounds = array<i64: 1, 32>}, {pipeline_mode = #tpu.pipeline_mode<synchronous>, transform_indices = @transform_19, window_bounds = array<i64: 1, 32>}, {pipeline_mode = #tpu.pipeline_mode<synchronous>, transform_indices = @transform_20, window_bounds = array<i64: 32, 128>}, {pipeline_mode = #tpu.pipeline_mode<synchronous>, transform_indices = @transform_21, window_bounds = array<i64: 1, 128>}, {pipeline_mode = #tpu.pipeline_mode<synchronous>, transform_indices = @transform_22, window_bounds = array<i64: 128, 32>}, {pipeline_mode = #tpu.pipeline_mode<synchronous>, transform_indices = @transform_23, window_bounds = array<i64: 1, 32>}, {transform_indices = @transform_24, window_bounds = array<i64: 1, 8, 32>}]} {
    %c0 = arith.constant 0 : index
    %c0_0 = arith.constant 0 : index
    %c0_1 = arith.constant 0 : index
    %0 = vector.load %arg1[%c0, %c0_0, %c0_1] : memref<1x8x32xbf16, #tpu.memory_space<vmem>>, vector<1x8x32xbf16>
    %1 = arith.extf %0 : vector<1x8x32xbf16> to vector<1x8x32xf32>
    %2 = vector.shape_cast %1 : vector<1x8x32xf32> to vector<8x32xf32>
    %c0_2 = arith.constant 0 : index
    %c0_3 = arith.constant 0 : index
    %c0_4 = arith.constant 0 : index
    %3 = vector.load %arg2[%c0_2, %c0_3, %c0_4] : memref<1x8x32xbf16, #tpu.memory_space<vmem>>, vector<1x8x32xbf16>
    %4 = vector.shape_cast %3 : vector<1x8x32xbf16> to vector<8x32xbf16>
    %5 = tpu.iota {dimensions = array<i32: 0>} : vector<8x8xi32>
    %6 = tpu.iota {dimensions = array<i32: 1>} : vector<8x8xi32>
    %7 = arith.cmpi sle, %6, %5 : vector<8x8xi32>
    %c0_5 = arith.constant 0 : index
    %c0_6 = arith.constant 0 : index
    %c0_7 = arith.constant 0 : index
    %8 = vector.load %arg3[%c0_5, %c0_6, %c0_7] : memref<1x1x8xi32, #tpu.memory_space<vmem>>, vector<1x1x8xi32>
    %9 = vector.shape_cast %8 : vector<1x1x8xi32> to vector<1x8xi32>
    %c0_i32 = arith.constant 0 : i32
    %10 = vector.broadcast %c0_i32 : i32 to vector<1x8xi32>
    %11 = arith.cmpi sgt, %9, %10 : vector<1x8xi32>
    %12 = vector.broadcast %11 : vector<1x8xi1> to vector<8x8xi1>
    %13 = arith.andi %7, %12 : vector<8x8xi1>
    %cst = arith.constant 0.000000e+00 : f32
    %cst_8 = arith.constant -1.000000e+09 : f32
    %14 = vector.broadcast %cst : f32 to vector<8x8xf32>
    %15 = vector.broadcast %cst_8 : f32 to vector<8x8xf32>
    %16 = arith.select %13, %14, %15 : vector<8x8xi1>, vector<8x8xf32>
    %c0_9 = arith.constant 0 : index
    %c0_10 = arith.constant 0 : index
    %c0_11 = arith.constant 0 : index
    %17 = vector.load %arg4[%c0_9, %c0_10, %c0_11] : memref<1x1x8xi32, #tpu.memory_space<vmem>>, vector<1x1x8xi32>
    %18 = vector.shape_cast %17 : vector<1x1x8xi32> to vector<1x8xi32>
    %c0_i32_12 = arith.constant 0 : i32
    %19 = vector.broadcast %c0_i32_12 : i32 to vector<1x8xi32>
    %20 = arith.cmpi sgt, %18, %19 : vector<1x8xi32>
    %cst_13 = arith.constant 0.000000e+00 : f32
    %cst_14 = arith.constant -1.000000e+09 : f32
    %21 = vector.broadcast %cst_13 : f32 to vector<1x8xf32>
    %22 = vector.broadcast %cst_14 : f32 to vector<1x8xf32>
    %23 = arith.select %20, %21, %22 : vector<1x8xi1>, vector<1x8xf32>
    %c0_15 = arith.constant 0 : index
    %c0_16 = arith.constant 0 : index
    %24 = vector.load %arg5[%c0_15, %c0_16] : memref<1x32xf32, #tpu.memory_space<vmem>>, vector<1x32xf32>
    %c0_17 = arith.constant 0 : index
    %c0_18 = arith.constant 0 : index
    %25 = vector.load %arg6[%c0_17, %c0_18] : memref<1x32xf32, #tpu.memory_space<vmem>>, vector<1x32xf32>
    %cst_19 = arith.constant dense<0.000000e+00> : vector<8xf32>
    %26 = vector.multi_reduction <add>, %2, %cst_19 [1] : vector<8x32xf32> to vector<8xf32>
    %27 = vector.shape_cast %26 : vector<8xf32> to vector<8x1xf32>
    %cst_20 = arith.constant 3.200000e+01 : f32
    %28 = vector.broadcast %cst_20 : f32 to vector<8x1xf32>
    %29 = arith.divf %27, %28 : vector<8x1xf32>
    %30 = vector.broadcast %29 : vector<8x1xf32> to vector<8x32xf32>
    %31 = arith.subf %2, %30 : vector<8x32xf32>
    %32 = arith.mulf %31, %31 : vector<8x32xf32>
    %cst_21 = arith.constant dense<0.000000e+00> : vector<8xf32>
    %33 = vector.multi_reduction <add>, %32, %cst_21 [1] : vector<8x32xf32> to vector<8xf32>
    %34 = vector.shape_cast %33 : vector<8xf32> to vector<8x1xf32>
    %cst_22 = arith.constant 3.200000e+01 : f32
    %35 = vector.broadcast %cst_22 : f32 to vector<8x1xf32>
    %36 = arith.divf %34, %35 : vector<8x1xf32>
    %cst_23 = arith.constant 9.99999974E-6 : f32
    %37 = vector.broadcast %cst_23 : f32 to vector<8x1xf32>
    %38 = arith.addf %36, %37 : vector<8x1xf32>
    %39 = math.rsqrt %38 : vector<8x1xf32>
    %40 = vector.broadcast %39 : vector<8x1xf32> to vector<8x32xf32>
    %41 = arith.mulf %31, %40 : vector<8x32xf32>
    %42 = vector.broadcast %24 : vector<1x32xf32> to vector<8x32xf32>
    %43 = arith.mulf %41, %42 : vector<8x32xf32>
    %44 = vector.broadcast %25 : vector<1x32xf32> to vector<8x32xf32>
    %45 = arith.addf %43, %44 : vector<8x32xf32>
    %46 = arith.truncf %45 : vector<8x32xf32> to vector<8x32xbf16>
    %c0_24 = arith.constant 0 : index
    %c0_25 = arith.constant 0 : index
    %47 = vector.load %arg7[%c0_24, %c0_25] : memref<32x32xbf16, #tpu.memory_space<vmem>>, vector<32x32xbf16>
    %c0_26 = arith.constant 0 : index
    %c0_27 = arith.constant 0 : index
    %48 = vector.load %arg8[%c0_26, %c0_27] : memref<32x32xbf16, #tpu.memory_space<vmem>>, vector<32x32xbf16>
    %c0_28 = arith.constant 0 : index
    %c0_29 = arith.constant 0 : index
    %49 = vector.load %arg9[%c0_28, %c0_29] : memref<32x32xbf16, #tpu.memory_space<vmem>>, vector<32x32xbf16>
    %c0_30 = arith.constant 0 : index
    %c0_31 = arith.constant 0 : index
    %50 = vector.load %arg10[%c0_30, %c0_31] : memref<32x32xbf16, #tpu.memory_space<vmem>>, vector<32x32xbf16>
    %c0_32 = arith.constant 0 : index
    %c0_33 = arith.constant 0 : index
    %51 = vector.load %arg11[%c0_32, %c0_33] : memref<1x32xf32, #tpu.memory_space<vmem>>, vector<1x32xf32>
    %cst_34 = arith.constant dense<0.000000e+00> : vector<8x32xf32>
    %52 = tpu.matmul %46, %47, %cst_34 {dimension_numbers = #tpu.dot_dimension_numbers<[1], [0], [0], [1], [0, 0, 1, 1], [], []>} : vector<8x32xbf16>, vector<32x32xbf16>, vector<8x32xf32> -> vector<8x32xf32>
    %cst_35 = arith.constant 0.353553385 : f32
    %53 = vector.broadcast %cst_35 : f32 to vector<8x32xf32>
    %54 = arith.mulf %52, %53 : vector<8x32xf32>
    %55 = arith.truncf %54 : vector<8x32xf32> to vector<8x32xbf16>
    %cst_36 = arith.constant dense<0.000000e+00> : vector<8x32xf32>
    %56 = tpu.matmul %46, %48, %cst_36 {dimension_numbers = #tpu.dot_dimension_numbers<[1], [0], [0], [1], [0, 0, 1, 1], [], []>} : vector<8x32xbf16>, vector<32x32xbf16>, vector<8x32xf32> -> vector<8x32xf32>
    %57 = arith.truncf %56 : vector<8x32xf32> to vector<8x32xbf16>
    %cst_37 = arith.constant dense<0.000000e+00> : vector<8x32xf32>
    %58 = tpu.matmul %46, %49, %cst_37 {dimension_numbers = #tpu.dot_dimension_numbers<[1], [0], [0], [1], [0, 0, 1, 1], [], []>} : vector<8x32xbf16>, vector<32x32xbf16>, vector<8x32xf32> -> vector<8x32xf32>
    %59 = arith.truncf %58 : vector<8x32xf32> to vector<8x32xbf16>
    %60 = vector.extract_strided_slice %55 {offsets = [0, 0], sizes = [8, 8], strides = [1, 1]} : vector<8x32xbf16> to vector<8x8xbf16>
    %61 = vector.extract_strided_slice %57 {offsets = [0, 0], sizes = [8, 8], strides = [1, 1]} : vector<8x32xbf16> to vector<8x8xbf16>
    %62 = vector.extract_strided_slice %59 {offsets = [0, 0], sizes = [8, 8], strides = [1, 1]} : vector<8x32xbf16> to vector<8x8xbf16>
    %cst_38 = arith.constant dense<0.000000e+00> : vector<8x8xf32>
    %63 = tpu.matmul %60, %61, %cst_38 {dimension_numbers = #tpu.dot_dimension_numbers<[1], [1], [0], [0], [0, 0, 1, 0], [], []>} : vector<8x8xbf16>, vector<8x8xbf16>, vector<8x8xf32> -> vector<8x8xf32>
    %64 = arith.addf %63, %16 : vector<8x8xf32>
    %cst_39 = arith.constant dense<0xFF800000> : vector<8xf32>
    %65 = vector.multi_reduction <maximumf>, %64, %cst_39 [1] : vector<8x8xf32> to vector<8xf32>
    %66 = vector.shape_cast %65 : vector<8xf32> to vector<8x1xf32>
    %67 = vector.broadcast %66 : vector<8x1xf32> to vector<8x8xf32>
    %68 = arith.subf %64, %67 : vector<8x8xf32>
    %69 = math.exp %68 : vector<8x8xf32>
    %cst_40 = arith.constant dense<0.000000e+00> : vector<8xf32>
    %70 = vector.multi_reduction <add>, %69, %cst_40 [1] : vector<8x8xf32> to vector<8xf32>
    %71 = vector.shape_cast %70 : vector<8xf32> to vector<8x1xf32>
    %72 = tpu.reciprocal %71 {approx = true} : vector<8x1xf32> -> vector<8x1xf32>
    %73 = vector.broadcast %72 : vector<8x1xf32> to vector<8x8xf32>
    %74 = arith.mulf %69, %73 : vector<8x8xf32>
    %75 = arith.truncf %74 : vector<8x8xf32> to vector<8x8xbf16>
    %cst_41 = arith.constant dense<0.000000e+00> : vector<8x8xf32>
    %76 = tpu.matmul %75, %62, %cst_41 {dimension_numbers = #tpu.dot_dimension_numbers<[1], [0], [0], [1], [0, 0, 1, 1], [], []>} : vector<8x8xbf16>, vector<8x8xbf16>, vector<8x8xf32> -> vector<8x8xf32>
    %77 = vector.extract_strided_slice %55 {offsets = [0, 8], sizes = [8, 8], strides = [1, 1]} : vector<8x32xbf16> to vector<8x8xbf16>
    %78 = vector.extract_strided_slice %57 {offsets = [0, 8], sizes = [8, 8], strides = [1, 1]} : vector<8x32xbf16> to vector<8x8xbf16>
    %79 = vector.extract_strided_slice %59 {offsets = [0, 8], sizes = [8, 8], strides = [1, 1]} : vector<8x32xbf16> to vector<8x8xbf16>
    %cst_42 = arith.constant dense<0.000000e+00> : vector<8x8xf32>
    %80 = tpu.matmul %77, %78, %cst_42 {dimension_numbers = #tpu.dot_dimension_numbers<[1], [1], [0], [0], [0, 0, 1, 0], [], []>} : vector<8x8xbf16>, vector<8x8xbf16>, vector<8x8xf32> -> vector<8x8xf32>
    %81 = arith.addf %80, %16 : vector<8x8xf32>
    %cst_43 = arith.constant dense<0xFF800000> : vector<8xf32>
    %82 = vector.multi_reduction <maximumf>, %81, %cst_43 [1] : vector<8x8xf32> to vector<8xf32>
    %83 = vector.shape_cast %82 : vector<8xf32> to vector<8x1xf32>
    %84 = vector.broadcast %83 : vector<8x1xf32> to vector<8x8xf32>
    %85 = arith.subf %81, %84 : vector<8x8xf32>
    %86 = math.exp %85 : vector<8x8xf32>
    %cst_44 = arith.constant dense<0.000000e+00> : vector<8xf32>
    %87 = vector.multi_reduction <add>, %86, %cst_44 [1] : vector<8x8xf32> to vector<8xf32>
    %88 = vector.shape_cast %87 : vector<8xf32> to vector<8x1xf32>
    %89 = tpu.reciprocal %88 {approx = true} : vector<8x1xf32> -> vector<8x1xf32>
    %90 = vector.broadcast %89 : vector<8x1xf32> to vector<8x8xf32>
    %91 = arith.mulf %86, %90 : vector<8x8xf32>
    %92 = arith.truncf %91 : vector<8x8xf32> to vector<8x8xbf16>
    %cst_45 = arith.constant dense<0.000000e+00> : vector<8x8xf32>
    %93 = tpu.matmul %92, %79, %cst_45 {dimension_numbers = #tpu.dot_dimension_numbers<[1], [0], [0], [1], [0, 0, 1, 1], [], []>} : vector<8x8xbf16>, vector<8x8xbf16>, vector<8x8xf32> -> vector<8x8xf32>
    %94 = vector.extract_strided_slice %55 {offsets = [0, 16], sizes = [8, 8], strides = [1, 1]} : vector<8x32xbf16> to vector<8x8xbf16>
    %95 = vector.extract_strided_slice %57 {offsets = [0, 16], sizes = [8, 8], strides = [1, 1]} : vector<8x32xbf16> to vector<8x8xbf16>
    %96 = vector.extract_strided_slice %59 {offsets = [0, 16], sizes = [8, 8], strides = [1, 1]} : vector<8x32xbf16> to vector<8x8xbf16>
    %cst_46 = arith.constant dense<0.000000e+00> : vector<8x8xf32>
    %97 = tpu.matmul %94, %95, %cst_46 {dimension_numbers = #tpu.dot_dimension_numbers<[1], [1], [0], [0], [0, 0, 1, 0], [], []>} : vector<8x8xbf16>, vector<8x8xbf16>, vector<8x8xf32> -> vector<8x8xf32>
    %98 = arith.addf %97, %16 : vector<8x8xf32>
    %cst_47 = arith.constant dense<0xFF800000> : vector<8xf32>
    %99 = vector.multi_reduction <maximumf>, %98, %cst_47 [1] : vector<8x8xf32> to vector<8xf32>
    %100 = vector.shape_cast %99 : vector<8xf32> to vector<8x1xf32>
    %101 = vector.broadcast %100 : vector<8x1xf32> to vector<8x8xf32>
    %102 = arith.subf %98, %101 : vector<8x8xf32>
    %103 = math.exp %102 : vector<8x8xf32>
    %cst_48 = arith.constant dense<0.000000e+00> : vector<8xf32>
    %104 = vector.multi_reduction <add>, %103, %cst_48 [1] : vector<8x8xf32> to vector<8xf32>
    %105 = vector.shape_cast %104 : vector<8xf32> to vector<8x1xf32>
    %106 = tpu.reciprocal %105 {approx = true} : vector<8x1xf32> -> vector<8x1xf32>
    %107 = vector.broadcast %106 : vector<8x1xf32> to vector<8x8xf32>
    %108 = arith.mulf %103, %107 : vector<8x8xf32>
    %109 = arith.truncf %108 : vector<8x8xf32> to vector<8x8xbf16>
    %cst_49 = arith.constant dense<0.000000e+00> : vector<8x8xf32>
    %110 = tpu.matmul %109, %96, %cst_49 {dimension_numbers = #tpu.dot_dimension_numbers<[1], [0], [0], [1], [0, 0, 1, 1], [], []>} : vector<8x8xbf16>, vector<8x8xbf16>, vector<8x8xf32> -> vector<8x8xf32>
    %111 = vector.extract_strided_slice %55 {offsets = [0, 24], sizes = [8, 8], strides = [1, 1]} : vector<8x32xbf16> to vector<8x8xbf16>
    %112 = vector.extract_strided_slice %57 {offsets = [0, 24], sizes = [8, 8], strides = [1, 1]} : vector<8x32xbf16> to vector<8x8xbf16>
    %113 = vector.extract_strided_slice %59 {offsets = [0, 24], sizes = [8, 8], strides = [1, 1]} : vector<8x32xbf16> to vector<8x8xbf16>
    %cst_50 = arith.constant dense<0.000000e+00> : vector<8x8xf32>
    %114 = tpu.matmul %111, %112, %cst_50 {dimension_numbers = #tpu.dot_dimension_numbers<[1], [1], [0], [0], [0, 0, 1, 0], [], []>} : vector<8x8xbf16>, vector<8x8xbf16>, vector<8x8xf32> -> vector<8x8xf32>
    %115 = arith.addf %114, %16 : vector<8x8xf32>
    %cst_51 = arith.constant dense<0xFF800000> : vector<8xf32>
    %116 = vector.multi_reduction <maximumf>, %115, %cst_51 [1] : vector<8x8xf32> to vector<8xf32>
    %117 = vector.shape_cast %116 : vector<8xf32> to vector<8x1xf32>
    %118 = vector.broadcast %117 : vector<8x1xf32> to vector<8x8xf32>
    %119 = arith.subf %115, %118 : vector<8x8xf32>
    %120 = math.exp %119 : vector<8x8xf32>
    %cst_52 = arith.constant dense<0.000000e+00> : vector<8xf32>
    %121 = vector.multi_reduction <add>, %120, %cst_52 [1] : vector<8x8xf32> to vector<8xf32>
    %122 = vector.shape_cast %121 : vector<8xf32> to vector<8x1xf32>
    %123 = tpu.reciprocal %122 {approx = true} : vector<8x1xf32> -> vector<8x1xf32>
    %124 = vector.broadcast %123 : vector<8x1xf32> to vector<8x8xf32>
    %125 = arith.mulf %120, %124 : vector<8x8xf32>
    %126 = arith.truncf %125 : vector<8x8xf32> to vector<8x8xbf16>
    %cst_53 = arith.constant dense<0.000000e+00> : vector<8x8xf32>
    %127 = tpu.matmul %126, %113, %cst_53 {dimension_numbers = #tpu.dot_dimension_numbers<[1], [0], [0], [1], [0, 0, 1, 1], [], []>} : vector<8x8xbf16>, vector<8x8xbf16>, vector<8x8xf32> -> vector<8x8xf32>
    %128 = tpu.concatenate %76, %93, %110, %127 in 1 : vector<8x8xf32>, vector<8x8xf32>, vector<8x8xf32>, vector<8x8xf32> -> vector<8x32xf32>
    %129 = arith.truncf %128 : vector<8x32xf32> to vector<8x32xbf16>
    %cst_54 = arith.constant dense<0.000000e+00> : vector<8x32xf32>
    %130 = tpu.matmul %129, %50, %cst_54 {dimension_numbers = #tpu.dot_dimension_numbers<[1], [0], [0], [1], [0, 0, 1, 1], [], []>} : vector<8x32xbf16>, vector<32x32xbf16>, vector<8x32xf32> -> vector<8x32xf32>
    %131 = vector.broadcast %51 : vector<1x32xf32> to vector<8x32xf32>
    %132 = arith.addf %130, %131 : vector<8x32xf32>
    %133 = arith.addf %2, %132 : vector<8x32xf32>
    %c0_55 = arith.constant 0 : index
    %c0_56 = arith.constant 0 : index
    %134 = vector.load %arg12[%c0_55, %c0_56] : memref<1x32xf32, #tpu.memory_space<vmem>>, vector<1x32xf32>
    %c0_57 = arith.constant 0 : index
    %c0_58 = arith.constant 0 : index
    %135 = vector.load %arg13[%c0_57, %c0_58] : memref<1x32xf32, #tpu.memory_space<vmem>>, vector<1x32xf32>
    %cst_59 = arith.constant dense<0.000000e+00> : vector<8xf32>
    %136 = vector.multi_reduction <add>, %133, %cst_59 [1] : vector<8x32xf32> to vector<8xf32>
    %137 = vector.shape_cast %136 : vector<8xf32> to vector<8x1xf32>
    %cst_60 = arith.constant 3.200000e+01 : f32
    %138 = vector.broadcast %cst_60 : f32 to vector<8x1xf32>
    %139 = arith.divf %137, %138 : vector<8x1xf32>
    %140 = vector.broadcast %139 : vector<8x1xf32> to vector<8x32xf32>
    %141 = arith.subf %133, %140 : vector<8x32xf32>
    %142 = arith.mulf %141, %141 : vector<8x32xf32>
    %cst_61 = arith.constant dense<0.000000e+00> : vector<8xf32>
    %143 = vector.multi_reduction <add>, %142, %cst_61 [1] : vector<8x32xf32> to vector<8xf32>
    %144 = vector.shape_cast %143 : vector<8xf32> to vector<8x1xf32>
    %cst_62 = arith.constant 3.200000e+01 : f32
    %145 = vector.broadcast %cst_62 : f32 to vector<8x1xf32>
    %146 = arith.divf %144, %145 : vector<8x1xf32>
    %cst_63 = arith.constant 9.99999974E-6 : f32
    %147 = vector.broadcast %cst_63 : f32 to vector<8x1xf32>
    %148 = arith.addf %146, %147 : vector<8x1xf32>
    %149 = math.rsqrt %148 : vector<8x1xf32>
    %150 = vector.broadcast %149 : vector<8x1xf32> to vector<8x32xf32>
    %151 = arith.mulf %141, %150 : vector<8x32xf32>
    %152 = vector.broadcast %134 : vector<1x32xf32> to vector<8x32xf32>
    %153 = arith.mulf %151, %152 : vector<8x32xf32>
    %154 = vector.broadcast %135 : vector<1x32xf32> to vector<8x32xf32>
    %155 = arith.addf %153, %154 : vector<8x32xf32>
    %156 = arith.truncf %155 : vector<8x32xf32> to vector<8x32xbf16>
    %c0_64 = arith.constant 0 : index
    %c0_65 = arith.constant 0 : index
    %157 = vector.load %arg14[%c0_64, %c0_65] : memref<32x32xbf16, #tpu.memory_space<vmem>>, vector<32x32xbf16>
    %c0_66 = arith.constant 0 : index
    %c0_67 = arith.constant 0 : index
    %158 = vector.load %arg15[%c0_66, %c0_67] : memref<32x32xbf16, #tpu.memory_space<vmem>>, vector<32x32xbf16>
    %c0_68 = arith.constant 0 : index
    %c0_69 = arith.constant 0 : index
    %159 = vector.load %arg16[%c0_68, %c0_69] : memref<32x32xbf16, #tpu.memory_space<vmem>>, vector<32x32xbf16>
    %c0_70 = arith.constant 0 : index
    %c0_71 = arith.constant 0 : index
    %160 = vector.load %arg17[%c0_70, %c0_71] : memref<32x32xbf16, #tpu.memory_space<vmem>>, vector<32x32xbf16>
    %c0_72 = arith.constant 0 : index
    %c0_73 = arith.constant 0 : index
    %161 = vector.load %arg18[%c0_72, %c0_73] : memref<1x32xf32, #tpu.memory_space<vmem>>, vector<1x32xf32>
    %cst_74 = arith.constant dense<0.000000e+00> : vector<8x32xf32>
    %162 = tpu.matmul %156, %157, %cst_74 {dimension_numbers = #tpu.dot_dimension_numbers<[1], [0], [0], [1], [0, 0, 1, 1], [], []>} : vector<8x32xbf16>, vector<32x32xbf16>, vector<8x32xf32> -> vector<8x32xf32>
    %cst_75 = arith.constant 0.353553385 : f32
    %163 = vector.broadcast %cst_75 : f32 to vector<8x32xf32>
    %164 = arith.mulf %162, %163 : vector<8x32xf32>
    %165 = arith.truncf %164 : vector<8x32xf32> to vector<8x32xbf16>
    %cst_76 = arith.constant dense<0.000000e+00> : vector<8x32xf32>
    %166 = tpu.matmul %4, %158, %cst_76 {dimension_numbers = #tpu.dot_dimension_numbers<[1], [0], [0], [1], [0, 0, 1, 1], [], []>} : vector<8x32xbf16>, vector<32x32xbf16>, vector<8x32xf32> -> vector<8x32xf32>
    %167 = arith.truncf %166 : vector<8x32xf32> to vector<8x32xbf16>
    %cst_77 = arith.constant dense<0.000000e+00> : vector<8x32xf32>
    %168 = tpu.matmul %4, %159, %cst_77 {dimension_numbers = #tpu.dot_dimension_numbers<[1], [0], [0], [1], [0, 0, 1, 1], [], []>} : vector<8x32xbf16>, vector<32x32xbf16>, vector<8x32xf32> -> vector<8x32xf32>
    %169 = arith.truncf %168 : vector<8x32xf32> to vector<8x32xbf16>
    %170 = vector.extract_strided_slice %165 {offsets = [0, 0], sizes = [8, 8], strides = [1, 1]} : vector<8x32xbf16> to vector<8x8xbf16>
    %171 = vector.extract_strided_slice %167 {offsets = [0, 0], sizes = [8, 8], strides = [1, 1]} : vector<8x32xbf16> to vector<8x8xbf16>
    %172 = vector.extract_strided_slice %169 {offsets = [0, 0], sizes = [8, 8], strides = [1, 1]} : vector<8x32xbf16> to vector<8x8xbf16>
    %cst_78 = arith.constant dense<0.000000e+00> : vector<8x8xf32>
    %173 = tpu.matmul %170, %171, %cst_78 {dimension_numbers = #tpu.dot_dimension_numbers<[1], [1], [0], [0], [0, 0, 1, 0], [], []>} : vector<8x8xbf16>, vector<8x8xbf16>, vector<8x8xf32> -> vector<8x8xf32>
    %174 = vector.broadcast %23 : vector<1x8xf32> to vector<8x8xf32>
    %175 = arith.addf %173, %174 : vector<8x8xf32>
    %cst_79 = arith.constant dense<0xFF800000> : vector<8xf32>
    %176 = vector.multi_reduction <maximumf>, %175, %cst_79 [1] : vector<8x8xf32> to vector<8xf32>
    %177 = vector.shape_cast %176 : vector<8xf32> to vector<8x1xf32>
    %178 = vector.broadcast %177 : vector<8x1xf32> to vector<8x8xf32>
    %179 = arith.subf %175, %178 : vector<8x8xf32>
    %180 = math.exp %179 : vector<8x8xf32>
    %cst_80 = arith.constant dense<0.000000e+00> : vector<8xf32>
    %181 = vector.multi_reduction <add>, %180, %cst_80 [1] : vector<8x8xf32> to vector<8xf32>
    %182 = vector.shape_cast %181 : vector<8xf32> to vector<8x1xf32>
    %183 = tpu.reciprocal %182 {approx = true} : vector<8x1xf32> -> vector<8x1xf32>
    %184 = vector.broadcast %183 : vector<8x1xf32> to vector<8x8xf32>
    %185 = arith.mulf %180, %184 : vector<8x8xf32>
    %186 = arith.truncf %185 : vector<8x8xf32> to vector<8x8xbf16>
    %cst_81 = arith.constant dense<0.000000e+00> : vector<8x8xf32>
    %187 = tpu.matmul %186, %172, %cst_81 {dimension_numbers = #tpu.dot_dimension_numbers<[1], [0], [0], [1], [0, 0, 1, 1], [], []>} : vector<8x8xbf16>, vector<8x8xbf16>, vector<8x8xf32> -> vector<8x8xf32>
    %188 = vector.extract_strided_slice %165 {offsets = [0, 8], sizes = [8, 8], strides = [1, 1]} : vector<8x32xbf16> to vector<8x8xbf16>
    %189 = vector.extract_strided_slice %167 {offsets = [0, 8], sizes = [8, 8], strides = [1, 1]} : vector<8x32xbf16> to vector<8x8xbf16>
    %190 = vector.extract_strided_slice %169 {offsets = [0, 8], sizes = [8, 8], strides = [1, 1]} : vector<8x32xbf16> to vector<8x8xbf16>
    %cst_82 = arith.constant dense<0.000000e+00> : vector<8x8xf32>
    %191 = tpu.matmul %188, %189, %cst_82 {dimension_numbers = #tpu.dot_dimension_numbers<[1], [1], [0], [0], [0, 0, 1, 0], [], []>} : vector<8x8xbf16>, vector<8x8xbf16>, vector<8x8xf32> -> vector<8x8xf32>
    %192 = vector.broadcast %23 : vector<1x8xf32> to vector<8x8xf32>
    %193 = arith.addf %191, %192 : vector<8x8xf32>
    %cst_83 = arith.constant dense<0xFF800000> : vector<8xf32>
    %194 = vector.multi_reduction <maximumf>, %193, %cst_83 [1] : vector<8x8xf32> to vector<8xf32>
    %195 = vector.shape_cast %194 : vector<8xf32> to vector<8x1xf32>
    %196 = vector.broadcast %195 : vector<8x1xf32> to vector<8x8xf32>
    %197 = arith.subf %193, %196 : vector<8x8xf32>
    %198 = math.exp %197 : vector<8x8xf32>
    %cst_84 = arith.constant dense<0.000000e+00> : vector<8xf32>
    %199 = vector.multi_reduction <add>, %198, %cst_84 [1] : vector<8x8xf32> to vector<8xf32>
    %200 = vector.shape_cast %199 : vector<8xf32> to vector<8x1xf32>
    %201 = tpu.reciprocal %200 {approx = true} : vector<8x1xf32> -> vector<8x1xf32>
    %202 = vector.broadcast %201 : vector<8x1xf32> to vector<8x8xf32>
    %203 = arith.mulf %198, %202 : vector<8x8xf32>
    %204 = arith.truncf %203 : vector<8x8xf32> to vector<8x8xbf16>
    %cst_85 = arith.constant dense<0.000000e+00> : vector<8x8xf32>
    %205 = tpu.matmul %204, %190, %cst_85 {dimension_numbers = #tpu.dot_dimension_numbers<[1], [0], [0], [1], [0, 0, 1, 1], [], []>} : vector<8x8xbf16>, vector<8x8xbf16>, vector<8x8xf32> -> vector<8x8xf32>
    %206 = vector.extract_strided_slice %165 {offsets = [0, 16], sizes = [8, 8], strides = [1, 1]} : vector<8x32xbf16> to vector<8x8xbf16>
    %207 = vector.extract_strided_slice %167 {offsets = [0, 16], sizes = [8, 8], strides = [1, 1]} : vector<8x32xbf16> to vector<8x8xbf16>
    %208 = vector.extract_strided_slice %169 {offsets = [0, 16], sizes = [8, 8], strides = [1, 1]} : vector<8x32xbf16> to vector<8x8xbf16>
    %cst_86 = arith.constant dense<0.000000e+00> : vector<8x8xf32>
    %209 = tpu.matmul %206, %207, %cst_86 {dimension_numbers = #tpu.dot_dimension_numbers<[1], [1], [0], [0], [0, 0, 1, 0], [], []>} : vector<8x8xbf16>, vector<8x8xbf16>, vector<8x8xf32> -> vector<8x8xf32>
    %210 = vector.broadcast %23 : vector<1x8xf32> to vector<8x8xf32>
    %211 = arith.addf %209, %210 : vector<8x8xf32>
    %cst_87 = arith.constant dense<0xFF800000> : vector<8xf32>
    %212 = vector.multi_reduction <maximumf>, %211, %cst_87 [1] : vector<8x8xf32> to vector<8xf32>
    %213 = vector.shape_cast %212 : vector<8xf32> to vector<8x1xf32>
    %214 = vector.broadcast %213 : vector<8x1xf32> to vector<8x8xf32>
    %215 = arith.subf %211, %214 : vector<8x8xf32>
    %216 = math.exp %215 : vector<8x8xf32>
    %cst_88 = arith.constant dense<0.000000e+00> : vector<8xf32>
    %217 = vector.multi_reduction <add>, %216, %cst_88 [1] : vector<8x8xf32> to vector<8xf32>
    %218 = vector.shape_cast %217 : vector<8xf32> to vector<8x1xf32>
    %219 = tpu.reciprocal %218 {approx = true} : vector<8x1xf32> -> vector<8x1xf32>
    %220 = vector.broadcast %219 : vector<8x1xf32> to vector<8x8xf32>
    %221 = arith.mulf %216, %220 : vector<8x8xf32>
    %222 = arith.truncf %221 : vector<8x8xf32> to vector<8x8xbf16>
    %cst_89 = arith.constant dense<0.000000e+00> : vector<8x8xf32>
    %223 = tpu.matmul %222, %208, %cst_89 {dimension_numbers = #tpu.dot_dimension_numbers<[1], [0], [0], [1], [0, 0, 1, 1], [], []>} : vector<8x8xbf16>, vector<8x8xbf16>, vector<8x8xf32> -> vector<8x8xf32>
    %224 = vector.extract_strided_slice %165 {offsets = [0, 24], sizes = [8, 8], strides = [1, 1]} : vector<8x32xbf16> to vector<8x8xbf16>
    %225 = vector.extract_strided_slice %167 {offsets = [0, 24], sizes = [8, 8], strides = [1, 1]} : vector<8x32xbf16> to vector<8x8xbf16>
    %226 = vector.extract_strided_slice %169 {offsets = [0, 24], sizes = [8, 8], strides = [1, 1]} : vector<8x32xbf16> to vector<8x8xbf16>
    %cst_90 = arith.constant dense<0.000000e+00> : vector<8x8xf32>
    %227 = tpu.matmul %224, %225, %cst_90 {dimension_numbers = #tpu.dot_dimension_numbers<[1], [1], [0], [0], [0, 0, 1, 0], [], []>} : vector<8x8xbf16>, vector<8x8xbf16>, vector<8x8xf32> -> vector<8x8xf32>
    %228 = vector.broadcast %23 : vector<1x8xf32> to vector<8x8xf32>
    %229 = arith.addf %227, %228 : vector<8x8xf32>
    %cst_91 = arith.constant dense<0xFF800000> : vector<8xf32>
    %230 = vector.multi_reduction <maximumf>, %229, %cst_91 [1] : vector<8x8xf32> to vector<8xf32>
    %231 = vector.shape_cast %230 : vector<8xf32> to vector<8x1xf32>
    %232 = vector.broadcast %231 : vector<8x1xf32> to vector<8x8xf32>
    %233 = arith.subf %229, %232 : vector<8x8xf32>
    %234 = math.exp %233 : vector<8x8xf32>
    %cst_92 = arith.constant dense<0.000000e+00> : vector<8xf32>
    %235 = vector.multi_reduction <add>, %234, %cst_92 [1] : vector<8x8xf32> to vector<8xf32>
    %236 = vector.shape_cast %235 : vector<8xf32> to vector<8x1xf32>
    %237 = tpu.reciprocal %236 {approx = true} : vector<8x1xf32> -> vector<8x1xf32>
    %238 = vector.broadcast %237 : vector<8x1xf32> to vector<8x8xf32>
    %239 = arith.mulf %234, %238 : vector<8x8xf32>
    %240 = arith.truncf %239 : vector<8x8xf32> to vector<8x8xbf16>
    %cst_93 = arith.constant dense<0.000000e+00> : vector<8x8xf32>
    %241 = tpu.matmul %240, %226, %cst_93 {dimension_numbers = #tpu.dot_dimension_numbers<[1], [0], [0], [1], [0, 0, 1, 1], [], []>} : vector<8x8xbf16>, vector<8x8xbf16>, vector<8x8xf32> -> vector<8x8xf32>
    %242 = tpu.concatenate %187, %205, %223, %241 in 1 : vector<8x8xf32>, vector<8x8xf32>, vector<8x8xf32>, vector<8x8xf32> -> vector<8x32xf32>
    %243 = arith.truncf %242 : vector<8x32xf32> to vector<8x32xbf16>
    %cst_94 = arith.constant dense<0.000000e+00> : vector<8x32xf32>
    %244 = tpu.matmul %243, %160, %cst_94 {dimension_numbers = #tpu.dot_dimension_numbers<[1], [0], [0], [1], [0, 0, 1, 1], [], []>} : vector<8x32xbf16>, vector<32x32xbf16>, vector<8x32xf32> -> vector<8x32xf32>
    %245 = vector.broadcast %161 : vector<1x32xf32> to vector<8x32xf32>
    %246 = arith.addf %244, %245 : vector<8x32xf32>
    %247 = arith.addf %133, %246 : vector<8x32xf32>
    %c0_95 = arith.constant 0 : index
    %c0_96 = arith.constant 0 : index
    %248 = vector.load %arg19[%c0_95, %c0_96] : memref<1x32xf32, #tpu.memory_space<vmem>>, vector<1x32xf32>
    %c0_97 = arith.constant 0 : index
    %c0_98 = arith.constant 0 : index
    %249 = vector.load %arg20[%c0_97, %c0_98] : memref<1x32xf32, #tpu.memory_space<vmem>>, vector<1x32xf32>
    %cst_99 = arith.constant dense<0.000000e+00> : vector<8xf32>
    %250 = vector.multi_reduction <add>, %247, %cst_99 [1] : vector<8x32xf32> to vector<8xf32>
    %251 = vector.shape_cast %250 : vector<8xf32> to vector<8x1xf32>
    %cst_100 = arith.constant 3.200000e+01 : f32
    %252 = vector.broadcast %cst_100 : f32 to vector<8x1xf32>
    %253 = arith.divf %251, %252 : vector<8x1xf32>
    %254 = vector.broadcast %253 : vector<8x1xf32> to vector<8x32xf32>
    %255 = arith.subf %247, %254 : vector<8x32xf32>
    %256 = arith.mulf %255, %255 : vector<8x32xf32>
    %cst_101 = arith.constant dense<0.000000e+00> : vector<8xf32>
    %257 = vector.multi_reduction <add>, %256, %cst_101 [1] : vector<8x32xf32> to vector<8xf32>
    %258 = vector.shape_cast %257 : vector<8xf32> to vector<8x1xf32>
    %cst_102 = arith.constant 3.200000e+01 : f32
    %259 = vector.broadcast %cst_102 : f32 to vector<8x1xf32>
    %260 = arith.divf %258, %259 : vector<8x1xf32>
    %cst_103 = arith.constant 9.99999974E-6 : f32
    %261 = vector.broadcast %cst_103 : f32 to vector<8x1xf32>
    %262 = arith.addf %260, %261 : vector<8x1xf32>
    %263 = math.rsqrt %262 : vector<8x1xf32>
    %264 = vector.broadcast %263 : vector<8x1xf32> to vector<8x32xf32>
    %265 = arith.mulf %255, %264 : vector<8x32xf32>
    %266 = vector.broadcast %248 : vector<1x32xf32> to vector<8x32xf32>
    %267 = arith.mulf %265, %266 : vector<8x32xf32>
    %268 = vector.broadcast %249 : vector<1x32xf32> to vector<8x32xf32>
    %269 = arith.addf %267, %268 : vector<8x32xf32>
    %270 = arith.truncf %269 : vector<8x32xf32> to vector<8x32xbf16>
    %c0_104 = arith.constant 0 : index
    %c0_105 = arith.constant 0 : index
    %271 = vector.load %arg21[%c0_104, %c0_105] : memref<32x128xbf16, #tpu.memory_space<vmem>>, vector<32x128xbf16>
    %cst_106 = arith.constant dense<0.000000e+00> : vector<8x128xf32>
    %272 = tpu.matmul %270, %271, %cst_106 {dimension_numbers = #tpu.dot_dimension_numbers<[1], [0], [0], [1], [0, 0, 1, 1], [], []>} : vector<8x32xbf16>, vector<32x128xbf16>, vector<8x128xf32> -> vector<8x128xf32>
    %c0_107 = arith.constant 0 : index
    %c0_108 = arith.constant 0 : index
    %273 = vector.load %arg22[%c0_107, %c0_108] : memref<1x128xf32, #tpu.memory_space<vmem>>, vector<1x128xf32>
    %274 = vector.broadcast %273 : vector<1x128xf32> to vector<8x128xf32>
    %275 = arith.addf %272, %274 : vector<8x128xf32>
    %276 = arith.mulf %275, %275 : vector<8x128xf32>
    %277 = arith.mulf %275, %276 : vector<8x128xf32>
    %cst_109 = arith.constant 4.471500e-02 : f32
    %278 = vector.broadcast %cst_109 : f32 to vector<8x128xf32>
    %279 = arith.mulf %278, %277 : vector<8x128xf32>
    %280 = arith.addf %275, %279 : vector<8x128xf32>
    %cst_110 = arith.constant 0.797884583 : f32
    %281 = vector.broadcast %cst_110 : f32 to vector<8x128xf32>
    %282 = arith.mulf %281, %280 : vector<8x128xf32>
    %283 = math.tanh %282 : vector<8x128xf32>
    %cst_111 = arith.constant 1.000000e+00 : f32
    %284 = vector.broadcast %cst_111 : f32 to vector<8x128xf32>
    %285 = arith.addf %284, %283 : vector<8x128xf32>
    %cst_112 = arith.constant 5.000000e-01 : f32
    %286 = vector.broadcast %cst_112 : f32 to vector<8x128xf32>
    %287 = arith.mulf %286, %285 : vector<8x128xf32>
    %288 = arith.mulf %275, %287 : vector<8x128xf32>
    %289 = arith.truncf %288 : vector<8x128xf32> to vector<8x128xbf16>
    %c0_113 = arith.constant 0 : index
    %c0_114 = arith.constant 0 : index
    %290 = vector.load %arg23[%c0_113, %c0_114] : memref<128x32xbf16, #tpu.memory_space<vmem>>, vector<128x32xbf16>
    %cst_115 = arith.constant dense<0.000000e+00> : vector<8x32xf32>
    %291 = tpu.matmul %289, %290, %cst_115 {dimension_numbers = #tpu.dot_dimension_numbers<[1], [0], [0], [1], [0, 0, 1, 1], [], []>} : vector<8x128xbf16>, vector<128x32xbf16>, vector<8x32xf32> -> vector<8x32xf32>
    %292 = arith.addf %247, %291 : vector<8x32xf32>
    %c0_116 = arith.constant 0 : index
    %c0_117 = arith.constant 0 : index
    %293 = vector.load %arg24[%c0_116, %c0_117] : memref<1x32xf32, #tpu.memory_space<vmem>>, vector<1x32xf32>
    %294 = vector.broadcast %293 : vector<1x32xf32> to vector<8x32xf32>
    %295 = arith.addf %292, %294 : vector<8x32xf32>
    %296 = vector.shape_cast %295 : vector<8x32xf32> to vector<1x8x32xf32>
    %297 = arith.truncf %296 : vector<1x8x32xf32> to vector<1x8x32xbf16>
    %c0_118 = arith.constant 0 : index
    %c0_119 = arith.constant 0 : index
    %c0_120 = arith.constant 0 : index
    %298 = vector.load %arg25[%c0_118, %c0_119, %c0_120] : memref<1x8x32xbf16, #tpu.memory_space<vmem>>, vector<1x8x32xbf16>
    tpu.vector_store %arg25[%c0_118, %c0_119, %c0_120], %297 {strides = array<i32>} : memref<1x8x32xbf16, #tpu.memory_space<vmem>>, vector<1x8x32xbf16>,
    return
  }
  func.func @transform_0(%arg0: i32) -> (i32, i32, i32) {
    %c0_i32 = arith.constant 0 : i32
    %c0_i32_0 = arith.constant 0 : i32
    %c0_i32_1 = arith.constant 0 : i32
    return %arg0, %c0_i32, %c0_i32_0 : i32, i32, i32
  }
  func.func @transform_1(%arg0: i32) -> (i32, i32, i32) {
    %c0_i32 = arith.constant 0 : i32
    %c0_i32_0 = arith.constant 0 : i32
    %c0_i32_1 = arith.constant 0 : i32
    return %arg0, %c0_i32, %c0_i32_0 : i32, i32, i32
  }
  func.func @transform_2(%arg0: i32) -> (i32, i32, i32) {
    %c0_i32 = arith.constant 0 : i32
    %c0_i32_0 = arith.constant 0 : i32
    %c0_i32_1 = arith.constant 0 : i32
    return %arg0, %c0_i32, %c0_i32_0 : i32, i32, i32
  }
  func.func @transform_3(%arg0: i32) -> (i32, i32, i32) {
    %c0_i32 = arith.constant 0 : i32
    %c0_i32_0 = arith.constant 0 : i32
    %c0_i32_1 = arith.constant 0 : i32
    return %arg0, %c0_i32, %c0_i32_0 : i32, i32, i32
  }
  func.func @transform_4(%arg0: i32) -> (i32, i32) {
    %c0_i32 = arith.constant 0 : i32
    %c0_i32_0 = arith.constant 0 : i32
    %c0_i32_1 = arith.constant 0 : i32
    return %c0_i32, %c0_i32_0 : i32, i32
  }
  func.func @transform_5(%arg0: i32) -> (i32, i32) {
    %c0_i32 = arith.constant 0 : i32
    %c0_i32_0 = arith.constant 0 : i32
    %c0_i32_1 = arith.constant 0 : i32
    return %c0_i32, %c0_i32_0 : i32, i32
  }
  func.func @transform_6(%arg0: i32) -> (i32, i32) {
    %c0_i32 = arith.constant 0 : i32
    %c0_i32_0 = arith.constant 0 : i32
    %c0_i32_1 = arith.constant 0 : i32
    return %c0_i32, %c0_i32_0 : i32, i32
  }
  func.func @transform_7(%arg0: i32) -> (i32, i32) {
    %c0_i32 = arith.constant 0 : i32
    %c0_i32_0 = arith.constant 0 : i32
    %c0_i32_1 = arith.constant 0 : i32
    return %c0_i32, %c0_i32_0 : i32, i32
  }
  func.func @transform_8(%arg0: i32) -> (i32, i32) {
    %c0_i32 = arith.constant 0 : i32
    %c0_i32_0 = arith.constant 0 : i32
    %c0_i32_1 = arith.constant 0 : i32
    return %c0_i32, %c0_i32_0 : i32, i32
  }
  func.func @transform_9(%arg0: i32) -> (i32, i32) {
    %c0_i32 = arith.constant 0 : i32
    %c0_i32_0 = arith.constant 0 : i32
    %c0_i32_1 = arith.constant 0 : i32
    return %c0_i32, %c0_i32_0 : i32, i32
  }
  func.func @transform_10(%arg0: i32) -> (i32, i32) {
    %c0_i32 = arith.constant 0 : i32
    %c0_i32_0 = arith.constant 0 : i32
    %c0_i32_1 = arith.constant 0 : i32
    return %c0_i32, %c0_i32_0 : i32, i32
  }
  func.func @transform_11(%arg0: i32) -> (i32, i32) {
    %c0_i32 = arith.constant 0 : i32
    %c0_i32_0 = arith.constant 0 : i32
    %c0_i32_1 = arith.constant 0 : i32
    return %c0_i32, %c0_i32_0 : i32, i32
  }
  func.func @transform_12(%arg0: i32) -> (i32, i32) {
    %c0_i32 = arith.constant 0 : i32
    %c0_i32_0 = arith.constant 0 : i32
    %c0_i32_1 = arith.constant 0 : i32
    return %c0_i32, %c0_i32_0 : i32, i32
  }
  func.func @transform_13(%arg0: i32) -> (i32, i32) {
    %c0_i32 = arith.constant 0 : i32
    %c0_i32_0 = arith.constant 0 : i32
    %c0_i32_1 = arith.constant 0 : i32
    return %c0_i32, %c0_i32_0 : i32, i32
  }
  func.func @transform_14(%arg0: i32) -> (i32, i32) {
    %c0_i32 = arith.constant 0 : i32
    %c0_i32_0 = arith.constant 0 : i32
    %c0_i32_1 = arith.constant 0 : i32
    return %c0_i32, %c0_i32_0 : i32, i32
  }
  func.func @transform_15(%arg0: i32) -> (i32, i32) {
    %c0_i32 = arith.constant 0 : i32
    %c0_i32_0 = arith.constant 0 : i32
    %c0_i32_1 = arith.constant 0 : i32
    return %c0_i32, %c0_i32_0 : i32, i32
  }
  func.func @transform_16(%arg0: i32) -> (i32, i32) {
    %c0_i32 = arith.constant 0 : i32
    %c0_i32_0 = arith.constant 0 : i32
    %c0_i32_1 = arith.constant 0 : i32
    return %c0_i32, %c0_i32_0 : i32, i32
  }
  func.func @transform_17(%arg0: i32) -> (i32, i32) {
    %c0_i32 = arith.constant 0 : i32
    %c0_i32_0 = arith.constant 0 : i32
    %c0_i32_1 = arith.constant 0 : i32
    return %c0_i32, %c0_i32_0 : i32, i32
  }
  func.func @transform_18(%arg0: i32) -> (i32, i32) {
    %c0_i32 = arith.constant 0 : i32
    %c0_i32_0 = arith.constant 0 : i32
    %c0_i32_1 = arith.constant 0 : i32
    return %c0_i32, %c0_i32_0 : i32, i32
  }
  func.func @transform_19(%arg0: i32) -> (i32, i32) {
    %c0_i32 = arith.constant 0 : i32
    %c0_i32_0 = arith.constant 0 : i32
    %c0_i32_1 = arith.constant 0 : i32
    return %c0_i32, %c0_i32_0 : i32, i32
  }
  func.func @transform_20(%arg0: i32) -> (i32, i32) {
    %c0_i32 = arith.constant 0 : i32
    %c0_i32_0 = arith.constant 0 : i32
    %c0_i32_1 = arith.constant 0 : i32
    return %c0_i32, %c0_i32_0 : i32, i32
  }
  func.func @transform_21(%arg0: i32) -> (i32, i32) {
    %c0_i32 = arith.constant 0 : i32
    %c0_i32_0 = arith.constant 0 : i32
    %c0_i32_1 = arith.constant 0 : i32
    return %c0_i32, %c0_i32_0 : i32, i32
  }
  func.func @transform_22(%arg0: i32) -> (i32, i32) {
    %c0_i32 = arith.constant 0 : i32
    %c0_i32_0 = arith.constant 0 : i32
    %c0_i32_1 = arith.constant 0 : i32
    return %c0_i32, %c0_i32_0 : i32, i32
  }
  func.func @transform_23(%arg0: i32) -> (i32, i32) {
    %c0_i32 = arith.constant 0 : i32
    %c0_i32_0 = arith.constant 0 : i32
    %c0_i32_1 = arith.constant 0 : i32
    return %c0_i32, %c0_i32_0 : i32, i32
  }
  func.func @transform_24(%arg0: i32) -> (i32, i32, i32) {
    %c0_i32 = arith.constant 0 : i32
    %c0_i32_0 = arith.constant 0 : i32
    %c0_i32_1 = arith.constant 0 : i32
    return %arg0, %c0_i32, %c0_i32_0 : i32, i32, i32
  }
}

</mosaic_0001>

<llo_original>
// kernel: forward.4
$region0: #{forward.4}
  #allocation0 [shape = 'u32[]', space=smem, size = 0x4, offset = 0x4, fixed_abs, tag = 'smem constant byte address 0x4 - core index']
  #allocation1 [shape = 'u32[144,128]{1,0:T(1,128)}', space=vmem, size = 0x12000, scoped, tag = 'internal scratch']
  %s0 = inlined_call_operand.vmem [shape: s32[16,3], index: 0, kind: input, shape index: {}]
  %s1 = inlined_call_operand.vmem [shape: bf16[29,32], index: 1, kind: input, shape index: {}]
  %s2 = inlined_call_operand.vmem [shape: bf16[16,32], index: 2, kind: output, shape index: {}]
  %s3 = sld [smem:[#allocation0]]
  $region18: #{forward.4} parent=0
    _
  %s5 = ssub.s32 1, %s3
  %s6 = scalar_select 0, %s5, %s3
  // Predicated region
  $region2: #{forward.4} parent=0 // pred_check
    _
  $region3: #{forward.4} parent=0 // pred_check_branch
    %8 = sbr.rel (0) target = $region5
  $region4: #{forward.4} parent=0 // pred_region
    _
  $region5: #{forward.4} parent=0 // pred_fallthru
    _
  // Predicated region
  $region6: #{forward.4} parent=0 // pred_check
    _
  $region7: #{forward.4} parent=0 // pred_check_branch
    %10 = sbr.rel (0) target = $region9
  $region8: #{forward.4} parent=0 // pred_region
    _
  $region9: #{forward.4} parent=0 // pred_fallthru
    _
  %v12 = vld [vmem:[%s0] sm:$0xff]
  %v13 = vld [vmem:[%s0 + $0x8] sm:$0xff]
  %v14 = vlaneseq
  %v15 = vand.u32 %v14, 127
  %16 = vset.pattern.permute.xlu0 0
  %17 = vperm.xlu0 %16, %v12
  %v18 = vpop.permute.xlu0 %17
  %19 = vset.pattern.permute.xlu0 0
  %20 = vperm.xlu0 %19, %v13
  %v21 = vpop.permute.xlu0 %20
  %vm22 = vcmp.eq.s32.totalorder %v15, %v18
  %vm23 = vcmp.eq.s32.totalorder %v15, %v21
  %v24 = vadd.s32 %v12, 9
  %v25 = vadd.s32 %v13, 9
  %26 = vset.pattern.permute.xlu0 1
  %27 = vperm.xlu0 %26, %v24
  %v28 = vpop.permute.xlu0 %27
  %29 = vset.pattern.permute.xlu0 1
  %30 = vperm.xlu0 %29, %v25
  %v31 = vpop.permute.xlu0 %30
  %vm32 = vcmp.eq.s32.totalorder %v15, %v28
  %vm33 = vcmp.eq.s32.totalorder %v15, %v31
  %vm34 = vmor %vm22, %vm32
  %vm35 = vmor %vm23, %vm33
  %v36 = vadd.s32 %v12, 21
  %v37 = vadd.s32 %v13, 21
  %38 = vset.pattern.permute.xlu0 2
  %39 = vperm.xlu0 %38, %v36
  %v40 = vpop.permute.xlu0 %39
  %41 = vset.pattern.permute.xlu0 2
  %42 = vperm.xlu0 %41, %v37
  %v43 = vpop.permute.xlu0 %42
  %vm44 = vcmp.eq.s32.totalorder %v15, %v40
  %vm45 = vcmp.eq.s32.totalorder %v15, %v43
  %vm46 = vmor %vm34, %vm44
  %vm47 = vmor %vm35, %vm45
  %v48 = vsel %vm46, 1, 0
  %v49 = vsel %vm47, 1, 0
  %v50 = vcvt.s32.f32 %v48
  %v51 = vcvt.s32.f32 %v49
  %v52 = vpack.c.bf16 %v51, %v50
  %v53 = vld [vmem:[%s1] sm:$0xf]
  %v54 = vld [vmem:[%s1 + $0x4] sm:$0xf]
  %v55 = vld [vmem:[%s1 + $0x8] sm:$0xf]
  %v56 = vld [vmem:[%s1 + $0xc] sm:$0x7]
  %v61 = vunpack.c.l.b16 %v53
  %v62 = vunpack.c.l.b16 %v54
  %v63 = vunpack.c.l.b16 %v55
  %v64 = vunpack.c.l.b16 %v56
  %v65 = vpack.c.b16 %v62, %v61
  %v66 = vpack.c.b16 %v64, %v63
  %vm68 = vcmask 236544
  %v70 = vsel %vm68, %v52, 0
  %vm72 = vcmask 1045504
  %vm73 = vcmask 1046528
  %v74 = vsel %vm72, 4294967295, 65535
  %v75 = vsel %vm73, %v74, 0
  %v77 = vand.u32 %v66, %v75
  %79 = vmatprep.subr.bf16.mxu0 0
  %80 = vmatpush1.bf16.msra.mxu0 %v65
  %81 = vmatprep.subr.bf16.mxu0 0
  %82 = vmatpush1.bf16.msra.mxu0 %v77
  %83 = vmatprep.subr.bf16.mxu0 0
  %84 = vmatpush1.bf16.msra.mxu0 0
  %85 = vmatprep.subr.bf16.mxu0 0
  %86 = vmatpush1.bf16.msra.mxu0 0
  %87 = vmatprep.subr.bf16.mxu0 0
  %88 = vmatpush1.bf16.msra.mxu0 0
  %89 = vmatprep.subr.bf16.mxu0 0
  %90 = vmatpush1.bf16.msra.mxu0 0
  %91 = vmatprep.subr.bf16.mxu0 0
  %92 = vmatpush1.bf16.msra.mxu0 0
  %93 = vmatprep.subr.bf16.mxu0 0
  %94 = vmatpush1.bf16.msra.mxu0 0
  %95 = vmatprep.subr.bf16.mxu0 0
  %96 = vmatpush1.bf16.msra.mxu0 0
  %97 = vmatprep.subr.bf16.mxu0 0
  %98 = vmatpush1.bf16.msra.mxu0 0
  %99 = vmatprep.subr.bf16.mxu0 0
  %100 = vmatpush1.bf16.msra.mxu0 0
  %101 = vmatprep.subr.bf16.mxu0 0
  %102 = vmatpush1.bf16.msra.mxu0 0
  %103 = vmatprep.subr.bf16.mxu0 0
  %104 = vmatpush1.bf16.msra.mxu0 0
  %105 = vmatprep.subr.bf16.mxu0 0
  %106 = vmatpush1.bf16.msra.mxu0 0
  %107 = vmatprep.subr.bf16.mxu0 0
  %108 = vmatpush1.bf16.msra.mxu0 0
  %109 = vmatprep.subr.bf16.mxu0 0
  %110 = vmatpush1.bf16.msra.mxu0 0
  %111 = vmatprep.mubr.bf16.mxu0 0
  %112 = vmatmul.mubr.bf16.gmra.mrb[0].mxu0 %v70
  %v113 = vpop.f32.mrb[0].mxu0
  %v114 = vadd.f32 0.0, %v113
  %v115 = vpop.f32.mrb[0].mxu0
  %v116 = vpop.f32.mrb[0].mxu0
  %v117 = vadd.f32 0.0, %v116
  %v118 = vpop.f32.mrb[0].mxu0
  %119 = vdwg.mxu0
  %v120 = vpack.c.bf16 %v117, %v114
  %v122 = vunpack.c.l.b16 %v120
  %v123 = vunpack.c.h.b16 %v120
  %v124 = vpack.c.b16 %v122, %v122
  %v125 = vpack.c.b16 %v123, %v123
  %vm128 = vcmask 257024
  %129 = vst.msk [vmem:[%s2] sm:$0xf] %vm128, %v124
  %130 = vst.msk [vmem:[%s2 + $0x4] sm:$0xf] %vm128, %v125
  // Predicated region
  $region10: #{forward.4} parent=0 // pred_check
    _
  $region11: #{forward.4} parent=0 // pred_check_branch
    %132 = sbr.rel (0) target = $region13
  $region12: #{forward.4} parent=0 // pred_region
    _
  $region13: #{forward.4} parent=0 // pred_fallthru
    _
  // Predicated region
  $region14: #{forward.4} parent=0 // pred_check
    _
  $region15: #{forward.4} parent=0 // pred_check_branch
    %134 = sbr.rel (0) target = $region17
  $region16: #{forward.4} parent=0 // pred_region
    _
  $region17: #{forward.4} parent=0 // pred_fallthru
    _

// kernel: forward.7
$region0: #{forward.7}
  #allocation0 [shape = 'u32[]', space=smem, size = 0x4, offset = 0x4, fixed_abs, tag = 'smem constant byte address 0x4 - core index']
  #allocation1 [shape = 'u32[144,128]{1,0:T(1,128)}', space=vmem, size = 0x12000, scoped, tag = 'internal scratch']
  %s0 = inlined_call_operand.vmem [shape: bf16[16,32], index: 0, kind: input, shape index: {}]
  %s1 = inlined_call_operand.vmem [shape: f32[1,32], index: 1, kind: input, shape index: {}]
  %s2 = inlined_call_operand.vmem [shape: f32[1,32], index: 2, kind: input, shape index: {}]
  %s3 = inlined_call_operand.vmem [shape: bf16[32,128], index: 3, kind: input, shape index: {}]
  %s4 = inlined_call_operand.vmem [shape: f32[1,128], index: 4, kind: input, shape index: {}]
  %s5 = inlined_call_operand.vmem [shape: f32[16,128], index: 5, kind: output, shape index: {}]
  %s6 = sld [smem:[#allocation0]]
  $region30: #{forward.7} parent=0
    _
  %s8 = ssub.s32 1, %s6
  %s9 = scalar_select 0, %s8, %s6
  // Predicated region
  $region2: #{forward.7} parent=0 // pred_check
    _
  $region3: #{forward.7} parent=0 // pred_check_branch
    %11 = sbr.rel (0) target = $region5
  $region4: #{forward.7} parent=0 // pred_region
    _
  $region5: #{forward.7} parent=0 // pred_fallthru
    _
  // Predicated region
  $region6: #{forward.7} parent=0 // pred_check
    _
  $region7: #{forward.7} parent=0 // pred_check_branch
    %13 = sbr.rel (0) target = $region9
  $region8: #{forward.7} parent=0 // pred_region
    _
  $region9: #{forward.7} parent=0 // pred_fallthru
    _
  // Predicated region
  $region10: #{forward.7} parent=0 // pred_check
    _
  $region11: #{forward.7} parent=0 // pred_check_branch
    %15 = sbr.rel (0) target = $region13
  $region12: #{forward.7} parent=0 // pred_region
    _
  $region13: #{forward.7} parent=0 // pred_fallthru
    _
  // Predicated region
  $region14: #{forward.7} parent=0 // pred_check
    _
  $region15: #{forward.7} parent=0 // pred_check_branch
    %17 = sbr.rel (0) target = $region17
  $region16: #{forward.7} parent=0 // pred_region
    _
  $region17: #{forward.7} parent=0 // pred_fallthru
    _
  // Predicated region
  $region18: #{forward.7} parent=0 // pred_check
    _
  $region19: #{forward.7} parent=0 // pred_check_branch
    %19 = sbr.rel (0) target = $region21
  $region20: #{forward.7} parent=0 // pred_region
    _
  $region21: #{forward.7} parent=0 // pred_fallthru
    _
  %v21 = vld [vmem:[%s0] sm:$0xf]
  %v22 = vld [vmem:[%s0 + $0x4] sm:$0xf]
  %v23 = vunpack.c.l.bf16 %v21
  %v24 = vunpack.c.l.bf16 %v22
  %v25 = vld [vmem:[%s1] sm:$0x1]
  %v26 = vld [vmem:[%s2] sm:$0x1]
  %vm27 = vcmask 261120
  %v28 = vsel %vm27, %v23, 0.0
  %29 = vadd.xlane.f32.xlu0 %v28
  %v30 = vpop.xlane.xlu0 %29
  %v31 = vsel %vm27, %v24, 0.0
  %32 = vadd.xlane.f32.xlu0 %v31
  %v33 = vpop.xlane.xlu0 %32
  %v34 = vrcp.pop 32.0
  %v35 = vmul.f32 %v30, %v34
  %v36 = vmul.f32 %v33, %v34
  %v37 = vsub.f32 %v23, %v35
  %v38 = vsub.f32 %v24, %v36
  %v39 = vmul.f32 %v37, %v37
  %v40 = vmul.f32 %v38, %v38
  %v41 = vsel %vm27, %v39, 0.0
  %42 = vadd.xlane.f32.xlu0 %v41
  %v43 = vpop.xlane.xlu0 %42
  %v44 = vsel %vm27, %v40, 0.0
  %45 = vadd.xlane.f32.xlu0 %v44
  %v46 = vpop.xlane.xlu0 %45
  %v47 = vmul.f32 %v43, %v34
  %v48 = vmul.f32 %v46, %v34
  %v49 = vadd.f32 %v47, 1e-05
  %v50 = vadd.f32 %v48, 1e-05
  %v51 = vrsqrt.pop %v49
  %v52 = vrsqrt.pop %v50
  %v53 = vmul.f32 %v37, %v51
  %v54 = vmul.f32 %v38, %v52
  %v56 = vlaneseq
  %v57 = vshrl.u32 %v56, 7
  %v58 = vsub.s32 0, %v57
  %v59 = vrot.slane %v25, %v58
  %v61 = vmul.f32 %v53, %v59
  %v62 = vmul.f32 %v54, %v59
  %v64 = vlaneseq
  %v65 = vshrl.u32 %v64, 7
  %v66 = vsub.s32 0, %v65
  %v67 = vrot.slane %v26, %v66
  %v69 = vadd.f32 %v61, %v67
  %v70 = vadd.f32 %v62, %v67
  %v71 = vpack.c.bf16 %v70, %v69
  %v72 = vld [vmem:[%s3] sm:$0xf]
  %v73 = vld [vmem:[%s3 + $0x4] sm:$0xf]
  %v74 = vld [vmem:[%s3 + $0x8] sm:$0xf]
  %v75 = vld [vmem:[%s3 + $0xc] sm:$0xf]
  %v76 = vld [vmem:[%s4] sm:$0x1]
  %v78 = vlaneseq
  %v79 = vshrl.u32 %v78, 7
  %v80 = vsub.s32 0, %v79
  %v81 = vrot.slane %v76, %v80
  %v87 = vunpack.c.l.b16 %v72
  %v88 = vunpack.c.l.b16 %v73
  %v89 = vunpack.c.l.b16 %v74
  %v90 = vunpack.c.l.b16 %v75
  %v91 = vpack.c.b16 %v88, %v87
  %v92 = vpack.c.b16 %v90, %v89
  %v96 = vsel %vm27, %v71, 0
  %98 = vmatprep.subr.bf16.mxu0 0
  %99 = vmatpush1.bf16.msra.mxu0 %v91
  %100 = vmatprep.subr.bf16.mxu0 0
  %101 = vmatpush1.bf16.msra.mxu0 %v92
  %102 = vmatprep.subr.bf16.mxu0 0
  %103 = vmatpush1.bf16.msra.mxu0 0
  %104 = vmatprep.subr.bf16.mxu0 0
  %105 = vmatpush1.bf16.msra.mxu0 0
  %106 = vmatprep.subr.bf16.mxu0 0
  %107 = vmatpush1.bf16.msra.mxu0 0
  %108 = vmatprep.subr.bf16.mxu0 0
  %109 = vmatpush1.bf16.msra.mxu0 0
  %110 = vmatprep.subr.bf16.mxu0 0
  %111 = vmatpush1.bf16.msra.mxu0 0
  %112 = vmatprep.subr.bf16.mxu0 0
  %113 = vmatpush1.bf16.msra.mxu0 0
  %114 = vmatprep.subr.bf16.mxu0 0
  %115 = vmatpush1.bf16.msra.mxu0 0
  %116 = vmatprep.subr.bf16.mxu0 0
  %117 = vmatpush1.bf16.msra.mxu0 0
  %118 = vmatprep.subr.bf16.mxu0 0
  %119 = vmatpush1.bf16.msra.mxu0 0
  %120 = vmatprep.subr.bf16.mxu0 0
  %121 = vmatpush1.bf16.msra.mxu0 0
  %122 = vmatprep.subr.bf16.mxu0 0
  %123 = vmatpush1.bf16.msra.mxu0 0
  %124 = vmatprep.subr.bf16.mxu0 0
  %125 = vmatpush1.bf16.msra.mxu0 0
  %126 = vmatprep.subr.bf16.mxu0 0
  %127 = vmatpush1.bf16.msra.mxu0 0
  %128 = vmatprep.subr.bf16.mxu0 0
  %129 = vmatpush1.bf16.msra.mxu0 0
  %130 = vmatprep.mubr.bf16.mxu0 0
  %131 = vmatmul.mubr.bf16.gmra.mrb[0].mxu0 %v96
  %v132 = vpop.f32.mrb[0].mxu0
  %v133 = vadd.f32 %v81, %v132
  %v134 = vpop.f32.mrb[0].mxu0
  %v135 = vpop.f32.mrb[0].mxu0
  %v136 = vadd.f32 %v81, %v135
  %v137 = vpop.f32.mrb[0].mxu0
  %138 = vdwg.mxu0
  %v139 = vlaneseq
  %v140 = vand.u32 %v139, 127
  %vm141 = vcmp.lt.s32.totalorder %v140, 12
  %vm142 = vcmp.ge.s32.totalorder %v140, 12
  %vm143 = vcmp.lt.s32.totalorder %v140, 20
  %vm144 = vmand %vm142, %vm143
  %v145 = vsel %vm141, %v133, -3.4028235e+38
  %v146 = vsel %vm141, %v136, -3.4028235e+38
  %147 = vmax.xlane.f32.xlu0 %v145
  %v148 = vpop.xlane.xlu0 %147
  %149 = vmax.xlane.f32.xlu0 %v146
  %v150 = vpop.xlane.xlu0 %149
  %v151 = vsel %vm144, %v133, -3.4028235e+38
  %v152 = vsel %vm144, %v136, -3.4028235e+38
  %153 = vmax.xlane.f32.xlu0 %v151
  %v154 = vpop.xlane.xlu0 %153
  %155 = vmax.xlane.f32.xlu0 %v152
  %v156 = vpop.xlane.xlu0 %155
  %v157 = vsub.f32 %v133, %v148
  %v158 = vsub.f32 %v136, %v150
  %v159 = vmul.f32 %v157, 1.442695
  %v160 = vpow.pop %v159
  %v161 = vmul.f32 %v158, 1.442695
  %v162 = vpow.pop %v161
  %v163 = vsel %vm141, %v160, 0.0
  %v164 = vsel %vm141, %v162, 0.0
  %v165 = vsub.f32 %v133, %v154
  %v166 = vsub.f32 %v136, %v156
  %v167 = vmul.f32 %v165, 1.442695
  %v168 = vpow.pop %v167
  %v169 = vmul.f32 %v166, 1.442695
  %v170 = vpow.pop %v169
  %v171 = vsel %vm144, %v168, 0.0
  %v172 = vsel %vm144, %v170, 0.0
  %173 = vadd.xlane.f32.xlu0 %v163
  %v174 = vpop.xlane.xlu0 %173
  %175 = vadd.xlane.f32.xlu0 %v164
  %v176 = vpop.xlane.xlu0 %175
  %177 = vadd.xlane.f32.xlu0 %v171
  %v178 = vpop.xlane.xlu0 %177
  %179 = vadd.xlane.f32.xlu0 %v172
  %v180 = vpop.xlane.xlu0 %179
  %v181 = vrcp.pop %v174
  %v182 = vmul.f32 1.0, %v181
  %v183 = vrcp.pop %v176
  %v184 = vmul.f32 1.0, %v183
  %v185 = vmul.f32 %v163, %v182
  %v186 = vmul.f32 %v164, %v184
  %v187 = vrcp.pop %v178
  %v188 = vmul.f32 1.0, %v187
  %v189 = vrcp.pop %v180
  %v190 = vmul.f32 1.0, %v189
  %v191 = vmul.f32 %v171, %v188
  %v192 = vmul.f32 %v172, %v190
  %v193 = vadd.f32 %v185, %v191
  %v194 = vadd.f32 %v186, %v192
  %195 = vst [vmem:[%s5] sm:$0xff] %v193
  %196 = vst [vmem:[%s5 + $0x8] sm:$0xff] %v194
  // Predicated region
  $region22: #{forward.7} parent=0 // pred_check
    _
  $region23: #{forward.7} parent=0 // pred_check_branch
    %198 = sbr.rel (0) target = $region25
  $region24: #{forward.7} parent=0 // pred_region
    _
  $region25: #{forward.7} parent=0 // pred_fallthru
    _
  // Predicated region
  $region26: #{forward.7} parent=0 // pred_check
    _
  $region27: #{forward.7} parent=0 // pred_check_branch
    %200 = sbr.rel (0) target = $region29
  $region28: #{forward.7} parent=0 // pred_region
    _
  $region29: #{forward.7} parent=0 // pred_fallthru
    _

// kernel: forward.6
$region0: #{forward.6}
  #allocation0 [shape = 'u32[]', space=smem, size = 0x4, offset = 0x4, fixed_abs, tag = 'smem constant byte address 0x4 - core index']
  #allocation1 [shape = 'u32[144,128]{1,0:T(1,128)}', space=vmem, size = 0x12000, scoped, tag = 'internal scratch']
  %s0 = inlined_call_operand.vmem [shape: bf16[2,8,32], index: 0, kind: input, shape index: {}]
  %s1 = inlined_call_operand.vmem [shape: bf16[2,8,32], index: 1, kind: input, shape index: {}]
  %s2 = inlined_call_operand.vmem [shape: s32[2,1,8], index: 2, kind: input, shape index: {}]
  %s3 = inlined_call_operand.vmem [shape: s32[2,1,8], index: 3, kind: input, shape index: {}]
  %s4 = inlined_call_operand.vmem [shape: f32[1,32], index: 4, kind: input, shape index: {}]
  %s5 = inlined_call_operand.vmem [shape: f32[1,32], index: 5, kind: input, shape index: {}]
  %s6 = inlined_call_operand.vmem [shape: bf16[32,32], index: 6, kind: input, shape index: {}]
  %s7 = inlined_call_operand.vmem [shape: bf16[32,32], index: 7, kind: input, shape index: {}]
  %s8 = inlined_call_operand.vmem [shape: bf16[32,32], index: 8, kind: input, shape index: {}]
  %s9 = inlined_call_operand.vmem [shape: bf16[32,32], index: 9, kind: input, shape index: {}]
  %s10 = inlined_call_operand.vmem [shape: f32[1,32], index: 10, kind: input, shape index: {}]
  %s11 = inlined_call_operand.vmem [shape: f32[1,32], index: 11, kind: input, shape index: {}]
  %s12 = inlined_call_operand.vmem [shape: f32[1,32], index: 12, kind: input, shape index: {}]
  %s13 = inlined_call_operand.vmem [shape: bf16[32,32], index: 13, kind: input, shape index: {}]
  %s14 = inlined_call_operand.vmem [shape: bf16[32,32], index: 14, kind: input, shape index: {}]
  %s15 = inlined_call_operand.vmem [shape: bf16[32,32], index: 15, kind: input, shape index: {}]
  %s16 = inlined_call_operand.vmem [shape: bf16[32,32], index: 16, kind: input, shape index: {}]
  %s17 = inlined_call_operand.vmem [shape: f32[1,32], index: 17, kind: input, shape index: {}]
  %s18 = inlined_call_operand.vmem [shape: f32[1,32], index: 18, kind: input, shape index: {}]
  %s19 = inlined_call_operand.vmem [shape: f32[1,32], index: 19, kind: input, shape index: {}]
  %s20 = inlined_call_operand.vmem [shape: bf16[32,128], index: 20, kind: input, shape index: {}]
  %s21 = inlined_call_operand.vmem [shape: f32[1,128], index: 21, kind: input, shape index: {}]
  %s22 = inlined_call_operand.vmem [shape: bf16[128,32], index: 22, kind: input, shape index: {}]
  %s23 = inlined_call_operand.hbm [shape: f32[1,32], index: 23, kind: input, shape index: {}]
  %s24 = inlined_call_operand.vmem [shape: bf16[2,8,32], index: 24, kind: output, shape index: {}]
  %s25 = sld [smem:[#allocation0]]
  $region133: #{forward.6} parent=0
    _
  %s27 = ssub.s32 1, %s25
  %s28 = scalar_select 0, %s27, %s25
  $region1: #{forward.6} parent=0
    #allocation2 [shape = 'u8[512]{0}', space=vmem, size = 0x400, scoped, tag = 'input window, operand 23, single buffered']
    #allocation3 [shape = 's32[2]{0}', space=sflag, size = 0x8, scoped, tag = 'scoped memory for forward.6']
    %29 = vsyncpa [#allocation3], 0
    loop: start=0, step=1, limit=4
    $region2: #{forward.6} parent=1 // loop_pre_header
      _
    $region3: #{forward.6} parent=1 // loop_header
      %s31 = sphi 0, %s35
      %p32 = scmp.ge.s32.totalorder %s31, 4
      %s41 = sphi 0, %s43
      %s44 = sphi 0, %s41
      %s45 = sphi 0, %s44
      %s61 = sphi 0, %s45
      %s67 = sphi 0, %s69
      %s70 = sphi 0, %s67
      %s71 = sphi 0, %s70
      %s87 = sphi 0, %s71
      %s93 = sphi 0, %s95
      %s96 = sphi 0, %s93
      %s97 = sphi 0, %s96
      %s113 = sphi 0, %s97
      %s119 = sphi 0, %s121
      %s122 = sphi 0, %s119
      %s123 = sphi 0, %s122
      %s139 = sphi 0, %s123
      %s143 = sphi 0, %s143
      %s145 = sphi 0, %s143
      %s146 = sphi 0, %s145
      %s160 = sphi 0, %s146
      %s164 = sphi 0, %s164
      %s166 = sphi 0, %s164
      %s167 = sphi 0, %s166
      %s181 = sphi 0, %s167
      %s185 = sphi 0, %s185
      %s187 = sphi 0, %s185
      %s188 = sphi 0, %s187
      %s202 = sphi 0, %s188
      %s206 = sphi 0, %s206
      %s208 = sphi 0, %s206
      %s209 = sphi 0, %s208
      %s223 = sphi 0, %s209
      %s227 = sphi 0, %s227
      %s229 = sphi 0, %s227
      %s230 = sphi 0, %s229
      %s244 = sphi 0, %s230
      %s248 = sphi 0, %s248
      %s250 = sphi 0, %s248
      %s251 = sphi 0, %s250
      %s265 = sphi 0, %s251
      %s269 = sphi 0, %s269
      %s271 = sphi 0, %s269
      %s272 = sphi 0, %s271
      %s286 = sphi 0, %s272
      %s290 = sphi 0, %s290
      %s292 = sphi 0, %s290
      %s293 = sphi 0, %s292
      %s307 = sphi 0, %s293
      %s311 = sphi 0, %s311
      %s313 = sphi 0, %s311
      %s314 = sphi 0, %s313
      %s328 = sphi 0, %s314
      %s332 = sphi 0, %s332
      %s334 = sphi 0, %s332
      %s335 = sphi 0, %s334
      %s349 = sphi 0, %s335
      %s353 = sphi 0, %s353
      %s355 = sphi 0, %s353
      %s356 = sphi 0, %s355
      %s370 = sphi 0, %s356
      %s374 = sphi 0, %s374
      %s376 = sphi 0, %s374
      %s377 = sphi 0, %s376
      %s391 = sphi 0, %s377
      %s395 = sphi 0, %s395
      %s397 = sphi 0, %s395
      %s398 = sphi 0, %s397
      %s412 = sphi 0, %s398
      %s416 = sphi 0, %s416
      %s418 = sphi 0, %s416
      %s419 = sphi 0, %s418
      %s433 = sphi 0, %s419
      %s437 = sphi 0, %s437
      %s439 = sphi 0, %s437
      %s440 = sphi 0, %s439
      %s454 = sphi 0, %s440
      %s458 = sphi 0, %s458
      %s460 = sphi 0, %s458
      %s461 = sphi 0, %s460
      %s475 = sphi 0, %s461
      %s479 = sphi 0, %s479
      %s481 = sphi 0, %s479
      %s482 = sphi 0, %s481
      %s496 = sphi 0, %s482
      %s500 = sphi 0, %s500
      %s502 = sphi 0, %s500
      %s503 = sphi 0, %s502
      %s517 = sphi 0, %s503
      %s521 = sphi 0, %s521
      %s523 = sphi 0, %s521
      %s524 = sphi 0, %s523
      %s538 = sphi 0, %s524
      %s542 = sphi 0, %s542
      %s544 = sphi 0, %s542
      %s545 = sphi 0, %s544
      %s559 = sphi 0, %s545
      %s565 = sphi 0, %s567
      %s568 = sphi 0, %s565
      %s569 = sphi 0, %s568
      %s585 = sphi 0, %s569
    $region4: #{forward.6} parent=1 // loop_header_branch
      %34 = sbr.rel (%p32) target = $region8
    $region5: #{forward.6} parent=1 // loop_body
      %s36 = ssub.s32 %s31, 1
      %s37 = ssub.s32 %s31, 2
      %s38 = sadd.s32 %s31, 1
      %s39 = ssub.s32 %s31, %s38
      %p40 = scmp.eq.s32.totalorder %s39, 0
      %s42 = sadd.s32 %s41, 1
      %s43 = scalar_select %p40, %s41, %s42
      %p46 = pneg %p40
      %p47 = scmp.eq.s32.totalorder %s31, 1
      %p48 = por %p46, %p47
      %p49 = scmp.ne.s32.totalorder %s41, %s44
      %p50 = scmp.eq.s32.totalorder %s31, 0
      %p51 = por %p49, %p50
      %p52 = scmp.ne.s32.totalorder %s41, %s44
      %p53 = scmp.eq.s32.totalorder %s36, 1
      %p54 = por %p52, %p53
      %p55 = scmp.ne.s32.totalorder %s44, %s45
      %p56 = scmp.eq.s32.totalorder %s36, 0
      %p57 = por %p55, %p56
      %p58 = scmp.ne.s32.totalorder %s44, %s45
      %p59 = scmp.eq.s32.totalorder %s37, 1
      %p60 = por %p58, %p59
      %p62 = scmp.ne.s32.totalorder %s45, %s61
      %p63 = scmp.eq.s32.totalorder %s37, 0
      %p64 = por %p62, %p63
      %s65 = ssub.s32 %s31, %s38
      %p66 = scmp.eq.s32.totalorder %s65, 0
      %s68 = sadd.s32 %s67, 1
      %s69 = scalar_select %p66, %s67, %s68
      %p72 = pneg %p66
      %p73 = scmp.eq.s32.totalorder %s31, 1
      %p74 = por %p72, %p73
      %p75 = scmp.ne.s32.totalorder %s67, %s70
      %p76 = scmp.eq.s32.totalorder %s31, 0
      %p77 = por %p75, %p76
      %p78 = scmp.ne.s32.totalorder %s67, %s70
      %p79 = scmp.eq.s32.totalorder %s36, 1
      %p80 = por %p78, %p79
      %p81 = scmp.ne.s32.totalorder %s70, %s71
      %p82 = scmp.eq.s32.totalorder %s36, 0
      %p83 = por %p81, %p82
      %p84 = scmp.ne.s32.totalorder %s70, %s71
      %p85 = scmp.eq.s32.totalorder %s37, 1
      %p86 = por %p84, %p85
      %p88 = scmp.ne.s32.totalorder %s71, %s87
      %p89 = scmp.eq.s32.totalorder %s37, 0
      %p90 = por %p88, %p89
      %s91 = ssub.s32 %s31, %s38
      %p92 = scmp.eq.s32.totalorder %s91, 0
      %s94 = sadd.s32 %s93, 1
      %s95 = scalar_select %p92, %s93, %s94
      %p98 = pneg %p92
      %p99 = scmp.eq.s32.totalorder %s31, 1
      %p100 = por %p98, %p99
      %p101 = scmp.ne.s32.totalorder %s93, %s96
      %p102 = scmp.eq.s32.totalorder %s31, 0
      %p103 = por %p101, %p102
      %p104 = scmp.ne.s32.totalorder %s93, %s96
      %p105 = scmp.eq.s32.totalorder %s36, 1
      %p106 = por %p104, %p105
      %p107 = scmp.ne.s32.totalorder %s96, %s97
      %p108 = scmp.eq.s32.totalorder %s36, 0
      %p109 = por %p107, %p108
      %p110 = scmp.ne.s32.totalorder %s96, %s97
      %p111 = scmp.eq.s32.totalorder %s37, 1
      %p112 = por %p110, %p111
      %p114 = scmp.ne.s32.totalorder %s97, %s113
      %p115 = scmp.eq.s32.totalorder %s37, 0
      %p116 = por %p114, %p115
      %s117 = ssub.s32 %s31, %s38
      %p118 = scmp.eq.s32.totalorder %s117, 0
      %s120 = sadd.s32 %s119, 1
      %s121 = scalar_select %p118, %s119, %s120
      %p124 = pneg %p118
      %p125 = scmp.eq.s32.totalorder %s31, 1
      %p126 = por %p124, %p125
      %p127 = scmp.ne.s32.totalorder %s119, %s122
      %p128 = scmp.eq.s32.totalorder %s31, 0
      %p129 = por %p127, %p128
      %p130 = scmp.ne.s32.totalorder %s119, %s122
      %p131 = scmp.eq.s32.totalorder %s36, 1
      %p132 = por %p130, %p131
      %p133 = scmp.ne.s32.totalorder %s122, %s123
      %p134 = scmp.eq.s32.totalorder %s36, 0
      %p135 = por %p133, %p134
      %p136 = scmp.ne.s32.totalorder %s122, %s123
      %p137 = scmp.eq.s32.totalorder %s37, 1
      %p138 = por %p136, %p137
      %p140 = scmp.ne.s32.totalorder %s123, %s139
      %p141 = scmp.eq.s32.totalorder %s37, 0
      %p142 = por %p140, %p141
      %s144 = sadd.s32 %s143, 1
      %p147 = scmp.eq.s32.totalorder %s31, 1
      %p148 = scmp.ne.s32.totalorder %s143, %s145
      %p149 = scmp.eq.s32.totalorder %s31, 0
      %p150 = por %p148, %p149
      %p151 = scmp.ne.s32.totalorder %s143, %s145
      %p152 = scmp.eq.s32.totalorder %s36, 1
      %p153 = por %p151, %p152
      %p154 = scmp.ne.s32.totalorder %s145, %s146
      %p155 = scmp.eq.s32.totalorder %s36, 0
      %p156 = por %p154, %p155
      %p157 = scmp.ne.s32.totalorder %s145, %s146
      %p158 = scmp.eq.s32.totalorder %s37, 1
      %p159 = por %p157, %p158
      %p161 = scmp.ne.s32.totalorder %s146, %s160
      %p162 = scmp.eq.s32.totalorder %s37, 0
      %p163 = por %p161, %p162
      %s165 = sadd.s32 %s164, 1
      %p168 = scmp.eq.s32.totalorder %s31, 1
      %p169 = scmp.ne.s32.totalorder %s164, %s166
      %p170 = scmp.eq.s32.totalorder %s31, 0
      %p171 = por %p169, %p170
      %p172 = scmp.ne.s32.totalorder %s164, %s166
      %p173 = scmp.eq.s32.totalorder %s36, 1
      %p174 = por %p172, %p173
      %p175 = scmp.ne.s32.totalorder %s166, %s167
      %p176 = scmp.eq.s32.totalorder %s36, 0
      %p177 = por %p175, %p176
      %p178 = scmp.ne.s32.totalorder %s166, %s167
      %p179 = scmp.eq.s32.totalorder %s37, 1
      %p180 = por %p178, %p179
      %p182 = scmp.ne.s32.totalorder %s167, %s181
      %p183 = scmp.eq.s32.totalorder %s37, 0
      %p184 = por %p182, %p183
      %s186 = sadd.s32 %s185, 1
      %p189 = scmp.eq.s32.totalorder %s31, 1
      %p190 = scmp.ne.s32.totalorder %s185, %s187
      %p191 = scmp.eq.s32.totalorder %s31, 0
      %p192 = por %p190, %p191
      %p193 = scmp.ne.s32.totalorder %s185, %s187
      %p194 = scmp.eq.s32.totalorder %s36, 1
      %p195 = por %p193, %p194
      %p196 = scmp.ne.s32.totalorder %s187, %s188
      %p197 = scmp.eq.s32.totalorder %s36, 0
      %p198 = por %p196, %p197
      %p199 = scmp.ne.s32.totalorder %s187, %s188
      %p200 = scmp.eq.s32.totalorder %s37, 1
      %p201 = por %p199, %p200
      %p203 = scmp.ne.s32.totalorder %s188, %s202
      %p204 = scmp.eq.s32.totalorder %s37, 0
      %p205 = por %p203, %p204
      %s207 = sadd.s32 %s206, 1
      %p210 = scmp.eq.s32.totalorder %s31, 1
      %p211 = scmp.ne.s32.totalorder %s206, %s208
      %p212 = scmp.eq.s32.totalorder %s31, 0
      %p213 = por %p211, %p212
      %p214 = scmp.ne.s32.totalorder %s206, %s208
      %p215 = scmp.eq.s32.totalorder %s36, 1
      %p216 = por %p214, %p215
      %p217 = scmp.ne.s32.totalorder %s208, %s209
      %p218 = scmp.eq.s32.totalorder %s36, 0
      %p219 = por %p217, %p218
      %p220 = scmp.ne.s32.totalorder %s208, %s209
      %p221 = scmp.eq.s32.totalorder %s37, 1
      %p222 = por %p220, %p221
      %p224 = scmp.ne.s32.totalorder %s209, %s223
      %p225 = scmp.eq.s32.totalorder %s37, 0
      %p226 = por %p224, %p225
      %s228 = sadd.s32 %s227, 1
      %p231 = scmp.eq.s32.totalorder %s31, 1
      %p232 = scmp.ne.s32.totalorder %s227, %s229
      %p233 = scmp.eq.s32.totalorder %s31, 0
      %p234 = por %p232, %p233
      %p235 = scmp.ne.s32.totalorder %s227, %s229
      %p236 = scmp.eq.s32.totalorder %s36, 1
      %p237 = por %p235, %p236
      %p238 = scmp.ne.s32.totalorder %s229, %s230
      %p239 = scmp.eq.s32.totalorder %s36, 0
      %p240 = por %p238, %p239
      %p241 = scmp.ne.s32.totalorder %s229, %s230
      %p242 = scmp.eq.s32.totalorder %s37, 1
      %p243 = por %p241, %p242
      %p245 = scmp.ne.s32.totalorder %s230, %s244
      %p246 = scmp.eq.s32.totalorder %s37, 0
      %p247 = por %p245, %p246
      %s249 = sadd.s32 %s248, 1
      %p252 = scmp.eq.s32.totalorder %s31, 1
      %p253 = scmp.ne.s32.totalorder %s248, %s250
      %p254 = scmp.eq.s32.totalorder %s31, 0
      %p255 = por %p253, %p254
      %p256 = scmp.ne.s32.totalorder %s248, %s250
      %p257 = scmp.eq.s32.totalorder %s36, 1
      %p258 = por %p256, %p257
      %p259 = scmp.ne.s32.totalorder %s250, %s251
      %p260 = scmp.eq.s32.totalorder %s36, 0
      %p261 = por %p259, %p260
      %p262 = scmp.ne.s32.totalorder %s250, %s251
      %p263 = scmp.eq.s32.totalorder %s37, 1
      %p264 = por %p262, %p263
      %p266 = scmp.ne.s32.totalorder %s251, %s265
      %p267 = scmp.eq.s32.totalorder %s37, 0
      %p268 = por %p266, %p267
      %s270 = sadd.s32 %s269, 1
      %p273 = scmp.eq.s32.totalorder %s31, 1
      %p274 = scmp.ne.s32.totalorder %s269, %s271
      %p275 = scmp.eq.s32.totalorder %s31, 0
      %p276 = por %p274, %p275
      %p277 = scmp.ne.s32.totalorder %s269, %s271
      %p278 = scmp.eq.s32.totalorder %s36, 1
      %p279 = por %p277, %p278
      %p280 = scmp.ne.s32.totalorder %s271, %s272
      %p281 = scmp.eq.s32.totalorder %s36, 0
      %p282 = por %p280, %p281
      %p283 = scmp.ne.s32.totalorder %s271, %s272
      %p284 = scmp.eq.s32.totalorder %s37, 1
      %p285 = por %p283, %p284
      %p287 = scmp.ne.s32.totalorder %s272, %s286
      %p288 = scmp.eq.s32.totalorder %s37, 0
      %p289 = por %p287, %p288
      %s291 = sadd.s32 %s290, 1
      %p294 = scmp.eq.s32.totalorder %s31, 1
      %p295 = scmp.ne.s32.totalorder %s290, %s292
      %p296 = scmp.eq.s32.totalorder %s31, 0
      %p297 = por %p295, %p296
      %p298 = scmp.ne.s32.totalorder %s290, %s292
      %p299 = scmp.eq.s32.totalorder %s36, 1
      %p300 = por %p298, %p299
      %p301 = scmp.ne.s32.totalorder %s292, %s293
      %p302 = scmp.eq.s32.totalorder %s36, 0
      %p303 = por %p301, %p302
      %p304 = scmp.ne.s32.totalorder %s292, %s293
      %p305 = scmp.eq.s32.totalorder %s37, 1
      %p306 = por %p304, %p305
      %p308 = scmp.ne.s32.totalorder %s293, %s307
      %p309 = scmp.eq.s32.totalorder %s37, 0
      %p310 = por %p308, %p309
      %s312 = sadd.s32 %s311, 1
      %p315 = scmp.eq.s32.totalorder %s31, 1
      %p316 = scmp.ne.s32.totalorder %s311, %s313
      %p317 = scmp.eq.s32.totalorder %s31, 0
      %p318 = por %p316, %p317
      %p319 = scmp.ne.s32.totalorder %s311, %s313
      %p320 = scmp.eq.s32.totalorder %s36, 1
      %p321 = por %p319, %p320
      %p322 = scmp.ne.s32.totalorder %s313, %s314
      %p323 = scmp.eq.s32.totalorder %s36, 0
      %p324 = por %p322, %p323
      %p325 = scmp.ne.s32.totalorder %s313, %s314
      %p326 = scmp.eq.s32.totalorder %s37, 1
      %p327 = por %p325, %p326
      %p329 = scmp.ne.s32.totalorder %s314, %s328
      %p330 = scmp.eq.s32.totalorder %s37, 0
      %p331 = por %p329, %p330
      %s333 = sadd.s32 %s332, 1
      %p336 = scmp.eq.s32.totalorder %s31, 1
      %p337 = scmp.ne.s32.totalorder %s332, %s334
      %p338 = scmp.eq.s32.totalorder %s31, 0
      %p339 = por %p337, %p338
      %p340 = scmp.ne.s32.totalorder %s332, %s334
      %p341 = scmp.eq.s32.totalorder %s36, 1
      %p342 = por %p340, %p341
      %p343 = scmp.ne.s32.totalorder %s334, %s335
      %p344 = scmp.eq.s32.totalorder %s36, 0
      %p345 = por %p343, %p344
      %p346 = scmp.ne.s32.totalorder %s334, %s335
      %p347 = scmp.eq.s32.totalorder %s37, 1
      %p348 = por %p346, %p347
      %p350 = scmp.ne.s32.totalorder %s335, %s349
      %p351 = scmp.eq.s32.totalorder %s37, 0
      %p352 = por %p350, %p351
      %s354 = sadd.s32 %s353, 1
      %p357 = scmp.eq.s32.totalorder %s31, 1
      %p358 = scmp.ne.s32.totalorder %s353, %s355
      %p359 = scmp.eq.s32.totalorder %s31, 0
      %p360 = por %p358, %p359
      %p361 = scmp.ne.s32.totalorder %s353, %s355
      %p362 = scmp.eq.s32.totalorder %s36, 1
      %p363 = por %p361, %p362
      %p364 = scmp.ne.s32.totalorder %s355, %s356
      %p365 = scmp.eq.s32.totalorder %s36, 0
      %p366 = por %p364, %p365
      %p367 = scmp.ne.s32.totalorder %s355, %s356
      %p368 = scmp.eq.s32.totalorder %s37, 1
      %p369 = por %p367, %p368
      %p371 = scmp.ne.s32.totalorder %s356, %s370
      %p372 = scmp.eq.s32.totalorder %s37, 0
      %p373 = por %p371, %p372
      %s375 = sadd.s32 %s374, 1
      %p378 = scmp.eq.s32.totalorder %s31, 1
      %p379 = scmp.ne.s32.totalorder %s374, %s376
      %p380 = scmp.eq.s32.totalorder %s31, 0
      %p381 = por %p379, %p380
      %p382 = scmp.ne.s32.totalorder %s374, %s376
      %p383 = scmp.eq.s32.totalorder %s36, 1
      %p384 = por %p382, %p383
      %p385 = scmp.ne.s32.totalorder %s376, %s377
      %p386 = scmp.eq.s32.totalorder %s36, 0
      %p387 = por %p385, %p386
      %p388 = scmp.ne.s32.totalorder %s376, %s377
      %p389 = scmp.eq.s32.totalorder %s37, 1
      %p390 = por %p388, %p389
      %p392 = scmp.ne.s32.totalorder %s377, %s391
      %p393 = scmp.eq.s32.totalorder %s37, 0
      %p394 = por %p392, %p393
      %s396 = sadd.s32 %s395, 1
      %p399 = scmp.eq.s32.totalorder %s31, 1
      %p400 = scmp.ne.s32.totalorder %s395, %s397
      %p401 = scmp.eq.s32.totalorder %s31, 0
      %p402 = por %p400, %p401
      %p403 = scmp.ne.s32.totalorder %s395, %s397
      %p404 = scmp.eq.s32.totalorder %s36, 1
      %p405 = por %p403, %p404
      %p406 = scmp.ne.s32.totalorder %s397, %s398
      %p407 = scmp.eq.s32.totalorder %s36, 0
      %p408 = por %p406, %p407
      %p409 = scmp.ne.s32.totalorder %s397, %s398
      %p410 = scmp.eq.s32.totalorder %s37, 1
      %p411 = por %p409, %p410
      %p413 = scmp.ne.s32.totalorder %s398, %s412
      %p414 = scmp.eq.s32.totalorder %s37, 0
      %p415 = por %p413, %p414
      %s417 = sadd.s32 %s416, 1
      %p420 = scmp.eq.s32.totalorder %s31, 1
      %p421 = scmp.ne.s32.totalorder %s416, %s418
      %p422 = scmp.eq.s32.totalorder %s31, 0
      %p423 = por %p421, %p422
      %p424 = scmp.ne.s32.totalorder %s416, %s418
      %p425 = scmp.eq.s32.totalorder %s36, 1
      %p426 = por %p424, %p425
      %p427 = scmp.ne.s32.totalorder %s418, %s419
      %p428 = scmp.eq.s32.totalorder %s36, 0
      %p429 = por %p427, %p428
      %p430 = scmp.ne.s32.totalorder %s418, %s419
      %p431 = scmp.eq.s32.totalorder %s37, 1
      %p432 = por %p430, %p431
      %p434 = scmp.ne.s32.totalorder %s419, %s433
      %p435 = scmp.eq.s32.totalorder %s37, 0
      %p436 = por %p434, %p435
      %s438 = sadd.s32 %s437, 1
      %p441 = scmp.eq.s32.totalorder %s31, 1
      %p442 = scmp.ne.s32.totalorder %s437, %s439
      %p443 = scmp.eq.s32.totalorder %s31, 0
      %p444 = por %p442, %p443
      %p445 = scmp.ne.s32.totalorder %s437, %s439
      %p446 = scmp.eq.s32.totalorder %s36, 1
      %p447 = por %p445, %p446
      %p448 = scmp.ne.s32.totalorder %s439, %s440
      %p449 = scmp.eq.s32.totalorder %s36, 0
      %p450 = por %p448, %p449
      %p451 = scmp.ne.s32.totalorder %s439, %s440
      %p452 = scmp.eq.s32.totalorder %s37, 1
      %p453 = por %p451, %p452
      %p455 = scmp.ne.s32.totalorder %s440, %s454
      %p456 = scmp.eq.s32.totalorder %s37, 0
      %p457 = por %p455, %p456
      %s459 = sadd.s32 %s458, 1
      %p462 = scmp.eq.s32.totalorder %s31, 1
      %p463 = scmp.ne.s32.totalorder %s458, %s460
      %p464 = scmp.eq.s32.totalorder %s31, 0
      %p465 = por %p463, %p464
      %p466 = scmp.ne.s32.totalorder %s458, %s460
      %p467 = scmp.eq.s32.totalorder %s36, 1
      %p468 = por %p466, %p467
      %p469 = scmp.ne.s32.totalorder %s460, %s461
      %p470 = scmp.eq.s32.totalorder %s36, 0
      %p471 = por %p469, %p470
      %p472 = scmp.ne.s32.totalorder %s460, %s461
      %p473 = scmp.eq.s32.totalorder %s37, 1
      %p474 = por %p472, %p473
      %p476 = scmp.ne.s32.totalorder %s461, %s475
      %p477 = scmp.eq.s32.totalorder %s37, 0
      %p478 = por %p476, %p477
      %s480 = sadd.s32 %s479, 1
      %p483 = scmp.eq.s32.totalorder %s31, 1
      %p484 = scmp.ne.s32.totalorder %s479, %s481
      %p485 = scmp.eq.s32.totalorder %s31, 0
      %p486 = por %p484, %p485
      %p487 = scmp.ne.s32.totalorder %s479, %s481
      %p488 = scmp.eq.s32.totalorder %s36, 1
      %p489 = por %p487, %p488
      %p490 = scmp.ne.s32.totalorder %s481, %s482
      %p491 = scmp.eq.s32.totalorder %s36, 0
      %p492 = por %p490, %p491
      %p493 = scmp.ne.s32.totalorder %s481, %s482
      %p494 = scmp.eq.s32.totalorder %s37, 1
      %p495 = por %p493, %p494
      %p497 = scmp.ne.s32.totalorder %s482, %s496
      %p498 = scmp.eq.s32.totalorder %s37, 0
      %p499 = por %p497, %p498
      %s501 = sadd.s32 %s500, 1
      %p504 = scmp.eq.s32.totalorder %s31, 1
      %p505 = scmp.ne.s32.totalorder %s500, %s502
      %p506 = scmp.eq.s32.totalorder %s31, 0
      %p507 = por %p505, %p506
      %p508 = scmp.ne.s32.totalorder %s500, %s502
      %p509 = scmp.eq.s32.totalorder %s36, 1
      %p510 = por %p508, %p509
      %p511 = scmp.ne.s32.totalorder %s502, %s503
      %p512 = scmp.eq.s32.totalorder %s36, 0
      %p513 = por %p511, %p512
      %p514 = scmp.ne.s32.totalorder %s502, %s503
      %p515 = scmp.eq.s32.totalorder %s37, 1
      %p516 = por %p514, %p515
      %p518 = scmp.ne.s32.totalorder %s503, %s517
      %p519 = scmp.eq.s32.totalorder %s37, 0
      %p520 = por %p518, %p519
      %s522 = sadd.s32 %s521, 1
      %p525 = scmp.eq.s32.totalorder %s31, 1
      %p526 = scmp.ne.s32.totalorder %s521, %s523
      %p527 = scmp.eq.s32.totalorder %s31, 0
      %p528 = por %p526, %p527
      %p529 = scmp.ne.s32.totalorder %s521, %s523
      %p530 = scmp.eq.s32.totalorder %s36, 1
      %p531 = por %p529, %p530
      %p532 = scmp.ne.s32.totalorder %s523, %s524
      %p533 = scmp.eq.s32.totalorder %s36, 0
      %p534 = por %p532, %p533
      %p535 = scmp.ne.s32.totalorder %s523, %s524
      %p536 = scmp.eq.s32.totalorder %s37, 1
      %p537 = por %p535, %p536
      %p539 = scmp.ne.s32.totalorder %s524, %s538
      %p540 = scmp.eq.s32.totalorder %s37, 0
      %p541 = por %p539, %p540
      %s543 = sadd.s32 %s542, 1
      %p546 = scmp.eq.s32.totalorder %s31, 1
      %p547 = scmp.ne.s32.totalorder %s542, %s544
      %p548 = scmp.eq.s32.totalorder %s31, 0
      %p549 = por %p547, %p548
      %p550 = scmp.ne.s32.totalorder %s542, %s544
      %p551 = scmp.eq.s32.totalorder %s36, 1
      %p552 = por %p550, %p551
      %p553 = scmp.ne.s32.totalorder %s544, %s545
      %p554 = scmp.eq.s32.totalorder %s36, 0
      %p555 = por %p553, %p554
      %p556 = scmp.ne.s32.totalorder %s544, %s545
      %p557 = scmp.eq.s32.totalorder %s37, 1
      %p558 = por %p556, %p557
      %p560 = scmp.ne.s32.totalorder %s545, %s559
      %p561 = scmp.eq.s32.totalorder %s37, 0
      %p562 = por %p560, %p561
      %s563 = ssub.s32 %s31, %s38
      %p564 = scmp.eq.s32.totalorder %s563, 0
      %s566 = sadd.s32 %s565, 1
      %s567 = scalar_select %p564, %s565, %s566
      %p570 = pneg %p564
      %p571 = scmp.eq.s32.totalorder %s31, 1
      %p572 = por %p570, %p571
      %p573 = scmp.ne.s32.totalorder %s565, %s568
      %p574 = scmp.eq.s32.totalorder %s31, 0
      %p575 = por %p573, %p574
      %p576 = scmp.ne.s32.totalorder %s565, %s568
      %p577 = scmp.eq.s32.totalorder %s36, 1
      %p578 = por %p576, %p577
      %p579 = scmp.ne.s32.totalorder %s568, %s569
      %p580 = scmp.eq.s32.totalorder %s36, 0
      %p581 = por %p579, %p580
      %p582 = scmp.ne.s32.totalorder %s568, %s569
      %p583 = scmp.eq.s32.totalorder %s37, 1
      %p584 = por %p582, %p583
      %p586 = scmp.ne.s32.totalorder %s569, %s585
      %p587 = scmp.eq.s32.totalorder %s37, 0
      %p588 = por %p586, %p587
      %p589 = scmp.le.s32.totalorder 1, %s31
      %p590 = scmp.lt.s32.totalorder %s31, 3
      %p591 = pnand %p589, %p590
      %p592 = pneg %p591
      // Predicated region
      $region9: #{forward.6} parent=5 // pred_check
        _
      $region10: #{forward.6} parent=5 // pred_check_branch
        %594 = sbr.rel (%p591) target = $region12
      $region11: #{forward.6} parent=5 // pred_region
        %s595 = ssub.s32 %s31, 1
        // Predicated region
        $region13: #{forward.6} parent=11 // pred_check
          %p596 = pneg %p156
        $region14: #{forward.6} parent=11 // pred_check_branch
          %598 = sbr.rel (%p596) target = $region16
        $region15: #{forward.6} parent=11 // pred_region
          _
        $region16: #{forward.6} parent=11 // pred_fallthru
          _
        // Predicated region
        $region17: #{forward.6} parent=11 // pred_check
          %p599 = pneg %p177
        $region18: #{forward.6} parent=11 // pred_check_branch
          %601 = sbr.rel (%p599) target = $region20
        $region19: #{forward.6} parent=11 // pred_region
          _
        $region20: #{forward.6} parent=11 // pred_fallthru
          _
        // Predicated region
        $region21: #{forward.6} parent=11 // pred_check
          %p602 = pneg %p198
        $region22: #{forward.6} parent=11 // pred_check_branch
          %604 = sbr.rel (%p602) target = $region24
        $region23: #{forward.6} parent=11 // pred_region
          _
        $region24: #{forward.6} parent=11 // pred_fallthru
          _
        // Predicated region
        $region25: #{forward.6} parent=11 // pred_check
          %p605 = pneg %p219
        $region26: #{forward.6} parent=11 // pred_check_branch
          %607 = sbr.rel (%p605) target = $region28
        $region27: #{forward.6} parent=11 // pred_region
          _
        $region28: #{forward.6} parent=11 // pred_fallthru
          _
        // Predicated region
        $region29: #{forward.6} parent=11 // pred_check
          %p608 = pneg %p240
        $region30: #{forward.6} parent=11 // pred_check_branch
          %610 = sbr.rel (%p608) target = $region32
        $region31: #{forward.6} parent=11 // pred_region
          _
        $region32: #{forward.6} parent=11 // pred_fallthru
          _
        // Predicated region
        $region33: #{forward.6} parent=11 // pred_check
          %p611 = pneg %p261
        $region34: #{forward.6} parent=11 // pred_check_branch
          %613 = sbr.rel (%p611) target = $region36
        $region35: #{forward.6} parent=11 // pred_region
          _
        $region36: #{forward.6} parent=11 // pred_fallthru
          _
        // Predicated region
        $region37: #{forward.6} parent=11 // pred_check
          %p614 = pneg %p282
        $region38: #{forward.6} parent=11 // pred_check_branch
          %616 = sbr.rel (%p614) target = $region40
        $region39: #{forward.6} parent=11 // pred_region
          _
        $region40: #{forward.6} parent=11 // pred_fallthru
          _
        // Predicated region
        $region41: #{forward.6} parent=11 // pred_check
          %p617 = pneg %p303
        $region42: #{forward.6} parent=11 // pred_check_branch
          %619 = sbr.rel (%p617) target = $region44
        $region43: #{forward.6} parent=11 // pred_region
          _
        $region44: #{forward.6} parent=11 // pred_fallthru
          _
        // Predicated region
        $region45: #{forward.6} parent=11 // pred_check
          %p620 = pneg %p324
        $region46: #{forward.6} parent=11 // pred_check_branch
          %622 = sbr.rel (%p620) target = $region48
        $region47: #{forward.6} parent=11 // pred_region
          _
        $region48: #{forward.6} parent=11 // pred_fallthru
          _
        // Predicated region
        $region49: #{forward.6} parent=11 // pred_check
          %p623 = pneg %p345
        $region50: #{forward.6} parent=11 // pred_check_branch
          %625 = sbr.rel (%p623) target = $region52
        $region51: #{forward.6} parent=11 // pred_region
          _
        $region52: #{forward.6} parent=11 // pred_fallthru
          _
        // Predicated region
        $region53: #{forward.6} parent=11 // pred_check
          %p626 = pneg %p366
        $region54: #{forward.6} parent=11 // pred_check_branch
          %628 = sbr.rel (%p626) target = $region56
        $region55: #{forward.6} parent=11 // pred_region
          _
        $region56: #{forward.6} parent=11 // pred_fallthru
          _
        // Predicated region
        $region57: #{forward.6} parent=11 // pred_check
          %p629 = pneg %p387
        $region58: #{forward.6} parent=11 // pred_check_branch
          %631 = sbr.rel (%p629) target = $region60
        $region59: #{forward.6} parent=11 // pred_region
          _
        $region60: #{forward.6} parent=11 // pred_fallthru
          _
        // Predicated region
        $region61: #{forward.6} parent=11 // pred_check
          %p632 = pneg %p408
        $region62: #{forward.6} parent=11 // pred_check_branch
          %634 = sbr.rel (%p632) target = $region64
        $region63: #{forward.6} parent=11 // pred_region
          _
        $region64: #{forward.6} parent=11 // pred_fallthru
          _
        // Predicated region
        $region65: #{forward.6} parent=11 // pred_check
          %p635 = pneg %p429
        $region66: #{forward.6} parent=11 // pred_check_branch
          %637 = sbr.rel (%p635) target = $region68
        $region67: #{forward.6} parent=11 // pred_region
          _
        $region68: #{forward.6} parent=11 // pred_fallthru
          _
        // Predicated region
        $region69: #{forward.6} parent=11 // pred_check
          %p638 = pneg %p450
        $region70: #{forward.6} parent=11 // pred_check_branch
          %640 = sbr.rel (%p638) target = $region72
        $region71: #{forward.6} parent=11 // pred_region
          _
        $region72: #{forward.6} parent=11 // pred_fallthru
          _
        // Predicated region
        $region73: #{forward.6} parent=11 // pred_check
          %p641 = pneg %p471
        $region74: #{forward.6} parent=11 // pred_check_branch
          %643 = sbr.rel (%p641) target = $region76
        $region75: #{forward.6} parent=11 // pred_region
          _
        $region76: #{forward.6} parent=11 // pred_fallthru
          _
        // Predicated region
        $region77: #{forward.6} parent=11 // pred_check
          %p644 = pneg %p492
        $region78: #{forward.6} parent=11 // pred_check_branch
          %646 = sbr.rel (%p644) target = $region80
        $region79: #{forward.6} parent=11 // pred_region
          _
        $region80: #{forward.6} parent=11 // pred_fallthru
          _
        // Predicated region
        $region81: #{forward.6} parent=11 // pred_check
          %p647 = pneg %p513
        $region82: #{forward.6} parent=11 // pred_check_branch
          %649 = sbr.rel (%p647) target = $region84
        $region83: #{forward.6} parent=11 // pred_region
          _
        $region84: #{forward.6} parent=11 // pred_fallthru
          _
        // Predicated region
        $region85: #{forward.6} parent=11 // pred_check
          %p650 = pneg %p534
        $region86: #{forward.6} parent=11 // pred_check_branch
          %652 = sbr.rel (%p650) target = $region88
        $region87: #{forward.6} parent=11 // pred_region
          _
        $region88: #{forward.6} parent=11 // pred_fallthru
          _
        // Predicated region
        $region89: #{forward.6} parent=11 // pred_check
          %p653 = pneg %p555
        $region90: #{forward.6} parent=11 // pred_check_branch
          %655 = sbr.rel (%p653) target = $region92
        $region91: #{forward.6} parent=11 // pred_region
          %s657 = ssub.s32 16, 16
          %658 = vsyncadd [#allocation3], %s657
          %s660 = sshll.u32 [#allocation2], 4
          %s661 = int_to_ptr.vmem [resolvable:$true] %s660
          %663 = dma.hbm_to_vmem [thread:$0]  %s23, 16, %s661, [#allocation3]
        $region92: #{forward.6} parent=11 // pred_fallthru
          _
      $region12: #{forward.6} parent=5 // pred_fallthru
        _
      %p664 = scmp.lt.s32.totalorder %s31, 2
      // Predicated region
      $region93: #{forward.6} parent=5 // pred_check
        %p665 = pneg %p664
      $region94: #{forward.6} parent=5 // pred_check_branch
        %667 = sbr.rel (%p665) target = $region96
      $region95: #{forward.6} parent=5 // pred_region
        // Predicated region
        $region97: #{forward.6} parent=95 // pred_check
          %p668 = pneg %p51
        $region98: #{forward.6} parent=95 // pred_check_branch
          %670 = sbr.rel (%p668) target = $region100
        $region99: #{forward.6} parent=95 // pred_region
          %p671 = scmp.lt.s32.totalorder %s31, 1
          %s672 = scalar_select %p671, %s31, 1
          %s673 = smul.addr %s672, 4
          %s674 = scalar_lea.vmem %s0, %s673
        $region100: #{forward.6} parent=95 // pred_fallthru
          _
        // Predicated region
        $region101: #{forward.6} parent=95 // pred_check
          %p675 = pneg %p77
        $region102: #{forward.6} parent=95 // pred_check_branch
          %677 = sbr.rel (%p675) target = $region104
        $region103: #{forward.6} parent=95 // pred_region
          %p678 = scmp.lt.s32.totalorder %s31, 1
          %s679 = scalar_select %p678, %s31, 1
          %s680 = smul.addr %s679, 4
          %s681 = scalar_lea.vmem %s1, %s680
        $region104: #{forward.6} parent=95 // pred_fallthru
          _
        // Predicated region
        $region105: #{forward.6} parent=95 // pred_check
          %p682 = pneg %p103
        $region106: #{forward.6} parent=95 // pred_check_branch
          %684 = sbr.rel (%p682) target = $region108
        $region107: #{forward.6} parent=95 // pred_region
          %p685 = scmp.lt.s32.totalorder %s31, 1
          %s686 = scalar_select %p685, %s31, 1
          %s687 = scalar_lea.vmem %s2, %s686
        $region108: #{forward.6} parent=95 // pred_fallthru
          _
        // Predicated region
        $region109: #{forward.6} parent=95 // pred_check
          %p688 = pneg %p129
        $region110: #{forward.6} parent=95 // pred_check_branch
          %690 = sbr.rel (%p688) target = $region112
        $region111: #{forward.6} parent=95 // pred_region
          %p691 = scmp.lt.s32.totalorder %s31, 1
          %s692 = scalar_select %p691, %s31, 1
          %s693 = scalar_lea.vmem %s3, %s692
        $region112: #{forward.6} parent=95 // pred_fallthru
          _
      $region96: #{forward.6} parent=5 // pred_fallthru
        _
      %p694 = scmp.le.s32.totalorder 1, %s31
      %p695 = scmp.lt.s32.totalorder %s31, 3
      %p696 = pnand %p694, %p695
      %p697 = pneg %p696
      // Predicated region
      $region113: #{forward.6} parent=5 // pred_check
        _
      $region114: #{forward.6} parent=5 // pred_check_branch
        %699 = sbr.rel (%p696) target = $region116
      $region115: #{forward.6} parent=5 // pred_region
        %s700 = ssub.s32 %s31, 1
        // Predicated region
        $region117: #{forward.6} parent=115 // pred_check
          %p701 = pneg %p555
        $region118: #{forward.6} parent=115 // pred_check_branch
          %703 = sbr.rel (%p701) target = $region120
        $region119: #{forward.6} parent=115 // pred_region
          %704 = dma.done [#allocation3], 16
        $region120: #{forward.6} parent=115 // pred_fallthru
          _
        %p705 = scmp.lt.s32.totalorder %s36, 1
        %s706 = scalar_select %p705, %s36, 1
        %s707 = smul.addr %s706, 4
        %s708 = scalar_lea.vmem %s0, %s707
        %p709 = pneg %p57
        %p710 = pneg %p54
        %p711 = scmp.lt.s32.totalorder %s36, 1
        %s712 = scalar_select %p711, %s36, 1
        %s713 = smul.addr %s712, 4
        %s714 = scalar_lea.vmem %s1, %s713
        %p715 = pneg %p83
        %p716 = pneg %p80
        %p717 = scmp.lt.s32.totalorder %s36, 1
        %s718 = scalar_select %p717, %s36, 1
        %s719 = scalar_lea.vmem %s2, %s718
        %p720 = pneg %p109
        %p721 = pneg %p106
        %p722 = scmp.lt.s32.totalorder %s36, 1
        %s723 = scalar_select %p722, %s36, 1
        %s724 = scalar_lea.vmem %s3, %s723
        %p725 = pneg %p135
        %p726 = pneg %p132
        %p727 = pneg %p156
        %p728 = pneg %p153
        %p729 = pneg %p177
        %p730 = pneg %p174
        %p731 = pneg %p198
        %p732 = pneg %p195
        %p733 = pneg %p219
        %p734 = pneg %p216
        %p735 = pneg %p240
        %p736 = pneg %p237
        %p737 = pneg %p261
        %p738 = pneg %p258
        %p739 = pneg %p282
        %p740 = pneg %p279
        %p741 = pneg %p303
        %p742 = pneg %p300
        %p743 = pneg %p324
        %p744 = pneg %p321
        %p745 = pneg %p345
        %p746 = pneg %p342
        %p747 = pneg %p366
        %p748 = pneg %p363
        %p749 = pneg %p387
        %p750 = pneg %p384
        %p751 = pneg %p408
        %p752 = pneg %p405
        %p753 = pneg %p429
        %p754 = pneg %p426
        %p755 = pneg %p450
        %p756 = pneg %p447
        %p757 = pneg %p471
        %p758 = pneg %p468
        %p759 = pneg %p492
        %p760 = pneg %p489
        %p761 = pneg %p513
        %p762 = pneg %p510
        %p763 = pneg %p534
        %p764 = pneg %p531
        %p765 = pneg %p555
        %p766 = pneg %p552
        %p767 = pneg %p581
        %p768 = pneg %p578
        %p769 = scmp.lt.s32.totalorder %s36, 1
        %s770 = scalar_select %p769, %s36, 1
        %s771 = smul.addr %s770, 4
        %s772 = scalar_lea.vmem %s24, %s771
        %p773 = scmp.lt.s32.totalorder %s36, 1
        %s774 = scalar_select %p773, %s36, 1
        %s775 = smul.addr %s774, 4
        %s776 = scalar_lea.vmem %s0, %s775
        %p777 = scmp.lt.s32.totalorder %s36, 1
        %s778 = scalar_select %p777, %s36, 1
        %s779 = smul.addr %s778, 4
        %s780 = scalar_lea.vmem %s1, %s779
        %p781 = scmp.lt.s32.totalorder %s36, 1
        %s782 = scalar_select %p781, %s36, 1
        %s783 = scalar_lea.vmem %s2, %s782
        %p784 = scmp.lt.s32.totalorder %s36, 1
        %s785 = scalar_select %p784, %s36, 1
        %s786 = scalar_lea.vmem %s3, %s785
        %p787 = scmp.lt.s32.totalorder %s36, 1
        %s788 = scalar_select %p787, %s36, 1
        %s789 = smul.addr %s788, 4
        %s790 = scalar_lea.vmem %s24, %s789
        %v792 = vld [vmem:[%s776] sm:$0xf]
        %v793 = vunpack.c.l.bf16 %v792
        %v794 = vld [vmem:[%s780] sm:$0xf]
        %v795 = vlaneseq
        %v796 = vshrl.u32 %v795, 7
        %v797 = vlaneseq
        %v798 = vand.u32 %v797, 127
        %vm799 = vcmp.le.s32.totalorder %v798, %v796
        %v800 = vld [vmem:[%s783] sm:$0x1]
        %vm801 = vcmp.gt.s32.totalorder %v800, 0
        %v802 = vsel %vm801, 1, 0
        %v803 = vlaneseq
        %v804 = vshrl.u32 %v803, 7
        %v805 = vsub.s32 0, %v804
        %v806 = vrot.slane %v802, %v805
        %vm807 = vcmp.eq.s32.totalorder %v806, 1
        %vm808 = vmand %vm799, %vm807
        %v809 = vsel %vm808, 0.0, -1e+09
        %v810 = vld [vmem:[%s786] sm:$0x1]
        %vm811 = vcmp.gt.s32.totalorder %v810, 0
        %v812 = vsel %vm811, 0.0, -1e+09
        %v813 = vld [vmem:[%s4] sm:$0x1]
        %v814 = vld [vmem:[%s5] sm:$0x1]
        %vm815 = vcmask 261120
        %v816 = vsel %vm815, %v793, 0.0
        %817 = vadd.xlane.f32.xlu0 %v816
        %v818 = vpop.xlane.xlu0 %817
        %v819 = vrcp.pop 32.0
        %v820 = vmul.f32 %v818, %v819
        %v821 = vsub.f32 %v793, %v820
        %v822 = vmul.f32 %v821, %v821
        %v823 = vsel %vm815, %v822, 0.0
        %824 = vadd.xlane.f32.xlu0 %v823
        %v825 = vpop.xlane.xlu0 %824
        %v826 = vmul.f32 %v825, %v819
        %v827 = vadd.f32 %v826, 1e-05
        %v828 = vrsqrt.pop %v827
        %v829 = vmul.f32 %v821, %v828
        %v831 = vlaneseq
        %v832 = vshrl.u32 %v831, 7
        %v833 = vsub.s32 0, %v832
        %v834 = vrot.slane %v813, %v833
        %v836 = vmul.f32 %v829, %v834
        %v838 = vlaneseq
        %v839 = vshrl.u32 %v838, 7
        %v840 = vsub.s32 0, %v839
        %v841 = vrot.slane %v814, %v840
        %v843 = vadd.f32 %v836, %v841
        %v844 = vpack.c.bf16 %v843, %v843
        %v845 = vld [vmem:[%s6] sm:$0xf]
        %v846 = vld [vmem:[%s6 + $0x4] sm:$0xf]
        %v847 = vld [vmem:[%s6 + $0x8] sm:$0xf]
        %v848 = vld [vmem:[%s6 + $0xc] sm:$0xf]
        %v849 = vld [vmem:[%s7] sm:$0xf]
        %v850 = vld [vmem:[%s7 + $0x4] sm:$0xf]
        %v851 = vld [vmem:[%s7 + $0x8] sm:$0xf]
        %v852 = vld [vmem:[%s7 + $0xc] sm:$0xf]
        %v853 = vld [vmem:[%s8] sm:$0xf]
        %v854 = vld [vmem:[%s8 + $0x4] sm:$0xf]
        %v855 = vld [vmem:[%s8 + $0x8] sm:$0xf]
        %v856 = vld [vmem:[%s8 + $0xc] sm:$0xf]
        %v857 = vld [vmem:[%s9] sm:$0xf]
        %v858 = vld [vmem:[%s9 + $0x4] sm:$0xf]
        %v859 = vld [vmem:[%s9 + $0x8] sm:$0xf]
        %v860 = vld [vmem:[%s9 + $0xc] sm:$0xf]
        %v861 = vld [vmem:[%s10] sm:$0x1]
        %v866 = vunpack.c.l.b16 %v845
        %v867 = vunpack.c.l.b16 %v846
        %v868 = vunpack.c.l.b16 %v847
        %v869 = vunpack.c.l.b16 %v848
        %v870 = vpack.c.b16 %v867, %v866
        %v871 = vpack.c.b16 %v869, %v868
        %v875 = vsel %vm815, %v844, 0
        %877 = vmatprep.subr.bf16.mxu0 0
        %878 = vmatpush1.bf16.msra.mxu0 %v870
        %879 = vmatprep.subr.bf16.mxu0 0
        %880 = vmatpush1.bf16.msra.mxu0 %v871
        %881 = vmatprep.subr.bf16.mxu0 0
        %882 = vmatpush1.bf16.msra.mxu0 0
        %883 = vmatprep.subr.bf16.mxu0 0
        %884 = vmatpush1.bf16.msra.mxu0 0
        %885 = vmatprep.subr.bf16.mxu0 0
        %886 = vmatpush1.bf16.msra.mxu0 0
        %887 = vmatprep.subr.bf16.mxu0 0
        %888 = vmatpush1.bf16.msra.mxu0 0
        %889 = vmatprep.subr.bf16.mxu0 0
        %890 = vmatpush1.bf16.msra.mxu0 0
        %891 = vmatprep.subr.bf16.mxu0 0
        %892 = vmatpush1.bf16.msra.mxu0 0
        %893 = vmatprep.subr.bf16.mxu0 0
        %894 = vmatpush1.bf16.msra.mxu0 0
        %895 = vmatprep.subr.bf16.mxu0 0
        %896 = vmatpush1.bf16.msra.mxu0 0
        %897 = vmatprep.subr.bf16.mxu0 0
        %898 = vmatpush1.bf16.msra.mxu0 0
        %899 = vmatprep.subr.bf16.mxu0 0
        %900 = vmatpush1.bf16.msra.mxu0 0
        %901 = vmatprep.subr.bf16.mxu0 0
        %902 = vmatpush1.bf16.msra.mxu0 0
        %903 = vmatprep.subr.bf16.mxu0 0
        %904 = vmatpush1.bf16.msra.mxu0 0
        %905 = vmatprep.subr.bf16.mxu0 0
        %906 = vmatpush1.bf16.msra.mxu0 0
        %907 = vmatprep.subr.bf16.mxu0 0
        %908 = vmatpush1.bf16.msra.mxu0 0
        %909 = vmatprep.mubr.bf16.mxu0 0
        %910 = vmatmul.mubr.bf16.gmra.mrb[0].mxu0 %v875
        %v911 = vpop.f32.mrb[0].mxu0
        %v912 = vadd.f32 0.0, %v911
        %v913 = vpop.f32.mrb[0].mxu0
        %v914 = vpop.f32.mrb[0].mxu0
        %v915 = vpop.f32.mrb[0].mxu0
        %916 = vdwg.mxu0
        %v917 = vmul.f32 %v912, 0.35355338
        %v918 = vpack.c.bf16 %v917, %v917
        %v923 = vunpack.c.l.b16 %v849
        %v924 = vunpack.c.l.b16 %v850
        %v925 = vunpack.c.l.b16 %v851
        %v926 = vunpack.c.l.b16 %v852
        %v927 = vpack.c.b16 %v924, %v923
        %v928 = vpack.c.b16 %v926, %v925
        %931 = vmatprep.subr.bf16.mxu0 0
        %932 = vmatpush1.bf16.msra.mxu0 %v927
        %933 = vmatprep.subr.bf16.mxu0 0
        %934 = vmatpush1.bf16.msra.mxu0 %v928
        %935 = vmatprep.subr.bf16.mxu0 0
        %936 = vmatpush1.bf16.msra.mxu0 0
        %937 = vmatprep.subr.bf16.mxu0 0
        %938 = vmatpush1.bf16.msra.mxu0 0
        %939 = vmatprep.subr.bf16.mxu0 0
        %940 = vmatpush1.bf16.msra.mxu0 0
        %941 = vmatprep.subr.bf16.mxu0 0
        %942 = vmatpush1.bf16.msra.mxu0 0
        %943 = vmatprep.subr.bf16.mxu0 0
        %944 = vmatpush1.bf16.msra.mxu0 0
        %945 = vmatprep.subr.bf16.mxu0 0
        %946 = vmatpush1.bf16.msra.mxu0 0
        %947 = vmatprep.subr.bf16.mxu0 0
        %948 = vmatpush1.bf16.msra.mxu0 0
        %949 = vmatprep.subr.bf16.mxu0 0
        %950 = vmatpush1.bf16.msra.mxu0 0
        %951 = vmatprep.subr.bf16.mxu0 0
        %952 = vmatpush1.bf16.msra.mxu0 0
        %953 = vmatprep.subr.bf16.mxu0 0
        %954 = vmatpush1.bf16.msra.mxu0 0
        %955 = vmatprep.subr.bf16.mxu0 0
        %956 = vmatpush1.bf16.msra.mxu0 0
        %957 = vmatprep.subr.bf16.mxu0 0
        %958 = vmatpush1.bf16.msra.mxu0 0
        %959 = vmatprep.subr.bf16.mxu0 0
        %960 = vmatpush1.bf16.msra.mxu0 0
        %961 = vmatprep.subr.bf16.mxu0 0
        %962 = vmatpush1.bf16.msra.mxu0 0
        %963 = vmatprep.mubr.bf16.mxu0 0
        %964 = vmatmul.mubr.bf16.gmra.mrb[0].mxu0 %v875
        %v965 = vpop.f32.mrb[0].mxu0
        %v966 = vadd.f32 0.0, %v965
        %v967 = vpop.f32.mrb[0].mxu0
        %v968 = vpop.f32.mrb[0].mxu0
        %v969 = vpop.f32.mrb[0].mxu0
        %970 = vdwg.mxu0
        %v971 = vpack.c.bf16 %v966, %v966
        %v976 = vunpack.c.l.b16 %v853
        %v977 = vunpack.c.l.b16 %v854
        %v978 = vunpack.c.l.b16 %v855
        %v979 = vunpack.c.l.b16 %v856
        %v980 = vpack.c.b16 %v977, %v976
        %v981 = vpack.c.b16 %v979, %v978
        %984 = vmatprep.subr.bf16.mxu0 0
        %985 = vmatpush1.bf16.msra.mxu0 %v980
        %986 = vmatprep.subr.bf16.mxu0 0
        %987 = vmatpush1.bf16.msra.mxu0 %v981
        %988 = vmatprep.subr.bf16.mxu0 0
        %989 = vmatpush1.bf16.msra.mxu0 0
        %990 = vmatprep.subr.bf16.mxu0 0
        %991 = vmatpush1.bf16.msra.mxu0 0
        %992 = vmatprep.subr.bf16.mxu0 0
        %993 = vmatpush1.bf16.msra.mxu0 0
        %994 = vmatprep.subr.bf16.mxu0 0
        %995 = vmatpush1.bf16.msra.mxu0 0
        %996 = vmatprep.subr.bf16.mxu0 0
        %997 = vmatpush1.bf16.msra.mxu0 0
        %998 = vmatprep.subr.bf16.mxu0 0
        %999 = vmatpush1.bf16.msra.mxu0 0
        %1000 = vmatprep.subr.bf16.mxu0 0
        %1001 = vmatpush1.bf16.msra.mxu0 0
        %1002 = vmatprep.subr.bf16.mxu0 0
        %1003 = vmatpush1.bf16.msra.mxu0 0
        %1004 = vmatprep.subr.bf16.mxu0 0
        %1005 = vmatpush1.bf16.msra.mxu0 0
        %1006 = vmatprep.subr.bf16.mxu0 0
        %1007 = vmatpush1.bf16.msra.mxu0 0
        %1008 = vmatprep.subr.bf16.mxu0 0
        %1009 = vmatpush1.bf16.msra.mxu0 0
        %1010 = vmatprep.subr.bf16.mxu0 0
        %1011 = vmatpush1.bf16.msra.mxu0 0
        %1012 = vmatprep.subr.bf16.mxu0 0
        %1013 = vmatpush1.bf16.msra.mxu0 0
        %1014 = vmatprep.subr.bf16.mxu0 0
        %1015 = vmatpush1.bf16.msra.mxu0 0
        %1016 = vmatprep.mubr.bf16.mxu0 0
        %1017 = vmatmul.mubr.bf16.gmra.mrb[0].mxu0 %v875
        %v1018 = vpop.f32.mrb[0].mxu0
        %v1019 = vadd.f32 0.0, %v1018
        %v1020 = vpop.f32.mrb[0].mxu0
        %v1021 = vpop.f32.mrb[0].mxu0
        %v1022 = vpop.f32.mrb[0].mxu0
        %1023 = vdwg.mxu0
        %v1024 = vpack.c.bf16 %v1019, %v1019
        %vm1025 = vcmask 64512
        %v1027 = vsel %vm1025, %v918, 0
        %v1030 = vsel %vm1025, %v971, 0
        %1032 = vmatprep.subr.bf16.mxu0 0
        %1033 = vmatpush1.bf16.xpose.msra.mxu0 %v1030
        %1034 = vmatprep.subr.bf16.mxu0 0
        %1035 = vmatpush1.bf16.xpose.msra.mxu0 0
        %1036 = vmatprep.subr.bf16.mxu0 0
        %1037 = vmatpush1.bf16.xpose.msra.mxu0 0
        %1038 = vmatprep.subr.bf16.mxu0 0
        %1039 = vmatpush1.bf16.xpose.msra.mxu0 0
        %1040 = vmatprep.subr.bf16.mxu0 0
        %1041 = vmatpush1.bf16.xpose.msra.mxu0 0
        %1042 = vmatprep.subr.bf16.mxu0 0
        %1043 = vmatpush1.bf16.xpose.msra.mxu0 0
        %1044 = vmatprep.subr.bf16.mxu0 0
        %1045 = vmatpush1.bf16.xpose.msra.mxu0 0
        %1046 = vmatprep.subr.bf16.mxu0 0
        %1047 = vmatpush1.bf16.xpose.msra.mxu0 0
        %1048 = vmatprep.subr.bf16.mxu0 0
        %1049 = vmatpush1.bf16.xpose.msra.mxu0 0
        %1050 = vmatprep.subr.bf16.mxu0 0
        %1051 = vmatpush1.bf16.xpose.msra.mxu0 0
        %1052 = vmatprep.subr.bf16.mxu0 0
        %1053 = vmatpush1.bf16.xpose.msra.mxu0 0
        %1054 = vmatprep.subr.bf16.mxu0 0
        %1055 = vmatpush1.bf16.xpose.msra.mxu0 0
        %1056 = vmatprep.subr.bf16.mxu0 0
        %1057 = vmatpush1.bf16.xpose.msra.mxu0 0
        %1058 = vmatprep.subr.bf16.mxu0 0
        %1059 = vmatpush1.bf16.xpose.msra.mxu0 0
        %1060 = vmatprep.subr.bf16.mxu0 0
        %1061 = vmatpush1.bf16.xpose.msra.mxu0 0
        %1062 = vmatprep.subr.bf16.mxu0 0
        %1063 = vmatpush1.bf16.xpose.msra.mxu0 0
        %1064 = vmatprep.mubr.bf16.mxu0 0
        %1065 = vmatmul.mubr.bf16.gmra.mrb[0].mxu0 %v1027
        %v1066 = vpop.f32.mrb[0].mxu0
        %v1067 = vadd.f32 %v809, %v1066
        %v1068 = vpop.f32.mrb[0].mxu0
        %v1069 = vpop.f32.mrb[0].mxu0
        %v1070 = vpop.f32.mrb[0].mxu0
        %1071 = vdwg.mxu0
        %v1072 = vsel %vm1025, %v1067, -inf
        %1073 = vmax.xlane.f32.xlu0 %v1072
        %v1074 = vpop.xlane.xlu0 %1073
        %v1075 = vsub.f32 %v1067, %v1074
        %v1076 = vmul.f32 %v1075, 1.442695
        %v1077 = vpow.pop %v1076
        %v1078 = vsel %vm1025, %v1077, 0.0
        %1079 = vadd.xlane.f32.xlu0 %v1078
        %v1080 = vpop.xlane.xlu0 %1079
        %v1081 = vrcp.pop %v1080
        %v1082 = vmul.f32 %v1077, %v1081
        %v1083 = vpack.c.bf16 %v1082, %v1082
        %v1085 = vsel %vm1025, %v1083, 0
        %vm1087 = vcmask 1043456
        %v1089 = vsel %vm1087, %v1024, 0
        %1091 = vmatprep.subr.bf16.mxu0 0
        %1092 = vmatpush1.bf16.msra.mxu0 %v1089
        %1093 = vmatprep.subr.bf16.mxu0 0
        %1094 = vmatpush1.bf16.msra.mxu0 0
        %1095 = vmatprep.subr.bf16.mxu0 0
        %1096 = vmatpush1.bf16.msra.mxu0 0
        %1097 = vmatprep.subr.bf16.mxu0 0
        %1098 = vmatpush1.bf16.msra.mxu0 0
        %1099 = vmatprep.subr.bf16.mxu0 0
        %1100 = vmatpush1.bf16.msra.mxu0 0
        %1101 = vmatprep.subr.bf16.mxu0 0
        %1102 = vmatpush1.bf16.msra.mxu0 0
        %1103 = vmatprep.subr.bf16.mxu0 0
        %1104 = vmatpush1.bf16.msra.mxu0 0
        %1105 = vmatprep.subr.bf16.mxu0 0
        %1106 = vmatpush1.bf16.msra.mxu0 0
        %1107 = vmatprep.subr.bf16.mxu0 0
        %1108 = vmatpush1.bf16.msra.mxu0 0
        %1109 = vmatprep.subr.bf16.mxu0 0
        %1110 = vmatpush1.bf16.msra.mxu0 0
        %1111 = vmatprep.subr.bf16.mxu0 0
        %1112 = vmatpush1.bf16.msra.mxu0 0
        %1113 = vmatprep.subr.bf16.mxu0 0
        %1114 = vmatpush1.bf16.msra.mxu0 0
        %1115 = vmatprep.subr.bf16.mxu0 0
        %1116 = vmatpush1.bf16.msra.mxu0 0
        %1117 = vmatprep.subr.bf16.mxu0 0
        %1118 = vmatpush1.bf16.msra.mxu0 0
        %1119 = vmatprep.subr.bf16.mxu0 0
        %1120 = vmatpush1.bf16.msra.mxu0 0
        %1121 = vmatprep.subr.bf16.mxu0 0
        %1122 = vmatpush1.bf16.msra.mxu0 0
        %1123 = vmatprep.mubr.bf16.mxu0 0
        %1124 = vmatmul.mubr.bf16.gmra.mrb[0].mxu0 %v1085
        %v1125 = vpop.f32.mrb[0].mxu0
        %v1126 = vadd.f32 0.0, %v1125
        %v1127 = vpop.f32.mrb[0].mxu0
        %v1128 = vpop.f32.mrb[0].mxu0
        %v1129 = vpop.f32.mrb[0].mxu0
        %1130 = vdwg.mxu0
        %1132 = vrot.lane.b32.xlu0 %v918, 120
        %v1133 = vpop.permute.xlu0 %1132
        %1135 = vrot.lane.b32.xlu0 %v971, 120
        %v1136 = vpop.permute.xlu0 %1135
        %v1138 = vsel %vm1025, %v1133, 0
        %v1141 = vsel %vm1025, %v1136, 0
        %1143 = vmatprep.subr.bf16.mxu0 0
        %1144 = vmatpush1.bf16.xpose.msra.mxu0 %v1141
        %1145 = vmatprep.subr.bf16.mxu0 0
        %1146 = vmatpush1.bf16.xpose.msra.mxu0 0
        %1147 = vmatprep.subr.bf16.mxu0 0
        %1148 = vmatpush1.bf16.xpose.msra.mxu0 0
        %1149 = vmatprep.subr.bf16.mxu0 0
        %1150 = vmatpush1.bf16.xpose.msra.mxu0 0
        %1151 = vmatprep.subr.bf16.mxu0 0
        %1152 = vmatpush1.bf16.xpose.msra.mxu0 0
        %1153 = vmatprep.subr.bf16.mxu0 0
        %1154 = vmatpush1.bf16.xpose.msra.mxu0 0
        %1155 = vmatprep.subr.bf16.mxu0 0
        %1156 = vmatpush1.bf16.xpose.msra.mxu0 0
        %1157 = vmatprep.subr.bf16.mxu0 0
        %1158 = vmatpush1.bf16.xpose.msra.mxu0 0
        %1159 = vmatprep.subr.bf16.mxu0 0
        %1160 = vmatpush1.bf16.xpose.msra.mxu0 0
        %1161 = vmatprep.subr.bf16.mxu0 0
        %1162 = vmatpush1.bf16.xpose.msra.mxu0 0
        %1163 = vmatprep.subr.bf16.mxu0 0
        %1164 = vmatpush1.bf16.xpose.msra.mxu0 0
        %1165 = vmatprep.subr.bf16.mxu0 0
        %1166 = vmatpush1.bf16.xpose.msra.mxu0 0
        %1167 = vmatprep.subr.bf16.mxu0 0
        %1168 = vmatpush1.bf16.xpose.msra.mxu0 0
        %1169 = vmatprep.subr.bf16.mxu0 0
        %1170 = vmatpush1.bf16.xpose.msra.mxu0 0
        %1171 = vmatprep.subr.bf16.mxu0 0
        %1172 = vmatpush1.bf16.xpose.msra.mxu0 0
        %1173 = vmatprep.subr.bf16.mxu0 0
        %1174 = vmatpush1.bf16.xpose.msra.mxu0 0
        %1175 = vmatprep.mubr.bf16.mxu0 0
        %1176 = vmatmul.mubr.bf16.gmra.mrb[0].mxu0 %v1138
        %v1177 = vpop.f32.mrb[0].mxu0
        %v1178 = vadd.f32 %v809, %v1177
        %v1179 = vpop.f32.mrb[0].mxu0
        %v1180 = vpop.f32.mrb[0].mxu0
        %v1181 = vpop.f32.mrb[0].mxu0
        %1182 = vdwg.mxu0
        %v1183 = vsel %vm1025, %v1178, -inf
        %1184 = vmax.xlane.f32.xlu0 %v1183
        %v1185 = vpop.xlane.xlu0 %1184
        %v1186 = vsub.f32 %v1178, %v1185
        %v1187 = vmul.f32 %v1186, 1.442695
        %v1188 = vpow.pop %v1187
        %v1189 = vsel %vm1025, %v1188, 0.0
        %1190 = vadd.xlane.f32.xlu0 %v1189
        %v1191 = vpop.xlane.xlu0 %1190
        %v1192 = vrcp.pop %v1191
        %v1193 = vmul.f32 %v1188, %v1192
        %v1194 = vpack.c.bf16 %v1193, %v1193
        %1196 = vrot.lane.b32.xlu0 %v1024, 120
        %v1197 = vpop.permute.xlu0 %1196
        %v1199 = vsel %vm1025, %v1194, 0
        %v1202 = vsel %vm1087, %v1197, 0
        %1204 = vmatprep.subr.bf16.mxu0 0
        %1205 = vmatpush1.bf16.msra.mxu0 %v1202
        %1206 = vmatprep.subr.bf16.mxu0 0
        %1207 = vmatpush1.bf16.msra.mxu0 0
        %1208 = vmatprep.subr.bf16.mxu0 0
        %1209 = vmatpush1.bf16.msra.mxu0 0
        %1210 = vmatprep.subr.bf16.mxu0 0
        %1211 = vmatpush1.bf16.msra.mxu0 0
        %1212 = vmatprep.subr.bf16.mxu0 0
        %1213 = vmatpush1.bf16.msra.mxu0 0
        %1214 = vmatprep.subr.bf16.mxu0 0
        %1215 = vmatpush1.bf16.msra.mxu0 0
        %1216 = vmatprep.subr.bf16.mxu0 0
        %1217 = vmatpush1.bf16.msra.mxu0 0
        %1218 = vmatprep.subr.bf16.mxu0 0
        %1219 = vmatpush1.bf16.msra.mxu0 0
        %1220 = vmatprep.subr.bf16.mxu0 0
        %1221 = vmatpush1.bf16.msra.mxu0 0
        %1222 = vmatprep.subr.bf16.mxu0 0
        %1223 = vmatpush1.bf16.msra.mxu0 0
        %1224 = vmatprep.subr.bf16.mxu0 0
        %1225 = vmatpush1.bf16.msra.mxu0 0
        %1226 = vmatprep.subr.bf16.mxu0 0
        %1227 = vmatpush1.bf16.msra.mxu0 0
        %1228 = vmatprep.subr.bf16.mxu0 0
        %1229 = vmatpush1.bf16.msra.mxu0 0
        %1230 = vmatprep.subr.bf16.mxu0 0
        %1231 = vmatpush1.bf16.msra.mxu0 0
        %1232 = vmatprep.subr.bf16.mxu0 0
        %1233 = vmatpush1.bf16.msra.mxu0 0
        %1234 = vmatprep.subr.bf16.mxu0 0
        %1235 = vmatpush1.bf16.msra.mxu0 0
        %1236 = vmatprep.mubr.bf16.mxu0 0
        %1237 = vmatmul.mubr.bf16.gmra.mrb[0].mxu0 %v1199
        %v1238 = vpop.f32.mrb[0].mxu0
        %v1239 = vadd.f32 0.0, %v1238
        %v1240 = vpop.f32.mrb[0].mxu0
        %v1241 = vpop.f32.mrb[0].mxu0
        %v1242 = vpop.f32.mrb[0].mxu0
        %1243 = vdwg.mxu0
        %1244 = vrot.lane.b32.xlu0 %v918, 112
        %v1245 = vpop.permute.xlu0 %1244
        %1246 = vrot.lane.b32.xlu0 %v971, 112
        %v1247 = vpop.permute.xlu0 %1246
        %v1249 = vsel %vm1025, %v1245, 0
        %v1252 = vsel %vm1025, %v1247, 0
        %1254 = vmatprep.subr.bf16.mxu0 0
        %1255 = vmatpush1.bf16.xpose.msra.mxu0 %v1252
        %1256 = vmatprep.subr.bf16.mxu0 0
        %1257 = vmatpush1.bf16.xpose.msra.mxu0 0
        %1258 = vmatprep.subr.bf16.mxu0 0
        %1259 = vmatpush1.bf16.xpose.msra.mxu0 0
        %1260 = vmatprep.subr.bf16.mxu0 0
        %1261 = vmatpush1.bf16.xpose.msra.mxu0 0
        %1262 = vmatprep.subr.bf16.mxu0 0
        %1263 = vmatpush1.bf16.xpose.msra.mxu0 0
        %1264 = vmatprep.subr.bf16.mxu0 0
        %1265 = vmatpush1.bf16.xpose.msra.mxu0 0
        %1266 = vmatprep.subr.bf16.mxu0 0
        %1267 = vmatpush1.bf16.xpose.msra.mxu0 0
        %1268 = vmatprep.subr.bf16.mxu0 0
        %1269 = vmatpush1.bf16.xpose.msra.mxu0 0
        %1270 = vmatprep.subr.bf16.mxu0 0
        %1271 = vmatpush1.bf16.xpose.msra.mxu0 0
        %1272 = vmatprep.subr.bf16.mxu0 0
        %1273 = vmatpush1.bf16.xpose.msra.mxu0 0
        %1274 = vmatprep.subr.bf16.mxu0 0
        %1275 = vmatpush1.bf16.xpose.msra.mxu0 0
        %1276 = vmatprep.subr.bf16.mxu0 0
        %1277 = vmatpush1.bf16.xpose.msra.mxu0 0
        %1278 = vmatprep.subr.bf16.mxu0 0
        %1279 = vmatpush1.bf16.xpose.msra.mxu0 0
        %1280 = vmatprep.subr.bf16.mxu0 0
        %1281 = vmatpush1.bf16.xpose.msra.mxu0 0
        %1282 = vmatprep.subr.bf16.mxu0 0
        %1283 = vmatpush1.bf16.xpose.msra.mxu0 0
        %1284 = vmatprep.subr.bf16.mxu0 0
        %1285 = vmatpush1.bf16.xpose.msra.mxu0 0
        %1286 = vmatprep.mubr.bf16.mxu0 0
        %1287 = vmatmul.mubr.bf16.gmra.mrb[0].mxu0 %v1249
        %v1288 = vpop.f32.mrb[0].mxu0
        %v1289 = vadd.f32 %v809, %v1288
        %v1290 = vpop.f32.mrb[0].mxu0
        %v1291 = vpop.f32.mrb[0].mxu0
        %v1292 = vpop.f32.mrb[0].mxu0
        %1293 = vdwg.mxu0
        %v1294 = vsel %vm1025, %v1289, -inf
        %1295 = vmax.xlane.f32.xlu0 %v1294
        %v1296 = vpop.xlane.xlu0 %1295
        %v1297 = vsub.f32 %v1289, %v1296
        %v1298 = vmul.f32 %v1297, 1.442695
        %v1299 = vpow.pop %v1298
        %v1300 = vsel %vm1025, %v1299, 0.0
        %1301 = vadd.xlane.f32.xlu0 %v1300
        %v1302 = vpop.xlane.xlu0 %1301
        %v1303 = vrcp.pop %v1302
        %v1304 = vmul.f32 %v1299, %v1303
        %v1305 = vpack.c.bf16 %v1304, %v1304
        %1306 = vrot.lane.b32.xlu0 %v1024, 112
        %v1307 = vpop.permute.xlu0 %1306
        %v1309 = vsel %vm1025, %v1305, 0
        %v1312 = vsel %vm1087, %v1307, 0
        %1314 = vmatprep.subr.bf16.mxu0 0
        %1315 = vmatpush1.bf16.msra.mxu0 %v1312
        %1316 = vmatprep.subr.bf16.mxu0 0
        %1317 = vmatpush1.bf16.msra.mxu0 0
        %1318 = vmatprep.subr.bf16.mxu0 0
        %1319 = vmatpush1.bf16.msra.mxu0 0
        %1320 = vmatprep.subr.bf16.mxu0 0
        %1321 = vmatpush1.bf16.msra.mxu0 0
        %1322 = vmatprep.subr.bf16.mxu0 0
        %1323 = vmatpush1.bf16.msra.mxu0 0
        %1324 = vmatprep.subr.bf16.mxu0 0
        %1325 = vmatpush1.bf16.msra.mxu0 0
        %1326 = vmatprep.subr.bf16.mxu0 0
        %1327 = vmatpush1.bf16.msra.mxu0 0
        %1328 = vmatprep.subr.bf16.mxu0 0
        %1329 = vmatpush1.bf16.msra.mxu0 0
        %1330 = vmatprep.subr.bf16.mxu0 0
        %1331 = vmatpush1.bf16.msra.mxu0 0
        %1332 = vmatprep.subr.bf16.mxu0 0
        %1333 = vmatpush1.bf16.msra.mxu0 0
        %1334 = vmatprep.subr.bf16.mxu0 0
        %1335 = vmatpush1.bf16.msra.mxu0 0
        %1336 = vmatprep.subr.bf16.mxu0 0
        %1337 = vmatpush1.bf16.msra.mxu0 0
        %1338 = vmatprep.subr.bf16.mxu0 0
        %1339 = vmatpush1.bf16.msra.mxu0 0
        %1340 = vmatprep.subr.bf16.mxu0 0
        %1341 = vmatpush1.bf16.msra.mxu0 0
        %1342 = vmatprep.subr.bf16.mxu0 0
        %1343 = vmatpush1.bf16.msra.mxu0 0
        %1344 = vmatprep.subr.bf16.mxu0 0
        %1345 = vmatpush1.bf16.msra.mxu0 0
        %1346 = vmatprep.mubr.bf16.mxu0 0
        %1347 = vmatmul.mubr.bf16.gmra.mrb[0].mxu0 %v1309
        %v1348 = vpop.f32.mrb[0].mxu0
        %v1349 = vadd.f32 0.0, %v1348
        %v1350 = vpop.f32.mrb[0].mxu0
        %v1351 = vpop.f32.mrb[0].mxu0
        %v1352 = vpop.f32.mrb[0].mxu0
        %1353 = vdwg.mxu0
        %1354 = vrot.lane.b32.xlu0 %v918, 104
        %v1355 = vpop.permute.xlu0 %1354
        %1356 = vrot.lane.b32.xlu0 %v971, 104
        %v1357 = vpop.permute.xlu0 %1356
        %v1359 = vsel %vm1025, %v1355, 0
        %v1362 = vsel %vm1025, %v1357, 0
        %1364 = vmatprep.subr.bf16.mxu0 0
        %1365 = vmatpush1.bf16.xpose.msra.mxu0 %v1362
        %1366 = vmatprep.subr.bf16.mxu0 0
        %1367 = vmatpush1.bf16.xpose.msra.mxu0 0
        %1368 = vmatprep.subr.bf16.mxu0 0
        %1369 = vmatpush1.bf16.xpose.msra.mxu0 0
        %1370 = vmatprep.subr.bf16.mxu0 0
        %1371 = vmatpush1.bf16.xpose.msra.mxu0 0
        %1372 = vmatprep.subr.bf16.mxu0 0
        %1373 = vmatpush1.bf16.xpose.msra.mxu0 0
        %1374 = vmatprep.subr.bf16.mxu0 0
        %1375 = vmatpush1.bf16.xpose.msra.mxu0 0
        %1376 = vmatprep.subr.bf16.mxu0 0
        %1377 = vmatpush1.bf16.xpose.msra.mxu0 0
        %1378 = vmatprep.subr.bf16.mxu0 0
        %1379 = vmatpush1.bf16.xpose.msra.mxu0 0
        %1380 = vmatprep.subr.bf16.mxu0 0
        %1381 = vmatpush1.bf16.xpose.msra.mxu0 0
        %1382 = vmatprep.subr.bf16.mxu0 0
        %1383 = vmatpush1.bf16.xpose.msra.mxu0 0
        %1384 = vmatprep.subr.bf16.mxu0 0
        %1385 = vmatpush1.bf16.xpose.msra.mxu0 0
        %1386 = vmatprep.subr.bf16.mxu0 0
        %1387 = vmatpush1.bf16.xpose.msra.mxu0 0
        %1388 = vmatprep.subr.bf16.mxu0 0
        %1389 = vmatpush1.bf16.xpose.msra.mxu0 0
        %1390 = vmatprep.subr.bf16.mxu0 0
        %1391 = vmatpush1.bf16.xpose.msra.mxu0 0
        %1392 = vmatprep.subr.bf16.mxu0 0
        %1393 = vmatpush1.bf16.xpose.msra.mxu0 0
        %1394 = vmatprep.subr.bf16.mxu0 0
        %1395 = vmatpush1.bf16.xpose.msra.mxu0 0
        %1396 = vmatprep.mubr.bf16.mxu0 0
        %1397 = vmatmul.mubr.bf16.gmra.mrb[0].mxu0 %v1359
        %v1398 = vpop.f32.mrb[0].mxu0
        %v1399 = vadd.f32 %v809, %v1398
        %v1400 = vpop.f32.mrb[0].mxu0
        %v1401 = vpop.f32.mrb[0].mxu0
        %v1402 = vpop.f32.mrb[0].mxu0
        %1403 = vdwg.mxu0
        %v1404 = vsel %vm1025, %v1399, -inf
        %1405 = vmax.xlane.f32.xlu0 %v1404
        %v1406 = vpop.xlane.xlu0 %1405
        %v1407 = vsub.f32 %v1399, %v1406
        %v1408 = vmul.f32 %v1407, 1.442695
        %v1409 = vpow.pop %v1408
        %v1410 = vsel %vm1025, %v1409, 0.0
        %1411 = vadd.xlane.f32.xlu0 %v1410
        %v1412 = vpop.xlane.xlu0 %1411
        %v1413 = vrcp.pop %v1412
        %v1414 = vmul.f32 %v1409, %v1413
        %v1415 = vpack.c.bf16 %v1414, %v1414
        %1416 = vrot.lane.b32.xlu0 %v1024, 104
        %v1417 = vpop.permute.xlu0 %1416
        %v1419 = vsel %vm1025, %v1415, 0
        %v1422 = vsel %vm1087, %v1417, 0
        %1424 = vmatprep.subr.bf16.mxu0 0
        %1425 = vmatpush1.bf16.msra.mxu0 %v1422
        %1426 = vmatprep.subr.bf16.mxu0 0
        %1427 = vmatpush1.bf16.msra.mxu0 0
        %1428 = vmatprep.subr.bf16.mxu0 0
        %1429 = vmatpush1.bf16.msra.mxu0 0
        %1430 = vmatprep.subr.bf16.mxu0 0
        %1431 = vmatpush1.bf16.msra.mxu0 0
        %1432 = vmatprep.subr.bf16.mxu0 0
        %1433 = vmatpush1.bf16.msra.mxu0 0
        %1434 = vmatprep.subr.bf16.mxu0 0
        %1435 = vmatpush1.bf16.msra.mxu0 0
        %1436 = vmatprep.subr.bf16.mxu0 0
        %1437 = vmatpush1.bf16.msra.mxu0 0
        %1438 = vmatprep.subr.bf16.mxu0 0
        %1439 = vmatpush1.bf16.msra.mxu0 0
        %1440 = vmatprep.subr.bf16.mxu0 0
        %1441 = vmatpush1.bf16.msra.mxu0 0
        %1442 = vmatprep.subr.bf16.mxu0 0
        %1443 = vmatpush1.bf16.msra.mxu0 0
        %1444 = vmatprep.subr.bf16.mxu0 0
        %1445 = vmatpush1.bf16.msra.mxu0 0
        %1446 = vmatprep.subr.bf16.mxu0 0
        %1447 = vmatpush1.bf16.msra.mxu0 0
        %1448 = vmatprep.subr.bf16.mxu0 0
        %1449 = vmatpush1.bf16.msra.mxu0 0
        %1450 = vmatprep.subr.bf16.mxu0 0
        %1451 = vmatpush1.bf16.msra.mxu0 0
        %1452 = vmatprep.subr.bf16.mxu0 0
        %1453 = vmatpush1.bf16.msra.mxu0 0
        %1454 = vmatprep.subr.bf16.mxu0 0
        %1455 = vmatpush1.bf16.msra.mxu0 0
        %1456 = vmatprep.mubr.bf16.mxu0 0
        %1457 = vmatmul.mubr.bf16.gmra.mrb[0].mxu0 %v1419
        %v1458 = vpop.f32.mrb[0].mxu0
        %v1459 = vadd.f32 0.0, %v1458
        %v1460 = vpop.f32.mrb[0].mxu0
        %v1461 = vpop.f32.mrb[0].mxu0
        %v1462 = vpop.f32.mrb[0].mxu0
        %1463 = vdwg.mxu0
        %1465 = vrot.lane.b32.xlu0 %v1239, 8
        %v1466 = vpop.permute.xlu0 %1465
        %1469 = vrot.lane.b32.xlu0 %v1349, 16
        %v1470 = vpop.permute.xlu0 %1469
        %1473 = vrot.lane.b32.xlu0 %v1459, 24
        %v1474 = vpop.permute.xlu0 %1473
        %v1476 = vsel %vm1025, %v1126, %v1466
        %vm1477 = vcmask 130048
        %v1478 = vsel %vm1477, %v1476, %v1470
        %vm1479 = vcmask 195584
        %v1480 = vsel %vm1479, %v1478, %v1474
        %v1481 = vpack.c.bf16 %v1480, %v1480
        %v1483 = vlaneseq
        %v1484 = vshrl.u32 %v1483, 7
        %v1485 = vsub.s32 0, %v1484
        %v1486 = vrot.slane %v861, %v1485
        %v1492 = vunpack.c.l.b16 %v857
        %v1493 = vunpack.c.l.b16 %v858
        %v1494 = vunpack.c.l.b16 %v859
        %v1495 = vunpack.c.l.b16 %v860
        %v1496 = vpack.c.b16 %v1493, %v1492
        %v1497 = vpack.c.b16 %v1495, %v1494
        %v1501 = vsel %vm815, %v1481, 0
        %1503 = vmatprep.subr.bf16.mxu0 0
        %1504 = vmatpush1.bf16.msra.mxu0 %v1496
        %1505 = vmatprep.subr.bf16.mxu0 0
        %1506 = vmatpush1.bf16.msra.mxu0 %v1497
        %1507 = vmatprep.subr.bf16.mxu0 0
        %1508 = vmatpush1.bf16.msra.mxu0 0
        %1509 = vmatprep.subr.bf16.mxu0 0
        %1510 = vmatpush1.bf16.msra.mxu0 0
        %1511 = vmatprep.subr.bf16.mxu0 0
        %1512 = vmatpush1.bf16.msra.mxu0 0
        %1513 = vmatprep.subr.bf16.mxu0 0
        %1514 = vmatpush1.bf16.msra.mxu0 0
        %1515 = vmatprep.subr.bf16.mxu0 0
        %1516 = vmatpush1.bf16.msra.mxu0 0
        %1517 = vmatprep.subr.bf16.mxu0 0
        %1518 = vmatpush1.bf16.msra.mxu0 0
        %1519 = vmatprep.subr.bf16.mxu0 0
        %1520 = vmatpush1.bf16.msra.mxu0 0
        %1521 = vmatprep.subr.bf16.mxu0 0
        %1522 = vmatpush1.bf16.msra.mxu0 0
        %1523 = vmatprep.subr.bf16.mxu0 0
        %1524 = vmatpush1.bf16.msra.mxu0 0
        %1525 = vmatprep.subr.bf16.mxu0 0
        %1526 = vmatpush1.bf16.msra.mxu0 0
        %1527 = vmatprep.subr.bf16.mxu0 0
        %1528 = vmatpush1.bf16.msra.mxu0 0
        %1529 = vmatprep.subr.bf16.mxu0 0
        %1530 = vmatpush1.bf16.msra.mxu0 0
        %1531 = vmatprep.subr.bf16.mxu0 0
        %1532 = vmatpush1.bf16.msra.mxu0 0
        %1533 = vmatprep.subr.bf16.mxu0 0
        %1534 = vmatpush1.bf16.msra.mxu0 0
        %1535 = vmatprep.mubr.bf16.mxu0 0
        %1536 = vmatmul.mubr.bf16.gmra.mrb[0].mxu0 %v1501
        %v1537 = vpop.f32.mrb[0].mxu0
        %v1538 = vadd.f32 %v1486, %v1537
        %v1539 = vpop.f32.mrb[0].mxu0
        %v1540 = vpop.f32.mrb[0].mxu0
        %v1541 = vpop.f32.mrb[0].mxu0
        %1542 = vdwg.mxu0
        %v1543 = vadd.f32 %v793, %v1538
        %v1544 = vld [vmem:[%s11] sm:$0x1]
        %v1545 = vld [vmem:[%s12] sm:$0x1]
        %v1546 = vsel %vm815, %v1543, 0.0
        %1547 = vadd.xlane.f32.xlu0 %v1546
        %v1548 = vpop.xlane.xlu0 %1547
        %v1549 = vmul.f32 %v1548, %v819
        %v1550 = vsub.f32 %v1543, %v1549
        %v1551 = vmul.f32 %v1550, %v1550
        %v1552 = vsel %vm815, %v1551, 0.0
        %1553 = vadd.xlane.f32.xlu0 %v1552
        %v1554 = vpop.xlane.xlu0 %1553
        %v1555 = vmul.f32 %v1554, %v819
        %v1556 = vadd.f32 %v1555, 1e-05
        %v1557 = vrsqrt.pop %v1556
        %v1558 = vmul.f32 %v1550, %v1557
        %v1560 = vlaneseq
        %v1561 = vshrl.u32 %v1560, 7
        %v1562 = vsub.s32 0, %v1561
        %v1563 = vrot.slane %v1544, %v1562
        %v1565 = vmul.f32 %v1558, %v1563
        %v1567 = vlaneseq
        %v1568 = vshrl.u32 %v1567, 7
        %v1569 = vsub.s32 0, %v1568
        %v1570 = vrot.slane %v1545, %v1569
        %v1572 = vadd.f32 %v1565, %v1570
        %v1573 = vpack.c.bf16 %v1572, %v1572
        %v1574 = vld [vmem:[%s13] sm:$0xf]
        %v1575 = vld [vmem:[%s13 + $0x4] sm:$0xf]
        %v1576 = vld [vmem:[%s13 + $0x8] sm:$0xf]
        %v1577 = vld [vmem:[%s13 + $0xc] sm:$0xf]
        %v1578 = vld [vmem:[%s14] sm:$0xf]
        %v1579 = vld [vmem:[%s14 + $0x4] sm:$0xf]
        %v1580 = vld [vmem:[%s14 + $0x8] sm:$0xf]
        %v1581 = vld [vmem:[%s14 + $0xc] sm:$0xf]
        %v1582 = vld [vmem:[%s15] sm:$0xf]
        %v1583 = vld [vmem:[%s15 + $0x4] sm:$0xf]
        %v1584 = vld [vmem:[%s15 + $0x8] sm:$0xf]
        %v1585 = vld [vmem:[%s15 + $0xc] sm:$0xf]
        %v1586 = vld [vmem:[%s16] sm:$0xf]
        %v1587 = vld [vmem:[%s16 + $0x4] sm:$0xf]
        %v1588 = vld [vmem:[%s16 + $0x8] sm:$0xf]
        %v1589 = vld [vmem:[%s16 + $0xc] sm:$0xf]
        %v1590 = vld [vmem:[%s17] sm:$0x1]
        %v1595 = vunpack.c.l.b16 %v1574
        %v1596 = vunpack.c.l.b16 %v1575
        %v1597 = vunpack.c.l.b16 %v1576
        %v1598 = vunpack.c.l.b16 %v1577
        %v1599 = vpack.c.b16 %v1596, %v1595
        %v1600 = vpack.c.b16 %v1598, %v1597
        %v1604 = vsel %vm815, %v1573, 0
        %1606 = vmatprep.subr.bf16.mxu0 0
        %1607 = vmatpush1.bf16.msra.mxu0 %v1599
        %1608 = vmatprep.subr.bf16.mxu0 0
        %1609 = vmatpush1.bf16.msra.mxu0 %v1600
        %1610 = vmatprep.subr.bf16.mxu0 0
        %1611 = vmatpush1.bf16.msra.mxu0 0
        %1612 = vmatprep.subr.bf16.mxu0 0
        %1613 = vmatpush1.bf16.msra.mxu0 0
        %1614 = vmatprep.subr.bf16.mxu0 0
        %1615 = vmatpush1.bf16.msra.mxu0 0
        %1616 = vmatprep.subr.bf16.mxu0 0
        %1617 = vmatpush1.bf16.msra.mxu0 0
        %1618 = vmatprep.subr.bf16.mxu0 0
        %1619 = vmatpush1.bf16.msra.mxu0 0
        %1620 = vmatprep.subr.bf16.mxu0 0
        %1621 = vmatpush1.bf16.msra.mxu0 0
        %1622 = vmatprep.subr.bf16.mxu0 0
        %1623 = vmatpush1.bf16.msra.mxu0 0
        %1624 = vmatprep.subr.bf16.mxu0 0
        %1625 = vmatpush1.bf16.msra.mxu0 0
        %1626 = vmatprep.subr.bf16.mxu0 0
        %1627 = vmatpush1.bf16.msra.mxu0 0
        %1628 = vmatprep.subr.bf16.mxu0 0
        %1629 = vmatpush1.bf16.msra.mxu0 0
        %1630 = vmatprep.subr.bf16.mxu0 0
        %1631 = vmatpush1.bf16.msra.mxu0 0
        %1632 = vmatprep.subr.bf16.mxu0 0
        %1633 = vmatpush1.bf16.msra.mxu0 0
        %1634 = vmatprep.subr.bf16.mxu0 0
        %1635 = vmatpush1.bf16.msra.mxu0 0
        %1636 = vmatprep.subr.bf16.mxu0 0
        %1637 = vmatpush1.bf16.msra.mxu0 0
        %1638 = vmatprep.mubr.bf16.mxu0 0
        %1639 = vmatmul.mubr.bf16.gmra.mrb[0].mxu0 %v1604
        %v1640 = vpop.f32.mrb[0].mxu0
        %v1641 = vadd.f32 0.0, %v1640
        %v1642 = vpop.f32.mrb[0].mxu0
        %v1643 = vpop.f32.mrb[0].mxu0
        %v1644 = vpop.f32.mrb[0].mxu0
        %1645 = vdwg.mxu0
        %v1646 = vmul.f32 %v1641, 0.35355338
        %v1647 = vpack.c.bf16 %v1646, %v1646
        %v1652 = vunpack.c.l.b16 %v1578
        %v1653 = vunpack.c.l.b16 %v1579
        %v1654 = vunpack.c.l.b16 %v1580
        %v1655 = vunpack.c.l.b16 %v1581
        %v1656 = vpack.c.b16 %v1653, %v1652
        %v1657 = vpack.c.b16 %v1655, %v1654
        %v1661 = vsel %vm815, %v794, 0
        %1663 = vmatprep.subr.bf16.mxu0 0
        %1664 = vmatpush1.bf16.msra.mxu0 %v1656
        %1665 = vmatprep.subr.bf16.mxu0 0
        %1666 = vmatpush1.bf16.msra.mxu0 %v1657
        %1667 = vmatprep.subr.bf16.mxu0 0
        %1668 = vmatpush1.bf16.msra.mxu0 0
        %1669 = vmatprep.subr.bf16.mxu0 0
        %1670 = vmatpush1.bf16.msra.mxu0 0
        %1671 = vmatprep.subr.bf16.mxu0 0
        %1672 = vmatpush1.bf16.msra.mxu0 0
        %1673 = vmatprep.subr.bf16.mxu0 0
        %1674 = vmatpush1.bf16.msra.mxu0 0
        %1675 = vmatprep.subr.bf16.mxu0 0
        %1676 = vmatpush1.bf16.msra.mxu0 0
        %1677 = vmatprep.subr.bf16.mxu0 0
        %1678 = vmatpush1.bf16.msra.mxu0 0
        %1679 = vmatprep.subr.bf16.mxu0 0
        %1680 = vmatpush1.bf16.msra.mxu0 0
        %1681 = vmatprep.subr.bf16.mxu0 0
        %1682 = vmatpush1.bf16.msra.mxu0 0
        %1683 = vmatprep.subr.bf16.mxu0 0
        %1684 = vmatpush1.bf16.msra.mxu0 0
        %1685 = vmatprep.subr.bf16.mxu0 0
        %1686 = vmatpush1.bf16.msra.mxu0 0
        %1687 = vmatprep.subr.bf16.mxu0 0
        %1688 = vmatpush1.bf16.msra.mxu0 0
        %1689 = vmatprep.subr.bf16.mxu0 0
        %1690 = vmatpush1.bf16.msra.mxu0 0
        %1691 = vmatprep.subr.bf16.mxu0 0
        %1692 = vmatpush1.bf16.msra.mxu0 0
        %1693 = vmatprep.subr.bf16.mxu0 0
        %1694 = vmatpush1.bf16.msra.mxu0 0
        %1695 = vmatprep.mubr.bf16.mxu0 0
        %1696 = vmatmul.mubr.bf16.gmra.mrb[0].mxu0 %v1661
        %v1697 = vpop.f32.mrb[0].mxu0
        %v1698 = vadd.f32 0.0, %v1697
        %v1699 = vpop.f32.mrb[0].mxu0
        %v1700 = vpop.f32.mrb[0].mxu0
        %v1701 = vpop.f32.mrb[0].mxu0
        %1702 = vdwg.mxu0
        %v1703 = vpack.c.bf16 %v1698, %v1698
        %v1708 = vunpack.c.l.b16 %v1582
        %v1709 = vunpack.c.l.b16 %v1583
        %v1710 = vunpack.c.l.b16 %v1584
        %v1711 = vunpack.c.l.b16 %v1585
        %v1712 = vpack.c.b16 %v1709, %v1708
        %v1713 = vpack.c.b16 %v1711, %v1710
        %1716 = vmatprep.subr.bf16.mxu0 0
        %1717 = vmatpush1.bf16.msra.mxu0 %v1712
        %1718 = vmatprep.subr.bf16.mxu0 0
        %1719 = vmatpush1.bf16.msra.mxu0 %v1713
        %1720 = vmatprep.subr.bf16.mxu0 0
        %1721 = vmatpush1.bf16.msra.mxu0 0
        %1722 = vmatprep.subr.bf16.mxu0 0
        %1723 = vmatpush1.bf16.msra.mxu0 0
        %1724 = vmatprep.subr.bf16.mxu0 0
        %1725 = vmatpush1.bf16.msra.mxu0 0
        %1726 = vmatprep.subr.bf16.mxu0 0
        %1727 = vmatpush1.bf16.msra.mxu0 0
        %1728 = vmatprep.subr.bf16.mxu0 0
        %1729 = vmatpush1.bf16.msra.mxu0 0
        %1730 = vmatprep.subr.bf16.mxu0 0
        %1731 = vmatpush1.bf16.msra.mxu0 0
        %1732 = vmatprep.subr.bf16.mxu0 0
        %1733 = vmatpush1.bf16.msra.mxu0 0
        %1734 = vmatprep.subr.bf16.mxu0 0
        %1735 = vmatpush1.bf16.msra.mxu0 0
        %1736 = vmatprep.subr.bf16.mxu0 0
        %1737 = vmatpush1.bf16.msra.mxu0 0
        %1738 = vmatprep.subr.bf16.mxu0 0
        %1739 = vmatpush1.bf16.msra.mxu0 0
        %1740 = vmatprep.subr.bf16.mxu0 0
        %1741 = vmatpush1.bf16.msra.mxu0 0
        %1742 = vmatprep.subr.bf16.mxu0 0
        %1743 = vmatpush1.bf16.msra.mxu0 0
        %1744 = vmatprep.subr.bf16.mxu0 0
        %1745 = vmatpush1.bf16.msra.mxu0 0
        %1746 = vmatprep.subr.bf16.mxu0 0
        %1747 = vmatpush1.bf16.msra.mxu0 0
        %1748 = vmatprep.mubr.bf16.mxu0 0
        %1749 = vmatmul.mubr.bf16.gmra.mrb[0].mxu0 %v1661
        %v1750 = vpop.f32.mrb[0].mxu0
        %v1751 = vadd.f32 0.0, %v1750
        %v1752 = vpop.f32.mrb[0].mxu0
        %v1753 = vpop.f32.mrb[0].mxu0
        %v1754 = vpop.f32.mrb[0].mxu0
        %1755 = vdwg.mxu0
        %v1756 = vpack.c.bf16 %v1751, %v1751
        %v1758 = vlaneseq
        %v1759 = vshrl.u32 %v1758, 7
        %v1760 = vsub.s32 0, %v1759
        %v1761 = vrot.slane %v812, %v1760
        %v1764 = vsel %vm1025, %v1647, 0
        %v1767 = vsel %vm1025, %v1703, 0
        %1769 = vmatprep.subr.bf16.mxu0 0
        %1770 = vmatpush1.bf16.xpose.msra.mxu0 %v1767
        %1771 = vmatprep.subr.bf16.mxu0 0
        %1772 = vmatpush1.bf16.xpose.msra.mxu0 0
        %1773 = vmatprep.subr.bf16.mxu0 0
        %1774 = vmatpush1.bf16.xpose.msra.mxu0 0
        %1775 = vmatprep.subr.bf16.mxu0 0
        %1776 = vmatpush1.bf16.xpose.msra.mxu0 0
        %1777 = vmatprep.subr.bf16.mxu0 0
        %1778 = vmatpush1.bf16.xpose.msra.mxu0 0
        %1779 = vmatprep.subr.bf16.mxu0 0
        %1780 = vmatpush1.bf16.xpose.msra.mxu0 0
        %1781 = vmatprep.subr.bf16.mxu0 0
        %1782 = vmatpush1.bf16.xpose.msra.mxu0 0
        %1783 = vmatprep.subr.bf16.mxu0 0
        %1784 = vmatpush1.bf16.xpose.msra.mxu0 0
        %1785 = vmatprep.subr.bf16.mxu0 0
        %1786 = vmatpush1.bf16.xpose.msra.mxu0 0
        %1787 = vmatprep.subr.bf16.mxu0 0
        %1788 = vmatpush1.bf16.xpose.msra.mxu0 0
        %1789 = vmatprep.subr.bf16.mxu0 0
        %1790 = vmatpush1.bf16.xpose.msra.mxu0 0
        %1791 = vmatprep.subr.bf16.mxu0 0
        %1792 = vmatpush1.bf16.xpose.msra.mxu0 0
        %1793 = vmatprep.subr.bf16.mxu0 0
        %1794 = vmatpush1.bf16.xpose.msra.mxu0 0
        %1795 = vmatprep.subr.bf16.mxu0 0
        %1796 = vmatpush1.bf16.xpose.msra.mxu0 0
        %1797 = vmatprep.subr.bf16.mxu0 0
        %1798 = vmatpush1.bf16.xpose.msra.mxu0 0
        %1799 = vmatprep.subr.bf16.mxu0 0
        %1800 = vmatpush1.bf16.xpose.msra.mxu0 0
        %1801 = vmatprep.mubr.bf16.mxu0 0
        %1802 = vmatmul.mubr.bf16.gmra.mrb[0].mxu0 %v1764
        %v1803 = vpop.f32.mrb[0].mxu0
        %v1804 = vadd.f32 %v1761, %v1803
        %v1805 = vpop.f32.mrb[0].mxu0
        %v1806 = vpop.f32.mrb[0].mxu0
        %v1807 = vpop.f32.mrb[0].mxu0
        %1808 = vdwg.mxu0
        %v1809 = vsel %vm1025, %v1804, -inf
        %1810 = vmax.xlane.f32.xlu0 %v1809
        %v1811 = vpop.xlane.xlu0 %1810
        %v1812 = vsub.f32 %v1804, %v1811
        %v1813 = vmul.f32 %v1812, 1.442695
        %v1814 = vpow.pop %v1813
        %v1815 = vsel %vm1025, %v1814, 0.0
        %1816 = vadd.xlane.f32.xlu0 %v1815
        %v1817 = vpop.xlane.xlu0 %1816
        %v1818 = vrcp.pop %v1817
        %v1819 = vmul.f32 %v1814, %v1818
        %v1820 = vpack.c.bf16 %v1819, %v1819
        %v1822 = vsel %vm1025, %v1820, 0
        %v1825 = vsel %vm1087, %v1756, 0
        %1827 = vmatprep.subr.bf16.mxu0 0
        %1828 = vmatpush1.bf16.msra.mxu0 %v1825
        %1829 = vmatprep.subr.bf16.mxu0 0
        %1830 = vmatpush1.bf16.msra.mxu0 0
        %1831 = vmatprep.subr.bf16.mxu0 0
        %1832 = vmatpush1.bf16.msra.mxu0 0
        %1833 = vmatprep.subr.bf16.mxu0 0
        %1834 = vmatpush1.bf16.msra.mxu0 0
        %1835 = vmatprep.subr.bf16.mxu0 0
        %1836 = vmatpush1.bf16.msra.mxu0 0
        %1837 = vmatprep.subr.bf16.mxu0 0
        %1838 = vmatpush1.bf16.msra.mxu0 0
        %1839 = vmatprep.subr.bf16.mxu0 0
        %1840 = vmatpush1.bf16.msra.mxu0 0
        %1841 = vmatprep.subr.bf16.mxu0 0
        %1842 = vmatpush1.bf16.msra.mxu0 0
        %1843 = vmatprep.subr.bf16.mxu0 0
        %1844 = vmatpush1.bf16.msra.mxu0 0
        %1845 = vmatprep.subr.bf16.mxu0 0
        %1846 = vmatpush1.bf16.msra.mxu0 0
        %1847 = vmatprep.subr.bf16.mxu0 0
        %1848 = vmatpush1.bf16.msra.mxu0 0
        %1849 = vmatprep.subr.bf16.mxu0 0
        %1850 = vmatpush1.bf16.msra.mxu0 0
        %1851 = vmatprep.subr.bf16.mxu0 0
        %1852 = vmatpush1.bf16.msra.mxu0 0
        %1853 = vmatprep.subr.bf16.mxu0 0
        %1854 = vmatpush1.bf16.msra.mxu0 0
        %1855 = vmatprep.subr.bf16.mxu0 0
        %1856 = vmatpush1.bf16.msra.mxu0 0
        %1857 = vmatprep.subr.bf16.mxu0 0
        %1858 = vmatpush1.bf16.msra.mxu0 0
        %1859 = vmatprep.mubr.bf16.mxu0 0
        %1860 = vmatmul.mubr.bf16.gmra.mrb[0].mxu0 %v1822
        %v1861 = vpop.f32.mrb[0].mxu0
        %v1862 = vadd.f32 0.0, %v1861
        %v1863 = vpop.f32.mrb[0].mxu0
        %v1864 = vpop.f32.mrb[0].mxu0
        %v1865 = vpop.f32.mrb[0].mxu0
        %1866 = vdwg.mxu0
        %1868 = vrot.lane.b32.xlu0 %v1647, 120
        %v1869 = vpop.permute.xlu0 %1868
        %1871 = vrot.lane.b32.xlu0 %v1703, 120
        %v1872 = vpop.permute.xlu0 %1871
        %v1874 = vsel %vm1025, %v1869, 0
        %v1877 = vsel %vm1025, %v1872, 0
        %1879 = vmatprep.subr.bf16.mxu0 0
        %1880 = vmatpush1.bf16.xpose.msra.mxu0 %v1877
        %1881 = vmatprep.subr.bf16.mxu0 0
        %1882 = vmatpush1.bf16.xpose.msra.mxu0 0
        %1883 = vmatprep.subr.bf16.mxu0 0
        %1884 = vmatpush1.bf16.xpose.msra.mxu0 0
        %1885 = vmatprep.subr.bf16.mxu0 0
        %1886 = vmatpush1.bf16.xpose.msra.mxu0 0
        %1887 = vmatprep.subr.bf16.mxu0 0
        %1888 = vmatpush1.bf16.xpose.msra.mxu0 0
        %1889 = vmatprep.subr.bf16.mxu0 0
        %1890 = vmatpush1.bf16.xpose.msra.mxu0 0
        %1891 = vmatprep.subr.bf16.mxu0 0
        %1892 = vmatpush1.bf16.xpose.msra.mxu0 0
        %1893 = vmatprep.subr.bf16.mxu0 0
        %1894 = vmatpush1.bf16.xpose.msra.mxu0 0
        %1895 = vmatprep.subr.bf16.mxu0 0
        %1896 = vmatpush1.bf16.xpose.msra.mxu0 0
        %1897 = vmatprep.subr.bf16.mxu0 0
        %1898 = vmatpush1.bf16.xpose.msra.mxu0 0
        %1899 = vmatprep.subr.bf16.mxu0 0
        %1900 = vmatpush1.bf16.xpose.msra.mxu0 0
        %1901 = vmatprep.subr.bf16.mxu0 0
        %1902 = vmatpush1.bf16.xpose.msra.mxu0 0
        %1903 = vmatprep.subr.bf16.mxu0 0
        %1904 = vmatpush1.bf16.xpose.msra.mxu0 0
        %1905 = vmatprep.subr.bf16.mxu0 0
        %1906 = vmatpush1.bf16.xpose.msra.mxu0 0
        %1907 = vmatprep.subr.bf16.mxu0 0
        %1908 = vmatpush1.bf16.xpose.msra.mxu0 0
        %1909 = vmatprep.subr.bf16.mxu0 0
        %1910 = vmatpush1.bf16.xpose.msra.mxu0 0
        %1911 = vmatprep.mubr.bf16.mxu0 0
        %1912 = vmatmul.mubr.bf16.gmra.mrb[0].mxu0 %v1874
        %v1913 = vpop.f32.mrb[0].mxu0
        %v1914 = vadd.f32 %v1761, %v1913
        %v1915 = vpop.f32.mrb[0].mxu0
        %v1916 = vpop.f32.mrb[0].mxu0
        %v1917 = vpop.f32.mrb[0].mxu0
        %1918 = vdwg.mxu0
        %v1919 = vsel %vm1025, %v1914, -inf
        %1920 = vmax.xlane.f32.xlu0 %v1919
        %v1921 = vpop.xlane.xlu0 %1920
        %v1922 = vsub.f32 %v1914, %v1921
        %v1923 = vmul.f32 %v1922, 1.442695
        %v1924 = vpow.pop %v1923
        %v1925 = vsel %vm1025, %v1924, 0.0
        %1926 = vadd.xlane.f32.xlu0 %v1925
        %v1927 = vpop.xlane.xlu0 %1926
        %v1928 = vrcp.pop %v1927
        %v1929 = vmul.f32 %v1924, %v1928
        %v1930 = vpack.c.bf16 %v1929, %v1929
        %1932 = vrot.lane.b32.xlu0 %v1756, 120
        %v1933 = vpop.permute.xlu0 %1932
        %v1935 = vsel %vm1025, %v1930, 0
        %v1938 = vsel %vm1087, %v1933, 0
        %1940 = vmatprep.subr.bf16.mxu0 0
        %1941 = vmatpush1.bf16.msra.mxu0 %v1938
        %1942 = vmatprep.subr.bf16.mxu0 0
        %1943 = vmatpush1.bf16.msra.mxu0 0
        %1944 = vmatprep.subr.bf16.mxu0 0
        %1945 = vmatpush1.bf16.msra.mxu0 0
        %1946 = vmatprep.subr.bf16.mxu0 0
        %1947 = vmatpush1.bf16.msra.mxu0 0
        %1948 = vmatprep.subr.bf16.mxu0 0
        %1949 = vmatpush1.bf16.msra.mxu0 0
        %1950 = vmatprep.subr.bf16.mxu0 0
        %1951 = vmatpush1.bf16.msra.mxu0 0
        %1952 = vmatprep.subr.bf16.mxu0 0
        %1953 = vmatpush1.bf16.msra.mxu0 0
        %1954 = vmatprep.subr.bf16.mxu0 0
        %1955 = vmatpush1.bf16.msra.mxu0 0
        %1956 = vmatprep.subr.bf16.mxu0 0
        %1957 = vmatpush1.bf16.msra.mxu0 0
        %1958 = vmatprep.subr.bf16.mxu0 0
        %1959 = vmatpush1.bf16.msra.mxu0 0
        %1960 = vmatprep.subr.bf16.mxu0 0
        %1961 = vmatpush1.bf16.msra.mxu0 0
        %1962 = vmatprep.subr.bf16.mxu0 0
        %1963 = vmatpush1.bf16.msra.mxu0 0
        %1964 = vmatprep.subr.bf16.mxu0 0
        %1965 = vmatpush1.bf16.msra.mxu0 0
        %1966 = vmatprep.subr.bf16.mxu0 0
        %1967 = vmatpush1.bf16.msra.mxu0 0
        %1968 = vmatprep.subr.bf16.mxu0 0
        %1969 = vmatpush1.bf16.msra.mxu0 0
        %1970 = vmatprep.subr.bf16.mxu0 0
        %1971 = vmatpush1.bf16.msra.mxu0 0
        %1972 = vmatprep.mubr.bf16.mxu0 0
        %1973 = vmatmul.mubr.bf16.gmra.mrb[0].mxu0 %v1935
        %v1974 = vpop.f32.mrb[0].mxu0
        %v1975 = vadd.f32 0.0, %v1974
        %v1976 = vpop.f32.mrb[0].mxu0
        %v1977 = vpop.f32.mrb[0].mxu0
        %v1978 = vpop.f32.mrb[0].mxu0
        %1979 = vdwg.mxu0
        %1980 = vrot.lane.b32.xlu0 %v1647, 112
        %v1981 = vpop.permute.xlu0 %1980
        %1982 = vrot.lane.b32.xlu0 %v1703, 112
        %v1983 = vpop.permute.xlu0 %1982
        %v1985 = vsel %vm1025, %v1981, 0
        %v1988 = vsel %vm1025, %v1983, 0
        %1990 = vmatprep.subr.bf16.mxu0 0
        %1991 = vmatpush1.bf16.xpose.msra.mxu0 %v1988
        %1992 = vmatprep.subr.bf16.mxu0 0
        %1993 = vmatpush1.bf16.xpose.msra.mxu0 0
        %1994 = vmatprep.subr.bf16.mxu0 0
        %1995 = vmatpush1.bf16.xpose.msra.mxu0 0
        %1996 = vmatprep.subr.bf16.mxu0 0
        %1997 = vmatpush1.bf16.xpose.msra.mxu0 0
        %1998 = vmatprep.subr.bf16.mxu0 0
        %1999 = vmatpush1.bf16.xpose.msra.mxu0 0
        %2000 = vmatprep.subr.bf16.mxu0 0
        %2001 = vmatpush1.bf16.xpose.msra.mxu0 0
        %2002 = vmatprep.subr.bf16.mxu0 0
        %2003 = vmatpush1.bf16.xpose.msra.mxu0 0
        %2004 = vmatprep.subr.bf16.mxu0 0
        %2005 = vmatpush1.bf16.xpose.msra.mxu0 0
        %2006 = vmatprep.subr.bf16.mxu0 0
        %2007 = vmatpush1.bf16.xpose.msra.mxu0 0
        %2008 = vmatprep.subr.bf16.mxu0 0
        %2009 = vmatpush1.bf16.xpose.msra.mxu0 0
        %2010 = vmatprep.subr.bf16.mxu0 0
        %2011 = vmatpush1.bf16.xpose.msra.mxu0 0
        %2012 = vmatprep.subr.bf16.mxu0 0
        %2013 = vmatpush1.bf16.xpose.msra.mxu0 0
        %2014 = vmatprep.subr.bf16.mxu0 0
        %2015 = vmatpush1.bf16.xpose.msra.mxu0 0
        %2016 = vmatprep.subr.bf16.mxu0 0
        %2017 = vmatpush1.bf16.xpose.msra.mxu0 0
        %2018 = vmatprep.subr.bf16.mxu0 0
        %2019 = vmatpush1.bf16.xpose.msra.mxu0 0
        %2020 = vmatprep.subr.bf16.mxu0 0
        %2021 = vmatpush1.bf16.xpose.msra.mxu0 0
        %2022 = vmatprep.mubr.bf16.mxu0 0
        %2023 = vmatmul.mubr.bf16.gmra.mrb[0].mxu0 %v1985
        %v2024 = vpop.f32.mrb[0].mxu0
        %v2025 = vadd.f32 %v1761, %v2024
        %v2026 = vpop.f32.mrb[0].mxu0
        %v2027 = vpop.f32.mrb[0].mxu0
        %v2028 = vpop.f32.mrb[0].mxu0
        %2029 = vdwg.mxu0
        %v2030 = vsel %vm1025, %v2025, -inf
        %2031 = vmax.xlane.f32.xlu0 %v2030
        %v2032 = vpop.xlane.xlu0 %2031
        %v2033 = vsub.f32 %v2025, %v2032
        %v2034 = vmul.f32 %v2033, 1.442695
        %v2035 = vpow.pop %v2034
        %v2036 = vsel %vm1025, %v2035, 0.0
        %2037 = vadd.xlane.f32.xlu0 %v2036
        %v2038 = vpop.xlane.xlu0 %2037
        %v2039 = vrcp.pop %v2038
        %v2040 = vmul.f32 %v2035, %v2039
        %v2041 = vpack.c.bf16 %v2040, %v2040
        %2042 = vrot.lane.b32.xlu0 %v1756, 112
        %v2043 = vpop.permute.xlu0 %2042
        %v2045 = vsel %vm1025, %v2041, 0
        %v2048 = vsel %vm1087, %v2043, 0
        %2050 = vmatprep.subr.bf16.mxu0 0
        %2051 = vmatpush1.bf16.msra.mxu0 %v2048
        %2052 = vmatprep.subr.bf16.mxu0 0
        %2053 = vmatpush1.bf16.msra.mxu0 0
        %2054 = vmatprep.subr.bf16.mxu0 0
        %2055 = vmatpush1.bf16.msra.mxu0 0
        %2056 = vmatprep.subr.bf16.mxu0 0
        %2057 = vmatpush1.bf16.msra.mxu0 0
        %2058 = vmatprep.subr.bf16.mxu0 0
        %2059 = vmatpush1.bf16.msra.mxu0 0
        %2060 = vmatprep.subr.bf16.mxu0 0
        %2061 = vmatpush1.bf16.msra.mxu0 0
        %2062 = vmatprep.subr.bf16.mxu0 0
        %2063 = vmatpush1.bf16.msra.mxu0 0
        %2064 = vmatprep.subr.bf16.mxu0 0
        %2065 = vmatpush1.bf16.msra.mxu0 0
        %2066 = vmatprep.subr.bf16.mxu0 0
        %2067 = vmatpush1.bf16.msra.mxu0 0
        %2068 = vmatprep.subr.bf16.mxu0 0
        %2069 = vmatpush1.bf16.msra.mxu0 0
        %2070 = vmatprep.subr.bf16.mxu0 0
        %2071 = vmatpush1.bf16.msra.mxu0 0
        %2072 = vmatprep.subr.bf16.mxu0 0
        %2073 = vmatpush1.bf16.msra.mxu0 0
        %2074 = vmatprep.subr.bf16.mxu0 0
        %2075 = vmatpush1.bf16.msra.mxu0 0
        %2076 = vmatprep.subr.bf16.mxu0 0
        %2077 = vmatpush1.bf16.msra.mxu0 0
        %2078 = vmatprep.subr.bf16.mxu0 0
        %2079 = vmatpush1.bf16.msra.mxu0 0
        %2080 = vmatprep.subr.bf16.mxu0 0
        %2081 = vmatpush1.bf16.msra.mxu0 0
        %2082 = vmatprep.mubr.bf16.mxu0 0
        %2083 = vmatmul.mubr.bf16.gmra.mrb[0].mxu0 %v2045
        %v2084 = vpop.f32.mrb[0].mxu0
        %v2085 = vadd.f32 0.0, %v2084
        %v2086 = vpop.f32.mrb[0].mxu0
        %v2087 = vpop.f32.mrb[0].mxu0
        %v2088 = vpop.f32.mrb[0].mxu0
        %2089 = vdwg.mxu0
        %2090 = vrot.lane.b32.xlu0 %v1647, 104
        %v2091 = vpop.permute.xlu0 %2090
        %2092 = vrot.lane.b32.xlu0 %v1703, 104
        %v2093 = vpop.permute.xlu0 %2092
        %v2095 = vsel %vm1025, %v2091, 0
        %v2098 = vsel %vm1025, %v2093, 0
        %2100 = vmatprep.subr.bf16.mxu0 0
        %2101 = vmatpush1.bf16.xpose.msra.mxu0 %v2098
        %2102 = vmatprep.subr.bf16.mxu0 0
        %2103 = vmatpush1.bf16.xpose.msra.mxu0 0
        %2104 = vmatprep.subr.bf16.mxu0 0
        %2105 = vmatpush1.bf16.xpose.msra.mxu0 0
        %2106 = vmatprep.subr.bf16.mxu0 0
        %2107 = vmatpush1.bf16.xpose.msra.mxu0 0
        %2108 = vmatprep.subr.bf16.mxu0 0
        %2109 = vmatpush1.bf16.xpose.msra.mxu0 0
        %2110 = vmatprep.subr.bf16.mxu0 0
        %2111 = vmatpush1.bf16.xpose.msra.mxu0 0
        %2112 = vmatprep.subr.bf16.mxu0 0
        %2113 = vmatpush1.bf16.xpose.msra.mxu0 0
        %2114 = vmatprep.subr.bf16.mxu0 0
        %2115 = vmatpush1.bf16.xpose.msra.mxu0 0
        %2116 = vmatprep.subr.bf16.mxu0 0
        %2117 = vmatpush1.bf16.xpose.msra.mxu0 0
        %2118 = vmatprep.subr.bf16.mxu0 0
        %2119 = vmatpush1.bf16.xpose.msra.mxu0 0
        %2120 = vmatprep.subr.bf16.mxu0 0
        %2121 = vmatpush1.bf16.xpose.msra.mxu0 0
        %2122 = vmatprep.subr.bf16.mxu0 0
        %2123 = vmatpush1.bf16.xpose.msra.mxu0 0
        %2124 = vmatprep.subr.bf16.mxu0 0
        %2125 = vmatpush1.bf16.xpose.msra.mxu0 0
        %2126 = vmatprep.subr.bf16.mxu0 0
        %2127 = vmatpush1.bf16.xpose.msra.mxu0 0
        %2128 = vmatprep.subr.bf16.mxu0 0
        %2129 = vmatpush1.bf16.xpose.msra.mxu0 0
        %2130 = vmatprep.subr.bf16.mxu0 0
        %2131 = vmatpush1.bf16.xpose.msra.mxu0 0
        %2132 = vmatprep.mubr.bf16.mxu0 0
        %2133 = vmatmul.mubr.bf16.gmra.mrb[0].mxu0 %v2095
        %v2134 = vpop.f32.mrb[0].mxu0
        %v2135 = vadd.f32 %v1761, %v2134
        %v2136 = vpop.f32.mrb[0].mxu0
        %v2137 = vpop.f32.mrb[0].mxu0
        %v2138 = vpop.f32.mrb[0].mxu0
        %2139 = vdwg.mxu0
        %v2140 = vsel %vm1025, %v2135, -inf
        %2141 = vmax.xlane.f32.xlu0 %v2140
        %v2142 = vpop.xlane.xlu0 %2141
        %v2143 = vsub.f32 %v2135, %v2142
        %v2144 = vmul.f32 %v2143, 1.442695
        %v2145 = vpow.pop %v2144
        %v2146 = vsel %vm1025, %v2145, 0.0
        %2147 = vadd.xlane.f32.xlu0 %v2146
        %v2148 = vpop.xlane.xlu0 %2147
        %v2149 = vrcp.pop %v2148
        %v2150 = vmul.f32 %v2145, %v2149
        %v2151 = vpack.c.bf16 %v2150, %v2150
        %2152 = vrot.lane.b32.xlu0 %v1756, 104
        %v2153 = vpop.permute.xlu0 %2152
        %v2155 = vsel %vm1025, %v2151, 0
        %v2158 = vsel %vm1087, %v2153, 0
        %2160 = vmatprep.subr.bf16.mxu0 0
        %2161 = vmatpush1.bf16.msra.mxu0 %v2158
        %2162 = vmatprep.subr.bf16.mxu0 0
        %2163 = vmatpush1.bf16.msra.mxu0 0
        %2164 = vmatprep.subr.bf16.mxu0 0
        %2165 = vmatpush1.bf16.msra.mxu0 0
        %2166 = vmatprep.subr.bf16.mxu0 0
        %2167 = vmatpush1.bf16.msra.mxu0 0
        %2168 = vmatprep.subr.bf16.mxu0 0
        %2169 = vmatpush1.bf16.msra.mxu0 0
        %2170 = vmatprep.subr.bf16.mxu0 0
        %2171 = vmatpush1.bf16.msra.mxu0 0
        %2172 = vmatprep.subr.bf16.mxu0 0
        %2173 = vmatpush1.bf16.msra.mxu0 0
        %2174 = vmatprep.subr.bf16.mxu0 0
        %2175 = vmatpush1.bf16.msra.mxu0 0
        %2176 = vmatprep.subr.bf16.mxu0 0
        %2177 = vmatpush1.bf16.msra.mxu0 0
        %2178 = vmatprep.subr.bf16.mxu0 0
        %2179 = vmatpush1.bf16.msra.mxu0 0
        %2180 = vmatprep.subr.bf16.mxu0 0
        %2181 = vmatpush1.bf16.msra.mxu0 0
        %2182 = vmatprep.subr.bf16.mxu0 0
        %2183 = vmatpush1.bf16.msra.mxu0 0
        %2184 = vmatprep.subr.bf16.mxu0 0
        %2185 = vmatpush1.bf16.msra.mxu0 0
        %2186 = vmatprep.subr.bf16.mxu0 0
        %2187 = vmatpush1.bf16.msra.mxu0 0
        %2188 = vmatprep.subr.bf16.mxu0 0
        %2189 = vmatpush1.bf16.msra.mxu0 0
        %2190 = vmatprep.subr.bf16.mxu0 0
        %2191 = vmatpush1.bf16.msra.mxu0 0
        %2192 = vmatprep.mubr.bf16.mxu0 0
        %2193 = vmatmul.mubr.bf16.gmra.mrb[0].mxu0 %v2155
        %v2194 = vpop.f32.mrb[0].mxu0
        %v2195 = vadd.f32 0.0, %v2194
        %v2196 = vpop.f32.mrb[0].mxu0
        %v2197 = vpop.f32.mrb[0].mxu0
        %v2198 = vpop.f32.mrb[0].mxu0
        %2199 = vdwg.mxu0
        %2201 = vrot.lane.b32.xlu0 %v1975, 8
        %v2202 = vpop.permute.xlu0 %2201
        %2205 = vrot.lane.b32.xlu0 %v2085, 16
        %v2206 = vpop.permute.xlu0 %2205
        %2209 = vrot.lane.b32.xlu0 %v2195, 24
        %v2210 = vpop.permute.xlu0 %2209
        %v2212 = vsel %vm1025, %v1862, %v2202
        %v2213 = vsel %vm1477, %v2212, %v2206
        %v2214 = vsel %vm1479, %v2213, %v2210
        %v2215 = vpack.c.bf16 %v2214, %v2214
        %v2217 = vlaneseq
        %v2218 = vshrl.u32 %v2217, 7
        %v2219 = vsub.s32 0, %v2218
        %v2220 = vrot.slane %v1590, %v2219
        %v2226 = vunpack.c.l.b16 %v1586
        %v2227 = vunpack.c.l.b16 %v1587
        %v2228 = vunpack.c.l.b16 %v1588
        %v2229 = vunpack.c.l.b16 %v1589
        %v2230 = vpack.c.b16 %v2227, %v2226
        %v2231 = vpack.c.b16 %v2229, %v2228
        %v2235 = vsel %vm815, %v2215, 0
        %2237 = vmatprep.subr.bf16.mxu0 0
        %2238 = vmatpush1.bf16.msra.mxu0 %v2230
        %2239 = vmatprep.subr.bf16.mxu0 0
        %2240 = vmatpush1.bf16.msra.mxu0 %v2231
        %2241 = vmatprep.subr.bf16.mxu0 0
        %2242 = vmatpush1.bf16.msra.mxu0 0
        %2243 = vmatprep.subr.bf16.mxu0 0
        %2244 = vmatpush1.bf16.msra.mxu0 0
        %2245 = vmatprep.subr.bf16.mxu0 0
        %2246 = vmatpush1.bf16.msra.mxu0 0
        %2247 = vmatprep.subr.bf16.mxu0 0
        %2248 = vmatpush1.bf16.msra.mxu0 0
        %2249 = vmatprep.subr.bf16.mxu0 0
        %2250 = vmatpush1.bf16.msra.mxu0 0
        %2251 = vmatprep.subr.bf16.mxu0 0
        %2252 = vmatpush1.bf16.msra.mxu0 0
        %2253 = vmatprep.subr.bf16.mxu0 0
        %2254 = vmatpush1.bf16.msra.mxu0 0
        %2255 = vmatprep.subr.bf16.mxu0 0
        %2256 = vmatpush1.bf16.msra.mxu0 0
        %2257 = vmatprep.subr.bf16.mxu0 0
        %2258 = vmatpush1.bf16.msra.mxu0 0
        %2259 = vmatprep.subr.bf16.mxu0 0
        %2260 = vmatpush1.bf16.msra.mxu0 0
        %2261 = vmatprep.subr.bf16.mxu0 0
        %2262 = vmatpush1.bf16.msra.mxu0 0
        %2263 = vmatprep.subr.bf16.mxu0 0
        %2264 = vmatpush1.bf16.msra.mxu0 0
        %2265 = vmatprep.subr.bf16.mxu0 0
        %2266 = vmatpush1.bf16.msra.mxu0 0
        %2267 = vmatprep.subr.bf16.mxu0 0
        %2268 = vmatpush1.bf16.msra.mxu0 0
        %2269 = vmatprep.mubr.bf16.mxu0 0
        %2270 = vmatmul.mubr.bf16.gmra.mrb[0].mxu0 %v2235
        %v2271 = vpop.f32.mrb[0].mxu0
        %v2272 = vadd.f32 %v2220, %v2271
        %v2273 = vpop.f32.mrb[0].mxu0
        %v2274 = vpop.f32.mrb[0].mxu0
        %v2275 = vpop.f32.mrb[0].mxu0
        %2276 = vdwg.mxu0
        %v2277 = vadd.f32 %v1543, %v2272
        %v2278 = vld [vmem:[%s18] sm:$0x1]
        %v2279 = vld [vmem:[%s19] sm:$0x1]
        %v2280 = vsel %vm815, %v2277, 0.0
        %2281 = vadd.xlane.f32.xlu0 %v2280
        %v2282 = vpop.xlane.xlu0 %2281
        %v2283 = vmul.f32 %v2282, %v819
        %v2284 = vsub.f32 %v2277, %v2283
        %v2285 = vmul.f32 %v2284, %v2284
        %v2286 = vsel %vm815, %v2285, 0.0
        %2287 = vadd.xlane.f32.xlu0 %v2286
        %v2288 = vpop.xlane.xlu0 %2287
        %v2289 = vmul.f32 %v2288, %v819
        %v2290 = vadd.f32 %v2289, 1e-05
        %v2291 = vrsqrt.pop %v2290
        %v2292 = vmul.f32 %v2284, %v2291
        %v2294 = vlaneseq
        %v2295 = vshrl.u32 %v2294, 7
        %v2296 = vsub.s32 0, %v2295
        %v2297 = vrot.slane %v2278, %v2296
        %v2299 = vmul.f32 %v2292, %v2297
        %v2301 = vlaneseq
        %v2302 = vshrl.u32 %v2301, 7
        %v2303 = vsub.s32 0, %v2302
        %v2304 = vrot.slane %v2279, %v2303
        %v2306 = vadd.f32 %v2299, %v2304
        %v2307 = vpack.c.bf16 %v2306, %v2306
        %v2308 = vld [vmem:[%s20] sm:$0xf]
        %v2309 = vld [vmem:[%s20 + $0x4] sm:$0xf]
        %v2310 = vld [vmem:[%s20 + $0x8] sm:$0xf]
        %v2311 = vld [vmem:[%s20 + $0xc] sm:$0xf]
        %v2312 = vld [vmem:[%s21] sm:$0x1]
        %v2314 = vlaneseq
        %v2315 = vshrl.u32 %v2314, 7
        %v2316 = vsub.s32 0, %v2315
        %v2317 = vrot.slane %v2312, %v2316
        %v2323 = vunpack.c.l.b16 %v2308
        %v2324 = vunpack.c.l.b16 %v2309
        %v2325 = vunpack.c.l.b16 %v2310
        %v2326 = vunpack.c.l.b16 %v2311
        %v2327 = vpack.c.b16 %v2324, %v2323
        %v2328 = vpack.c.b16 %v2326, %v2325
        %v2332 = vsel %vm815, %v2307, 0
        %2334 = vmatprep.subr.bf16.mxu0 0
        %2335 = vmatpush1.bf16.msra.mxu0 %v2327
        %2336 = vmatprep.subr.bf16.mxu0 0
        %2337 = vmatpush1.bf16.msra.mxu0 %v2328
        %2338 = vmatprep.subr.bf16.mxu0 0
        %2339 = vmatpush1.bf16.msra.mxu0 0
        %2340 = vmatprep.subr.bf16.mxu0 0
        %2341 = vmatpush1.bf16.msra.mxu0 0
        %2342 = vmatprep.subr.bf16.mxu0 0
        %2343 = vmatpush1.bf16.msra.mxu0 0
        %2344 = vmatprep.subr.bf16.mxu0 0
        %2345 = vmatpush1.bf16.msra.mxu0 0
        %2346 = vmatprep.subr.bf16.mxu0 0
        %2347 = vmatpush1.bf16.msra.mxu0 0
        %2348 = vmatprep.subr.bf16.mxu0 0
        %2349 = vmatpush1.bf16.msra.mxu0 0
        %2350 = vmatprep.subr.bf16.mxu0 0
        %2351 = vmatpush1.bf16.msra.mxu0 0
        %2352 = vmatprep.subr.bf16.mxu0 0
        %2353 = vmatpush1.bf16.msra.mxu0 0
        %2354 = vmatprep.subr.bf16.mxu0 0
        %2355 = vmatpush1.bf16.msra.mxu0 0
        %2356 = vmatprep.subr.bf16.mxu0 0
        %2357 = vmatpush1.bf16.msra.mxu0 0
        %2358 = vmatprep.subr.bf16.mxu0 0
        %2359 = vmatpush1.bf16.msra.mxu0 0
        %2360 = vmatprep.subr.bf16.mxu0 0
        %2361 = vmatpush1.bf16.msra.mxu0 0
        %2362 = vmatprep.subr.bf16.mxu0 0
        %2363 = vmatpush1.bf16.msra.mxu0 0
        %2364 = vmatprep.subr.bf16.mxu0 0
        %2365 = vmatpush1.bf16.msra.mxu0 0
        %2366 = vmatprep.mubr.bf16.mxu0 0
        %2367 = vmatmul.mubr.bf16.gmra.mrb[0].mxu0 %v2332
        %v2368 = vpop.f32.mrb[0].mxu0
        %v2369 = vadd.f32 %v2317, %v2368
        %v2370 = vpop.f32.mrb[0].mxu0
        %v2371 = vpop.f32.mrb[0].mxu0
        %v2372 = vpop.f32.mrb[0].mxu0
        %2373 = vdwg.mxu0
        %v2374 = vmul.f32 %v2369, %v2369
        %v2375 = vmul.f32 %v2369, %v2374
        %v2376 = vmul.f32 %v2375, 0.044715
        %v2377 = vadd.f32 %v2369, %v2376
        %v2378 = vmul.f32 %v2377, 0.7978846
        %v2379 = vtanh.pop %v2378
        %v2380 = vadd.f32 %v2379, 1.0
        %v2381 = vmul.f32 %v2380, 0.5
        %v2382 = vmul.f32 %v2369, %v2381
        %v2383 = vpack.c.bf16 %v2382, %v2382
        %v2384 = vld [vmem:[%s22] sm:$0xf]
        %v2385 = vld [vmem:[%s22 + $0x4] sm:$0xf]
        %v2386 = vld [vmem:[%s22 + $0x8] sm:$0xf]
        %v2387 = vld [vmem:[%s22 + $0xc] sm:$0xf]
        %v2388 = vld [vmem:[%s22 + $0x10] sm:$0xf]
        %v2389 = vld [vmem:[%s22 + $0x14] sm:$0xf]
        %v2390 = vld [vmem:[%s22 + $0x18] sm:$0xf]
        %v2391 = vld [vmem:[%s22 + $0x1c] sm:$0xf]
        %v2392 = vld [vmem:[%s22 + $0x20] sm:$0xf]
        %v2393 = vld [vmem:[%s22 + $0x24] sm:$0xf]
        %v2394 = vld [vmem:[%s22 + $0x28] sm:$0xf]
        %v2395 = vld [vmem:[%s22 + $0x2c] sm:$0xf]
        %v2396 = vld [vmem:[%s22 + $0x30] sm:$0xf]
        %v2397 = vld [vmem:[%s22 + $0x34] sm:$0xf]
        %v2398 = vld [vmem:[%s22 + $0x38] sm:$0xf]
        %v2399 = vld [vmem:[%s22 + $0x3c] sm:$0xf]
        %v2416 = vunpack.c.l.b16 %v2384
        %v2417 = vunpack.c.l.b16 %v2385
        %v2418 = vunpack.c.l.b16 %v2386
        %v2419 = vunpack.c.l.b16 %v2387
        %v2420 = vunpack.c.l.b16 %v2388
        %v2421 = vunpack.c.l.b16 %v2389
        %v2422 = vunpack.c.l.b16 %v2390
        %v2423 = vunpack.c.l.b16 %v2391
        %v2424 = vunpack.c.l.b16 %v2392
        %v2425 = vunpack.c.l.b16 %v2393
        %v2426 = vunpack.c.l.b16 %v2394
        %v2427 = vunpack.c.l.b16 %v2395
        %v2428 = vunpack.c.l.b16 %v2396
        %v2429 = vunpack.c.l.b16 %v2397
        %v2430 = vunpack.c.l.b16 %v2398
        %v2431 = vunpack.c.l.b16 %v2399
        %v2432 = vpack.c.b16 %v2417, %v2416
        %v2433 = vpack.c.b16 %v2419, %v2418
        %v2434 = vpack.c.b16 %v2421, %v2420
        %v2435 = vpack.c.b16 %v2423, %v2422
        %v2436 = vpack.c.b16 %v2425, %v2424
        %v2437 = vpack.c.b16 %v2427, %v2426
        %v2438 = vpack.c.b16 %v2429, %v2428
        %v2439 = vpack.c.b16 %v2431, %v2430
        %2448 = vmatprep.subr.bf16.mxu0 0
        %2449 = vmatpush1.bf16.msra.mxu0 %v2432
        %2450 = vmatprep.subr.bf16.mxu0 0
        %2451 = vmatpush1.bf16.msra.mxu0 %v2433
        %2452 = vmatprep.subr.bf16.mxu0 0
        %2453 = vmatpush1.bf16.msra.mxu0 %v2434
        %2454 = vmatprep.subr.bf16.mxu0 0
        %2455 = vmatpush1.bf16.msra.mxu0 %v2435
        %2456 = vmatprep.subr.bf16.mxu0 0
        %2457 = vmatpush1.bf16.msra.mxu0 %v2436
        %2458 = vmatprep.subr.bf16.mxu0 0
        %2459 = vmatpush1.bf16.msra.mxu0 %v2437
        %2460 = vmatprep.subr.bf16.mxu0 0
        %2461 = vmatpush1.bf16.msra.mxu0 %v2438
        %2462 = vmatprep.subr.bf16.mxu0 0
        %2463 = vmatpush1.bf16.msra.mxu0 %v2439
        %2464 = vmatprep.subr.bf16.mxu0 0
        %2465 = vmatpush1.bf16.msra.mxu0 0
        %2466 = vmatprep.subr.bf16.mxu0 0
        %2467 = vmatpush1.bf16.msra.mxu0 0
        %2468 = vmatprep.subr.bf16.mxu0 0
        %2469 = vmatpush1.bf16.msra.mxu0 0
        %2470 = vmatprep.subr.bf16.mxu0 0
        %2471 = vmatpush1.bf16.msra.mxu0 0
        %2472 = vmatprep.subr.bf16.mxu0 0
        %2473 = vmatpush1.bf16.msra.mxu0 0
        %2474 = vmatprep.subr.bf16.mxu0 0
        %2475 = vmatpush1.bf16.msra.mxu0 0
        %2476 = vmatprep.subr.bf16.mxu0 0
        %2477 = vmatpush1.bf16.msra.mxu0 0
        %2478 = vmatprep.subr.bf16.mxu0 0
        %2479 = vmatpush1.bf16.msra.mxu0 0
        %2480 = vmatprep.mubr.bf16.mxu0 0
        %2481 = vmatmul.mubr.bf16.gmra.mrb[0].mxu0 %v2383
        %v2482 = vpop.f32.mrb[0].mxu0
        %v2483 = vadd.f32 0.0, %v2482
        %v2484 = vpop.f32.mrb[0].mxu0
        %v2485 = vpop.f32.mrb[0].mxu0
        %v2486 = vpop.f32.mrb[0].mxu0
        %2487 = vdwg.mxu0
        %v2488 = vadd.f32 %v2277, %v2483
        %v2489 = vld [vmem:[#allocation2] sm:$0x1]
        %v2491 = vlaneseq
        %v2492 = vshrl.u32 %v2491, 7
        %v2493 = vsub.s32 0, %v2492
        %v2494 = vrot.slane %v2489, %v2493
        %v2496 = vadd.f32 %v2488, %v2494
        %v2497 = vpack.c.bf16 %v2496, %v2496
        %vm2498 = vcmask 257024
        %2499 = vst.msk [vmem:[%s790] sm:$0xf] %vm2498, %v2497
        %p2500 = scmp.lt.s32.totalorder %s36, 1
        %s2501 = scalar_select %p2500, %s36, 1
        %s2502 = smul.addr %s2501, 4
        %s2503 = scalar_lea.vmem %s24, %s2502
        // Predicated region
        $region121: #{forward.6} parent=115 // pred_check
          %p2504 = pneg %p578
        $region122: #{forward.6} parent=115 // pred_check_branch
          %2506 = sbr.rel (%p2504) target = $region124
        $region123: #{forward.6} parent=115 // pred_region
          _
        $region124: #{forward.6} parent=115 // pred_fallthru
          _
      $region116: #{forward.6} parent=5 // pred_fallthru
        _
      %p2507 = scmp.le.s32.totalorder 2, %s31
      // Predicated region
      $region125: #{forward.6} parent=5 // pred_check
        %p2508 = pneg %p2507
      $region126: #{forward.6} parent=5 // pred_check_branch
        %2510 = sbr.rel (%p2508) target = $region128
      $region127: #{forward.6} parent=5 // pred_region
        %s2511 = ssub.s32 %s31, 2
        // Predicated region
        $region129: #{forward.6} parent=127 // pred_check
          %p2512 = pneg %p584
        $region130: #{forward.6} parent=127 // pred_check_branch
          %2514 = sbr.rel (%p2512) target = $region132
        $region131: #{forward.6} parent=127 // pred_region
          %p2515 = scmp.lt.s32.totalorder %s37, 1
          %s2516 = scalar_select %p2515, %s37, 1
          %s2517 = smul.addr %s2516, 4
          %s2518 = scalar_lea.vmem %s24, %s2517
        $region132: #{forward.6} parent=127 // pred_fallthru
          _
      $region128: #{forward.6} parent=5 // pred_fallthru
        _
    $region6: #{forward.6} parent=1 // loop_footer
      %s35 = sadd.s32 1, %s31
    $region7: #{forward.6} parent=1 // loop_footer_branch
      %30 = sbr.rel target = $region3
    $region8: #{forward.6} parent=1 // loop_exit
      _
    %2519 = vsyncpa [#allocation3], 1
    %s2520 = scalar_lea.sflag [#allocation3], 1
    %2521 = vsyncpa %s2520, 1

// kernel: forward.5
$region0: #{forward.5}
  #allocation0 [shape = 'u32[]', space=smem, size = 0x4, offset = 0x4, fixed_abs, tag = 'smem constant byte address 0x4 - core index']
  #allocation1 [shape = 'u32[144,128]{1,0:T(1,128)}', space=vmem, size = 0x12000, scoped, tag = 'internal scratch']
  %s0 = inlined_call_operand.vmem [shape: bf16[2,8,32], index: 0, kind: input, shape index: {}]
  %s1 = inlined_call_operand.vmem [shape: bf16[2,8,32], index: 1, kind: input, shape index: {}]
  %s2 = inlined_call_operand.vmem [shape: s32[2,1,8], index: 2, kind: input, shape index: {}]
  %s3 = inlined_call_operand.vmem [shape: s32[2,1,8], index: 3, kind: input, shape index: {}]
  %s4 = inlined_call_operand.vmem [shape: f32[1,32], index: 4, kind: input, shape index: {}]
  %s5 = inlined_call_operand.vmem [shape: f32[1,32], index: 5, kind: input, shape index: {}]
  %s6 = inlined_call_operand.vmem [shape: bf16[32,32], index: 6, kind: input, shape index: {}]
  %s7 = inlined_call_operand.vmem [shape: bf16[32,32], index: 7, kind: input, shape index: {}]
  %s8 = inlined_call_operand.vmem [shape: bf16[32,32], index: 8, kind: input, shape index: {}]
  %s9 = inlined_call_operand.vmem [shape: bf16[32,32], index: 9, kind: input, shape index: {}]
  %s10 = inlined_call_operand.vmem [shape: f32[1,32], index: 10, kind: input, shape index: {}]
  %s11 = inlined_call_operand.vmem [shape: f32[1,32], index: 11, kind: input, shape index: {}]
  %s12 = inlined_call_operand.vmem [shape: f32[1,32], index: 12, kind: input, shape index: {}]
  %s13 = inlined_call_operand.vmem [shape: bf16[32,32], index: 13, kind: input, shape index: {}]
  %s14 = inlined_call_operand.vmem [shape: bf16[32,32], index: 14, kind: input, shape index: {}]
  %s15 = inlined_call_operand.vmem [shape: bf16[32,32], index: 15, kind: input, shape index: {}]
  %s16 = inlined_call_operand.vmem [shape: bf16[32,32], index: 16, kind: input, shape index: {}]
  %s17 = inlined_call_operand.vmem [shape: f32[1,32], index: 17, kind: input, shape index: {}]
  %s18 = inlined_call_operand.vmem [shape: f32[1,32], index: 18, kind: input, shape index: {}]
  %s19 = inlined_call_operand.vmem [shape: f32[1,32], index: 19, kind: input, shape index: {}]
  %s20 = inlined_call_operand.vmem [shape: bf16[32,128], index: 20, kind: input, shape index: {}]
  %s21 = inlined_call_operand.vmem [shape: f32[1,128], index: 21, kind: input, shape index: {}]
  %s22 = inlined_call_operand.vmem [shape: bf16[128,32], index: 22, kind: input, shape index: {}]
  %s23 = inlined_call_operand.vmem [shape: f32[1,32], index: 23, kind: input, shape index: {}]
  %s24 = inlined_call_operand.vmem [shape: bf16[2,8,32], index: 24, kind: output, shape index: {}]
  %s25 = sld [smem:[#allocation0]]
  $region129: #{forward.5} parent=0
    _
  %s27 = ssub.s32 1, %s25
  %s28 = scalar_select 0, %s27, %s25
  loop: start=0, step=1, limit=4
  $region2: #{forward.5} parent=0 // loop_pre_header
    _
  $region3: #{forward.5} parent=0 // loop_header
    %s30 = sphi 0, %s34
    %p31 = scmp.ge.s32.totalorder %s30, 4
    %s40 = sphi 0, %s42
    %s43 = sphi 0, %s40
    %s44 = sphi 0, %s43
    %s60 = sphi 0, %s44
    %s66 = sphi 0, %s68
    %s69 = sphi 0, %s66
    %s70 = sphi 0, %s69
    %s86 = sphi 0, %s70
    %s92 = sphi 0, %s94
    %s95 = sphi 0, %s92
    %s96 = sphi 0, %s95
    %s112 = sphi 0, %s96
    %s118 = sphi 0, %s120
    %s121 = sphi 0, %s118
    %s122 = sphi 0, %s121
    %s138 = sphi 0, %s122
    %s142 = sphi 0, %s142
    %s144 = sphi 0, %s142
    %s145 = sphi 0, %s144
    %s159 = sphi 0, %s145
    %s163 = sphi 0, %s163
    %s165 = sphi 0, %s163
    %s166 = sphi 0, %s165
    %s180 = sphi 0, %s166
    %s184 = sphi 0, %s184
    %s186 = sphi 0, %s184
    %s187 = sphi 0, %s186
    %s201 = sphi 0, %s187
    %s205 = sphi 0, %s205
    %s207 = sphi 0, %s205
    %s208 = sphi 0, %s207
    %s222 = sphi 0, %s208
    %s226 = sphi 0, %s226
    %s228 = sphi 0, %s226
    %s229 = sphi 0, %s228
    %s243 = sphi 0, %s229
    %s247 = sphi 0, %s247
    %s249 = sphi 0, %s247
    %s250 = sphi 0, %s249
    %s264 = sphi 0, %s250
    %s268 = sphi 0, %s268
    %s270 = sphi 0, %s268
    %s271 = sphi 0, %s270
    %s285 = sphi 0, %s271
    %s289 = sphi 0, %s289
    %s291 = sphi 0, %s289
    %s292 = sphi 0, %s291
    %s306 = sphi 0, %s292
    %s310 = sphi 0, %s310
    %s312 = sphi 0, %s310
    %s313 = sphi 0, %s312
    %s327 = sphi 0, %s313
    %s331 = sphi 0, %s331
    %s333 = sphi 0, %s331
    %s334 = sphi 0, %s333
    %s348 = sphi 0, %s334
    %s352 = sphi 0, %s352
    %s354 = sphi 0, %s352
    %s355 = sphi 0, %s354
    %s369 = sphi 0, %s355
    %s373 = sphi 0, %s373
    %s375 = sphi 0, %s373
    %s376 = sphi 0, %s375
    %s390 = sphi 0, %s376
    %s394 = sphi 0, %s394
    %s396 = sphi 0, %s394
    %s397 = sphi 0, %s396
    %s411 = sphi 0, %s397
    %s415 = sphi 0, %s415
    %s417 = sphi 0, %s415
    %s418 = sphi 0, %s417
    %s432 = sphi 0, %s418
    %s436 = sphi 0, %s436
    %s438 = sphi 0, %s436
    %s439 = sphi 0, %s438
    %s453 = sphi 0, %s439
    %s457 = sphi 0, %s457
    %s459 = sphi 0, %s457
    %s460 = sphi 0, %s459
    %s474 = sphi 0, %s460
    %s478 = sphi 0, %s478
    %s480 = sphi 0, %s478
    %s481 = sphi 0, %s480
    %s495 = sphi 0, %s481
    %s499 = sphi 0, %s499
    %s501 = sphi 0, %s499
    %s502 = sphi 0, %s501
    %s516 = sphi 0, %s502
    %s520 = sphi 0, %s520
    %s522 = sphi 0, %s520
    %s523 = sphi 0, %s522
    %s537 = sphi 0, %s523
    %s541 = sphi 0, %s541
    %s543 = sphi 0, %s541
    %s544 = sphi 0, %s543
    %s558 = sphi 0, %s544
    %s564 = sphi 0, %s566
    %s567 = sphi 0, %s564
    %s568 = sphi 0, %s567
    %s584 = sphi 0, %s568
  $region4: #{forward.5} parent=0 // loop_header_branch
    %33 = sbr.rel (%p31) target = $region8
  $region5: #{forward.5} parent=0 // loop_body
    %s35 = ssub.s32 %s30, 1
    %s36 = ssub.s32 %s30, 2
    %s37 = sadd.s32 %s30, 1
    %s38 = ssub.s32 %s30, %s37
    %p39 = scmp.eq.s32.totalorder %s38, 0
    %s41 = sadd.s32 %s40, 1
    %s42 = scalar_select %p39, %s40, %s41
    %p45 = pneg %p39
    %p46 = scmp.eq.s32.totalorder %s30, 1
    %p47 = por %p45, %p46
    %p48 = scmp.ne.s32.totalorder %s40, %s43
    %p49 = scmp.eq.s32.totalorder %s30, 0
    %p50 = por %p48, %p49
    %p51 = scmp.ne.s32.totalorder %s40, %s43
    %p52 = scmp.eq.s32.totalorder %s35, 1
    %p53 = por %p51, %p52
    %p54 = scmp.ne.s32.totalorder %s43, %s44
    %p55 = scmp.eq.s32.totalorder %s35, 0
    %p56 = por %p54, %p55
    %p57 = scmp.ne.s32.totalorder %s43, %s44
    %p58 = scmp.eq.s32.totalorder %s36, 1
    %p59 = por %p57, %p58
    %p61 = scmp.ne.s32.totalorder %s44, %s60
    %p62 = scmp.eq.s32.totalorder %s36, 0
    %p63 = por %p61, %p62
    %s64 = ssub.s32 %s30, %s37
    %p65 = scmp.eq.s32.totalorder %s64, 0
    %s67 = sadd.s32 %s66, 1
    %s68 = scalar_select %p65, %s66, %s67
    %p71 = pneg %p65
    %p72 = scmp.eq.s32.totalorder %s30, 1
    %p73 = por %p71, %p72
    %p74 = scmp.ne.s32.totalorder %s66, %s69
    %p75 = scmp.eq.s32.totalorder %s30, 0
    %p76 = por %p74, %p75
    %p77 = scmp.ne.s32.totalorder %s66, %s69
    %p78 = scmp.eq.s32.totalorder %s35, 1
    %p79 = por %p77, %p78
    %p80 = scmp.ne.s32.totalorder %s69, %s70
    %p81 = scmp.eq.s32.totalorder %s35, 0
    %p82 = por %p80, %p81
    %p83 = scmp.ne.s32.totalorder %s69, %s70
    %p84 = scmp.eq.s32.totalorder %s36, 1
    %p85 = por %p83, %p84
    %p87 = scmp.ne.s32.totalorder %s70, %s86
    %p88 = scmp.eq.s32.totalorder %s36, 0
    %p89 = por %p87, %p88
    %s90 = ssub.s32 %s30, %s37
    %p91 = scmp.eq.s32.totalorder %s90, 0
    %s93 = sadd.s32 %s92, 1
    %s94 = scalar_select %p91, %s92, %s93
    %p97 = pneg %p91
    %p98 = scmp.eq.s32.totalorder %s30, 1
    %p99 = por %p97, %p98
    %p100 = scmp.ne.s32.totalorder %s92, %s95
    %p101 = scmp.eq.s32.totalorder %s30, 0
    %p102 = por %p100, %p101
    %p103 = scmp.ne.s32.totalorder %s92, %s95
    %p104 = scmp.eq.s32.totalorder %s35, 1
    %p105 = por %p103, %p104
    %p106 = scmp.ne.s32.totalorder %s95, %s96
    %p107 = scmp.eq.s32.totalorder %s35, 0
    %p108 = por %p106, %p107
    %p109 = scmp.ne.s32.totalorder %s95, %s96
    %p110 = scmp.eq.s32.totalorder %s36, 1
    %p111 = por %p109, %p110
    %p113 = scmp.ne.s32.totalorder %s96, %s112
    %p114 = scmp.eq.s32.totalorder %s36, 0
    %p115 = por %p113, %p114
    %s116 = ssub.s32 %s30, %s37
    %p117 = scmp.eq.s32.totalorder %s116, 0
    %s119 = sadd.s32 %s118, 1
    %s120 = scalar_select %p117, %s118, %s119
    %p123 = pneg %p117
    %p124 = scmp.eq.s32.totalorder %s30, 1
    %p125 = por %p123, %p124
    %p126 = scmp.ne.s32.totalorder %s118, %s121
    %p127 = scmp.eq.s32.totalorder %s30, 0
    %p128 = por %p126, %p127
    %p129 = scmp.ne.s32.totalorder %s118, %s121
    %p130 = scmp.eq.s32.totalorder %s35, 1
    %p131 = por %p129, %p130
    %p132 = scmp.ne.s32.totalorder %s121, %s122
    %p133 = scmp.eq.s32.totalorder %s35, 0
    %p134 = por %p132, %p133
    %p135 = scmp.ne.s32.totalorder %s121, %s122
    %p136 = scmp.eq.s32.totalorder %s36, 1
    %p137 = por %p135, %p136
    %p139 = scmp.ne.s32.totalorder %s122, %s138
    %p140 = scmp.eq.s32.totalorder %s36, 0
    %p141 = por %p139, %p140
    %s143 = sadd.s32 %s142, 1
    %p146 = scmp.eq.s32.totalorder %s30, 1
    %p147 = scmp.ne.s32.totalorder %s142, %s144
    %p148 = scmp.eq.s32.totalorder %s30, 0
    %p149 = por %p147, %p148
    %p150 = scmp.ne.s32.totalorder %s142, %s144
    %p151 = scmp.eq.s32.totalorder %s35, 1
    %p152 = por %p150, %p151
    %p153 = scmp.ne.s32.totalorder %s144, %s145
    %p154 = scmp.eq.s32.totalorder %s35, 0
    %p155 = por %p153, %p154
    %p156 = scmp.ne.s32.totalorder %s144, %s145
    %p157 = scmp.eq.s32.totalorder %s36, 1
    %p158 = por %p156, %p157
    %p160 = scmp.ne.s32.totalorder %s145, %s159
    %p161 = scmp.eq.s32.totalorder %s36, 0
    %p162 = por %p160, %p161
    %s164 = sadd.s32 %s163, 1
    %p167 = scmp.eq.s32.totalorder %s30, 1
    %p168 = scmp.ne.s32.totalorder %s163, %s165
    %p169 = scmp.eq.s32.totalorder %s30, 0
    %p170 = por %p168, %p169
    %p171 = scmp.ne.s32.totalorder %s163, %s165
    %p172 = scmp.eq.s32.totalorder %s35, 1
    %p173 = por %p171, %p172
    %p174 = scmp.ne.s32.totalorder %s165, %s166
    %p175 = scmp.eq.s32.totalorder %s35, 0
    %p176 = por %p174, %p175
    %p177 = scmp.ne.s32.totalorder %s165, %s166
    %p178 = scmp.eq.s32.totalorder %s36, 1
    %p179 = por %p177, %p178
    %p181 = scmp.ne.s32.totalorder %s166, %s180
    %p182 = scmp.eq.s32.totalorder %s36, 0
    %p183 = por %p181, %p182
    %s185 = sadd.s32 %s184, 1
    %p188 = scmp.eq.s32.totalorder %s30, 1
    %p189 = scmp.ne.s32.totalorder %s184, %s186
    %p190 = scmp.eq.s32.totalorder %s30, 0
    %p191 = por %p189, %p190
    %p192 = scmp.ne.s32.totalorder %s184, %s186
    %p193 = scmp.eq.s32.totalorder %s35, 1
    %p194 = por %p192, %p193
    %p195 = scmp.ne.s32.totalorder %s186, %s187
    %p196 = scmp.eq.s32.totalorder %s35, 0
    %p197 = por %p195, %p196
    %p198 = scmp.ne.s32.totalorder %s186, %s187
    %p199 = scmp.eq.s32.totalorder %s36, 1
    %p200 = por %p198, %p199
    %p202 = scmp.ne.s32.totalorder %s187, %s201
    %p203 = scmp.eq.s32.totalorder %s36, 0
    %p204 = por %p202, %p203
    %s206 = sadd.s32 %s205, 1
    %p209 = scmp.eq.s32.totalorder %s30, 1
    %p210 = scmp.ne.s32.totalorder %s205, %s207
    %p211 = scmp.eq.s32.totalorder %s30, 0
    %p212 = por %p210, %p211
    %p213 = scmp.ne.s32.totalorder %s205, %s207
    %p214 = scmp.eq.s32.totalorder %s35, 1
    %p215 = por %p213, %p214
    %p216 = scmp.ne.s32.totalorder %s207, %s208
    %p217 = scmp.eq.s32.totalorder %s35, 0
    %p218 = por %p216, %p217
    %p219 = scmp.ne.s32.totalorder %s207, %s208
    %p220 = scmp.eq.s32.totalorder %s36, 1
    %p221 = por %p219, %p220
    %p223 = scmp.ne.s32.totalorder %s208, %s222
    %p224 = scmp.eq.s32.totalorder %s36, 0
    %p225 = por %p223, %p224
    %s227 = sadd.s32 %s226, 1
    %p230 = scmp.eq.s32.totalorder %s30, 1
    %p231 = scmp.ne.s32.totalorder %s226, %s228
    %p232 = scmp.eq.s32.totalorder %s30, 0
    %p233 = por %p231, %p232
    %p234 = scmp.ne.s32.totalorder %s226, %s228
    %p235 = scmp.eq.s32.totalorder %s35, 1
    %p236 = por %p234, %p235
    %p237 = scmp.ne.s32.totalorder %s228, %s229
    %p238 = scmp.eq.s32.totalorder %s35, 0
    %p239 = por %p237, %p238
    %p240 = scmp.ne.s32.totalorder %s228, %s229
    %p241 = scmp.eq.s32.totalorder %s36, 1
    %p242 = por %p240, %p241
    %p244 = scmp.ne.s32.totalorder %s229, %s243
    %p245 = scmp.eq.s32.totalorder %s36, 0
    %p246 = por %p244, %p245
    %s248 = sadd.s32 %s247, 1
    %p251 = scmp.eq.s32.totalorder %s30, 1
    %p252 = scmp.ne.s32.totalorder %s247, %s249
    %p253 = scmp.eq.s32.totalorder %s30, 0
    %p254 = por %p252, %p253
    %p255 = scmp.ne.s32.totalorder %s247, %s249
    %p256 = scmp.eq.s32.totalorder %s35, 1
    %p257 = por %p255, %p256
    %p258 = scmp.ne.s32.totalorder %s249, %s250
    %p259 = scmp.eq.s32.totalorder %s35, 0
    %p260 = por %p258, %p259
    %p261 = scmp.ne.s32.totalorder %s249, %s250
    %p262 = scmp.eq.s32.totalorder %s36, 1
    %p263 = por %p261, %p262
    %p265 = scmp.ne.s32.totalorder %s250, %s264
    %p266 = scmp.eq.s32.totalorder %s36, 0
    %p267 = por %p265, %p266
    %s269 = sadd.s32 %s268, 1
    %p272 = scmp.eq.s32.totalorder %s30, 1
    %p273 = scmp.ne.s32.totalorder %s268, %s270
    %p274 = scmp.eq.s32.totalorder %s30, 0
    %p275 = por %p273, %p274
    %p276 = scmp.ne.s32.totalorder %s268, %s270
    %p277 = scmp.eq.s32.totalorder %s35, 1
    %p278 = por %p276, %p277
    %p279 = scmp.ne.s32.totalorder %s270, %s271
    %p280 = scmp.eq.s32.totalorder %s35, 0
    %p281 = por %p279, %p280
    %p282 = scmp.ne.s32.totalorder %s270, %s271
    %p283 = scmp.eq.s32.totalorder %s36, 1
    %p284 = por %p282, %p283
    %p286 = scmp.ne.s32.totalorder %s271, %s285
    %p287 = scmp.eq.s32.totalorder %s36, 0
    %p288 = por %p286, %p287
    %s290 = sadd.s32 %s289, 1
    %p293 = scmp.eq.s32.totalorder %s30, 1
    %p294 = scmp.ne.s32.totalorder %s289, %s291
    %p295 = scmp.eq.s32.totalorder %s30, 0
    %p296 = por %p294, %p295
    %p297 = scmp.ne.s32.totalorder %s289, %s291
    %p298 = scmp.eq.s32.totalorder %s35, 1
    %p299 = por %p297, %p298
    %p300 = scmp.ne.s32.totalorder %s291, %s292
    %p301 = scmp.eq.s32.totalorder %s35, 0
    %p302 = por %p300, %p301
    %p303 = scmp.ne.s32.totalorder %s291, %s292
    %p304 = scmp.eq.s32.totalorder %s36, 1
    %p305 = por %p303, %p304
    %p307 = scmp.ne.s32.totalorder %s292, %s306
    %p308 = scmp.eq.s32.totalorder %s36, 0
    %p309 = por %p307, %p308
    %s311 = sadd.s32 %s310, 1
    %p314 = scmp.eq.s32.totalorder %s30, 1
    %p315 = scmp.ne.s32.totalorder %s310, %s312
    %p316 = scmp.eq.s32.totalorder %s30, 0
    %p317 = por %p315, %p316
    %p318 = scmp.ne.s32.totalorder %s310, %s312
    %p319 = scmp.eq.s32.totalorder %s35, 1
    %p320 = por %p318, %p319
    %p321 = scmp.ne.s32.totalorder %s312, %s313
    %p322 = scmp.eq.s32.totalorder %s35, 0
    %p323 = por %p321, %p322
    %p324 = scmp.ne.s32.totalorder %s312, %s313
    %p325 = scmp.eq.s32.totalorder %s36, 1
    %p326 = por %p324, %p325
    %p328 = scmp.ne.s32.totalorder %s313, %s327
    %p329 = scmp.eq.s32.totalorder %s36, 0
    %p330 = por %p328, %p329
    %s332 = sadd.s32 %s331, 1
    %p335 = scmp.eq.s32.totalorder %s30, 1
    %p336 = scmp.ne.s32.totalorder %s331, %s333
    %p337 = scmp.eq.s32.totalorder %s30, 0
    %p338 = por %p336, %p337
    %p339 = scmp.ne.s32.totalorder %s331, %s333
    %p340 = scmp.eq.s32.totalorder %s35, 1
    %p341 = por %p339, %p340
    %p342 = scmp.ne.s32.totalorder %s333, %s334
    %p343 = scmp.eq.s32.totalorder %s35, 0
    %p344 = por %p342, %p343
    %p345 = scmp.ne.s32.totalorder %s333, %s334
    %p346 = scmp.eq.s32.totalorder %s36, 1
    %p347 = por %p345, %p346
    %p349 = scmp.ne.s32.totalorder %s334, %s348
    %p350 = scmp.eq.s32.totalorder %s36, 0
    %p351 = por %p349, %p350
    %s353 = sadd.s32 %s352, 1
    %p356 = scmp.eq.s32.totalorder %s30, 1
    %p357 = scmp.ne.s32.totalorder %s352, %s354
    %p358 = scmp.eq.s32.totalorder %s30, 0
    %p359 = por %p357, %p358
    %p360 = scmp.ne.s32.totalorder %s352, %s354
    %p361 = scmp.eq.s32.totalorder %s35, 1
    %p362 = por %p360, %p361
    %p363 = scmp.ne.s32.totalorder %s354, %s355
    %p364 = scmp.eq.s32.totalorder %s35, 0
    %p365 = por %p363, %p364
    %p366 = scmp.ne.s32.totalorder %s354, %s355
    %p367 = scmp.eq.s32.totalorder %s36, 1
    %p368 = por %p366, %p367
    %p370 = scmp.ne.s32.totalorder %s355, %s369
    %p371 = scmp.eq.s32.totalorder %s36, 0
    %p372 = por %p370, %p371
    %s374 = sadd.s32 %s373, 1
    %p377 = scmp.eq.s32.totalorder %s30, 1
    %p378 = scmp.ne.s32.totalorder %s373, %s375
    %p379 = scmp.eq.s32.totalorder %s30, 0
    %p380 = por %p378, %p379
    %p381 = scmp.ne.s32.totalorder %s373, %s375
    %p382 = scmp.eq.s32.totalorder %s35, 1
    %p383 = por %p381, %p382
    %p384 = scmp.ne.s32.totalorder %s375, %s376
    %p385 = scmp.eq.s32.totalorder %s35, 0
    %p386 = por %p384, %p385
    %p387 = scmp.ne.s32.totalorder %s375, %s376
    %p388 = scmp.eq.s32.totalorder %s36, 1
    %p389 = por %p387, %p388
    %p391 = scmp.ne.s32.totalorder %s376, %s390
    %p392 = scmp.eq.s32.totalorder %s36, 0
    %p393 = por %p391, %p392
    %s395 = sadd.s32 %s394, 1
    %p398 = scmp.eq.s32.totalorder %s30, 1
    %p399 = scmp.ne.s32.totalorder %s394, %s396
    %p400 = scmp.eq.s32.totalorder %s30, 0
    %p401 = por %p399, %p400
    %p402 = scmp.ne.s32.totalorder %s394, %s396
    %p403 = scmp.eq.s32.totalorder %s35, 1
    %p404 = por %p402, %p403
    %p405 = scmp.ne.s32.totalorder %s396, %s397
    %p406 = scmp.eq.s32.totalorder %s35, 0
    %p407 = por %p405, %p406
    %p408 = scmp.ne.s32.totalorder %s396, %s397
    %p409 = scmp.eq.s32.totalorder %s36, 1
    %p410 = por %p408, %p409
    %p412 = scmp.ne.s32.totalorder %s397, %s411
    %p413 = scmp.eq.s32.totalorder %s36, 0
    %p414 = por %p412, %p413
    %s416 = sadd.s32 %s415, 1
    %p419 = scmp.eq.s32.totalorder %s30, 1
    %p420 = scmp.ne.s32.totalorder %s415, %s417
    %p421 = scmp.eq.s32.totalorder %s30, 0
    %p422 = por %p420, %p421
    %p423 = scmp.ne.s32.totalorder %s415, %s417
    %p424 = scmp.eq.s32.totalorder %s35, 1
    %p425 = por %p423, %p424
    %p426 = scmp.ne.s32.totalorder %s417, %s418
    %p427 = scmp.eq.s32.totalorder %s35, 0
    %p428 = por %p426, %p427
    %p429 = scmp.ne.s32.totalorder %s417, %s418
    %p430 = scmp.eq.s32.totalorder %s36, 1
    %p431 = por %p429, %p430
    %p433 = scmp.ne.s32.totalorder %s418, %s432
    %p434 = scmp.eq.s32.totalorder %s36, 0
    %p435 = por %p433, %p434
    %s437 = sadd.s32 %s436, 1
    %p440 = scmp.eq.s32.totalorder %s30, 1
    %p441 = scmp.ne.s32.totalorder %s436, %s438
    %p442 = scmp.eq.s32.totalorder %s30, 0
    %p443 = por %p441, %p442
    %p444 = scmp.ne.s32.totalorder %s436, %s438
    %p445 = scmp.eq.s32.totalorder %s35, 1
    %p446 = por %p444, %p445
    %p447 = scmp.ne.s32.totalorder %s438, %s439
    %p448 = scmp.eq.s32.totalorder %s35, 0
    %p449 = por %p447, %p448
    %p450 = scmp.ne.s32.totalorder %s438, %s439
    %p451 = scmp.eq.s32.totalorder %s36, 1
    %p452 = por %p450, %p451
    %p454 = scmp.ne.s32.totalorder %s439, %s453
    %p455 = scmp.eq.s32.totalorder %s36, 0
    %p456 = por %p454, %p455
    %s458 = sadd.s32 %s457, 1
    %p461 = scmp.eq.s32.totalorder %s30, 1
    %p462 = scmp.ne.s32.totalorder %s457, %s459
    %p463 = scmp.eq.s32.totalorder %s30, 0
    %p464 = por %p462, %p463
    %p465 = scmp.ne.s32.totalorder %s457, %s459
    %p466 = scmp.eq.s32.totalorder %s35, 1
    %p467 = por %p465, %p466
    %p468 = scmp.ne.s32.totalorder %s459, %s460
    %p469 = scmp.eq.s32.totalorder %s35, 0
    %p470 = por %p468, %p469
    %p471 = scmp.ne.s32.totalorder %s459, %s460
    %p472 = scmp.eq.s32.totalorder %s36, 1
    %p473 = por %p471, %p472
    %p475 = scmp.ne.s32.totalorder %s460, %s474
    %p476 = scmp.eq.s32.totalorder %s36, 0
    %p477 = por %p475, %p476
    %s479 = sadd.s32 %s478, 1
    %p482 = scmp.eq.s32.totalorder %s30, 1
    %p483 = scmp.ne.s32.totalorder %s478, %s480
    %p484 = scmp.eq.s32.totalorder %s30, 0
    %p485 = por %p483, %p484
    %p486 = scmp.ne.s32.totalorder %s478, %s480
    %p487 = scmp.eq.s32.totalorder %s35, 1
    %p488 = por %p486, %p487
    %p489 = scmp.ne.s32.totalorder %s480, %s481
    %p490 = scmp.eq.s32.totalorder %s35, 0
    %p491 = por %p489, %p490
    %p492 = scmp.ne.s32.totalorder %s480, %s481
    %p493 = scmp.eq.s32.totalorder %s36, 1
    %p494 = por %p492, %p493
    %p496 = scmp.ne.s32.totalorder %s481, %s495
    %p497 = scmp.eq.s32.totalorder %s36, 0
    %p498 = por %p496, %p497
    %s500 = sadd.s32 %s499, 1
    %p503 = scmp.eq.s32.totalorder %s30, 1
    %p504 = scmp.ne.s32.totalorder %s499, %s501
    %p505 = scmp.eq.s32.totalorder %s30, 0
    %p506 = por %p504, %p505
    %p507 = scmp.ne.s32.totalorder %s499, %s501
    %p508 = scmp.eq.s32.totalorder %s35, 1
    %p509 = por %p507, %p508
    %p510 = scmp.ne.s32.totalorder %s501, %s502
    %p511 = scmp.eq.s32.totalorder %s35, 0
    %p512 = por %p510, %p511
    %p513 = scmp.ne.s32.totalorder %s501, %s502
    %p514 = scmp.eq.s32.totalorder %s36, 1
    %p515 = por %p513, %p514
    %p517 = scmp.ne.s32.totalorder %s502, %s516
    %p518 = scmp.eq.s32.totalorder %s36, 0
    %p519 = por %p517, %p518
    %s521 = sadd.s32 %s520, 1
    %p524 = scmp.eq.s32.totalorder %s30, 1
    %p525 = scmp.ne.s32.totalorder %s520, %s522
    %p526 = scmp.eq.s32.totalorder %s30, 0
    %p527 = por %p525, %p526
    %p528 = scmp.ne.s32.totalorder %s520, %s522
    %p529 = scmp.eq.s32.totalorder %s35, 1
    %p530 = por %p528, %p529
    %p531 = scmp.ne.s32.totalorder %s522, %s523
    %p532 = scmp.eq.s32.totalorder %s35, 0
    %p533 = por %p531, %p532
    %p534 = scmp.ne.s32.totalorder %s522, %s523
    %p535 = scmp.eq.s32.totalorder %s36, 1
    %p536 = por %p534, %p535
    %p538 = scmp.ne.s32.totalorder %s523, %s537
    %p539 = scmp.eq.s32.totalorder %s36, 0
    %p540 = por %p538, %p539
    %s542 = sadd.s32 %s541, 1
    %p545 = scmp.eq.s32.totalorder %s30, 1
    %p546 = scmp.ne.s32.totalorder %s541, %s543
    %p547 = scmp.eq.s32.totalorder %s30, 0
    %p548 = por %p546, %p547
    %p549 = scmp.ne.s32.totalorder %s541, %s543
    %p550 = scmp.eq.s32.totalorder %s35, 1
    %p551 = por %p549, %p550
    %p552 = scmp.ne.s32.totalorder %s543, %s544
    %p553 = scmp.eq.s32.totalorder %s35, 0
    %p554 = por %p552, %p553
    %p555 = scmp.ne.s32.totalorder %s543, %s544
    %p556 = scmp.eq.s32.totalorder %s36, 1
    %p557 = por %p555, %p556
    %p559 = scmp.ne.s32.totalorder %s544, %s558
    %p560 = scmp.eq.s32.totalorder %s36, 0
    %p561 = por %p559, %p560
    %s562 = ssub.s32 %s30, %s37
    %p563 = scmp.eq.s32.totalorder %s562, 0
    %s565 = sadd.s32 %s564, 1
    %s566 = scalar_select %p563, %s564, %s565
    %p569 = pneg %p563
    %p570 = scmp.eq.s32.totalorder %s30, 1
    %p571 = por %p569, %p570
    %p572 = scmp.ne.s32.totalorder %s564, %s567
    %p573 = scmp.eq.s32.totalorder %s30, 0
    %p574 = por %p572, %p573
    %p575 = scmp.ne.s32.totalorder %s564, %s567
    %p576 = scmp.eq.s32.totalorder %s35, 1
    %p577 = por %p575, %p576
    %p578 = scmp.ne.s32.totalorder %s567, %s568
    %p579 = scmp.eq.s32.totalorder %s35, 0
    %p580 = por %p578, %p579
    %p581 = scmp.ne.s32.totalorder %s567, %s568
    %p582 = scmp.eq.s32.totalorder %s36, 1
    %p583 = por %p581, %p582
    %p585 = scmp.ne.s32.totalorder %s568, %s584
    %p586 = scmp.eq.s32.totalorder %s36, 0
    %p587 = por %p585, %p586
    %p588 = scmp.le.s32.totalorder 1, %s30
    %p589 = scmp.lt.s32.totalorder %s30, 3
    %p590 = pnand %p588, %p589
    %p591 = pneg %p590
    // Predicated region
    $region9: #{forward.5} parent=5 // pred_check
      _
    $region10: #{forward.5} parent=5 // pred_check_branch
      %593 = sbr.rel (%p590) target = $region12
    $region11: #{forward.5} parent=5 // pred_region
      %s594 = ssub.s32 %s30, 1
      // Predicated region
      $region13: #{forward.5} parent=11 // pred_check
        %p595 = pneg %p155
      $region14: #{forward.5} parent=11 // pred_check_branch
        %597 = sbr.rel (%p595) target = $region16
      $region15: #{forward.5} parent=11 // pred_region
        _
      $region16: #{forward.5} parent=11 // pred_fallthru
        _
      // Predicated region
      $region17: #{forward.5} parent=11 // pred_check
        %p598 = pneg %p176
      $region18: #{forward.5} parent=11 // pred_check_branch
        %600 = sbr.rel (%p598) target = $region20
      $region19: #{forward.5} parent=11 // pred_region
        _
      $region20: #{forward.5} parent=11 // pred_fallthru
        _
      // Predicated region
      $region21: #{forward.5} parent=11 // pred_check
        %p601 = pneg %p197
      $region22: #{forward.5} parent=11 // pred_check_branch
        %603 = sbr.rel (%p601) target = $region24
      $region23: #{forward.5} parent=11 // pred_region
        _
      $region24: #{forward.5} parent=11 // pred_fallthru
        _
      // Predicated region
      $region25: #{forward.5} parent=11 // pred_check
        %p604 = pneg %p218
      $region26: #{forward.5} parent=11 // pred_check_branch
        %606 = sbr.rel (%p604) target = $region28
      $region27: #{forward.5} parent=11 // pred_region
        _
      $region28: #{forward.5} parent=11 // pred_fallthru
        _
      // Predicated region
      $region29: #{forward.5} parent=11 // pred_check
        %p607 = pneg %p239
      $region30: #{forward.5} parent=11 // pred_check_branch
        %609 = sbr.rel (%p607) target = $region32
      $region31: #{forward.5} parent=11 // pred_region
        _
      $region32: #{forward.5} parent=11 // pred_fallthru
        _
      // Predicated region
      $region33: #{forward.5} parent=11 // pred_check
        %p610 = pneg %p260
      $region34: #{forward.5} parent=11 // pred_check_branch
        %612 = sbr.rel (%p610) target = $region36
      $region35: #{forward.5} parent=11 // pred_region
        _
      $region36: #{forward.5} parent=11 // pred_fallthru
        _
      // Predicated region
      $region37: #{forward.5} parent=11 // pred_check
        %p613 = pneg %p281
      $region38: #{forward.5} parent=11 // pred_check_branch
        %615 = sbr.rel (%p613) target = $region40
      $region39: #{forward.5} parent=11 // pred_region
        _
      $region40: #{forward.5} parent=11 // pred_fallthru
        _
      // Predicated region
      $region41: #{forward.5} parent=11 // pred_check
        %p616 = pneg %p302
      $region42: #{forward.5} parent=11 // pred_check_branch
        %618 = sbr.rel (%p616) target = $region44
      $region43: #{forward.5} parent=11 // pred_region
        _
      $region44: #{forward.5} parent=11 // pred_fallthru
        _
      // Predicated region
      $region45: #{forward.5} parent=11 // pred_check
        %p619 = pneg %p323
      $region46: #{forward.5} parent=11 // pred_check_branch
        %621 = sbr.rel (%p619) target = $region48
      $region47: #{forward.5} parent=11 // pred_region
        _
      $region48: #{forward.5} parent=11 // pred_fallthru
        _
      // Predicated region
      $region49: #{forward.5} parent=11 // pred_check
        %p622 = pneg %p344
      $region50: #{forward.5} parent=11 // pred_check_branch
        %624 = sbr.rel (%p622) target = $region52
      $region51: #{forward.5} parent=11 // pred_region
        _
      $region52: #{forward.5} parent=11 // pred_fallthru
        _
      // Predicated region
      $region53: #{forward.5} parent=11 // pred_check
        %p625 = pneg %p365
      $region54: #{forward.5} parent=11 // pred_check_branch
        %627 = sbr.rel (%p625) target = $region56
      $region55: #{forward.5} parent=11 // pred_region
        _
      $region56: #{forward.5} parent=11 // pred_fallthru
        _
      // Predicated region
      $region57: #{forward.5} parent=11 // pred_check
        %p628 = pneg %p386
      $region58: #{forward.5} parent=11 // pred_check_branch
        %630 = sbr.rel (%p628) target = $region60
      $region59: #{forward.5} parent=11 // pred_region
        _
      $region60: #{forward.5} parent=11 // pred_fallthru
        _
      // Predicated region
      $region61: #{forward.5} parent=11 // pred_check
        %p631 = pneg %p407
      $region62: #{forward.5} parent=11 // pred_check_branch
        %633 = sbr.rel (%p631) target = $region64
      $region63: #{forward.5} parent=11 // pred_region
        _
      $region64: #{forward.5} parent=11 // pred_fallthru
        _
      // Predicated region
      $region65: #{forward.5} parent=11 // pred_check
        %p634 = pneg %p428
      $region66: #{forward.5} parent=11 // pred_check_branch
        %636 = sbr.rel (%p634) target = $region68
      $region67: #{forward.5} parent=11 // pred_region
        _
      $region68: #{forward.5} parent=11 // pred_fallthru
        _
      // Predicated region
      $region69: #{forward.5} parent=11 // pred_check
        %p637 = pneg %p449
      $region70: #{forward.5} parent=11 // pred_check_branch
        %639 = sbr.rel (%p637) target = $region72
      $region71: #{forward.5} parent=11 // pred_region
        _
      $region72: #{forward.5} parent=11 // pred_fallthru
        _
      // Predicated region
      $region73: #{forward.5} parent=11 // pred_check
        %p640 = pneg %p470
      $region74: #{forward.5} parent=11 // pred_check_branch
        %642 = sbr.rel (%p640) target = $region76
      $region75: #{forward.5} parent=11 // pred_region
        _
      $region76: #{forward.5} parent=11 // pred_fallthru
        _
      // Predicated region
      $region77: #{forward.5} parent=11 // pred_check
        %p643 = pneg %p491
      $region78: #{forward.5} parent=11 // pred_check_branch
        %645 = sbr.rel (%p643) target = $region80
      $region79: #{forward.5} parent=11 // pred_region
        _
      $region80: #{forward.5} parent=11 // pred_fallthru
        _
      // Predicated region
      $region81: #{forward.5} parent=11 // pred_check
        %p646 = pneg %p512
      $region82: #{forward.5} parent=11 // pred_check_branch
        %648 = sbr.rel (%p646) target = $region84
      $region83: #{forward.5} parent=11 // pred_region
        _
      $region84: #{forward.5} parent=11 // pred_fallthru
        _
      // Predicated region
      $region85: #{forward.5} parent=11 // pred_check
        %p649 = pneg %p533
      $region86: #{forward.5} parent=11 // pred_check_branch
        %651 = sbr.rel (%p649) target = $region88
      $region87: #{forward.5} parent=11 // pred_region
        _
      $region88: #{forward.5} parent=11 // pred_fallthru
        _
      // Predicated region
      $region89: #{forward.5} parent=11 // pred_check
        %p652 = pneg %p554
      $region90: #{forward.5} parent=11 // pred_check_branch
        %654 = sbr.rel (%p652) target = $region92
      $region91: #{forward.5} parent=11 // pred_region
        _
      $region92: #{forward.5} parent=11 // pred_fallthru
        _
    $region12: #{forward.5} parent=5 // pred_fallthru
      _
    %p655 = scmp.lt.s32.totalorder %s30, 2
    // Predicated region
    $region93: #{forward.5} parent=5 // pred_check
      %p656 = pneg %p655
    $region94: #{forward.5} parent=5 // pred_check_branch
      %658 = sbr.rel (%p656) target = $region96
    $region95: #{forward.5} parent=5 // pred_region
      // Predicated region
      $region97: #{forward.5} parent=95 // pred_check
        %p659 = pneg %p50
      $region98: #{forward.5} parent=95 // pred_check_branch
        %661 = sbr.rel (%p659) target = $region100
      $region99: #{forward.5} parent=95 // pred_region
        %p662 = scmp.lt.s32.totalorder %s30, 1
        %s663 = scalar_select %p662, %s30, 1
        %s664 = smul.addr %s663, 4
        %s665 = scalar_lea.vmem %s0, %s664
      $region100: #{forward.5} parent=95 // pred_fallthru
        _
      // Predicated region
      $region101: #{forward.5} parent=95 // pred_check
        %p666 = pneg %p76
      $region102: #{forward.5} parent=95 // pred_check_branch
        %668 = sbr.rel (%p666) target = $region104
      $region103: #{forward.5} parent=95 // pred_region
        %p669 = scmp.lt.s32.totalorder %s30, 1
        %s670 = scalar_select %p669, %s30, 1
        %s671 = smul.addr %s670, 4
        %s672 = scalar_lea.vmem %s1, %s671
      $region104: #{forward.5} parent=95 // pred_fallthru
        _
      // Predicated region
      $region105: #{forward.5} parent=95 // pred_check
        %p673 = pneg %p102
      $region106: #{forward.5} parent=95 // pred_check_branch
        %675 = sbr.rel (%p673) target = $region108
      $region107: #{forward.5} parent=95 // pred_region
        %p676 = scmp.lt.s32.totalorder %s30, 1
        %s677 = scalar_select %p676, %s30, 1
        %s678 = scalar_lea.vmem %s2, %s677
      $region108: #{forward.5} parent=95 // pred_fallthru
        _
      // Predicated region
      $region109: #{forward.5} parent=95 // pred_check
        %p679 = pneg %p128
      $region110: #{forward.5} parent=95 // pred_check_branch
        %681 = sbr.rel (%p679) target = $region112
      $region111: #{forward.5} parent=95 // pred_region
        %p682 = scmp.lt.s32.totalorder %s30, 1
        %s683 = scalar_select %p682, %s30, 1
        %s684 = scalar_lea.vmem %s3, %s683
      $region112: #{forward.5} parent=95 // pred_fallthru
        _
    $region96: #{forward.5} parent=5 // pred_fallthru
      _
    %p685 = scmp.le.s32.totalorder 1, %s30
    %p686 = scmp.lt.s32.totalorder %s30, 3
    %p687 = pnand %p685, %p686
    %p688 = pneg %p687
    // Predicated region
    $region113: #{forward.5} parent=5 // pred_check
      _
    $region114: #{forward.5} parent=5 // pred_check_branch
      %690 = sbr.rel (%p687) target = $region116
    $region115: #{forward.5} parent=5 // pred_region
      %s691 = ssub.s32 %s30, 1
      %p692 = scmp.lt.s32.totalorder %s35, 1
      %s693 = scalar_select %p692, %s35, 1
      %s694 = smul.addr %s693, 4
      %s695 = scalar_lea.vmem %s0, %s694
      %p696 = pneg %p56
      %p697 = pneg %p53
      %p698 = scmp.lt.s32.totalorder %s35, 1
      %s699 = scalar_select %p698, %s35, 1
      %s700 = smul.addr %s699, 4
      %s701 = scalar_lea.vmem %s1, %s700
      %p702 = pneg %p82
      %p703 = pneg %p79
      %p704 = scmp.lt.s32.totalorder %s35, 1
      %s705 = scalar_select %p704, %s35, 1
      %s706 = scalar_lea.vmem %s2, %s705
      %p707 = pneg %p108
      %p708 = pneg %p105
      %p709 = scmp.lt.s32.totalorder %s35, 1
      %s710 = scalar_select %p709, %s35, 1
      %s711 = scalar_lea.vmem %s3, %s710
      %p712 = pneg %p134
      %p713 = pneg %p131
      %p714 = pneg %p155
      %p715 = pneg %p152
      %p716 = pneg %p176
      %p717 = pneg %p173
      %p718 = pneg %p197
      %p719 = pneg %p194
      %p720 = pneg %p218
      %p721 = pneg %p215
      %p722 = pneg %p239
      %p723 = pneg %p236
      %p724 = pneg %p260
      %p725 = pneg %p257
      %p726 = pneg %p281
      %p727 = pneg %p278
      %p728 = pneg %p302
      %p729 = pneg %p299
      %p730 = pneg %p323
      %p731 = pneg %p320
      %p732 = pneg %p344
      %p733 = pneg %p341
      %p734 = pneg %p365
      %p735 = pneg %p362
      %p736 = pneg %p386
      %p737 = pneg %p383
      %p738 = pneg %p407
      %p739 = pneg %p404
      %p740 = pneg %p428
      %p741 = pneg %p425
      %p742 = pneg %p449
      %p743 = pneg %p446
      %p744 = pneg %p470
      %p745 = pneg %p467
      %p746 = pneg %p491
      %p747 = pneg %p488
      %p748 = pneg %p512
      %p749 = pneg %p509
      %p750 = pneg %p533
      %p751 = pneg %p530
      %p752 = pneg %p554
      %p753 = pneg %p551
      %p754 = pneg %p580
      %p755 = pneg %p577
      %p756 = scmp.lt.s32.totalorder %s35, 1
      %s757 = scalar_select %p756, %s35, 1
      %s758 = smul.addr %s757, 4
      %s759 = scalar_lea.vmem %s24, %s758
      %p760 = scmp.lt.s32.totalorder %s35, 1
      %s761 = scalar_select %p760, %s35, 1
      %s762 = smul.addr %s761, 4
      %s763 = scalar_lea.vmem %s0, %s762
      %p764 = scmp.lt.s32.totalorder %s35, 1
      %s765 = scalar_select %p764, %s35, 1
      %s766 = smul.addr %s765, 4
      %s767 = scalar_lea.vmem %s1, %s766
      %p768 = scmp.lt.s32.totalorder %s35, 1
      %s769 = scalar_select %p768, %s35, 1
      %s770 = scalar_lea.vmem %s2, %s769
      %p771 = scmp.lt.s32.totalorder %s35, 1
      %s772 = scalar_select %p771, %s35, 1
      %s773 = scalar_lea.vmem %s3, %s772
      %p774 = scmp.lt.s32.totalorder %s35, 1
      %s775 = scalar_select %p774, %s35, 1
      %s776 = smul.addr %s775, 4
      %s777 = scalar_lea.vmem %s24, %s776
      %v779 = vld [vmem:[%s763] sm:$0xf]
      %v780 = vunpack.c.l.bf16 %v779
      %v781 = vld [vmem:[%s767] sm:$0xf]
      %v782 = vlaneseq
      %v783 = vshrl.u32 %v782, 7
      %v784 = vlaneseq
      %v785 = vand.u32 %v784, 127
      %vm786 = vcmp.le.s32.totalorder %v785, %v783
      %v787 = vld [vmem:[%s770] sm:$0x1]
      %vm788 = vcmp.gt.s32.totalorder %v787, 0
      %v789 = vsel %vm788, 1, 0
      %v790 = vlaneseq
      %v791 = vshrl.u32 %v790, 7
      %v792 = vsub.s32 0, %v791
      %v793 = vrot.slane %v789, %v792
      %vm794 = vcmp.eq.s32.totalorder %v793, 1
      %vm795 = vmand %vm786, %vm794
      %v796 = vsel %vm795, 0.0, -1e+09
      %v797 = vld [vmem:[%s773] sm:$0x1]
      %vm798 = vcmp.gt.s32.totalorder %v797, 0
      %v799 = vsel %vm798, 0.0, -1e+09
      %v800 = vld [vmem:[%s4] sm:$0x1]
      %v801 = vld [vmem:[%s5] sm:$0x1]
      %vm802 = vcmask 261120
      %v803 = vsel %vm802, %v780, 0.0
      %804 = vadd.xlane.f32.xlu0 %v803
      %v805 = vpop.xlane.xlu0 %804
      %v806 = vrcp.pop 32.0
      %v807 = vmul.f32 %v805, %v806
      %v808 = vsub.f32 %v780, %v807
      %v809 = vmul.f32 %v808, %v808
      %v810 = vsel %vm802, %v809, 0.0
      %811 = vadd.xlane.f32.xlu0 %v810
      %v812 = vpop.xlane.xlu0 %811
      %v813 = vmul.f32 %v812, %v806
      %v814 = vadd.f32 %v813, 1e-05
      %v815 = vrsqrt.pop %v814
      %v816 = vmul.f32 %v808, %v815
      %v818 = vlaneseq
      %v819 = vshrl.u32 %v818, 7
      %v820 = vsub.s32 0, %v819
      %v821 = vrot.slane %v800, %v820
      %v823 = vmul.f32 %v816, %v821
      %v825 = vlaneseq
      %v826 = vshrl.u32 %v825, 7
      %v827 = vsub.s32 0, %v826
      %v828 = vrot.slane %v801, %v827
      %v830 = vadd.f32 %v823, %v828
      %v831 = vpack.c.bf16 %v830, %v830
      %v832 = vld [vmem:[%s6] sm:$0xf]
      %v833 = vld [vmem:[%s6 + $0x4] sm:$0xf]
      %v834 = vld [vmem:[%s6 + $0x8] sm:$0xf]
      %v835 = vld [vmem:[%s6 + $0xc] sm:$0xf]
      %v836 = vld [vmem:[%s7] sm:$0xf]
      %v837 = vld [vmem:[%s7 + $0x4] sm:$0xf]
      %v838 = vld [vmem:[%s7 + $0x8] sm:$0xf]
      %v839 = vld [vmem:[%s7 + $0xc] sm:$0xf]
      %v840 = vld [vmem:[%s8] sm:$0xf]
      %v841 = vld [vmem:[%s8 + $0x4] sm:$0xf]
      %v842 = vld [vmem:[%s8 + $0x8] sm:$0xf]
      %v843 = vld [vmem:[%s8 + $0xc] sm:$0xf]
      %v844 = vld [vmem:[%s9] sm:$0xf]
      %v845 = vld [vmem:[%s9 + $0x4] sm:$0xf]
      %v846 = vld [vmem:[%s9 + $0x8] sm:$0xf]
      %v847 = vld [vmem:[%s9 + $0xc] sm:$0xf]
      %v848 = vld [vmem:[%s10] sm:$0x1]
      %v853 = vunpack.c.l.b16 %v832
      %v854 = vunpack.c.l.b16 %v833
      %v855 = vunpack.c.l.b16 %v834
      %v856 = vunpack.c.l.b16 %v835
      %v857 = vpack.c.b16 %v854, %v853
      %v858 = vpack.c.b16 %v856, %v855
      %v862 = vsel %vm802, %v831, 0
      %864 = vmatprep.subr.bf16.mxu0 0
      %865 = vmatpush1.bf16.msra.mxu0 %v857
      %866 = vmatprep.subr.bf16.mxu0 0
      %867 = vmatpush1.bf16.msra.mxu0 %v858
      %868 = vmatprep.subr.bf16.mxu0 0
      %869 = vmatpush1.bf16.msra.mxu0 0
      %870 = vmatprep.subr.bf16.mxu0 0
      %871 = vmatpush1.bf16.msra.mxu0 0
      %872 = vmatprep.subr.bf16.mxu0 0
      %873 = vmatpush1.bf16.msra.mxu0 0
      %874 = vmatprep.subr.bf16.mxu0 0
      %875 = vmatpush1.bf16.msra.mxu0 0
      %876 = vmatprep.subr.bf16.mxu0 0
      %877 = vmatpush1.bf16.msra.mxu0 0
      %878 = vmatprep.subr.bf16.mxu0 0
      %879 = vmatpush1.bf16.msra.mxu0 0
      %880 = vmatprep.subr.bf16.mxu0 0
      %881 = vmatpush1.bf16.msra.mxu0 0
      %882 = vmatprep.subr.bf16.mxu0 0
      %883 = vmatpush1.bf16.msra.mxu0 0
      %884 = vmatprep.subr.bf16.mxu0 0
      %885 = vmatpush1.bf16.msra.mxu0 0
      %886 = vmatprep.subr.bf16.mxu0 0
      %887 = vmatpush1.bf16.msra.mxu0 0
      %888 = vmatprep.subr.bf16.mxu0 0
      %889 = vmatpush1.bf16.msra.mxu0 0
      %890 = vmatprep.subr.bf16.mxu0 0
      %891 = vmatpush1.bf16.msra.mxu0 0
      %892 = vmatprep.subr.bf16.mxu0 0
      %893 = vmatpush1.bf16.msra.mxu0 0
      %894 = vmatprep.subr.bf16.mxu0 0
      %895 = vmatpush1.bf16.msra.mxu0 0
      %896 = vmatprep.mubr.bf16.mxu0 0
      %897 = vmatmul.mubr.bf16.gmra.mrb[0].mxu0 %v862
      %v898 = vpop.f32.mrb[0].mxu0
      %v899 = vadd.f32 0.0, %v898
      %v900 = vpop.f32.mrb[0].mxu0
      %v901 = vpop.f32.mrb[0].mxu0
      %v902 = vpop.f32.mrb[0].mxu0
      %903 = vdwg.mxu0
      %v904 = vmul.f32 %v899, 0.35355338
      %v905 = vpack.c.bf16 %v904, %v904
      %v910 = vunpack.c.l.b16 %v836
      %v911 = vunpack.c.l.b16 %v837
      %v912 = vunpack.c.l.b16 %v838
      %v913 = vunpack.c.l.b16 %v839
      %v914 = vpack.c.b16 %v911, %v910
      %v915 = vpack.c.b16 %v913, %v912
      %918 = vmatprep.subr.bf16.mxu0 0
      %919 = vmatpush1.bf16.msra.mxu0 %v914
      %920 = vmatprep.subr.bf16.mxu0 0
      %921 = vmatpush1.bf16.msra.mxu0 %v915
      %922 = vmatprep.subr.bf16.mxu0 0
      %923 = vmatpush1.bf16.msra.mxu0 0
      %924 = vmatprep.subr.bf16.mxu0 0
      %925 = vmatpush1.bf16.msra.mxu0 0
      %926 = vmatprep.subr.bf16.mxu0 0
      %927 = vmatpush1.bf16.msra.mxu0 0
      %928 = vmatprep.subr.bf16.mxu0 0
      %929 = vmatpush1.bf16.msra.mxu0 0
      %930 = vmatprep.subr.bf16.mxu0 0
      %931 = vmatpush1.bf16.msra.mxu0 0
      %932 = vmatprep.subr.bf16.mxu0 0
      %933 = vmatpush1.bf16.msra.mxu0 0
      %934 = vmatprep.subr.bf16.mxu0 0
      %935 = vmatpush1.bf16.msra.mxu0 0
      %936 = vmatprep.subr.bf16.mxu0 0
      %937 = vmatpush1.bf16.msra.mxu0 0
      %938 = vmatprep.subr.bf16.mxu0 0
      %939 = vmatpush1.bf16.msra.mxu0 0
      %940 = vmatprep.subr.bf16.mxu0 0
      %941 = vmatpush1.bf16.msra.mxu0 0
      %942 = vmatprep.subr.bf16.mxu0 0
      %943 = vmatpush1.bf16.msra.mxu0 0
      %944 = vmatprep.subr.bf16.mxu0 0
      %945 = vmatpush1.bf16.msra.mxu0 0
      %946 = vmatprep.subr.bf16.mxu0 0
      %947 = vmatpush1.bf16.msra.mxu0 0
      %948 = vmatprep.subr.bf16.mxu0 0
      %949 = vmatpush1.bf16.msra.mxu0 0
      %950 = vmatprep.mubr.bf16.mxu0 0
      %951 = vmatmul.mubr.bf16.gmra.mrb[0].mxu0 %v862
      %v952 = vpop.f32.mrb[0].mxu0
      %v953 = vadd.f32 0.0, %v952
      %v954 = vpop.f32.mrb[0].mxu0
      %v955 = vpop.f32.mrb[0].mxu0
      %v956 = vpop.f32.mrb[0].mxu0
      %957 = vdwg.mxu0
      %v958 = vpack.c.bf16 %v953, %v953
      %v963 = vunpack.c.l.b16 %v840
      %v964 = vunpack.c.l.b16 %v841
      %v965 = vunpack.c.l.b16 %v842
      %v966 = vunpack.c.l.b16 %v843
      %v967 = vpack.c.b16 %v964, %v963
      %v968 = vpack.c.b16 %v966, %v965
      %971 = vmatprep.subr.bf16.mxu0 0
      %972 = vmatpush1.bf16.msra.mxu0 %v967
      %973 = vmatprep.subr.bf16.mxu0 0
      %974 = vmatpush1.bf16.msra.mxu0 %v968
      %975 = vmatprep.subr.bf16.mxu0 0
      %976 = vmatpush1.bf16.msra.mxu0 0
      %977 = vmatprep.subr.bf16.mxu0 0
      %978 = vmatpush1.bf16.msra.mxu0 0
      %979 = vmatprep.subr.bf16.mxu0 0
      %980 = vmatpush1.bf16.msra.mxu0 0
      %981 = vmatprep.subr.bf16.mxu0 0
      %982 = vmatpush1.bf16.msra.mxu0 0
      %983 = vmatprep.subr.bf16.mxu0 0
      %984 = vmatpush1.bf16.msra.mxu0 0
      %985 = vmatprep.subr.bf16.mxu0 0
      %986 = vmatpush1.bf16.msra.mxu0 0
      %987 = vmatprep.subr.bf16.mxu0 0
      %988 = vmatpush1.bf16.msra.mxu0 0
      %989 = vmatprep.subr.bf16.mxu0 0
      %990 = vmatpush1.bf16.msra.mxu0 0
      %991 = vmatprep.subr.bf16.mxu0 0
      %992 = vmatpush1.bf16.msra.mxu0 0
      %993 = vmatprep.subr.bf16.mxu0 0
      %994 = vmatpush1.bf16.msra.mxu0 0
      %995 = vmatprep.subr.bf16.mxu0 0
      %996 = vmatpush1.bf16.msra.mxu0 0
      %997 = vmatprep.subr.bf16.mxu0 0
      %998 = vmatpush1.bf16.msra.mxu0 0
      %999 = vmatprep.subr.bf16.mxu0 0
      %1000 = vmatpush1.bf16.msra.mxu0 0
      %1001 = vmatprep.subr.bf16.mxu0 0
      %1002 = vmatpush1.bf16.msra.mxu0 0
      %1003 = vmatprep.mubr.bf16.mxu0 0
      %1004 = vmatmul.mubr.bf16.gmra.mrb[0].mxu0 %v862
      %v1005 = vpop.f32.mrb[0].mxu0
      %v1006 = vadd.f32 0.0, %v1005
      %v1007 = vpop.f32.mrb[0].mxu0
      %v1008 = vpop.f32.mrb[0].mxu0
      %v1009 = vpop.f32.mrb[0].mxu0
      %1010 = vdwg.mxu0
      %v1011 = vpack.c.bf16 %v1006, %v1006
      %vm1012 = vcmask 64512
      %v1014 = vsel %vm1012, %v905, 0
      %v1017 = vsel %vm1012, %v958, 0
      %1019 = vmatprep.subr.bf16.mxu0 0
      %1020 = vmatpush1.bf16.xpose.msra.mxu0 %v1017
      %1021 = vmatprep.subr.bf16.mxu0 0
      %1022 = vmatpush1.bf16.xpose.msra.mxu0 0
      %1023 = vmatprep.subr.bf16.mxu0 0
      %1024 = vmatpush1.bf16.xpose.msra.mxu0 0
      %1025 = vmatprep.subr.bf16.mxu0 0
      %1026 = vmatpush1.bf16.xpose.msra.mxu0 0
      %1027 = vmatprep.subr.bf16.mxu0 0
      %1028 = vmatpush1.bf16.xpose.msra.mxu0 0
      %1029 = vmatprep.subr.bf16.mxu0 0
      %1030 = vmatpush1.bf16.xpose.msra.mxu0 0
      %1031 = vmatprep.subr.bf16.mxu0 0
      %1032 = vmatpush1.bf16.xpose.msra.mxu0 0
      %1033 = vmatprep.subr.bf16.mxu0 0
      %1034 = vmatpush1.bf16.xpose.msra.mxu0 0
      %1035 = vmatprep.subr.bf16.mxu0 0
      %1036 = vmatpush1.bf16.xpose.msra.mxu0 0
      %1037 = vmatprep.subr.bf16.mxu0 0
      %1038 = vmatpush1.bf16.xpose.msra.mxu0 0
      %1039 = vmatprep.subr.bf16.mxu0 0
      %1040 = vmatpush1.bf16.xpose.msra.mxu0 0
      %1041 = vmatprep.subr.bf16.mxu0 0
      %1042 = vmatpush1.bf16.xpose.msra.mxu0 0
      %1043 = vmatprep.subr.bf16.mxu0 0
      %1044 = vmatpush1.bf16.xpose.msra.mxu0 0
      %1045 = vmatprep.subr.bf16.mxu0 0
      %1046 = vmatpush1.bf16.xpose.msra.mxu0 0
      %1047 = vmatprep.subr.bf16.mxu0 0
      %1048 = vmatpush1.bf16.xpose.msra.mxu0 0
      %1049 = vmatprep.subr.bf16.mxu0 0
      %1050 = vmatpush1.bf16.xpose.msra.mxu0 0
      %1051 = vmatprep.mubr.bf16.mxu0 0
      %1052 = vmatmul.mubr.bf16.gmra.mrb[0].mxu0 %v1014
      %v1053 = vpop.f32.mrb[0].mxu0
      %v1054 = vadd.f32 %v796, %v1053
      %v1055 = vpop.f32.mrb[0].mxu0
      %v1056 = vpop.f32.mrb[0].mxu0
      %v1057 = vpop.f32.mrb[0].mxu0
      %1058 = vdwg.mxu0
      %v1059 = vsel %vm1012, %v1054, -inf
      %1060 = vmax.xlane.f32.xlu0 %v1059
      %v1061 = vpop.xlane.xlu0 %1060
      %v1062 = vsub.f32 %v1054, %v1061
      %v1063 = vmul.f32 %v1062, 1.442695
      %v1064 = vpow.pop %v1063
      %v1065 = vsel %vm1012, %v1064, 0.0
      %1066 = vadd.xlane.f32.xlu0 %v1065
      %v1067 = vpop.xlane.xlu0 %1066
      %v1068 = vrcp.pop %v1067
      %v1069 = vmul.f32 %v1064, %v1068
      %v1070 = vpack.c.bf16 %v1069, %v1069
      %v1072 = vsel %vm1012, %v1070, 0
      %vm1074 = vcmask 1043456
      %v1076 = vsel %vm1074, %v1011, 0
      %1078 = vmatprep.subr.bf16.mxu0 0
      %1079 = vmatpush1.bf16.msra.mxu0 %v1076
      %1080 = vmatprep.subr.bf16.mxu0 0
      %1081 = vmatpush1.bf16.msra.mxu0 0
      %1082 = vmatprep.subr.bf16.mxu0 0
      %1083 = vmatpush1.bf16.msra.mxu0 0
      %1084 = vmatprep.subr.bf16.mxu0 0
      %1085 = vmatpush1.bf16.msra.mxu0 0
      %1086 = vmatprep.subr.bf16.mxu0 0
      %1087 = vmatpush1.bf16.msra.mxu0 0
      %1088 = vmatprep.subr.bf16.mxu0 0
      %1089 = vmatpush1.bf16.msra.mxu0 0
      %1090 = vmatprep.subr.bf16.mxu0 0
      %1091 = vmatpush1.bf16.msra.mxu0 0
      %1092 = vmatprep.subr.bf16.mxu0 0
      %1093 = vmatpush1.bf16.msra.mxu0 0
      %1094 = vmatprep.subr.bf16.mxu0 0
      %1095 = vmatpush1.bf16.msra.mxu0 0
      %1096 = vmatprep.subr.bf16.mxu0 0
      %1097 = vmatpush1.bf16.msra.mxu0 0
      %1098 = vmatprep.subr.bf16.mxu0 0
      %1099 = vmatpush1.bf16.msra.mxu0 0
      %1100 = vmatprep.subr.bf16.mxu0 0
      %1101 = vmatpush1.bf16.msra.mxu0 0
      %1102 = vmatprep.subr.bf16.mxu0 0
      %1103 = vmatpush1.bf16.msra.mxu0 0
      %1104 = vmatprep.subr.bf16.mxu0 0
      %1105 = vmatpush1.bf16.msra.mxu0 0
      %1106 = vmatprep.subr.bf16.mxu0 0
      %1107 = vmatpush1.bf16.msra.mxu0 0
      %1108 = vmatprep.subr.bf16.mxu0 0
      %1109 = vmatpush1.bf16.msra.mxu0 0
      %1110 = vmatprep.mubr.bf16.mxu0 0
      %1111 = vmatmul.mubr.bf16.gmra.mrb[0].mxu0 %v1072
      %v1112 = vpop.f32.mrb[0].mxu0
      %v1113 = vadd.f32 0.0, %v1112
      %v1114 = vpop.f32.mrb[0].mxu0
      %v1115 = vpop.f32.mrb[0].mxu0
      %v1116 = vpop.f32.mrb[0].mxu0
      %1117 = vdwg.mxu0
      %1119 = vrot.lane.b32.xlu0 %v905, 120
      %v1120 = vpop.permute.xlu0 %1119
      %1122 = vrot.lane.b32.xlu0 %v958, 120
      %v1123 = vpop.permute.xlu0 %1122
      %v1125 = vsel %vm1012, %v1120, 0
      %v1128 = vsel %vm1012, %v1123, 0
      %1130 = vmatprep.subr.bf16.mxu0 0
      %1131 = vmatpush1.bf16.xpose.msra.mxu0 %v1128
      %1132 = vmatprep.subr.bf16.mxu0 0
      %1133 = vmatpush1.bf16.xpose.msra.mxu0 0
      %1134 = vmatprep.subr.bf16.mxu0 0
      %1135 = vmatpush1.bf16.xpose.msra.mxu0 0
      %1136 = vmatprep.subr.bf16.mxu0 0
      %1137 = vmatpush1.bf16.xpose.msra.mxu0 0
      %1138 = vmatprep.subr.bf16.mxu0 0
      %1139 = vmatpush1.bf16.xpose.msra.mxu0 0
      %1140 = vmatprep.subr.bf16.mxu0 0
      %1141 = vmatpush1.bf16.xpose.msra.mxu0 0
      %1142 = vmatprep.subr.bf16.mxu0 0
      %1143 = vmatpush1.bf16.xpose.msra.mxu0 0
      %1144 = vmatprep.subr.bf16.mxu0 0
      %1145 = vmatpush1.bf16.xpose.msra.mxu0 0
      %1146 = vmatprep.subr.bf16.mxu0 0
      %1147 = vmatpush1.bf16.xpose.msra.mxu0 0
      %1148 = vmatprep.subr.bf16.mxu0 0
      %1149 = vmatpush1.bf16.xpose.msra.mxu0 0
      %1150 = vmatprep.subr.bf16.mxu0 0
      %1151 = vmatpush1.bf16.xpose.msra.mxu0 0
      %1152 = vmatprep.subr.bf16.mxu0 0
      %1153 = vmatpush1.bf16.xpose.msra.mxu0 0
      %1154 = vmatprep.subr.bf16.mxu0 0
      %1155 = vmatpush1.bf16.xpose.msra.mxu0 0
      %1156 = vmatprep.subr.bf16.mxu0 0
      %1157 = vmatpush1.bf16.xpose.msra.mxu0 0
      %1158 = vmatprep.subr.bf16.mxu0 0
      %1159 = vmatpush1.bf16.xpose.msra.mxu0 0
      %1160 = vmatprep.subr.bf16.mxu0 0
      %1161 = vmatpush1.bf16.xpose.msra.mxu0 0
      %1162 = vmatprep.mubr.bf16.mxu0 0
      %1163 = vmatmul.mubr.bf16.gmra.mrb[0].mxu0 %v1125
      %v1164 = vpop.f32.mrb[0].mxu0
      %v1165 = vadd.f32 %v796, %v1164
      %v1166 = vpop.f32.mrb[0].mxu0
      %v1167 = vpop.f32.mrb[0].mxu0
      %v1168 = vpop.f32.mrb[0].mxu0
      %1169 = vdwg.mxu0
      %v1170 = vsel %vm1012, %v1165, -inf
      %1171 = vmax.xlane.f32.xlu0 %v1170
      %v1172 = vpop.xlane.xlu0 %1171
      %v1173 = vsub.f32 %v1165, %v1172
      %v1174 = vmul.f32 %v1173, 1.442695
      %v1175 = vpow.pop %v1174
      %v1176 = vsel %vm1012, %v1175, 0.0
      %1177 = vadd.xlane.f32.xlu0 %v1176
      %v1178 = vpop.xlane.xlu0 %1177
      %v1179 = vrcp.pop %v1178
      %v1180 = vmul.f32 %v1175, %v1179
      %v1181 = vpack.c.bf16 %v1180, %v1180
      %1183 = vrot.lane.b32.xlu0 %v1011, 120
      %v1184 = vpop.permute.xlu0 %1183
      %v1186 = vsel %vm1012, %v1181, 0
      %v1189 = vsel %vm1074, %v1184, 0
      %1191 = vmatprep.subr.bf16.mxu0 0
      %1192 = vmatpush1.bf16.msra.mxu0 %v1189
      %1193 = vmatprep.subr.bf16.mxu0 0
      %1194 = vmatpush1.bf16.msra.mxu0 0
      %1195 = vmatprep.subr.bf16.mxu0 0
      %1196 = vmatpush1.bf16.msra.mxu0 0
      %1197 = vmatprep.subr.bf16.mxu0 0
      %1198 = vmatpush1.bf16.msra.mxu0 0
      %1199 = vmatprep.subr.bf16.mxu0 0
      %1200 = vmatpush1.bf16.msra.mxu0 0
      %1201 = vmatprep.subr.bf16.mxu0 0
      %1202 = vmatpush1.bf16.msra.mxu0 0
      %1203 = vmatprep.subr.bf16.mxu0 0
      %1204 = vmatpush1.bf16.msra.mxu0 0
      %1205 = vmatprep.subr.bf16.mxu0 0
      %1206 = vmatpush1.bf16.msra.mxu0 0
      %1207 = vmatprep.subr.bf16.mxu0 0
      %1208 = vmatpush1.bf16.msra.mxu0 0
      %1209 = vmatprep.subr.bf16.mxu0 0
      %1210 = vmatpush1.bf16.msra.mxu0 0
      %1211 = vmatprep.subr.bf16.mxu0 0
      %1212 = vmatpush1.bf16.msra.mxu0 0
      %1213 = vmatprep.subr.bf16.mxu0 0
      %1214 = vmatpush1.bf16.msra.mxu0 0
      %1215 = vmatprep.subr.bf16.mxu0 0
      %1216 = vmatpush1.bf16.msra.mxu0 0
      %1217 = vmatprep.subr.bf16.mxu0 0
      %1218 = vmatpush1.bf16.msra.mxu0 0
      %1219 = vmatprep.subr.bf16.mxu0 0
      %1220 = vmatpush1.bf16.msra.mxu0 0
      %1221 = vmatprep.subr.bf16.mxu0 0
      %1222 = vmatpush1.bf16.msra.mxu0 0
      %1223 = vmatprep.mubr.bf16.mxu0 0
      %1224 = vmatmul.mubr.bf16.gmra.mrb[0].mxu0 %v1186
      %v1225 = vpop.f32.mrb[0].mxu0
      %v1226 = vadd.f32 0.0, %v1225
      %v1227 = vpop.f32.mrb[0].mxu0
      %v1228 = vpop.f32.mrb[0].mxu0
      %v1229 = vpop.f32.mrb[0].mxu0
      %1230 = vdwg.mxu0
      %1231 = vrot.lane.b32.xlu0 %v905, 112
      %v1232 = vpop.permute.xlu0 %1231
      %1233 = vrot.lane.b32.xlu0 %v958, 112
      %v1234 = vpop.permute.xlu0 %1233
      %v1236 = vsel %vm1012, %v1232, 0
      %v1239 = vsel %vm1012, %v1234, 0
      %1241 = vmatprep.subr.bf16.mxu0 0
      %1242 = vmatpush1.bf16.xpose.msra.mxu0 %v1239
      %1243 = vmatprep.subr.bf16.mxu0 0
      %1244 = vmatpush1.bf16.xpose.msra.mxu0 0
      %1245 = vmatprep.subr.bf16.mxu0 0
      %1246 = vmatpush1.bf16.xpose.msra.mxu0 0
      %1247 = vmatprep.subr.bf16.mxu0 0
      %1248 = vmatpush1.bf16.xpose.msra.mxu0 0
      %1249 = vmatprep.subr.bf16.mxu0 0
      %1250 = vmatpush1.bf16.xpose.msra.mxu0 0
      %1251 = vmatprep.subr.bf16.mxu0 0
      %1252 = vmatpush1.bf16.xpose.msra.mxu0 0
      %1253 = vmatprep.subr.bf16.mxu0 0
      %1254 = vmatpush1.bf16.xpose.msra.mxu0 0
      %1255 = vmatprep.subr.bf16.mxu0 0
      %1256 = vmatpush1.bf16.xpose.msra.mxu0 0
      %1257 = vmatprep.subr.bf16.mxu0 0
      %1258 = vmatpush1.bf16.xpose.msra.mxu0 0
      %1259 = vmatprep.subr.bf16.mxu0 0
      %1260 = vmatpush1.bf16.xpose.msra.mxu0 0
      %1261 = vmatprep.subr.bf16.mxu0 0
      %1262 = vmatpush1.bf16.xpose.msra.mxu0 0
      %1263 = vmatprep.subr.bf16.mxu0 0
      %1264 = vmatpush1.bf16.xpose.msra.mxu0 0
      %1265 = vmatprep.subr.bf16.mxu0 0
      %1266 = vmatpush1.bf16.xpose.msra.mxu0 0
      %1267 = vmatprep.subr.bf16.mxu0 0
      %1268 = vmatpush1.bf16.xpose.msra.mxu0 0
      %1269 = vmatprep.subr.bf16.mxu0 0
      %1270 = vmatpush1.bf16.xpose.msra.mxu0 0
      %1271 = vmatprep.subr.bf16.mxu0 0
      %1272 = vmatpush1.bf16.xpose.msra.mxu0 0
      %1273 = vmatprep.mubr.bf16.mxu0 0
      %1274 = vmatmul.mubr.bf16.gmra.mrb[0].mxu0 %v1236
      %v1275 = vpop.f32.mrb[0].mxu0
      %v1276 = vadd.f32 %v796, %v1275
      %v1277 = vpop.f32.mrb[0].mxu0
      %v1278 = vpop.f32.mrb[0].mxu0
      %v1279 = vpop.f32.mrb[0].mxu0
      %1280 = vdwg.mxu0
      %v1281 = vsel %vm1012, %v1276, -inf
      %1282 = vmax.xlane.f32.xlu0 %v1281
      %v1283 = vpop.xlane.xlu0 %1282
      %v1284 = vsub.f32 %v1276, %v1283
      %v1285 = vmul.f32 %v1284, 1.442695
      %v1286 = vpow.pop %v1285
      %v1287 = vsel %vm1012, %v1286, 0.0
      %1288 = vadd.xlane.f32.xlu0 %v1287
      %v1289 = vpop.xlane.xlu0 %1288
      %v1290 = vrcp.pop %v1289
      %v1291 = vmul.f32 %v1286, %v1290
      %v1292 = vpack.c.bf16 %v1291, %v1291
      %1293 = vrot.lane.b32.xlu0 %v1011, 112
      %v1294 = vpop.permute.xlu0 %1293
      %v1296 = vsel %vm1012, %v1292, 0
      %v1299 = vsel %vm1074, %v1294, 0
      %1301 = vmatprep.subr.bf16.mxu0 0
      %1302 = vmatpush1.bf16.msra.mxu0 %v1299
      %1303 = vmatprep.subr.bf16.mxu0 0
      %1304 = vmatpush1.bf16.msra.mxu0 0
      %1305 = vmatprep.subr.bf16.mxu0 0
      %1306 = vmatpush1.bf16.msra.mxu0 0
      %1307 = vmatprep.subr.bf16.mxu0 0
      %1308 = vmatpush1.bf16.msra.mxu0 0
      %1309 = vmatprep.subr.bf16.mxu0 0
      %1310 = vmatpush1.bf16.msra.mxu0 0
      %1311 = vmatprep.subr.bf16.mxu0 0
      %1312 = vmatpush1.bf16.msra.mxu0 0
      %1313 = vmatprep.subr.bf16.mxu0 0
      %1314 = vmatpush1.bf16.msra.mxu0 0
      %1315 = vmatprep.subr.bf16.mxu0 0
      %1316 = vmatpush1.bf16.msra.mxu0 0
      %1317 = vmatprep.subr.bf16.mxu0 0
      %1318 = vmatpush1.bf16.msra.mxu0 0
      %1319 = vmatprep.subr.bf16.mxu0 0
      %1320 = vmatpush1.bf16.msra.mxu0 0
      %1321 = vmatprep.subr.bf16.mxu0 0
      %1322 = vmatpush1.bf16.msra.mxu0 0
      %1323 = vmatprep.subr.bf16.mxu0 0
      %1324 = vmatpush1.bf16.msra.mxu0 0
      %1325 = vmatprep.subr.bf16.mxu0 0
      %1326 = vmatpush1.bf16.msra.mxu0 0
      %1327 = vmatprep.subr.bf16.mxu0 0
      %1328 = vmatpush1.bf16.msra.mxu0 0
      %1329 = vmatprep.subr.bf16.mxu0 0
      %1330 = vmatpush1.bf16.msra.mxu0 0
      %1331 = vmatprep.subr.bf16.mxu0 0
      %1332 = vmatpush1.bf16.msra.mxu0 0
      %1333 = vmatprep.mubr.bf16.mxu0 0
      %1334 = vmatmul.mubr.bf16.gmra.mrb[0].mxu0 %v1296
      %v1335 = vpop.f32.mrb[0].mxu0
      %v1336 = vadd.f32 0.0, %v1335
      %v1337 = vpop.f32.mrb[0].mxu0
      %v1338 = vpop.f32.mrb[0].mxu0
      %v1339 = vpop.f32.mrb[0].mxu0
      %1340 = vdwg.mxu0
      %1341 = vrot.lane.b32.xlu0 %v905, 104
      %v1342 = vpop.permute.xlu0 %1341
      %1343 = vrot.lane.b32.xlu0 %v958, 104
      %v1344 = vpop.permute.xlu0 %1343
      %v1346 = vsel %vm1012, %v1342, 0
      %v1349 = vsel %vm1012, %v1344, 0
      %1351 = vmatprep.subr.bf16.mxu0 0
      %1352 = vmatpush1.bf16.xpose.msra.mxu0 %v1349
      %1353 = vmatprep.subr.bf16.mxu0 0
      %1354 = vmatpush1.bf16.xpose.msra.mxu0 0
      %1355 = vmatprep.subr.bf16.mxu0 0
      %1356 = vmatpush1.bf16.xpose.msra.mxu0 0
      %1357 = vmatprep.subr.bf16.mxu0 0
      %1358 = vmatpush1.bf16.xpose.msra.mxu0 0
      %1359 = vmatprep.subr.bf16.mxu0 0
      %1360 = vmatpush1.bf16.xpose.msra.mxu0 0
      %1361 = vmatprep.subr.bf16.mxu0 0
      %1362 = vmatpush1.bf16.xpose.msra.mxu0 0
      %1363 = vmatprep.subr.bf16.mxu0 0
      %1364 = vmatpush1.bf16.xpose.msra.mxu0 0
      %1365 = vmatprep.subr.bf16.mxu0 0
      %1366 = vmatpush1.bf16.xpose.msra.mxu0 0
      %1367 = vmatprep.subr.bf16.mxu0 0
      %1368 = vmatpush1.bf16.xpose.msra.mxu0 0
      %1369 = vmatprep.subr.bf16.mxu0 0
      %1370 = vmatpush1.bf16.xpose.msra.mxu0 0
      %1371 = vmatprep.subr.bf16.mxu0 0
      %1372 = vmatpush1.bf16.xpose.msra.mxu0 0
      %1373 = vmatprep.subr.bf16.mxu0 0
      %1374 = vmatpush1.bf16.xpose.msra.mxu0 0
      %1375 = vmatprep.subr.bf16.mxu0 0
      %1376 = vmatpush1.bf16.xpose.msra.mxu0 0
      %1377 = vmatprep.subr.bf16.mxu0 0
      %1378 = vmatpush1.bf16.xpose.msra.mxu0 0
      %1379 = vmatprep.subr.bf16.mxu0 0
      %1380 = vmatpush1.bf16.xpose.msra.mxu0 0
      %1381 = vmatprep.subr.bf16.mxu0 0
      %1382 = vmatpush1.bf16.xpose.msra.mxu0 0
      %1383 = vmatprep.mubr.bf16.mxu0 0
      %1384 = vmatmul.mubr.bf16.gmra.mrb[0].mxu0 %v1346
      %v1385 = vpop.f32.mrb[0].mxu0
      %v1386 = vadd.f32 %v796, %v1385
      %v1387 = vpop.f32.mrb[0].mxu0
      %v1388 = vpop.f32.mrb[0].mxu0
      %v1389 = vpop.f32.mrb[0].mxu0
      %1390 = vdwg.mxu0
      %v1391 = vsel %vm1012, %v1386, -inf
      %1392 = vmax.xlane.f32.xlu0 %v1391
      %v1393 = vpop.xlane.xlu0 %1392
      %v1394 = vsub.f32 %v1386, %v1393
      %v1395 = vmul.f32 %v1394, 1.442695
      %v1396 = vpow.pop %v1395
      %v1397 = vsel %vm1012, %v1396, 0.0
      %1398 = vadd.xlane.f32.xlu0 %v1397
      %v1399 = vpop.xlane.xlu0 %1398
      %v1400 = vrcp.pop %v1399
      %v1401 = vmul.f32 %v1396, %v1400
      %v1402 = vpack.c.bf16 %v1401, %v1401
      %1403 = vrot.lane.b32.xlu0 %v1011, 104
      %v1404 = vpop.permute.xlu0 %1403
      %v1406 = vsel %vm1012, %v1402, 0
      %v1409 = vsel %vm1074, %v1404, 0
      %1411 = vmatprep.subr.bf16.mxu0 0
      %1412 = vmatpush1.bf16.msra.mxu0 %v1409
      %1413 = vmatprep.subr.bf16.mxu0 0
      %1414 = vmatpush1.bf16.msra.mxu0 0
      %1415 = vmatprep.subr.bf16.mxu0 0
      %1416 = vmatpush1.bf16.msra.mxu0 0
      %1417 = vmatprep.subr.bf16.mxu0 0
      %1418 = vmatpush1.bf16.msra.mxu0 0
      %1419 = vmatprep.subr.bf16.mxu0 0
      %1420 = vmatpush1.bf16.msra.mxu0 0
      %1421 = vmatprep.subr.bf16.mxu0 0
      %1422 = vmatpush1.bf16.msra.mxu0 0
      %1423 = vmatprep.subr.bf16.mxu0 0
      %1424 = vmatpush1.bf16.msra.mxu0 0
      %1425 = vmatprep.subr.bf16.mxu0 0
      %1426 = vmatpush1.bf16.msra.mxu0 0
      %1427 = vmatprep.subr.bf16.mxu0 0
      %1428 = vmatpush1.bf16.msra.mxu0 0
      %1429 = vmatprep.subr.bf16.mxu0 0
      %1430 = vmatpush1.bf16.msra.mxu0 0
      %1431 = vmatprep.subr.bf16.mxu0 0
      %1432 = vmatpush1.bf16.msra.mxu0 0
      %1433 = vmatprep.subr.bf16.mxu0 0
      %1434 = vmatpush1.bf16.msra.mxu0 0
      %1435 = vmatprep.subr.bf16.mxu0 0
      %1436 = vmatpush1.bf16.msra.mxu0 0
      %1437 = vmatprep.subr.bf16.mxu0 0
      %1438 = vmatpush1.bf16.msra.mxu0 0
      %1439 = vmatprep.subr.bf16.mxu0 0
      %1440 = vmatpush1.bf16.msra.mxu0 0
      %1441 = vmatprep.subr.bf16.mxu0 0
      %1442 = vmatpush1.bf16.msra.mxu0 0
      %1443 = vmatprep.mubr.bf16.mxu0 0
      %1444 = vmatmul.mubr.bf16.gmra.mrb[0].mxu0 %v1406
      %v1445 = vpop.f32.mrb[0].mxu0
      %v1446 = vadd.f32 0.0, %v1445
      %v1447 = vpop.f32.mrb[0].mxu0
      %v1448 = vpop.f32.mrb[0].mxu0
      %v1449 = vpop.f32.mrb[0].mxu0
      %1450 = vdwg.mxu0
      %1452 = vrot.lane.b32.xlu0 %v1226, 8
      %v1453 = vpop.permute.xlu0 %1452
      %1456 = vrot.lane.b32.xlu0 %v1336, 16
      %v1457 = vpop.permute.xlu0 %1456
      %1460 = vrot.lane.b32.xlu0 %v1446, 24
      %v1461 = vpop.permute.xlu0 %1460
      %v1463 = vsel %vm1012, %v1113, %v1453
      %vm1464 = vcmask 130048
      %v1465 = vsel %vm1464, %v1463, %v1457
      %vm1466 = vcmask 195584
      %v1467 = vsel %vm1466, %v1465, %v1461
      %v1468 = vpack.c.bf16 %v1467, %v1467
      %v1470 = vlaneseq
      %v1471 = vshrl.u32 %v1470, 7
      %v1472 = vsub.s32 0, %v1471
      %v1473 = vrot.slane %v848, %v1472
      %v1479 = vunpack.c.l.b16 %v844
      %v1480 = vunpack.c.l.b16 %v845
      %v1481 = vunpack.c.l.b16 %v846
      %v1482 = vunpack.c.l.b16 %v847
      %v1483 = vpack.c.b16 %v1480, %v1479
      %v1484 = vpack.c.b16 %v1482, %v1481
      %v1488 = vsel %vm802, %v1468, 0
      %1490 = vmatprep.subr.bf16.mxu0 0
      %1491 = vmatpush1.bf16.msra.mxu0 %v1483
      %1492 = vmatprep.subr.bf16.mxu0 0
      %1493 = vmatpush1.bf16.msra.mxu0 %v1484
      %1494 = vmatprep.subr.bf16.mxu0 0
      %1495 = vmatpush1.bf16.msra.mxu0 0
      %1496 = vmatprep.subr.bf16.mxu0 0
      %1497 = vmatpush1.bf16.msra.mxu0 0
      %1498 = vmatprep.subr.bf16.mxu0 0
      %1499 = vmatpush1.bf16.msra.mxu0 0
      %1500 = vmatprep.subr.bf16.mxu0 0
      %1501 = vmatpush1.bf16.msra.mxu0 0
      %1502 = vmatprep.subr.bf16.mxu0 0
      %1503 = vmatpush1.bf16.msra.mxu0 0
      %1504 = vmatprep.subr.bf16.mxu0 0
      %1505 = vmatpush1.bf16.msra.mxu0 0
      %1506 = vmatprep.subr.bf16.mxu0 0
      %1507 = vmatpush1.bf16.msra.mxu0 0
      %1508 = vmatprep.subr.bf16.mxu0 0
      %1509 = vmatpush1.bf16.msra.mxu0 0
      %1510 = vmatprep.subr.bf16.mxu0 0
      %1511 = vmatpush1.bf16.msra.mxu0 0
      %1512 = vmatprep.subr.bf16.mxu0 0
      %1513 = vmatpush1.bf16.msra.mxu0 0
      %1514 = vmatprep.subr.bf16.mxu0 0
      %1515 = vmatpush1.bf16.msra.mxu0 0
      %1516 = vmatprep.subr.bf16.mxu0 0
      %1517 = vmatpush1.bf16.msra.mxu0 0
      %1518 = vmatprep.subr.bf16.mxu0 0
      %1519 = vmatpush1.bf16.msra.mxu0 0
      %1520 = vmatprep.subr.bf16.mxu0 0
      %1521 = vmatpush1.bf16.msra.mxu0 0
      %1522 = vmatprep.mubr.bf16.mxu0 0
      %1523 = vmatmul.mubr.bf16.gmra.mrb[0].mxu0 %v1488
      %v1524 = vpop.f32.mrb[0].mxu0
      %v1525 = vadd.f32 %v1473, %v1524
      %v1526 = vpop.f32.mrb[0].mxu0
      %v1527 = vpop.f32.mrb[0].mxu0
      %v1528 = vpop.f32.mrb[0].mxu0
      %1529 = vdwg.mxu0
      %v1530 = vadd.f32 %v780, %v1525
      %v1531 = vld [vmem:[%s11] sm:$0x1]
      %v1532 = vld [vmem:[%s12] sm:$0x1]
      %v1533 = vsel %vm802, %v1530, 0.0
      %1534 = vadd.xlane.f32.xlu0 %v1533
      %v1535 = vpop.xlane.xlu0 %1534
      %v1536 = vmul.f32 %v1535, %v806
      %v1537 = vsub.f32 %v1530, %v1536
      %v1538 = vmul.f32 %v1537, %v1537
      %v1539 = vsel %vm802, %v1538, 0.0
      %1540 = vadd.xlane.f32.xlu0 %v1539
      %v1541 = vpop.xlane.xlu0 %1540
      %v1542 = vmul.f32 %v1541, %v806
      %v1543 = vadd.f32 %v1542, 1e-05
      %v1544 = vrsqrt.pop %v1543
      %v1545 = vmul.f32 %v1537, %v1544
      %v1547 = vlaneseq
      %v1548 = vshrl.u32 %v1547, 7
      %v1549 = vsub.s32 0, %v1548
      %v1550 = vrot.slane %v1531, %v1549
      %v1552 = vmul.f32 %v1545, %v1550
      %v1554 = vlaneseq
      %v1555 = vshrl.u32 %v1554, 7
      %v1556 = vsub.s32 0, %v1555
      %v1557 = vrot.slane %v1532, %v1556
      %v1559 = vadd.f32 %v1552, %v1557
      %v1560 = vpack.c.bf16 %v1559, %v1559
      %v1561 = vld [vmem:[%s13] sm:$0xf]
      %v1562 = vld [vmem:[%s13 + $0x4] sm:$0xf]
      %v1563 = vld [vmem:[%s13 + $0x8] sm:$0xf]
      %v1564 = vld [vmem:[%s13 + $0xc] sm:$0xf]
      %v1565 = vld [vmem:[%s14] sm:$0xf]
      %v1566 = vld [vmem:[%s14 + $0x4] sm:$0xf]
      %v1567 = vld [vmem:[%s14 + $0x8] sm:$0xf]
      %v1568 = vld [vmem:[%s14 + $0xc] sm:$0xf]
      %v1569 = vld [vmem:[%s15] sm:$0xf]
      %v1570 = vld [vmem:[%s15 + $0x4] sm:$0xf]
      %v1571 = vld [vmem:[%s15 + $0x8] sm:$0xf]
      %v1572 = vld [vmem:[%s15 + $0xc] sm:$0xf]
      %v1573 = vld [vmem:[%s16] sm:$0xf]
      %v1574 = vld [vmem:[%s16 + $0x4] sm:$0xf]
      %v1575 = vld [vmem:[%s16 + $0x8] sm:$0xf]
      %v1576 = vld [vmem:[%s16 + $0xc] sm:$0xf]
      %v1577 = vld [vmem:[%s17] sm:$0x1]
      %v1582 = vunpack.c.l.b16 %v1561
      %v1583 = vunpack.c.l.b16 %v1562
      %v1584 = vunpack.c.l.b16 %v1563
      %v1585 = vunpack.c.l.b16 %v1564
      %v1586 = vpack.c.b16 %v1583, %v1582
      %v1587 = vpack.c.b16 %v1585, %v1584
      %v1591 = vsel %vm802, %v1560, 0
      %1593 = vmatprep.subr.bf16.mxu0 0
      %1594 = vmatpush1.bf16.msra.mxu0 %v1586
      %1595 = vmatprep.subr.bf16.mxu0 0
      %1596 = vmatpush1.bf16.msra.mxu0 %v1587
      %1597 = vmatprep.subr.bf16.mxu0 0
      %1598 = vmatpush1.bf16.msra.mxu0 0
      %1599 = vmatprep.subr.bf16.mxu0 0
      %1600 = vmatpush1.bf16.msra.mxu0 0
      %1601 = vmatprep.subr.bf16.mxu0 0
      %1602 = vmatpush1.bf16.msra.mxu0 0
      %1603 = vmatprep.subr.bf16.mxu0 0
      %1604 = vmatpush1.bf16.msra.mxu0 0
      %1605 = vmatprep.subr.bf16.mxu0 0
      %1606 = vmatpush1.bf16.msra.mxu0 0
      %1607 = vmatprep.subr.bf16.mxu0 0
      %1608 = vmatpush1.bf16.msra.mxu0 0
      %1609 = vmatprep.subr.bf16.mxu0 0
      %1610 = vmatpush1.bf16.msra.mxu0 0
      %1611 = vmatprep.subr.bf16.mxu0 0
      %1612 = vmatpush1.bf16.msra.mxu0 0
      %1613 = vmatprep.subr.bf16.mxu0 0
      %1614 = vmatpush1.bf16.msra.mxu0 0
      %1615 = vmatprep.subr.bf16.mxu0 0
      %1616 = vmatpush1.bf16.msra.mxu0 0
      %1617 = vmatprep.subr.bf16.mxu0 0
      %1618 = vmatpush1.bf16.msra.mxu0 0
      %1619 = vmatprep.subr.bf16.mxu0 0
      %1620 = vmatpush1.bf16.msra.mxu0 0
      %1621 = vmatprep.subr.bf16.mxu0 0
      %1622 = vmatpush1.bf16.msra.mxu0 0
      %1623 = vmatprep.subr.bf16.mxu0 0
      %1624 = vmatpush1.bf16.msra.mxu0 0
      %1625 = vmatprep.mubr.bf16.mxu0 0
      %1626 = vmatmul.mubr.bf16.gmra.mrb[0].mxu0 %v1591
      %v1627 = vpop.f32.mrb[0].mxu0
      %v1628 = vadd.f32 0.0, %v1627
      %v1629 = vpop.f32.mrb[0].mxu0
      %v1630 = vpop.f32.mrb[0].mxu0
      %v1631 = vpop.f32.mrb[0].mxu0
      %1632 = vdwg.mxu0
      %v1633 = vmul.f32 %v1628, 0.35355338
      %v1634 = vpack.c.bf16 %v1633, %v1633
      %v1639 = vunpack.c.l.b16 %v1565
      %v1640 = vunpack.c.l.b16 %v1566
      %v1641 = vunpack.c.l.b16 %v1567
      %v1642 = vunpack.c.l.b16 %v1568
      %v1643 = vpack.c.b16 %v1640, %v1639
      %v1644 = vpack.c.b16 %v1642, %v1641
      %v1648 = vsel %vm802, %v781, 0
      %1650 = vmatprep.subr.bf16.mxu0 0
      %1651 = vmatpush1.bf16.msra.mxu0 %v1643
      %1652 = vmatprep.subr.bf16.mxu0 0
      %1653 = vmatpush1.bf16.msra.mxu0 %v1644
      %1654 = vmatprep.subr.bf16.mxu0 0
      %1655 = vmatpush1.bf16.msra.mxu0 0
      %1656 = vmatprep.subr.bf16.mxu0 0
      %1657 = vmatpush1.bf16.msra.mxu0 0
      %1658 = vmatprep.subr.bf16.mxu0 0
      %1659 = vmatpush1.bf16.msra.mxu0 0
      %1660 = vmatprep.subr.bf16.mxu0 0
      %1661 = vmatpush1.bf16.msra.mxu0 0
      %1662 = vmatprep.subr.bf16.mxu0 0
      %1663 = vmatpush1.bf16.msra.mxu0 0
      %1664 = vmatprep.subr.bf16.mxu0 0
      %1665 = vmatpush1.bf16.msra.mxu0 0
      %1666 = vmatprep.subr.bf16.mxu0 0
      %1667 = vmatpush1.bf16.msra.mxu0 0
      %1668 = vmatprep.subr.bf16.mxu0 0
      %1669 = vmatpush1.bf16.msra.mxu0 0
      %1670 = vmatprep.subr.bf16.mxu0 0
      %1671 = vmatpush1.bf16.msra.mxu0 0
      %1672 = vmatprep.subr.bf16.mxu0 0
      %1673 = vmatpush1.bf16.msra.mxu0 0
      %1674 = vmatprep.subr.bf16.mxu0 0
      %1675 = vmatpush1.bf16.msra.mxu0 0
      %1676 = vmatprep.subr.bf16.mxu0 0
      %1677 = vmatpush1.bf16.msra.mxu0 0
      %1678 = vmatprep.subr.bf16.mxu0 0
      %1679 = vmatpush1.bf16.msra.mxu0 0
      %1680 = vmatprep.subr.bf16.mxu0 0
      %1681 = vmatpush1.bf16.msra.mxu0 0
      %1682 = vmatprep.mubr.bf16.mxu0 0
      %1683 = vmatmul.mubr.bf16.gmra.mrb[0].mxu0 %v1648
      %v1684 = vpop.f32.mrb[0].mxu0
      %v1685 = vadd.f32 0.0, %v1684
      %v1686 = vpop.f32.mrb[0].mxu0
      %v1687 = vpop.f32.mrb[0].mxu0
      %v1688 = vpop.f32.mrb[0].mxu0
      %1689 = vdwg.mxu0
      %v1690 = vpack.c.bf16 %v1685, %v1685
      %v1695 = vunpack.c.l.b16 %v1569
      %v1696 = vunpack.c.l.b16 %v1570
      %v1697 = vunpack.c.l.b16 %v1571
      %v1698 = vunpack.c.l.b16 %v1572
      %v1699 = vpack.c.b16 %v1696, %v1695
      %v1700 = vpack.c.b16 %v1698, %v1697
      %1703 = vmatprep.subr.bf16.mxu0 0
      %1704 = vmatpush1.bf16.msra.mxu0 %v1699
      %1705 = vmatprep.subr.bf16.mxu0 0
      %1706 = vmatpush1.bf16.msra.mxu0 %v1700
      %1707 = vmatprep.subr.bf16.mxu0 0
      %1708 = vmatpush1.bf16.msra.mxu0 0
      %1709 = vmatprep.subr.bf16.mxu0 0
      %1710 = vmatpush1.bf16.msra.mxu0 0
      %1711 = vmatprep.subr.bf16.mxu0 0
      %1712 = vmatpush1.bf16.msra.mxu0 0
      %1713 = vmatprep.subr.bf16.mxu0 0
      %1714 = vmatpush1.bf16.msra.mxu0 0
      %1715 = vmatprep.subr.bf16.mxu0 0
      %1716 = vmatpush1.bf16.msra.mxu0 0
      %1717 = vmatprep.subr.bf16.mxu0 0
      %1718 = vmatpush1.bf16.msra.mxu0 0
      %1719 = vmatprep.subr.bf16.mxu0 0
      %1720 = vmatpush1.bf16.msra.mxu0 0
      %1721 = vmatprep.subr.bf16.mxu0 0
      %1722 = vmatpush1.bf16.msra.mxu0 0
      %1723 = vmatprep.subr.bf16.mxu0 0
      %1724 = vmatpush1.bf16.msra.mxu0 0
      %1725 = vmatprep.subr.bf16.mxu0 0
      %1726 = vmatpush1.bf16.msra.mxu0 0
      %1727 = vmatprep.subr.bf16.mxu0 0
      %1728 = vmatpush1.bf16.msra.mxu0 0
      %1729 = vmatprep.subr.bf16.mxu0 0
      %1730 = vmatpush1.bf16.msra.mxu0 0
      %1731 = vmatprep.subr.bf16.mxu0 0
      %1732 = vmatpush1.bf16.msra.mxu0 0
      %1733 = vmatprep.subr.bf16.mxu0 0
      %1734 = vmatpush1.bf16.msra.mxu0 0
      %1735 = vmatprep.mubr.bf16.mxu0 0
      %1736 = vmatmul.mubr.bf16.gmra.mrb[0].mxu0 %v1648
      %v1737 = vpop.f32.mrb[0].mxu0
      %v1738 = vadd.f32 0.0, %v1737
      %v1739 = vpop.f32.mrb[0].mxu0
      %v1740 = vpop.f32.mrb[0].mxu0
      %v1741 = vpop.f32.mrb[0].mxu0
      %1742 = vdwg.mxu0
      %v1743 = vpack.c.bf16 %v1738, %v1738
      %v1745 = vlaneseq
      %v1746 = vshrl.u32 %v1745, 7
      %v1747 = vsub.s32 0, %v1746
      %v1748 = vrot.slane %v799, %v1747
      %v1751 = vsel %vm1012, %v1634, 0
      %v1754 = vsel %vm1012, %v1690, 0
      %1756 = vmatprep.subr.bf16.mxu0 0
      %1757 = vmatpush1.bf16.xpose.msra.mxu0 %v1754
      %1758 = vmatprep.subr.bf16.mxu0 0
      %1759 = vmatpush1.bf16.xpose.msra.mxu0 0
      %1760 = vmatprep.subr.bf16.mxu0 0
      %1761 = vmatpush1.bf16.xpose.msra.mxu0 0
      %1762 = vmatprep.subr.bf16.mxu0 0
      %1763 = vmatpush1.bf16.xpose.msra.mxu0 0
      %1764 = vmatprep.subr.bf16.mxu0 0
      %1765 = vmatpush1.bf16.xpose.msra.mxu0 0
      %1766 = vmatprep.subr.bf16.mxu0 0
      %1767 = vmatpush1.bf16.xpose.msra.mxu0 0
      %1768 = vmatprep.subr.bf16.mxu0 0
      %1769 = vmatpush1.bf16.xpose.msra.mxu0 0
      %1770 = vmatprep.subr.bf16.mxu0 0
      %1771 = vmatpush1.bf16.xpose.msra.mxu0 0
      %1772 = vmatprep.subr.bf16.mxu0 0
      %1773 = vmatpush1.bf16.xpose.msra.mxu0 0
      %1774 = vmatprep.subr.bf16.mxu0 0
      %1775 = vmatpush1.bf16.xpose.msra.mxu0 0
      %1776 = vmatprep.subr.bf16.mxu0 0
      %1777 = vmatpush1.bf16.xpose.msra.mxu0 0
      %1778 = vmatprep.subr.bf16.mxu0 0
      %1779 = vmatpush1.bf16.xpose.msra.mxu0 0
      %1780 = vmatprep.subr.bf16.mxu0 0
      %1781 = vmatpush1.bf16.xpose.msra.mxu0 0
      %1782 = vmatprep.subr.bf16.mxu0 0
      %1783 = vmatpush1.bf16.xpose.msra.mxu0 0
      %1784 = vmatprep.subr.bf16.mxu0 0
      %1785 = vmatpush1.bf16.xpose.msra.mxu0 0
      %1786 = vmatprep.subr.bf16.mxu0 0
      %1787 = vmatpush1.bf16.xpose.msra.mxu0 0
      %1788 = vmatprep.mubr.bf16.mxu0 0
      %1789 = vmatmul.mubr.bf16.gmra.mrb[0].mxu0 %v1751
      %v1790 = vpop.f32.mrb[0].mxu0
      %v1791 = vadd.f32 %v1748, %v1790
      %v1792 = vpop.f32.mrb[0].mxu0
      %v1793 = vpop.f32.mrb[0].mxu0
      %v1794 = vpop.f32.mrb[0].mxu0
      %1795 = vdwg.mxu0
      %v1796 = vsel %vm1012, %v1791, -inf
      %1797 = vmax.xlane.f32.xlu0 %v1796
      %v1798 = vpop.xlane.xlu0 %1797
      %v1799 = vsub.f32 %v1791, %v1798
      %v1800 = vmul.f32 %v1799, 1.442695
      %v1801 = vpow.pop %v1800
      %v1802 = vsel %vm1012, %v1801, 0.0
      %1803 = vadd.xlane.f32.xlu0 %v1802
      %v1804 = vpop.xlane.xlu0 %1803
      %v1805 = vrcp.pop %v1804
      %v1806 = vmul.f32 %v1801, %v1805
      %v1807 = vpack.c.bf16 %v1806, %v1806
      %v1809 = vsel %vm1012, %v1807, 0
      %v1812 = vsel %vm1074, %v1743, 0
      %1814 = vmatprep.subr.bf16.mxu0 0
      %1815 = vmatpush1.bf16.msra.mxu0 %v1812
      %1816 = vmatprep.subr.bf16.mxu0 0
      %1817 = vmatpush1.bf16.msra.mxu0 0
      %1818 = vmatprep.subr.bf16.mxu0 0
      %1819 = vmatpush1.bf16.msra.mxu0 0
      %1820 = vmatprep.subr.bf16.mxu0 0
      %1821 = vmatpush1.bf16.msra.mxu0 0
      %1822 = vmatprep.subr.bf16.mxu0 0
      %1823 = vmatpush1.bf16.msra.mxu0 0
      %1824 = vmatprep.subr.bf16.mxu0 0
      %1825 = vmatpush1.bf16.msra.mxu0 0
      %1826 = vmatprep.subr.bf16.mxu0 0
      %1827 = vmatpush1.bf16.msra.mxu0 0
      %1828 = vmatprep.subr.bf16.mxu0 0
      %1829 = vmatpush1.bf16.msra.mxu0 0
      %1830 = vmatprep.subr.bf16.mxu0 0
      %1831 = vmatpush1.bf16.msra.mxu0 0
      %1832 = vmatprep.subr.bf16.mxu0 0
      %1833 = vmatpush1.bf16.msra.mxu0 0
      %1834 = vmatprep.subr.bf16.mxu0 0
      %1835 = vmatpush1.bf16.msra.mxu0 0
      %1836 = vmatprep.subr.bf16.mxu0 0
      %1837 = vmatpush1.bf16.msra.mxu0 0
      %1838 = vmatprep.subr.bf16.mxu0 0
      %1839 = vmatpush1.bf16.msra.mxu0 0
      %1840 = vmatprep.subr.bf16.mxu0 0
      %1841 = vmatpush1.bf16.msra.mxu0 0
      %1842 = vmatprep.subr.bf16.mxu0 0
      %1843 = vmatpush1.bf16.msra.mxu0 0
      %1844 = vmatprep.subr.bf16.mxu0 0
      %1845 = vmatpush1.bf16.msra.mxu0 0
      %1846 = vmatprep.mubr.bf16.mxu0 0
      %1847 = vmatmul.mubr.bf16.gmra.mrb[0].mxu0 %v1809
      %v1848 = vpop.f32.mrb[0].mxu0
      %v1849 = vadd.f32 0.0, %v1848
      %v1850 = vpop.f32.mrb[0].mxu0
      %v1851 = vpop.f32.mrb[0].mxu0
      %v1852 = vpop.f32.mrb[0].mxu0
      %1853 = vdwg.mxu0
      %1855 = vrot.lane.b32.xlu0 %v1634, 120
      %v1856 = vpop.permute.xlu0 %1855
      %1858 = vrot.lane.b32.xlu0 %v1690, 120
      %v1859 = vpop.permute.xlu0 %1858
      %v1861 = vsel %vm1012, %v1856, 0
      %v1864 = vsel %vm1012, %v1859, 0
      %1866 = vmatprep.subr.bf16.mxu0 0
      %1867 = vmatpush1.bf16.xpose.msra.mxu0 %v1864
      %1868 = vmatprep.subr.bf16.mxu0 0
      %1869 = vmatpush1.bf16.xpose.msra.mxu0 0
      %1870 = vmatprep.subr.bf16.mxu0 0
      %1871 = vmatpush1.bf16.xpose.msra.mxu0 0
      %1872 = vmatprep.subr.bf16.mxu0 0
      %1873 = vmatpush1.bf16.xpose.msra.mxu0 0
      %1874 = vmatprep.subr.bf16.mxu0 0
      %1875 = vmatpush1.bf16.xpose.msra.mxu0 0
      %1876 = vmatprep.subr.bf16.mxu0 0
      %1877 = vmatpush1.bf16.xpose.msra.mxu0 0
      %1878 = vmatprep.subr.bf16.mxu0 0
      %1879 = vmatpush1.bf16.xpose.msra.mxu0 0
      %1880 = vmatprep.subr.bf16.mxu0 0
      %1881 = vmatpush1.bf16.xpose.msra.mxu0 0
      %1882 = vmatprep.subr.bf16.mxu0 0
      %1883 = vmatpush1.bf16.xpose.msra.mxu0 0
      %1884 = vmatprep.subr.bf16.mxu0 0
      %1885 = vmatpush1.bf16.xpose.msra.mxu0 0
      %1886 = vmatprep.subr.bf16.mxu0 0
      %1887 = vmatpush1.bf16.xpose.msra.mxu0 0
      %1888 = vmatprep.subr.bf16.mxu0 0
      %1889 = vmatpush1.bf16.xpose.msra.mxu0 0
      %1890 = vmatprep.subr.bf16.mxu0 0
      %1891 = vmatpush1.bf16.xpose.msra.mxu0 0
      %1892 = vmatprep.subr.bf16.mxu0 0
      %1893 = vmatpush1.bf16.xpose.msra.mxu0 0
      %1894 = vmatprep.subr.bf16.mxu0 0
      %1895 = vmatpush1.bf16.xpose.msra.mxu0 0
      %1896 = vmatprep.subr.bf16.mxu0 0
      %1897 = vmatpush1.bf16.xpose.msra.mxu0 0
      %1898 = vmatprep.mubr.bf16.mxu0 0
      %1899 = vmatmul.mubr.bf16.gmra.mrb[0].mxu0 %v1861
      %v1900 = vpop.f32.mrb[0].mxu0
      %v1901 = vadd.f32 %v1748, %v1900
      %v1902 = vpop.f32.mrb[0].mxu0
      %v1903 = vpop.f32.mrb[0].mxu0
      %v1904 = vpop.f32.mrb[0].mxu0
      %1905 = vdwg.mxu0
      %v1906 = vsel %vm1012, %v1901, -inf
      %1907 = vmax.xlane.f32.xlu0 %v1906
      %v1908 = vpop.xlane.xlu0 %1907
      %v1909 = vsub.f32 %v1901, %v1908
      %v1910 = vmul.f32 %v1909, 1.442695
      %v1911 = vpow.pop %v1910
      %v1912 = vsel %vm1012, %v1911, 0.0
      %1913 = vadd.xlane.f32.xlu0 %v1912
      %v1914 = vpop.xlane.xlu0 %1913
      %v1915 = vrcp.pop %v1914
      %v1916 = vmul.f32 %v1911, %v1915
      %v1917 = vpack.c.bf16 %v1916, %v1916
      %1919 = vrot.lane.b32.xlu0 %v1743, 120
      %v1920 = vpop.permute.xlu0 %1919
      %v1922 = vsel %vm1012, %v1917, 0
      %v1925 = vsel %vm1074, %v1920, 0
      %1927 = vmatprep.subr.bf16.mxu0 0
      %1928 = vmatpush1.bf16.msra.mxu0 %v1925
      %1929 = vmatprep.subr.bf16.mxu0 0
      %1930 = vmatpush1.bf16.msra.mxu0 0
      %1931 = vmatprep.subr.bf16.mxu0 0
      %1932 = vmatpush1.bf16.msra.mxu0 0
      %1933 = vmatprep.subr.bf16.mxu0 0
      %1934 = vmatpush1.bf16.msra.mxu0 0
      %1935 = vmatprep.subr.bf16.mxu0 0
      %1936 = vmatpush1.bf16.msra.mxu0 0
      %1937 = vmatprep.subr.bf16.mxu0 0
      %1938 = vmatpush1.bf16.msra.mxu0 0
      %1939 = vmatprep.subr.bf16.mxu0 0
      %1940 = vmatpush1.bf16.msra.mxu0 0
      %1941 = vmatprep.subr.bf16.mxu0 0
      %1942 = vmatpush1.bf16.msra.mxu0 0
      %1943 = vmatprep.subr.bf16.mxu0 0
      %1944 = vmatpush1.bf16.msra.mxu0 0
      %1945 = vmatprep.subr.bf16.mxu0 0
      %1946 = vmatpush1.bf16.msra.mxu0 0
      %1947 = vmatprep.subr.bf16.mxu0 0
      %1948 = vmatpush1.bf16.msra.mxu0 0
      %1949 = vmatprep.subr.bf16.mxu0 0
      %1950 = vmatpush1.bf16.msra.mxu0 0
      %1951 = vmatprep.subr.bf16.mxu0 0
      %1952 = vmatpush1.bf16.msra.mxu0 0
      %1953 = vmatprep.subr.bf16.mxu0 0
      %1954 = vmatpush1.bf16.msra.mxu0 0
      %1955 = vmatprep.subr.bf16.mxu0 0
      %1956 = vmatpush1.bf16.msra.mxu0 0
      %1957 = vmatprep.subr.bf16.mxu0 0
      %1958 = vmatpush1.bf16.msra.mxu0 0
      %1959 = vmatprep.mubr.bf16.mxu0 0
      %1960 = vmatmul.mubr.bf16.gmra.mrb[0].mxu0 %v1922
      %v1961 = vpop.f32.mrb[0].mxu0
      %v1962 = vadd.f32 0.0, %v1961
      %v1963 = vpop.f32.mrb[0].mxu0
      %v1964 = vpop.f32.mrb[0].mxu0
      %v1965 = vpop.f32.mrb[0].mxu0
      %1966 = vdwg.mxu0
      %1967 = vrot.lane.b32.xlu0 %v1634, 112
      %v1968 = vpop.permute.xlu0 %1967
      %1969 = vrot.lane.b32.xlu0 %v1690, 112
      %v1970 = vpop.permute.xlu0 %1969
      %v1972 = vsel %vm1012, %v1968, 0
      %v1975 = vsel %vm1012, %v1970, 0
      %1977 = vmatprep.subr.bf16.mxu0 0
      %1978 = vmatpush1.bf16.xpose.msra.mxu0 %v1975
      %1979 = vmatprep.subr.bf16.mxu0 0
      %1980 = vmatpush1.bf16.xpose.msra.mxu0 0
      %1981 = vmatprep.subr.bf16.mxu0 0
      %1982 = vmatpush1.bf16.xpose.msra.mxu0 0
      %1983 = vmatprep.subr.bf16.mxu0 0
      %1984 = vmatpush1.bf16.xpose.msra.mxu0 0
      %1985 = vmatprep.subr.bf16.mxu0 0
      %1986 = vmatpush1.bf16.xpose.msra.mxu0 0
      %1987 = vmatprep.subr.bf16.mxu0 0
      %1988 = vmatpush1.bf16.xpose.msra.mxu0 0
      %1989 = vmatprep.subr.bf16.mxu0 0
      %1990 = vmatpush1.bf16.xpose.msra.mxu0 0
      %1991 = vmatprep.subr.bf16.mxu0 0
      %1992 = vmatpush1.bf16.xpose.msra.mxu0 0
      %1993 = vmatprep.subr.bf16.mxu0 0
      %1994 = vmatpush1.bf16.xpose.msra.mxu0 0
      %1995 = vmatprep.subr.bf16.mxu0 0
      %1996 = vmatpush1.bf16.xpose.msra.mxu0 0
      %1997 = vmatprep.subr.bf16.mxu0 0
      %1998 = vmatpush1.bf16.xpose.msra.mxu0 0
      %1999 = vmatprep.subr.bf16.mxu0 0
      %2000 = vmatpush1.bf16.xpose.msra.mxu0 0
      %2001 = vmatprep.subr.bf16.mxu0 0
      %2002 = vmatpush1.bf16.xpose.msra.mxu0 0
      %2003 = vmatprep.subr.bf16.mxu0 0
      %2004 = vmatpush1.bf16.xpose.msra.mxu0 0
      %2005 = vmatprep.subr.bf16.mxu0 0
      %2006 = vmatpush1.bf16.xpose.msra.mxu0 0
      %2007 = vmatprep.subr.bf16.mxu0 0
      %2008 = vmatpush1.bf16.xpose.msra.mxu0 0
      %2009 = vmatprep.mubr.bf16.mxu0 0
      %2010 = vmatmul.mubr.bf16.gmra.mrb[0].mxu0 %v1972
      %v2011 = vpop.f32.mrb[0].mxu0
      %v2012 = vadd.f32 %v1748, %v2011
      %v2013 = vpop.f32.mrb[0].mxu0
      %v2014 = vpop.f32.mrb[0].mxu0
      %v2015 = vpop.f32.mrb[0].mxu0
      %2016 = vdwg.mxu0
      %v2017 = vsel %vm1012, %v2012, -inf
      %2018 = vmax.xlane.f32.xlu0 %v2017
      %v2019 = vpop.xlane.xlu0 %2018
      %v2020 = vsub.f32 %v2012, %v2019
      %v2021 = vmul.f32 %v2020, 1.442695
      %v2022 = vpow.pop %v2021
      %v2023 = vsel %vm1012, %v2022, 0.0
      %2024 = vadd.xlane.f32.xlu0 %v2023
      %v2025 = vpop.xlane.xlu0 %2024
      %v2026 = vrcp.pop %v2025
      %v2027 = vmul.f32 %v2022, %v2026
      %v2028 = vpack.c.bf16 %v2027, %v2027
      %2029 = vrot.lane.b32.xlu0 %v1743, 112
      %v2030 = vpop.permute.xlu0 %2029
      %v2032 = vsel %vm1012, %v2028, 0
      %v2035 = vsel %vm1074, %v2030, 0
      %2037 = vmatprep.subr.bf16.mxu0 0
      %2038 = vmatpush1.bf16.msra.mxu0 %v2035
      %2039 = vmatprep.subr.bf16.mxu0 0
      %2040 = vmatpush1.bf16.msra.mxu0 0
      %2041 = vmatprep.subr.bf16.mxu0 0
      %2042 = vmatpush1.bf16.msra.mxu0 0
      %2043 = vmatprep.subr.bf16.mxu0 0
      %2044 = vmatpush1.bf16.msra.mxu0 0
      %2045 = vmatprep.subr.bf16.mxu0 0
      %2046 = vmatpush1.bf16.msra.mxu0 0
      %2047 = vmatprep.subr.bf16.mxu0 0
      %2048 = vmatpush1.bf16.msra.mxu0 0
      %2049 = vmatprep.subr.bf16.mxu0 0
      %2050 = vmatpush1.bf16.msra.mxu0 0
      %2051 = vmatprep.subr.bf16.mxu0 0
      %2052 = vmatpush1.bf16.msra.mxu0 0
      %2053 = vmatprep.subr.bf16.mxu0 0
      %2054 = vmatpush1.bf16.msra.mxu0 0
      %2055 = vmatprep.subr.bf16.mxu0 0
      %2056 = vmatpush1.bf16.msra.mxu0 0
      %2057 = vmatprep.subr.bf16.mxu0 0
      %2058 = vmatpush1.bf16.msra.mxu0 0
      %2059 = vmatprep.subr.bf16.mxu0 0
      %2060 = vmatpush1.bf16.msra.mxu0 0
      %2061 = vmatprep.subr.bf16.mxu0 0
      %2062 = vmatpush1.bf16.msra.mxu0 0
      %2063 = vmatprep.subr.bf16.mxu0 0
      %2064 = vmatpush1.bf16.msra.mxu0 0
      %2065 = vmatprep.subr.bf16.mxu0 0
      %2066 = vmatpush1.bf16.msra.mxu0 0
      %2067 = vmatprep.subr.bf16.mxu0 0
      %2068 = vmatpush1.bf16.msra.mxu0 0
      %2069 = vmatprep.mubr.bf16.mxu0 0
      %2070 = vmatmul.mubr.bf16.gmra.mrb[0].mxu0 %v2032
      %v2071 = vpop.f32.mrb[0].mxu0
      %v2072 = vadd.f32 0.0, %v2071
      %v2073 = vpop.f32.mrb[0].mxu0
      %v2074 = vpop.f32.mrb[0].mxu0
      %v2075 = vpop.f32.mrb[0].mxu0
      %2076 = vdwg.mxu0
      %2077 = vrot.lane.b32.xlu0 %v1634, 104
      %v2078 = vpop.permute.xlu0 %2077
      %2079 = vrot.lane.b32.xlu0 %v1690, 104
      %v2080 = vpop.permute.xlu0 %2079
      %v2082 = vsel %vm1012, %v2078, 0
      %v2085 = vsel %vm1012, %v2080, 0
      %2087 = vmatprep.subr.bf16.mxu0 0
      %2088 = vmatpush1.bf16.xpose.msra.mxu0 %v2085
      %2089 = vmatprep.subr.bf16.mxu0 0
      %2090 = vmatpush1.bf16.xpose.msra.mxu0 0
      %2091 = vmatprep.subr.bf16.mxu0 0
      %2092 = vmatpush1.bf16.xpose.msra.mxu0 0
      %2093 = vmatprep.subr.bf16.mxu0 0
      %2094 = vmatpush1.bf16.xpose.msra.mxu0 0
      %2095 = vmatprep.subr.bf16.mxu0 0
      %2096 = vmatpush1.bf16.xpose.msra.mxu0 0
      %2097 = vmatprep.subr.bf16.mxu0 0
      %2098 = vmatpush1.bf16.xpose.msra.mxu0 0
      %2099 = vmatprep.subr.bf16.mxu0 0
      %2100 = vmatpush1.bf16.xpose.msra.mxu0 0
      %2101 = vmatprep.subr.bf16.mxu0 0
      %2102 = vmatpush1.bf16.xpose.msra.mxu0 0
      %2103 = vmatprep.subr.bf16.mxu0 0
      %2104 = vmatpush1.bf16.xpose.msra.mxu0 0
      %2105 = vmatprep.subr.bf16.mxu0 0
      %2106 = vmatpush1.bf16.xpose.msra.mxu0 0
      %2107 = vmatprep.subr.bf16.mxu0 0
      %2108 = vmatpush1.bf16.xpose.msra.mxu0 0
      %2109 = vmatprep.subr.bf16.mxu0 0
      %2110 = vmatpush1.bf16.xpose.msra.mxu0 0
      %2111 = vmatprep.subr.bf16.mxu0 0
      %2112 = vmatpush1.bf16.xpose.msra.mxu0 0
      %2113 = vmatprep.subr.bf16.mxu0 0
      %2114 = vmatpush1.bf16.xpose.msra.mxu0 0
      %2115 = vmatprep.subr.bf16.mxu0 0
      %2116 = vmatpush1.bf16.xpose.msra.mxu0 0
      %2117 = vmatprep.subr.bf16.mxu0 0
      %2118 = vmatpush1.bf16.xpose.msra.mxu0 0
      %2119 = vmatprep.mubr.bf16.mxu0 0
      %2120 = vmatmul.mubr.bf16.gmra.mrb[0].mxu0 %v2082
      %v2121 = vpop.f32.mrb[0].mxu0
      %v2122 = vadd.f32 %v1748, %v2121
      %v2123 = vpop.f32.mrb[0].mxu0
      %v2124 = vpop.f32.mrb[0].mxu0
      %v2125 = vpop.f32.mrb[0].mxu0
      %2126 = vdwg.mxu0
      %v2127 = vsel %vm1012, %v2122, -inf
      %2128 = vmax.xlane.f32.xlu0 %v2127
      %v2129 = vpop.xlane.xlu0 %2128
      %v2130 = vsub.f32 %v2122, %v2129
      %v2131 = vmul.f32 %v2130, 1.442695
      %v2132 = vpow.pop %v2131
      %v2133 = vsel %vm1012, %v2132, 0.0
      %2134 = vadd.xlane.f32.xlu0 %v2133
      %v2135 = vpop.xlane.xlu0 %2134
      %v2136 = vrcp.pop %v2135
      %v2137 = vmul.f32 %v2132, %v2136
      %v2138 = vpack.c.bf16 %v2137, %v2137
      %2139 = vrot.lane.b32.xlu0 %v1743, 104
      %v2140 = vpop.permute.xlu0 %2139
      %v2142 = vsel %vm1012, %v2138, 0
      %v2145 = vsel %vm1074, %v2140, 0
      %2147 = vmatprep.subr.bf16.mxu0 0
      %2148 = vmatpush1.bf16.msra.mxu0 %v2145
      %2149 = vmatprep.subr.bf16.mxu0 0
      %2150 = vmatpush1.bf16.msra.mxu0 0
      %2151 = vmatprep.subr.bf16.mxu0 0
      %2152 = vmatpush1.bf16.msra.mxu0 0
      %2153 = vmatprep.subr.bf16.mxu0 0
      %2154 = vmatpush1.bf16.msra.mxu0 0
      %2155 = vmatprep.subr.bf16.mxu0 0
      %2156 = vmatpush1.bf16.msra.mxu0 0
      %2157 = vmatprep.subr.bf16.mxu0 0
      %2158 = vmatpush1.bf16.msra.mxu0 0
      %2159 = vmatprep.subr.bf16.mxu0 0
      %2160 = vmatpush1.bf16.msra.mxu0 0
      %2161 = vmatprep.subr.bf16.mxu0 0
      %2162 = vmatpush1.bf16.msra.mxu0 0
      %2163 = vmatprep.subr.bf16.mxu0 0
      %2164 = vmatpush1.bf16.msra.mxu0 0
      %2165 = vmatprep.subr.bf16.mxu0 0
      %2166 = vmatpush1.bf16.msra.mxu0 0
      %2167 = vmatprep.subr.bf16.mxu0 0
      %2168 = vmatpush1.bf16.msra.mxu0 0
      %2169 = vmatprep.subr.bf16.mxu0 0
      %2170 = vmatpush1.bf16.msra.mxu0 0
      %2171 = vmatprep.subr.bf16.mxu0 0
      %2172 = vmatpush1.bf16.msra.mxu0 0
      %2173 = vmatprep.subr.bf16.mxu0 0
      %2174 = vmatpush1.bf16.msra.mxu0 0
      %2175 = vmatprep.subr.bf16.mxu0 0
      %2176 = vmatpush1.bf16.msra.mxu0 0
      %2177 = vmatprep.subr.bf16.mxu0 0
      %2178 = vmatpush1.bf16.msra.mxu0 0
      %2179 = vmatprep.mubr.bf16.mxu0 0
      %2180 = vmatmul.mubr.bf16.gmra.mrb[0].mxu0 %v2142
      %v2181 = vpop.f32.mrb[0].mxu0
      %v2182 = vadd.f32 0.0, %v2181
      %v2183 = vpop.f32.mrb[0].mxu0
      %v2184 = vpop.f32.mrb[0].mxu0
      %v2185 = vpop.f32.mrb[0].mxu0
      %2186 = vdwg.mxu0
      %2188 = vrot.lane.b32.xlu0 %v1962, 8
      %v2189 = vpop.permute.xlu0 %2188
      %2192 = vrot.lane.b32.xlu0 %v2072, 16
      %v2193 = vpop.permute.xlu0 %2192
      %2196 = vrot.lane.b32.xlu0 %v2182, 24
      %v2197 = vpop.permute.xlu0 %2196
      %v2199 = vsel %vm1012, %v1849, %v2189
      %v2200 = vsel %vm1464, %v2199, %v2193
      %v2201 = vsel %vm1466, %v2200, %v2197
      %v2202 = vpack.c.bf16 %v2201, %v2201
      %v2204 = vlaneseq
      %v2205 = vshrl.u32 %v2204, 7
      %v2206 = vsub.s32 0, %v2205
      %v2207 = vrot.slane %v1577, %v2206
      %v2213 = vunpack.c.l.b16 %v1573
      %v2214 = vunpack.c.l.b16 %v1574
      %v2215 = vunpack.c.l.b16 %v1575
      %v2216 = vunpack.c.l.b16 %v1576
      %v2217 = vpack.c.b16 %v2214, %v2213
      %v2218 = vpack.c.b16 %v2216, %v2215
      %v2222 = vsel %vm802, %v2202, 0
      %2224 = vmatprep.subr.bf16.mxu0 0
      %2225 = vmatpush1.bf16.msra.mxu0 %v2217
      %2226 = vmatprep.subr.bf16.mxu0 0
      %2227 = vmatpush1.bf16.msra.mxu0 %v2218
      %2228 = vmatprep.subr.bf16.mxu0 0
      %2229 = vmatpush1.bf16.msra.mxu0 0
      %2230 = vmatprep.subr.bf16.mxu0 0
      %2231 = vmatpush1.bf16.msra.mxu0 0
      %2232 = vmatprep.subr.bf16.mxu0 0
      %2233 = vmatpush1.bf16.msra.mxu0 0
      %2234 = vmatprep.subr.bf16.mxu0 0
      %2235 = vmatpush1.bf16.msra.mxu0 0
      %2236 = vmatprep.subr.bf16.mxu0 0
      %2237 = vmatpush1.bf16.msra.mxu0 0
      %2238 = vmatprep.subr.bf16.mxu0 0
      %2239 = vmatpush1.bf16.msra.mxu0 0
      %2240 = vmatprep.subr.bf16.mxu0 0
      %2241 = vmatpush1.bf16.msra.mxu0 0
      %2242 = vmatprep.subr.bf16.mxu0 0
      %2243 = vmatpush1.bf16.msra.mxu0 0
      %2244 = vmatprep.subr.bf16.mxu0 0
      %2245 = vmatpush1.bf16.msra.mxu0 0
      %2246 = vmatprep.subr.bf16.mxu0 0
      %2247 = vmatpush1.bf16.msra.mxu0 0
      %2248 = vmatprep.subr.bf16.mxu0 0
      %2249 = vmatpush1.bf16.msra.mxu0 0
      %2250 = vmatprep.subr.bf16.mxu0 0
      %2251 = vmatpush1.bf16.msra.mxu0 0
      %2252 = vmatprep.subr.bf16.mxu0 0
      %2253 = vmatpush1.bf16.msra.mxu0 0
      %2254 = vmatprep.subr.bf16.mxu0 0
      %2255 = vmatpush1.bf16.msra.mxu0 0
      %2256 = vmatprep.mubr.bf16.mxu0 0
      %2257 = vmatmul.mubr.bf16.gmra.mrb[0].mxu0 %v2222
      %v2258 = vpop.f32.mrb[0].mxu0
      %v2259 = vadd.f32 %v2207, %v2258
      %v2260 = vpop.f32.mrb[0].mxu0
      %v2261 = vpop.f32.mrb[0].mxu0
      %v2262 = vpop.f32.mrb[0].mxu0
      %2263 = vdwg.mxu0
      %v2264 = vadd.f32 %v1530, %v2259
      %v2265 = vld [vmem:[%s18] sm:$0x1]
      %v2266 = vld [vmem:[%s19] sm:$0x1]
      %v2267 = vsel %vm802, %v2264, 0.0
      %2268 = vadd.xlane.f32.xlu0 %v2267
      %v2269 = vpop.xlane.xlu0 %2268
      %v2270 = vmul.f32 %v2269, %v806
      %v2271 = vsub.f32 %v2264, %v2270
      %v2272 = vmul.f32 %v2271, %v2271
      %v2273 = vsel %vm802, %v2272, 0.0
      %2274 = vadd.xlane.f32.xlu0 %v2273
      %v2275 = vpop.xlane.xlu0 %2274
      %v2276 = vmul.f32 %v2275, %v806
      %v2277 = vadd.f32 %v2276, 1e-05
      %v2278 = vrsqrt.pop %v2277
      %v2279 = vmul.f32 %v2271, %v2278
      %v2281 = vlaneseq
      %v2282 = vshrl.u32 %v2281, 7
      %v2283 = vsub.s32 0, %v2282
      %v2284 = vrot.slane %v2265, %v2283
      %v2286 = vmul.f32 %v2279, %v2284
      %v2288 = vlaneseq
      %v2289 = vshrl.u32 %v2288, 7
      %v2290 = vsub.s32 0, %v2289
      %v2291 = vrot.slane %v2266, %v2290
      %v2293 = vadd.f32 %v2286, %v2291
      %v2294 = vpack.c.bf16 %v2293, %v2293
      %v2295 = vld [vmem:[%s20] sm:$0xf]
      %v2296 = vld [vmem:[%s20 + $0x4] sm:$0xf]
      %v2297 = vld [vmem:[%s20 + $0x8] sm:$0xf]
      %v2298 = vld [vmem:[%s20 + $0xc] sm:$0xf]
      %v2299 = vld [vmem:[%s21] sm:$0x1]
      %v2301 = vlaneseq
      %v2302 = vshrl.u32 %v2301, 7
      %v2303 = vsub.s32 0, %v2302
      %v2304 = vrot.slane %v2299, %v2303
      %v2310 = vunpack.c.l.b16 %v2295
      %v2311 = vunpack.c.l.b16 %v2296
      %v2312 = vunpack.c.l.b16 %v2297
      %v2313 = vunpack.c.l.b16 %v2298
      %v2314 = vpack.c.b16 %v2311, %v2310
      %v2315 = vpack.c.b16 %v2313, %v2312
      %v2319 = vsel %vm802, %v2294, 0
      %2321 = vmatprep.subr.bf16.mxu0 0
      %2322 = vmatpush1.bf16.msra.mxu0 %v2314
      %2323 = vmatprep.subr.bf16.mxu0 0
      %2324 = vmatpush1.bf16.msra.mxu0 %v2315
      %2325 = vmatprep.subr.bf16.mxu0 0
      %2326 = vmatpush1.bf16.msra.mxu0 0
      %2327 = vmatprep.subr.bf16.mxu0 0
      %2328 = vmatpush1.bf16.msra.mxu0 0
      %2329 = vmatprep.subr.bf16.mxu0 0
      %2330 = vmatpush1.bf16.msra.mxu0 0
      %2331 = vmatprep.subr.bf16.mxu0 0
      %2332 = vmatpush1.bf16.msra.mxu0 0
      %2333 = vmatprep.subr.bf16.mxu0 0
      %2334 = vmatpush1.bf16.msra.mxu0 0
      %2335 = vmatprep.subr.bf16.mxu0 0
      %2336 = vmatpush1.bf16.msra.mxu0 0
      %2337 = vmatprep.subr.bf16.mxu0 0
      %2338 = vmatpush1.bf16.msra.mxu0 0
      %2339 = vmatprep.subr.bf16.mxu0 0
      %2340 = vmatpush1.bf16.msra.mxu0 0
      %2341 = vmatprep.subr.bf16.mxu0 0
      %2342 = vmatpush1.bf16.msra.mxu0 0
      %2343 = vmatprep.subr.bf16.mxu0 0
      %2344 = vmatpush1.bf16.msra.mxu0 0
      %2345 = vmatprep.subr.bf16.mxu0 0
      %2346 = vmatpush1.bf16.msra.mxu0 0
      %2347 = vmatprep.subr.bf16.mxu0 0
      %2348 = vmatpush1.bf16.msra.mxu0 0
      %2349 = vmatprep.subr.bf16.mxu0 0
      %2350 = vmatpush1.bf16.msra.mxu0 0
      %2351 = vmatprep.subr.bf16.mxu0 0
      %2352 = vmatpush1.bf16.msra.mxu0 0
      %2353 = vmatprep.mubr.bf16.mxu0 0
      %2354 = vmatmul.mubr.bf16.gmra.mrb[0].mxu0 %v2319
      %v2355 = vpop.f32.mrb[0].mxu0
      %v2356 = vadd.f32 %v2304, %v2355
      %v2357 = vpop.f32.mrb[0].mxu0
      %v2358 = vpop.f32.mrb[0].mxu0
      %v2359 = vpop.f32.mrb[0].mxu0
      %2360 = vdwg.mxu0
      %v2361 = vmul.f32 %v2356, %v2356
      %v2362 = vmul.f32 %v2356, %v2361
      %v2363 = vmul.f32 %v2362, 0.044715
      %v2364 = vadd.f32 %v2356, %v2363
      %v2365 = vmul.f32 %v2364, 0.7978846
      %v2366 = vtanh.pop %v2365
      %v2367 = vadd.f32 %v2366, 1.0
      %v2368 = vmul.f32 %v2367, 0.5
      %v2369 = vmul.f32 %v2356, %v2368
      %v2370 = vpack.c.bf16 %v2369, %v2369
      %v2371 = vld [vmem:[%s22] sm:$0xf]
      %v2372 = vld [vmem:[%s22 + $0x4] sm:$0xf]
      %v2373 = vld [vmem:[%s22 + $0x8] sm:$0xf]
      %v2374 = vld [vmem:[%s22 + $0xc] sm:$0xf]
      %v2375 = vld [vmem:[%s22 + $0x10] sm:$0xf]
      %v2376 = vld [vmem:[%s22 + $0x14] sm:$0xf]
      %v2377 = vld [vmem:[%s22 + $0x18] sm:$0xf]
      %v2378 = vld [vmem:[%s22 + $0x1c] sm:$0xf]
      %v2379 = vld [vmem:[%s22 + $0x20] sm:$0xf]
      %v2380 = vld [vmem:[%s22 + $0x24] sm:$0xf]
      %v2381 = vld [vmem:[%s22 + $0x28] sm:$0xf]
      %v2382 = vld [vmem:[%s22 + $0x2c] sm:$0xf]
      %v2383 = vld [vmem:[%s22 + $0x30] sm:$0xf]
      %v2384 = vld [vmem:[%s22 + $0x34] sm:$0xf]
      %v2385 = vld [vmem:[%s22 + $0x38] sm:$0xf]
      %v2386 = vld [vmem:[%s22 + $0x3c] sm:$0xf]
      %v2403 = vunpack.c.l.b16 %v2371
      %v2404 = vunpack.c.l.b16 %v2372
      %v2405 = vunpack.c.l.b16 %v2373
      %v2406 = vunpack.c.l.b16 %v2374
      %v2407 = vunpack.c.l.b16 %v2375
      %v2408 = vunpack.c.l.b16 %v2376
      %v2409 = vunpack.c.l.b16 %v2377
      %v2410 = vunpack.c.l.b16 %v2378
      %v2411 = vunpack.c.l.b16 %v2379
      %v2412 = vunpack.c.l.b16 %v2380
      %v2413 = vunpack.c.l.b16 %v2381
      %v2414 = vunpack.c.l.b16 %v2382
      %v2415 = vunpack.c.l.b16 %v2383
      %v2416 = vunpack.c.l.b16 %v2384
      %v2417 = vunpack.c.l.b16 %v2385
      %v2418 = vunpack.c.l.b16 %v2386
      %v2419 = vpack.c.b16 %v2404, %v2403
      %v2420 = vpack.c.b16 %v2406, %v2405
      %v2421 = vpack.c.b16 %v2408, %v2407
      %v2422 = vpack.c.b16 %v2410, %v2409
      %v2423 = vpack.c.b16 %v2412, %v2411
      %v2424 = vpack.c.b16 %v2414, %v2413
      %v2425 = vpack.c.b16 %v2416, %v2415
      %v2426 = vpack.c.b16 %v2418, %v2417
      %2435 = vmatprep.subr.bf16.mxu0 0
      %2436 = vmatpush1.bf16.msra.mxu0 %v2419
      %2437 = vmatprep.subr.bf16.mxu0 0
      %2438 = vmatpush1.bf16.msra.mxu0 %v2420
      %2439 = vmatprep.subr.bf16.mxu0 0
      %2440 = vmatpush1.bf16.msra.mxu0 %v2421
      %2441 = vmatprep.subr.bf16.mxu0 0
      %2442 = vmatpush1.bf16.msra.mxu0 %v2422
      %2443 = vmatprep.subr.bf16.mxu0 0
      %2444 = vmatpush1.bf16.msra.mxu0 %v2423
      %2445 = vmatprep.subr.bf16.mxu0 0
      %2446 = vmatpush1.bf16.msra.mxu0 %v2424
      %2447 = vmatprep.subr.bf16.mxu0 0
      %2448 = vmatpush1.bf16.msra.mxu0 %v2425
      %2449 = vmatprep.subr.bf16.mxu0 0
      %2450 = vmatpush1.bf16.msra.mxu0 %v2426
      %2451 = vmatprep.subr.bf16.mxu0 0
      %2452 = vmatpush1.bf16.msra.mxu0 0
      %2453 = vmatprep.subr.bf16.mxu0 0
      %2454 = vmatpush1.bf16.msra.mxu0 0
      %2455 = vmatprep.subr.bf16.mxu0 0
      %2456 = vmatpush1.bf16.msra.mxu0 0
      %2457 = vmatprep.subr.bf16.mxu0 0
      %2458 = vmatpush1.bf16.msra.mxu0 0
      %2459 = vmatprep.subr.bf16.mxu0 0
      %2460 = vmatpush1.bf16.msra.mxu0 0
      %2461 = vmatprep.subr.bf16.mxu0 0
      %2462 = vmatpush1.bf16.msra.mxu0 0
      %2463 = vmatprep.subr.bf16.mxu0 0
      %2464 = vmatpush1.bf16.msra.mxu0 0
      %2465 = vmatprep.subr.bf16.mxu0 0
      %2466 = vmatpush1.bf16.msra.mxu0 0
      %2467 = vmatprep.mubr.bf16.mxu0 0
      %2468 = vmatmul.mubr.bf16.gmra.mrb[0].mxu0 %v2370
      %v2469 = vpop.f32.mrb[0].mxu0
      %v2470 = vadd.f32 0.0, %v2469
      %v2471 = vpop.f32.mrb[0].mxu0
      %v2472 = vpop.f32.mrb[0].mxu0
      %v2473 = vpop.f32.mrb[0].mxu0
      %2474 = vdwg.mxu0
      %v2475 = vadd.f32 %v2264, %v2470
      %v2476 = vld [vmem:[%s23] sm:$0x1]
      %v2478 = vlaneseq
      %v2479 = vshrl.u32 %v2478, 7
      %v2480 = vsub.s32 0, %v2479
      %v2481 = vrot.slane %v2476, %v2480
      %v2483 = vadd.f32 %v2475, %v2481
      %v2484 = vpack.c.bf16 %v2483, %v2483
      %vm2485 = vcmask 257024
      %2486 = vst.msk [vmem:[%s777] sm:$0xf] %vm2485, %v2484
      %p2487 = scmp.lt.s32.totalorder %s35, 1
      %s2488 = scalar_select %p2487, %s35, 1
      %s2489 = smul.addr %s2488, 4
      %s2490 = scalar_lea.vmem %s24, %s2489
      // Predicated region
      $region117: #{forward.5} parent=115 // pred_check
        %p2491 = pneg %p577
      $region118: #{forward.5} parent=115 // pred_check_branch
        %2493 = sbr.rel (%p2491) target = $region120
      $region119: #{forward.5} parent=115 // pred_region
        _
      $region120: #{forward.5} parent=115 // pred_fallthru
        _
    $region116: #{forward.5} parent=5 // pred_fallthru
      _
    %p2494 = scmp.le.s32.totalorder 2, %s30
    // Predicated region
    $region121: #{forward.5} parent=5 // pred_check
      %p2495 = pneg %p2494
    $region122: #{forward.5} parent=5 // pred_check_branch
      %2497 = sbr.rel (%p2495) target = $region124
    $region123: #{forward.5} parent=5 // pred_region
      %s2498 = ssub.s32 %s30, 2
      // Predicated region
      $region125: #{forward.5} parent=123 // pred_check
        %p2499 = pneg %p583
      $region126: #{forward.5} parent=123 // pred_check_branch
        %2501 = sbr.rel (%p2499) target = $region128
      $region127: #{forward.5} parent=123 // pred_region
        %p2502 = scmp.lt.s32.totalorder %s36, 1
        %s2503 = scalar_select %p2502, %s36, 1
        %s2504 = smul.addr %s2503, 4
        %s2505 = scalar_lea.vmem %s24, %s2504
      $region128: #{forward.5} parent=123 // pred_fallthru
        _
    $region124: #{forward.5} parent=5 // pred_fallthru
      _
  $region6: #{forward.5} parent=0 // loop_footer
    %s34 = sadd.s32 1, %s30
  $region7: #{forward.5} parent=0 // loop_footer_branch
    %29 = sbr.rel target = $region3
  $region8: #{forward.5} parent=0 // loop_exit
    _

</llo_original>
